<compile_context>
chip_gen: v7x
topology: tpu7x:2x2x1
jax: 0.10.0
libtpu: 0.0.40
codegen_flags: <defaults>
</compile_context>

<pallas_src>
import math
import jax
import jax.numpy as jnp
from jax.experimental import pallas as pl
from jax.experimental.pallas import tpu as pltpu

# ----------------------------- configuration --------------------------------
B = 2                  # batch
N_MELS = 32            # mel bins
T_SEQ = 16             # time frames
N_CLASSES = 8
FLUX = False           # flux = 0
CAUSAL = False         # TODO(synk): causal conv padding / causal attn mask unused (causal=False)
NUM_CH = 4             # num_channels
NUM_BLOCKS = 3         # num_attention_blocks
NUM_HEADS = 4
EXPANSION = 4

N_DIMS = N_MELS * (1 + int(FLUX))
D_MODEL = NUM_CH * (N_DIMS // 4)          # 32
HEAD_DIM = D_MODEL // NUM_HEADS           # 8
D_FF = D_MODEL * EXPANSION                # 128


# ------------------------------ fused kernel --------------------------------
def _fused_kernel(x_ref,
                  c1w1, c1b1, c1wsc, c1bsc, c1w2, c1b2, sel1e, sel1o,
                  c2w1, c2b1, c2w2, c2b2, sel2e, sel2o,
                  tshift, pe_ref, amask_ref,
                  wqkv_ref, bqkv_ref, wo_ref, bo_ref,
                  g1_ref, be1_ref, w1_ref, b1_ref, w2_ref, b2_ref,
                  g2_ref, be2_ref, fcw_ref, fcb_ref,
                  o_ref):
    f32 = jnp.float32

    # host-packed time-shift matrices (block-diagonal over batch, zero-fill)
    s_dn = tshift[0]          # out row t reads row t-1   (time tap dt = 0)
    s_up = tshift[1]          # out row t reads row t+1   (time tap dt = 2)

    # 3x3 'same' conv on the (B*T, Cin*F) slab:
    #   3 block GEMMs (freq taps + channel mix folded on host) + 2 time-shift
    #   GEMMs + bias (+ residual) + ReLU.
    def conv3x3(a, w_ref, b_ref, residual=None):
        z0 = jnp.dot(a, w_ref[0], preferred_element_type=f32)
        z1 = jnp.dot(a, w_ref[1], preferred_element_type=f32)
        z2 = jnp.dot(a, w_ref[2], preferred_element_type=f32)
        out = (z1
               + jnp.dot(s_dn, z0, preferred_element_type=f32)
               + jnp.dot(s_up, z2, preferred_element_type=f32)
               + b_ref[...])
        if residual is not None:
            out = out + residual
        return jnp.maximum(out, 0.0)

    # MaxPool2d((2,1)) over frequency (lane axis) via two selection GEMMs
    def maxpool(a, sel_e_ref, sel_o_ref):
        return jnp.maximum(jnp.dot(a, sel_e_ref[...], preferred_element_type=f32),
                           jnp.dot(a, sel_o_ref[...], preferred_element_type=f32))

    # ----------------------- conv front-end (all in VMEM) --------------------
    a0 = x_ref[...]                                       # (B*T, F)       = (32, 32)
    h = conv3x3(a0, c1w1, c1b1)                           # (B*T, C*F)     = (32, 128)
    sc = jnp.dot(a0, c1wsc[...], preferred_element_type=f32) + c1bsc[...]   # 1x1 shortcut
    a1 = conv3x3(h, c1w2, c1b2, residual=sc)
    p1 = maxpool(a1, sel1e, sel1o)                        # (B*T, C*F/2)   = (32, 64)

    h2 = conv3x3(p1, c2w1, c2b1)
    a2 = conv3x3(h2, c2w2, c2b2, residual=p1)             # identity shortcut
    xx = maxpool(a2, sel2e, sel2o)                        # (B*T, D)       = (32, 32)

    # lane index is c*(F//4)+f == PyTorch reshape order -> sequence is ready
    xx = xx + pe_ref[...]                                 # positional encoding (tiled over batch)

    # --------------------------- transformer stack ---------------------------
    def layer_norm(v, g, b):
        mu = jnp.mean(v, axis=-1, keepdims=True)
        var = jnp.mean(jnp.square(v - mu), axis=-1, keepdims=True)
        return (v - mu) * jax.lax.rsqrt(var + 1e-5) * g + b

    D, H, hd = D_MODEL, NUM_HEADS, HEAD_DIM
    amask = amask_ref[...]                                # 0 within item, -1e9 across items
    for i in range(NUM_BLOCKS):
        qkv = jnp.dot(xx, wqkv_ref[i], preferred_element_type=f32) + bqkv_ref[i]   # (B*T, 3D)
        heads = []
        for hh in range(H):
            q = qkv[:, hh * hd:(hh + 1) * hd]             # 1/sqrt(hd) folded into W_q
            k = qkv[:, D + hh * hd:D + (hh + 1) * hd]
            v = qkv[:, 2 * D + hh * hd:2 * D + (hh + 1) * hd]
            s = jax.lax.dot_general(q, k, (((1,), (1,)), ((), ())),
                                    preferred_element_type=f32) + amask             # (B*T, B*T)
            s = s - jnp.max(s, axis=-1, keepdims=True)
            p = jnp.exp(s)
            p = p * pl.reciprocal(jnp.sum(p, axis=-1, keepdims=True), approx=True)
            heads.append(jnp.dot(p, v, preferred_element_type=f32))                 # (B*T, hd)
        o_all = jnp.concatenate(heads, axis=-1)                                     # (B*T, D)
        attn = xx + jnp.dot(o_all, wo_ref[i], preferred_element_type=f32) + bo_ref[i]
        y = layer_norm(attn, g1_ref[i], be1_ref[i])
        ff = jnp.maximum(jnp.dot(y, w1_ref[i], preferred_element_type=f32) + b1_ref[i], 0.0)
        ff = jnp.dot(ff, w2_ref[i], preferred_element_type=f32) + b2_ref[i] + y
        xx = layer_norm(ff, g2_ref[i], be2_ref[i])

    # ------------------------------- final FC --------------------------------
    logits = jnp.dot(xx, fcw_ref[...], preferred_element_type=f32) + fcb_ref[...]   # (B*T, n_classes)
    o_ref[...] = jnp.maximum(logits, 0.0)   # module applies activation to the logits


# ------------------------- host-side parameter packing -----------------------
def positional_encoding(T, D):
    pos = jnp.arange(T, dtype=jnp.float32)[:, None]
    div = jnp.exp(jnp.arange(0, D, 2, dtype=jnp.float32) * (-math.log(10000.0) / D))
    pe = jnp.zeros((T, D), jnp.float32)
    pe = pe.at[:, 0::2].set(jnp.sin(pos * div))
    pe = pe.at[:, 1::2].set(jnp.cos(pos * div))
    return pe


def conv_blockmats(w, F):
    """(Cout,Cin,3,3) conv -> 3 block matrices (Cin*F, Cout*F), one per TIME tap.

    Row index = ci*F + f_in, col index = co*F + f_out; the three frequency taps
    (with zero padding at the frequency edges) and the channel mixing are all
    folded in, so the kernel does one GEMM per time tap on the whole slab.
    """
    cout, cin = w.shape[0], w.shape[1]
    fi = jnp.arange(F)[:, None]
    fo = jnp.arange(F)[None, :]
    rs = jnp.stack([(fi == fo + df - 1).astype(jnp.float32) for df in range(3)])  # (3, F, F)
    blocks = []
    for dt in range(3):
        blk = jnp.einsum('oid,dab->ioab', w[:, :, :, dt], rs)       # (cin, cout, F, F)
        blocks.append(blk.transpose(0, 2, 1, 3).reshape(cin * F, cout * F))
    return jnp.stack(blocks)                                         # (3, cin*F, cout*F)


def shortcut_blockmat(wsc, F):
    """1x1 conv (Cout,Cin,1,1) -> (Cin*F, Cout*F) block-diagonal-over-frequency matrix."""
    eye = jnp.eye(F, dtype=jnp.float32)
    blk = jnp.einsum('oi,ab->ioab', wsc[:, :, 0, 0], eye)
    return blk.transpose(0, 2, 1, 3).reshape(wsc.shape[1] * F, wsc.shape[0] * F)


def pool_selmats(C, F):
    """MaxPool2d((2,1)) even/odd frequency-selection matrices (C*F, C*F//2)."""
    Fh = F // 2
    f = jnp.arange(F)[:, None]
    fp = jnp.arange(Fh)[None, :]
    e = (f == 2 * fp).astype(jnp.float32)
    o = (f == 2 * fp + 1).astype(jnp.float32)
    eye_c = jnp.eye(C, dtype=jnp.float32)
    return jnp.kron(eye_c, e), jnp.kron(eye_c, o)


def time_shift_mats(Bn, T):
    """(2, Bn*T, Bn*T) zero-fill time-shift matrices, block-diagonal over batch."""
    r = jnp.arange(Bn * T)
    b, t = r // T, r % T
    same = b[:, None] == b[None, :]
    dn = (same & (t[None, :] == t[:, None] - 1)).astype(jnp.float32)   # read row t-1
    up = (same & (t[None, :] == t[:, None] + 1)).astype(jnp.float32)   # read row t+1
    return jnp.stack([dn, up])


def batch_attn_mask(Bn, T):
    """0 within a batch item, -1e9 across items (keeps fused-batch attention exact)."""
    r = jnp.arange(Bn * T)
    b = r // T
    same = b[:, None] == b[None, :]
    return jnp.where(same, 0.0, -1e9).astype(jnp.float32)


def pack_params(p, Bn):
    scale = 1.0 / math.sqrt(HEAD_DIM)

    def stack(fn):
        return jnp.stack([fn(i) for i in range(NUM_BLOCKS)], axis=0)

    # ---- conv front-end, lane-packed block matrices ----
    F0 = N_DIMS
    c1w1 = conv_blockmats(p['c1_w1'], F0)
    c1b1 = jnp.repeat(p['c1_b1'], F0)[None, :]
    c1wsc = shortcut_blockmat(p['c1_wsc'], F0)
    c1bsc = jnp.repeat(p['c1_bsc'], F0)[None, :]
    c1w2 = conv_blockmats(p['c1_w2'], F0)
    c1b2 = jnp.repeat(p['c1_b2'], F0)[None, :]
    sel1e, sel1o = pool_selmats(NUM_CH, F0)

    F1 = F0 // 2
    c2w1 = conv_blockmats(p['c2_w1'], F1)
    c2b1 = jnp.repeat(p['c2_b1'], F1)[None, :]
    c2w2 = conv_blockmats(p['c2_w2'], F1)
    c2b2 = jnp.repeat(p['c2_b2'], F1)[None, :]
    sel2e, sel2o = pool_selmats(NUM_CH, F1)

    # ---- hoisted constants ----
    tshift = time_shift_mats(Bn, T_SEQ)
    pe = jnp.tile(positional_encoding(T_SEQ, D_MODEL), (Bn, 1))
    amask = batch_attn_mask(Bn, T_SEQ)

    # ---- attention blocks ----
    wqkv = stack(lambda i: jnp.concatenate(
        [p[f'a{i}_wq'] * scale, p[f'a{i}_wk'], p[f'a{i}_wv']], axis=1))
    bqkv = stack(lambda i: jnp.concatenate(
        [p[f'a{i}_bq'] * scale, p[f'a{i}_bk'], p[f'a{i}_bv']])[None, :])
    wo = stack(lambda i: p[f'a{i}_wo'])
    bo = stack(lambda i: p[f'a{i}_bo'][None, :])
    g1 = stack(lambda i: p[f'a{i}_g1'][None, :])
    be1 = stack(lambda i: p[f'a{i}_be1'][None, :])
    w1 = stack(lambda i: p[f'a{i}_w1'])
    b1 = stack(lambda i: p[f'a{i}_b1'][None, :])
    w2 = stack(lambda i: p[f'a{i}_w2'])
    b2 = stack(lambda i: p[f'a{i}_b2'][None, :])
    g2 = stack(lambda i: p[f'a{i}_g2'][None, :])
    be2 = stack(lambda i: p[f'a{i}_be2'][None, :])

    fcw = p['fc_w']                  # (D, n_classes)
    fcb = p['fc_b'][None, :]         # (1, n_classes)

    return (c1w1, c1b1, c1wsc, c1bsc, c1w2, c1b2, sel1e, sel1o,
            c2w1, c2b1, c2w2, c2b2, sel2e, sel2o,
            tshift, pe, amask,
            wqkv, bqkv, wo, bo, g1, be1, w1, b1, w2, b2, g2, be2,
            fcw, fcb)


# ------------------------------- forward pass --------------------------------
def cnn_attention_forward(x, packed):
    if FLUX:
        diff = x[..., 1:] - x[..., :-1]
        diff = jnp.maximum(jnp.pad(diff, ((0, 0), (0, 0), (1, 0))), 0.0)
        x = jnp.concatenate([x, diff], axis=1)

    Bn = x.shape[0]
    # (B, F, T) -> (B*T, F): time-major rows so the conv front-end runs in the
    # lane-packed layout and the (T, D) sequence falls out with no transpose.
    a0 = x.transpose(0, 2, 1).reshape(Bn * T_SEQ, N_DIMS)

    out_flat = pl.pallas_call(
        _fused_kernel,
        out_shape=jax.ShapeDtypeStruct((Bn * T_SEQ, N_CLASSES), jnp.float32),
        compiler_params=pltpu.CompilerParams(vmem_limit_bytes=32 * 1024 * 1024),
    )(a0, *packed)

    # (B*T, n_classes) -> (B, n_classes, T) to match the module's output layout
    return out_flat.reshape(Bn, T_SEQ, N_CLASSES).transpose(0, 2, 1)


# ------------------------------- parameters ----------------------------------
def init_params(key):
    p = {}
    keys = iter(jax.random.split(key, 128))

    def dense(shape, scale=0.05):
        return jax.random.normal(next(keys), shape, jnp.float32) * scale

    # conv residual block 1 (1 -> NUM_CH, with 1x1 shortcut)
    p['c1_w1'] = dense((NUM_CH, 1, 3, 3));        p['c1_b1'] = dense((NUM_CH,), 0.01)
    p['c1_w2'] = dense((NUM_CH, NUM_CH, 3, 3));   p['c1_b2'] = dense((NUM_CH,), 0.01)
    p['c1_wsc'] = dense((NUM_CH, 1, 1, 1));       p['c1_bsc'] = dense((NUM_CH,), 0.01)
    # conv residual block 2 (NUM_CH -> NUM_CH, identity shortcut)
    p['c2_w1'] = dense((NUM_CH, NUM_CH, 3, 3));   p['c2_b1'] = dense((NUM_CH,), 0.01)
    p['c2_w2'] = dense((NUM_CH, NUM_CH, 3, 3));   p['c2_b2'] = dense((NUM_CH,), 0.01)
    # attention blocks
    D, Dff = D_MODEL, D_FF
    for i in range(NUM_BLOCKS):
        for nm in ('wq', 'wk', 'wv', 'wo'):
            p[f'a{i}_{nm}'] = dense((D, D))
        for nm in ('bq', 'bk', 'bv', 'bo'):
            p[f'a{i}_{nm}'] = dense((D,), 0.01)
        p[f'a{i}_g1'] = jnp.ones((D,), jnp.float32);  p[f'a{i}_be1'] = jnp.zeros((D,), jnp.float32)
        p[f'a{i}_w1'] = dense((D, Dff));              p[f'a{i}_b1'] = dense((Dff,), 0.01)
        p[f'a{i}_w2'] = dense((Dff, D));              p[f'a{i}_b2'] = dense((D,), 0.01)
        p[f'a{i}_g2'] = jnp.ones((D,), jnp.float32);  p[f'a{i}_be2'] = jnp.zeros((D,), jnp.float32)
    # final classifier
    p['fc_w'] = dense((D, N_CLASSES));            p['fc_b'] = dense((N_CLASSES,), 0.01)
    return p


# ---------------------------------- main --------------------------------------
if __name__ == "__main__":
    key = jax.random.PRNGKey(0)
    k_in, k_par = jax.random.split(key)
    x = jax.random.normal(k_in, (B, N_MELS, T_SEQ), jnp.float32)   # (B, n_mels, T)
    params = init_params(k_par)
    packed = pack_params(params, B)

    fwd = jax.jit(lambda inp: cnn_attention_forward(inp, packed))
    out = jax.block_until_ready(fwd(x))

    assert out.shape == (B, N_CLASSES, T_SEQ), out.shape
    assert bool(jnp.all(jnp.isfinite(out)))
    print("KERNEL_OK")
</pallas_src>

<mosaic_0001>
module attributes {stable_mosaic.version = 11 : i64} {
  func.func @_fused_kernel(%arg0: memref<32x32xf32, #tpu.memory_space<vmem>>, %arg1: memref<3x32x128xf32, #tpu.memory_space<vmem>>, %arg2: memref<1x128xf32, #tpu.memory_space<vmem>>, %arg3: memref<32x128xf32, #tpu.memory_space<vmem>>, %arg4: memref<1x128xf32, #tpu.memory_space<vmem>>, %arg5: memref<3x128x128xf32, #tpu.memory_space<vmem>>, %arg6: memref<1x128xf32, #tpu.memory_space<vmem>>, %arg7: memref<128x64xf32, #tpu.memory_space<vmem>>, %arg8: memref<128x64xf32, #tpu.memory_space<vmem>>, %arg9: memref<3x64x64xf32, #tpu.memory_space<vmem>>, %arg10: memref<1x64xf32, #tpu.memory_space<vmem>>, %arg11: memref<3x64x64xf32, #tpu.memory_space<vmem>>, %arg12: memref<1x64xf32, #tpu.memory_space<vmem>>, %arg13: memref<64x32xf32, #tpu.memory_space<vmem>>, %arg14: memref<64x32xf32, #tpu.memory_space<vmem>>, %arg15: memref<2x32x32xf32, #tpu.memory_space<vmem>>, %arg16: memref<32x32xf32, #tpu.memory_space<vmem>>, %arg17: memref<32x32xf32, #tpu.memory_space<vmem>>, %arg18: memref<3x32x96xf32, #tpu.memory_space<vmem>>, %arg19: memref<3x1x96xf32, #tpu.memory_space<vmem>>, %arg20: memref<3x32x32xf32, #tpu.memory_space<vmem>>, %arg21: memref<3x1x32xf32, #tpu.memory_space<vmem>>, %arg22: memref<3x1x32xf32, #tpu.memory_space<vmem>>, %arg23: memref<3x1x32xf32, #tpu.memory_space<vmem>>, %arg24: memref<3x32x128xf32, #tpu.memory_space<vmem>>, %arg25: memref<3x1x128xf32, #tpu.memory_space<vmem>>, %arg26: memref<3x128x32xf32, #tpu.memory_space<vmem>>, %arg27: memref<3x1x32xf32, #tpu.memory_space<vmem>>, %arg28: memref<3x1x32xf32, #tpu.memory_space<vmem>>, %arg29: memref<3x1x32xf32, #tpu.memory_space<vmem>>, %arg30: memref<32x8xf32, #tpu.memory_space<vmem>>, %arg31: memref<1x8xf32, #tpu.memory_space<vmem>>, %arg32: memref<32x8xf32, #tpu.memory_space<vmem>>) attributes {dimension_semantics = [], scalar_prefetch = 0 : i64, scratch_operands = 0 : i64, tpu.core_type = #tpu.core_type<tc>} {
    %c0 = arith.constant 0 : index
    %c0_0 = arith.constant 0 : index
    %c0_1 = arith.constant 0 : index
    %0 = vector.load %arg15[%c0, %c0_0, %c0_1] : memref<2x32x32xf32, #tpu.memory_space<vmem>>, vector<1x32x32xf32>
    %1 = vector.shape_cast %0 : vector<1x32x32xf32> to vector<32x32xf32>
    %c1 = arith.constant 1 : index
    %c0_2 = arith.constant 0 : index
    %c0_3 = arith.constant 0 : index
    %2 = vector.load %arg15[%c1, %c0_2, %c0_3] : memref<2x32x32xf32, #tpu.memory_space<vmem>>, vector<1x32x32xf32>
    %3 = vector.shape_cast %2 : vector<1x32x32xf32> to vector<32x32xf32>
    %c0_4 = arith.constant 0 : index
    %c0_5 = arith.constant 0 : index
    %4 = vector.load %arg0[%c0_4, %c0_5] : memref<32x32xf32, #tpu.memory_space<vmem>>, vector<32x32xf32>
    %c0_6 = arith.constant 0 : index
    %c0_7 = arith.constant 0 : index
    %c0_8 = arith.constant 0 : index
    %5 = vector.load %arg1[%c0_6, %c0_7, %c0_8] : memref<3x32x128xf32, #tpu.memory_space<vmem>>, vector<1x32x128xf32>
    %6 = vector.shape_cast %5 : vector<1x32x128xf32> to vector<32x128xf32>
    %cst = arith.constant dense<0.000000e+00> : vector<32x128xf32>
    %7 = tpu.matmul %4, %6, %cst {dimension_numbers = #tpu.dot_dimension_numbers<[1], [0], [0], [1], [0, 0, 1, 1], [], []>} : vector<32x32xf32>, vector<32x128xf32>, vector<32x128xf32> -> vector<32x128xf32>
    %c1_9 = arith.constant 1 : index
    %c0_10 = arith.constant 0 : index
    %c0_11 = arith.constant 0 : index
    %8 = vector.load %arg1[%c1_9, %c0_10, %c0_11] : memref<3x32x128xf32, #tpu.memory_space<vmem>>, vector<1x32x128xf32>
    %9 = vector.shape_cast %8 : vector<1x32x128xf32> to vector<32x128xf32>
    %cst_12 = arith.constant dense<0.000000e+00> : vector<32x128xf32>
    %10 = tpu.matmul %4, %9, %cst_12 {dimension_numbers = #tpu.dot_dimension_numbers<[1], [0], [0], [1], [0, 0, 1, 1], [], []>} : vector<32x32xf32>, vector<32x128xf32>, vector<32x128xf32> -> vector<32x128xf32>
    %c2 = arith.constant 2 : index
    %c0_13 = arith.constant 0 : index
    %c0_14 = arith.constant 0 : index
    %11 = vector.load %arg1[%c2, %c0_13, %c0_14] : memref<3x32x128xf32, #tpu.memory_space<vmem>>, vector<1x32x128xf32>
    %12 = vector.shape_cast %11 : vector<1x32x128xf32> to vector<32x128xf32>
    %cst_15 = arith.constant dense<0.000000e+00> : vector<32x128xf32>
    %13 = tpu.matmul %4, %12, %cst_15 {dimension_numbers = #tpu.dot_dimension_numbers<[1], [0], [0], [1], [0, 0, 1, 1], [], []>} : vector<32x32xf32>, vector<32x128xf32>, vector<32x128xf32> -> vector<32x128xf32>
    %cst_16 = arith.constant dense<0.000000e+00> : vector<32x128xf32>
    %14 = tpu.matmul %1, %7, %cst_16 {dimension_numbers = #tpu.dot_dimension_numbers<[1], [0], [0], [1], [0, 0, 1, 1], [], []>} : vector<32x32xf32>, vector<32x128xf32>, vector<32x128xf32> -> vector<32x128xf32>
    %15 = arith.addf %10, %14 : vector<32x128xf32>
    %cst_17 = arith.constant dense<0.000000e+00> : vector<32x128xf32>
    %16 = tpu.matmul %3, %13, %cst_17 {dimension_numbers = #tpu.dot_dimension_numbers<[1], [0], [0], [1], [0, 0, 1, 1], [], []>} : vector<32x32xf32>, vector<32x128xf32>, vector<32x128xf32> -> vector<32x128xf32>
    %17 = arith.addf %15, %16 : vector<32x128xf32>
    %c0_18 = arith.constant 0 : index
    %c0_19 = arith.constant 0 : index
    %18 = vector.load %arg2[%c0_18, %c0_19] : memref<1x128xf32, #tpu.memory_space<vmem>>, vector<1x128xf32>
    %19 = vector.broadcast %18 : vector<1x128xf32> to vector<32x128xf32>
    %20 = arith.addf %17, %19 : vector<32x128xf32>
    %cst_20 = arith.constant 0.000000e+00 : f32
    %21 = vector.broadcast %cst_20 : f32 to vector<32x128xf32>
    %22 = arith.maximumf %20, %21 : vector<32x128xf32>
    %c0_21 = arith.constant 0 : index
    %c0_22 = arith.constant 0 : index
    %23 = vector.load %arg3[%c0_21, %c0_22] : memref<32x128xf32, #tpu.memory_space<vmem>>, vector<32x128xf32>
    %cst_23 = arith.constant dense<0.000000e+00> : vector<32x128xf32>
    %24 = tpu.matmul %4, %23, %cst_23 {dimension_numbers = #tpu.dot_dimension_numbers<[1], [0], [0], [1], [0, 0, 1, 1], [], []>} : vector<32x32xf32>, vector<32x128xf32>, vector<32x128xf32> -> vector<32x128xf32>
    %c0_24 = arith.constant 0 : index
    %c0_25 = arith.constant 0 : index
    %25 = vector.load %arg4[%c0_24, %c0_25] : memref<1x128xf32, #tpu.memory_space<vmem>>, vector<1x128xf32>
    %26 = vector.broadcast %25 : vector<1x128xf32> to vector<32x128xf32>
    %27 = arith.addf %24, %26 : vector<32x128xf32>
    %c0_26 = arith.constant 0 : index
    %c0_27 = arith.constant 0 : index
    %c0_28 = arith.constant 0 : index
    %28 = vector.load %arg5[%c0_26, %c0_27, %c0_28] : memref<3x128x128xf32, #tpu.memory_space<vmem>>, vector<1x128x128xf32>
    %29 = vector.shape_cast %28 : vector<1x128x128xf32> to vector<128x128xf32>
    %cst_29 = arith.constant dense<0.000000e+00> : vector<32x128xf32>
    %30 = tpu.matmul %22, %29, %cst_29 {dimension_numbers = #tpu.dot_dimension_numbers<[1], [0], [0], [1], [0, 0, 1, 1], [], []>} : vector<32x128xf32>, vector<128x128xf32>, vector<32x128xf32> -> vector<32x128xf32>
    %c1_30 = arith.constant 1 : index
    %c0_31 = arith.constant 0 : index
    %c0_32 = arith.constant 0 : index
    %31 = vector.load %arg5[%c1_30, %c0_31, %c0_32] : memref<3x128x128xf32, #tpu.memory_space<vmem>>, vector<1x128x128xf32>
    %32 = vector.shape_cast %31 : vector<1x128x128xf32> to vector<128x128xf32>
    %cst_33 = arith.constant dense<0.000000e+00> : vector<32x128xf32>
    %33 = tpu.matmul %22, %32, %cst_33 {dimension_numbers = #tpu.dot_dimension_numbers<[1], [0], [0], [1], [0, 0, 1, 1], [], []>} : vector<32x128xf32>, vector<128x128xf32>, vector<32x128xf32> -> vector<32x128xf32>
    %c2_34 = arith.constant 2 : index
    %c0_35 = arith.constant 0 : index
    %c0_36 = arith.constant 0 : index
    %34 = vector.load %arg5[%c2_34, %c0_35, %c0_36] : memref<3x128x128xf32, #tpu.memory_space<vmem>>, vector<1x128x128xf32>
    %35 = vector.shape_cast %34 : vector<1x128x128xf32> to vector<128x128xf32>
    %cst_37 = arith.constant dense<0.000000e+00> : vector<32x128xf32>
    %36 = tpu.matmul %22, %35, %cst_37 {dimension_numbers = #tpu.dot_dimension_numbers<[1], [0], [0], [1], [0, 0, 1, 1], [], []>} : vector<32x128xf32>, vector<128x128xf32>, vector<32x128xf32> -> vector<32x128xf32>
    %cst_38 = arith.constant dense<0.000000e+00> : vector<32x128xf32>
    %37 = tpu.matmul %1, %30, %cst_38 {dimension_numbers = #tpu.dot_dimension_numbers<[1], [0], [0], [1], [0, 0, 1, 1], [], []>} : vector<32x32xf32>, vector<32x128xf32>, vector<32x128xf32> -> vector<32x128xf32>
    %38 = arith.addf %33, %37 : vector<32x128xf32>
    %cst_39 = arith.constant dense<0.000000e+00> : vector<32x128xf32>
    %39 = tpu.matmul %3, %36, %cst_39 {dimension_numbers = #tpu.dot_dimension_numbers<[1], [0], [0], [1], [0, 0, 1, 1], [], []>} : vector<32x32xf32>, vector<32x128xf32>, vector<32x128xf32> -> vector<32x128xf32>
    %40 = arith.addf %38, %39 : vector<32x128xf32>
    %c0_40 = arith.constant 0 : index
    %c0_41 = arith.constant 0 : index
    %41 = vector.load %arg6[%c0_40, %c0_41] : memref<1x128xf32, #tpu.memory_space<vmem>>, vector<1x128xf32>
    %42 = vector.broadcast %41 : vector<1x128xf32> to vector<32x128xf32>
    %43 = arith.addf %40, %42 : vector<32x128xf32>
    %44 = arith.addf %43, %27 : vector<32x128xf32>
    %cst_42 = arith.constant 0.000000e+00 : f32
    %45 = vector.broadcast %cst_42 : f32 to vector<32x128xf32>
    %46 = arith.maximumf %44, %45 : vector<32x128xf32>
    %c0_43 = arith.constant 0 : index
    %c0_44 = arith.constant 0 : index
    %47 = vector.load %arg7[%c0_43, %c0_44] : memref<128x64xf32, #tpu.memory_space<vmem>>, vector<128x64xf32>
    %cst_45 = arith.constant dense<0.000000e+00> : vector<32x64xf32>
    %48 = tpu.matmul %46, %47, %cst_45 {dimension_numbers = #tpu.dot_dimension_numbers<[1], [0], [0], [1], [0, 0, 1, 1], [], []>} : vector<32x128xf32>, vector<128x64xf32>, vector<32x64xf32> -> vector<32x64xf32>
    %c0_46 = arith.constant 0 : index
    %c0_47 = arith.constant 0 : index
    %49 = vector.load %arg8[%c0_46, %c0_47] : memref<128x64xf32, #tpu.memory_space<vmem>>, vector<128x64xf32>
    %cst_48 = arith.constant dense<0.000000e+00> : vector<32x64xf32>
    %50 = tpu.matmul %46, %49, %cst_48 {dimension_numbers = #tpu.dot_dimension_numbers<[1], [0], [0], [1], [0, 0, 1, 1], [], []>} : vector<32x128xf32>, vector<128x64xf32>, vector<32x64xf32> -> vector<32x64xf32>
    %51 = arith.maximumf %48, %50 : vector<32x64xf32>
    %c0_49 = arith.constant 0 : index
    %c0_50 = arith.constant 0 : index
    %c0_51 = arith.constant 0 : index
    %52 = vector.load %arg9[%c0_49, %c0_50, %c0_51] : memref<3x64x64xf32, #tpu.memory_space<vmem>>, vector<1x64x64xf32>
    %53 = vector.shape_cast %52 : vector<1x64x64xf32> to vector<64x64xf32>
    %cst_52 = arith.constant dense<0.000000e+00> : vector<32x64xf32>
    %54 = tpu.matmul %51, %53, %cst_52 {dimension_numbers = #tpu.dot_dimension_numbers<[1], [0], [0], [1], [0, 0, 1, 1], [], []>} : vector<32x64xf32>, vector<64x64xf32>, vector<32x64xf32> -> vector<32x64xf32>
    %c1_53 = arith.constant 1 : index
    %c0_54 = arith.constant 0 : index
    %c0_55 = arith.constant 0 : index
    %55 = vector.load %arg9[%c1_53, %c0_54, %c0_55] : memref<3x64x64xf32, #tpu.memory_space<vmem>>, vector<1x64x64xf32>
    %56 = vector.shape_cast %55 : vector<1x64x64xf32> to vector<64x64xf32>
    %cst_56 = arith.constant dense<0.000000e+00> : vector<32x64xf32>
    %57 = tpu.matmul %51, %56, %cst_56 {dimension_numbers = #tpu.dot_dimension_numbers<[1], [0], [0], [1], [0, 0, 1, 1], [], []>} : vector<32x64xf32>, vector<64x64xf32>, vector<32x64xf32> -> vector<32x64xf32>
    %c2_57 = arith.constant 2 : index
    %c0_58 = arith.constant 0 : index
    %c0_59 = arith.constant 0 : index
    %58 = vector.load %arg9[%c2_57, %c0_58, %c0_59] : memref<3x64x64xf32, #tpu.memory_space<vmem>>, vector<1x64x64xf32>
    %59 = vector.shape_cast %58 : vector<1x64x64xf32> to vector<64x64xf32>
    %cst_60 = arith.constant dense<0.000000e+00> : vector<32x64xf32>
    %60 = tpu.matmul %51, %59, %cst_60 {dimension_numbers = #tpu.dot_dimension_numbers<[1], [0], [0], [1], [0, 0, 1, 1], [], []>} : vector<32x64xf32>, vector<64x64xf32>, vector<32x64xf32> -> vector<32x64xf32>
    %cst_61 = arith.constant dense<0.000000e+00> : vector<32x64xf32>
    %61 = tpu.matmul %1, %54, %cst_61 {dimension_numbers = #tpu.dot_dimension_numbers<[1], [0], [0], [1], [0, 0, 1, 1], [], []>} : vector<32x32xf32>, vector<32x64xf32>, vector<32x64xf32> -> vector<32x64xf32>
    %62 = arith.addf %57, %61 : vector<32x64xf32>
    %cst_62 = arith.constant dense<0.000000e+00> : vector<32x64xf32>
    %63 = tpu.matmul %3, %60, %cst_62 {dimension_numbers = #tpu.dot_dimension_numbers<[1], [0], [0], [1], [0, 0, 1, 1], [], []>} : vector<32x32xf32>, vector<32x64xf32>, vector<32x64xf32> -> vector<32x64xf32>
    %64 = arith.addf %62, %63 : vector<32x64xf32>
    %c0_63 = arith.constant 0 : index
    %c0_64 = arith.constant 0 : index
    %65 = vector.load %arg10[%c0_63, %c0_64] : memref<1x64xf32, #tpu.memory_space<vmem>>, vector<1x64xf32>
    %66 = vector.broadcast %65 : vector<1x64xf32> to vector<32x64xf32>
    %67 = arith.addf %64, %66 : vector<32x64xf32>
    %cst_65 = arith.constant 0.000000e+00 : f32
    %68 = vector.broadcast %cst_65 : f32 to vector<32x64xf32>
    %69 = arith.maximumf %67, %68 : vector<32x64xf32>
    %c0_66 = arith.constant 0 : index
    %c0_67 = arith.constant 0 : index
    %c0_68 = arith.constant 0 : index
    %70 = vector.load %arg11[%c0_66, %c0_67, %c0_68] : memref<3x64x64xf32, #tpu.memory_space<vmem>>, vector<1x64x64xf32>
    %71 = vector.shape_cast %70 : vector<1x64x64xf32> to vector<64x64xf32>
    %cst_69 = arith.constant dense<0.000000e+00> : vector<32x64xf32>
    %72 = tpu.matmul %69, %71, %cst_69 {dimension_numbers = #tpu.dot_dimension_numbers<[1], [0], [0], [1], [0, 0, 1, 1], [], []>} : vector<32x64xf32>, vector<64x64xf32>, vector<32x64xf32> -> vector<32x64xf32>
    %c1_70 = arith.constant 1 : index
    %c0_71 = arith.constant 0 : index
    %c0_72 = arith.constant 0 : index
    %73 = vector.load %arg11[%c1_70, %c0_71, %c0_72] : memref<3x64x64xf32, #tpu.memory_space<vmem>>, vector<1x64x64xf32>
    %74 = vector.shape_cast %73 : vector<1x64x64xf32> to vector<64x64xf32>
    %cst_73 = arith.constant dense<0.000000e+00> : vector<32x64xf32>
    %75 = tpu.matmul %69, %74, %cst_73 {dimension_numbers = #tpu.dot_dimension_numbers<[1], [0], [0], [1], [0, 0, 1, 1], [], []>} : vector<32x64xf32>, vector<64x64xf32>, vector<32x64xf32> -> vector<32x64xf32>
    %c2_74 = arith.constant 2 : index
    %c0_75 = arith.constant 0 : index
    %c0_76 = arith.constant 0 : index
    %76 = vector.load %arg11[%c2_74, %c0_75, %c0_76] : memref<3x64x64xf32, #tpu.memory_space<vmem>>, vector<1x64x64xf32>
    %77 = vector.shape_cast %76 : vector<1x64x64xf32> to vector<64x64xf32>
    %cst_77 = arith.constant dense<0.000000e+00> : vector<32x64xf32>
    %78 = tpu.matmul %69, %77, %cst_77 {dimension_numbers = #tpu.dot_dimension_numbers<[1], [0], [0], [1], [0, 0, 1, 1], [], []>} : vector<32x64xf32>, vector<64x64xf32>, vector<32x64xf32> -> vector<32x64xf32>
    %cst_78 = arith.constant dense<0.000000e+00> : vector<32x64xf32>
    %79 = tpu.matmul %1, %72, %cst_78 {dimension_numbers = #tpu.dot_dimension_numbers<[1], [0], [0], [1], [0, 0, 1, 1], [], []>} : vector<32x32xf32>, vector<32x64xf32>, vector<32x64xf32> -> vector<32x64xf32>
    %80 = arith.addf %75, %79 : vector<32x64xf32>
    %cst_79 = arith.constant dense<0.000000e+00> : vector<32x64xf32>
    %81 = tpu.matmul %3, %78, %cst_79 {dimension_numbers = #tpu.dot_dimension_numbers<[1], [0], [0], [1], [0, 0, 1, 1], [], []>} : vector<32x32xf32>, vector<32x64xf32>, vector<32x64xf32> -> vector<32x64xf32>
    %82 = arith.addf %80, %81 : vector<32x64xf32>
    %c0_80 = arith.constant 0 : index
    %c0_81 = arith.constant 0 : index
    %83 = vector.load %arg12[%c0_80, %c0_81] : memref<1x64xf32, #tpu.memory_space<vmem>>, vector<1x64xf32>
    %84 = vector.broadcast %83 : vector<1x64xf32> to vector<32x64xf32>
    %85 = arith.addf %82, %84 : vector<32x64xf32>
    %86 = arith.addf %85, %51 : vector<32x64xf32>
    %cst_82 = arith.constant 0.000000e+00 : f32
    %87 = vector.broadcast %cst_82 : f32 to vector<32x64xf32>
    %88 = arith.maximumf %86, %87 : vector<32x64xf32>
    %c0_83 = arith.constant 0 : index
    %c0_84 = arith.constant 0 : index
    %89 = vector.load %arg13[%c0_83, %c0_84] : memref<64x32xf32, #tpu.memory_space<vmem>>, vector<64x32xf32>
    %cst_85 = arith.constant dense<0.000000e+00> : vector<32x32xf32>
    %90 = tpu.matmul %88, %89, %cst_85 {dimension_numbers = #tpu.dot_dimension_numbers<[1], [0], [0], [1], [0, 0, 1, 1], [], []>} : vector<32x64xf32>, vector<64x32xf32>, vector<32x32xf32> -> vector<32x32xf32>
    %c0_86 = arith.constant 0 : index
    %c0_87 = arith.constant 0 : index
    %91 = vector.load %arg14[%c0_86, %c0_87] : memref<64x32xf32, #tpu.memory_space<vmem>>, vector<64x32xf32>
    %cst_88 = arith.constant dense<0.000000e+00> : vector<32x32xf32>
    %92 = tpu.matmul %88, %91, %cst_88 {dimension_numbers = #tpu.dot_dimension_numbers<[1], [0], [0], [1], [0, 0, 1, 1], [], []>} : vector<32x64xf32>, vector<64x32xf32>, vector<32x32xf32> -> vector<32x32xf32>
    %93 = arith.maximumf %90, %92 : vector<32x32xf32>
    %c0_89 = arith.constant 0 : index
    %c0_90 = arith.constant 0 : index
    %94 = vector.load %arg16[%c0_89, %c0_90] : memref<32x32xf32, #tpu.memory_space<vmem>>, vector<32x32xf32>
    %95 = arith.addf %93, %94 : vector<32x32xf32>
    %c0_91 = arith.constant 0 : index
    %c0_92 = arith.constant 0 : index
    %96 = vector.load %arg17[%c0_91, %c0_92] : memref<32x32xf32, #tpu.memory_space<vmem>>, vector<32x32xf32>
    %c0_93 = arith.constant 0 : index
    %c0_94 = arith.constant 0 : index
    %c0_95 = arith.constant 0 : index
    %97 = vector.load %arg18[%c0_93, %c0_94, %c0_95] : memref<3x32x96xf32, #tpu.memory_space<vmem>>, vector<1x32x96xf32>
    %98 = vector.shape_cast %97 : vector<1x32x96xf32> to vector<32x96xf32>
    %cst_96 = arith.constant dense<0.000000e+00> : vector<32x96xf32>
    %99 = tpu.matmul %95, %98, %cst_96 {dimension_numbers = #tpu.dot_dimension_numbers<[1], [0], [0], [1], [0, 0, 1, 1], [], []>} : vector<32x32xf32>, vector<32x96xf32>, vector<32x96xf32> -> vector<32x96xf32>
    %c0_97 = arith.constant 0 : index
    %c0_98 = arith.constant 0 : index
    %c0_99 = arith.constant 0 : index
    %100 = vector.load %arg19[%c0_97, %c0_98, %c0_99] : memref<3x1x96xf32, #tpu.memory_space<vmem>>, vector<1x1x96xf32>
    %101 = vector.shape_cast %100 : vector<1x1x96xf32> to vector<1x96xf32>
    %102 = vector.broadcast %101 : vector<1x96xf32> to vector<32x96xf32>
    %103 = arith.addf %99, %102 : vector<32x96xf32>
    %104 = vector.extract_strided_slice %103 {offsets = [0, 0], sizes = [32, 8], strides = [1, 1]} : vector<32x96xf32> to vector<32x8xf32>
    %105 = vector.extract_strided_slice %103 {offsets = [0, 32], sizes = [32, 8], strides = [1, 1]} : vector<32x96xf32> to vector<32x8xf32>
    %106 = vector.extract_strided_slice %103 {offsets = [0, 64], sizes = [32, 8], strides = [1, 1]} : vector<32x96xf32> to vector<32x8xf32>
    %cst_100 = arith.constant dense<0.000000e+00> : vector<32x32xf32>
    %107 = tpu.matmul %104, %105, %cst_100 {dimension_numbers = #tpu.dot_dimension_numbers<[1], [1], [0], [0], [0, 0, 1, 0], [], []>} : vector<32x8xf32>, vector<32x8xf32>, vector<32x32xf32> -> vector<32x32xf32>
    %108 = arith.addf %107, %96 : vector<32x32xf32>
    %cst_101 = arith.constant dense<0xFF800000> : vector<32xf32>
    %109 = vector.multi_reduction <maximumf>, %108, %cst_101 [1] : vector<32x32xf32> to vector<32xf32>
    %110 = vector.shape_cast %109 : vector<32xf32> to vector<32x1xf32>
    %111 = vector.broadcast %110 : vector<32x1xf32> to vector<32x32xf32>
    %112 = arith.subf %108, %111 : vector<32x32xf32>
    %113 = math.exp %112 : vector<32x32xf32>
    %cst_102 = arith.constant dense<0.000000e+00> : vector<32xf32>
    %114 = vector.multi_reduction <add>, %113, %cst_102 [1] : vector<32x32xf32> to vector<32xf32>
    %115 = vector.shape_cast %114 : vector<32xf32> to vector<32x1xf32>
    %116 = tpu.reciprocal %115 {approx = true} : vector<32x1xf32> -> vector<32x1xf32>
    %117 = vector.broadcast %116 : vector<32x1xf32> to vector<32x32xf32>
    %118 = arith.mulf %113, %117 : vector<32x32xf32>
    %cst_103 = arith.constant dense<0.000000e+00> : vector<32x8xf32>
    %119 = tpu.matmul %118, %106, %cst_103 {dimension_numbers = #tpu.dot_dimension_numbers<[1], [0], [0], [1], [0, 0, 1, 1], [], []>} : vector<32x32xf32>, vector<32x8xf32>, vector<32x8xf32> -> vector<32x8xf32>
    %120 = vector.extract_strided_slice %103 {offsets = [0, 8], sizes = [32, 8], strides = [1, 1]} : vector<32x96xf32> to vector<32x8xf32>
    %121 = vector.extract_strided_slice %103 {offsets = [0, 40], sizes = [32, 8], strides = [1, 1]} : vector<32x96xf32> to vector<32x8xf32>
    %122 = vector.extract_strided_slice %103 {offsets = [0, 72], sizes = [32, 8], strides = [1, 1]} : vector<32x96xf32> to vector<32x8xf32>
    %cst_104 = arith.constant dense<0.000000e+00> : vector<32x32xf32>
    %123 = tpu.matmul %120, %121, %cst_104 {dimension_numbers = #tpu.dot_dimension_numbers<[1], [1], [0], [0], [0, 0, 1, 0], [], []>} : vector<32x8xf32>, vector<32x8xf32>, vector<32x32xf32> -> vector<32x32xf32>
    %124 = arith.addf %123, %96 : vector<32x32xf32>
    %cst_105 = arith.constant dense<0xFF800000> : vector<32xf32>
    %125 = vector.multi_reduction <maximumf>, %124, %cst_105 [1] : vector<32x32xf32> to vector<32xf32>
    %126 = vector.shape_cast %125 : vector<32xf32> to vector<32x1xf32>
    %127 = vector.broadcast %126 : vector<32x1xf32> to vector<32x32xf32>
    %128 = arith.subf %124, %127 : vector<32x32xf32>
    %129 = math.exp %128 : vector<32x32xf32>
    %cst_106 = arith.constant dense<0.000000e+00> : vector<32xf32>
    %130 = vector.multi_reduction <add>, %129, %cst_106 [1] : vector<32x32xf32> to vector<32xf32>
    %131 = vector.shape_cast %130 : vector<32xf32> to vector<32x1xf32>
    %132 = tpu.reciprocal %131 {approx = true} : vector<32x1xf32> -> vector<32x1xf32>
    %133 = vector.broadcast %132 : vector<32x1xf32> to vector<32x32xf32>
    %134 = arith.mulf %129, %133 : vector<32x32xf32>
    %cst_107 = arith.constant dense<0.000000e+00> : vector<32x8xf32>
    %135 = tpu.matmul %134, %122, %cst_107 {dimension_numbers = #tpu.dot_dimension_numbers<[1], [0], [0], [1], [0, 0, 1, 1], [], []>} : vector<32x32xf32>, vector<32x8xf32>, vector<32x8xf32> -> vector<32x8xf32>
    %136 = vector.extract_strided_slice %103 {offsets = [0, 16], sizes = [32, 8], strides = [1, 1]} : vector<32x96xf32> to vector<32x8xf32>
    %137 = vector.extract_strided_slice %103 {offsets = [0, 48], sizes = [32, 8], strides = [1, 1]} : vector<32x96xf32> to vector<32x8xf32>
    %138 = vector.extract_strided_slice %103 {offsets = [0, 80], sizes = [32, 8], strides = [1, 1]} : vector<32x96xf32> to vector<32x8xf32>
    %cst_108 = arith.constant dense<0.000000e+00> : vector<32x32xf32>
    %139 = tpu.matmul %136, %137, %cst_108 {dimension_numbers = #tpu.dot_dimension_numbers<[1], [1], [0], [0], [0, 0, 1, 0], [], []>} : vector<32x8xf32>, vector<32x8xf32>, vector<32x32xf32> -> vector<32x32xf32>
    %140 = arith.addf %139, %96 : vector<32x32xf32>
    %cst_109 = arith.constant dense<0xFF800000> : vector<32xf32>
    %141 = vector.multi_reduction <maximumf>, %140, %cst_109 [1] : vector<32x32xf32> to vector<32xf32>
    %142 = vector.shape_cast %141 : vector<32xf32> to vector<32x1xf32>
    %143 = vector.broadcast %142 : vector<32x1xf32> to vector<32x32xf32>
    %144 = arith.subf %140, %143 : vector<32x32xf32>
    %145 = math.exp %144 : vector<32x32xf32>
    %cst_110 = arith.constant dense<0.000000e+00> : vector<32xf32>
    %146 = vector.multi_reduction <add>, %145, %cst_110 [1] : vector<32x32xf32> to vector<32xf32>
    %147 = vector.shape_cast %146 : vector<32xf32> to vector<32x1xf32>
    %148 = tpu.reciprocal %147 {approx = true} : vector<32x1xf32> -> vector<32x1xf32>
    %149 = vector.broadcast %148 : vector<32x1xf32> to vector<32x32xf32>
    %150 = arith.mulf %145, %149 : vector<32x32xf32>
    %cst_111 = arith.constant dense<0.000000e+00> : vector<32x8xf32>
    %151 = tpu.matmul %150, %138, %cst_111 {dimension_numbers = #tpu.dot_dimension_numbers<[1], [0], [0], [1], [0, 0, 1, 1], [], []>} : vector<32x32xf32>, vector<32x8xf32>, vector<32x8xf32> -> vector<32x8xf32>
    %152 = vector.extract_strided_slice %103 {offsets = [0, 24], sizes = [32, 8], strides = [1, 1]} : vector<32x96xf32> to vector<32x8xf32>
    %153 = vector.extract_strided_slice %103 {offsets = [0, 56], sizes = [32, 8], strides = [1, 1]} : vector<32x96xf32> to vector<32x8xf32>
    %154 = vector.extract_strided_slice %103 {offsets = [0, 88], sizes = [32, 8], strides = [1, 1]} : vector<32x96xf32> to vector<32x8xf32>
    %cst_112 = arith.constant dense<0.000000e+00> : vector<32x32xf32>
    %155 = tpu.matmul %152, %153, %cst_112 {dimension_numbers = #tpu.dot_dimension_numbers<[1], [1], [0], [0], [0, 0, 1, 0], [], []>} : vector<32x8xf32>, vector<32x8xf32>, vector<32x32xf32> -> vector<32x32xf32>
    %156 = arith.addf %155, %96 : vector<32x32xf32>
    %cst_113 = arith.constant dense<0xFF800000> : vector<32xf32>
    %157 = vector.multi_reduction <maximumf>, %156, %cst_113 [1] : vector<32x32xf32> to vector<32xf32>
    %158 = vector.shape_cast %157 : vector<32xf32> to vector<32x1xf32>
    %159 = vector.broadcast %158 : vector<32x1xf32> to vector<32x32xf32>
    %160 = arith.subf %156, %159 : vector<32x32xf32>
    %161 = math.exp %160 : vector<32x32xf32>
    %cst_114 = arith.constant dense<0.000000e+00> : vector<32xf32>
    %162 = vector.multi_reduction <add>, %161, %cst_114 [1] : vector<32x32xf32> to vector<32xf32>
    %163 = vector.shape_cast %162 : vector<32xf32> to vector<32x1xf32>
    %164 = tpu.reciprocal %163 {approx = true} : vector<32x1xf32> -> vector<32x1xf32>
    %165 = vector.broadcast %164 : vector<32x1xf32> to vector<32x32xf32>
    %166 = arith.mulf %161, %165 : vector<32x32xf32>
    %cst_115 = arith.constant dense<0.000000e+00> : vector<32x8xf32>
    %167 = tpu.matmul %166, %154, %cst_115 {dimension_numbers = #tpu.dot_dimension_numbers<[1], [0], [0], [1], [0, 0, 1, 1], [], []>} : vector<32x32xf32>, vector<32x8xf32>, vector<32x8xf32> -> vector<32x8xf32>
    %168 = tpu.concatenate %119, %135, %151, %167 in 1 : vector<32x8xf32>, vector<32x8xf32>, vector<32x8xf32>, vector<32x8xf32> -> vector<32x32xf32>
    %c0_116 = arith.constant 0 : index
    %c0_117 = arith.constant 0 : index
    %c0_118 = arith.constant 0 : index
    %169 = vector.load %arg20[%c0_116, %c0_117, %c0_118] : memref<3x32x32xf32, #tpu.memory_space<vmem>>, vector<1x32x32xf32>
    %170 = vector.shape_cast %169 : vector<1x32x32xf32> to vector<32x32xf32>
    %cst_119 = arith.constant dense<0.000000e+00> : vector<32x32xf32>
    %171 = tpu.matmul %168, %170, %cst_119 {dimension_numbers = #tpu.dot_dimension_numbers<[1], [0], [0], [1], [0, 0, 1, 1], [], []>} : vector<32x32xf32>, vector<32x32xf32>, vector<32x32xf32> -> vector<32x32xf32>
    %172 = arith.addf %95, %171 : vector<32x32xf32>
    %c0_120 = arith.constant 0 : index
    %c0_121 = arith.constant 0 : index
    %c0_122 = arith.constant 0 : index
    %173 = vector.load %arg21[%c0_120, %c0_121, %c0_122] : memref<3x1x32xf32, #tpu.memory_space<vmem>>, vector<1x1x32xf32>
    %174 = vector.shape_cast %173 : vector<1x1x32xf32> to vector<1x32xf32>
    %175 = vector.broadcast %174 : vector<1x32xf32> to vector<32x32xf32>
    %176 = arith.addf %172, %175 : vector<32x32xf32>
    %c0_123 = arith.constant 0 : index
    %c0_124 = arith.constant 0 : index
    %c0_125 = arith.constant 0 : index
    %177 = vector.load %arg22[%c0_123, %c0_124, %c0_125] : memref<3x1x32xf32, #tpu.memory_space<vmem>>, vector<1x1x32xf32>
    %178 = vector.shape_cast %177 : vector<1x1x32xf32> to vector<1x32xf32>
    %c0_126 = arith.constant 0 : index
    %c0_127 = arith.constant 0 : index
    %c0_128 = arith.constant 0 : index
    %179 = vector.load %arg23[%c0_126, %c0_127, %c0_128] : memref<3x1x32xf32, #tpu.memory_space<vmem>>, vector<1x1x32xf32>
    %180 = vector.shape_cast %179 : vector<1x1x32xf32> to vector<1x32xf32>
    %cst_129 = arith.constant dense<0.000000e+00> : vector<32xf32>
    %181 = vector.multi_reduction <add>, %176, %cst_129 [1] : vector<32x32xf32> to vector<32xf32>
    %182 = vector.shape_cast %181 : vector<32xf32> to vector<32x1xf32>
    %cst_130 = arith.constant 3.200000e+01 : f32
    %183 = vector.broadcast %cst_130 : f32 to vector<32x1xf32>
    %184 = arith.divf %182, %183 : vector<32x1xf32>
    %185 = vector.broadcast %184 : vector<32x1xf32> to vector<32x32xf32>
    %186 = arith.subf %176, %185 : vector<32x32xf32>
    %187 = arith.mulf %186, %186 : vector<32x32xf32>
    %cst_131 = arith.constant dense<0.000000e+00> : vector<32xf32>
    %188 = vector.multi_reduction <add>, %187, %cst_131 [1] : vector<32x32xf32> to vector<32xf32>
    %189 = vector.shape_cast %188 : vector<32xf32> to vector<32x1xf32>
    %cst_132 = arith.constant 3.200000e+01 : f32
    %190 = vector.broadcast %cst_132 : f32 to vector<32x1xf32>
    %191 = arith.divf %189, %190 : vector<32x1xf32>
    %192 = vector.broadcast %184 : vector<32x1xf32> to vector<32x32xf32>
    %193 = arith.subf %176, %192 : vector<32x32xf32>
    %cst_133 = arith.constant 9.99999974E-6 : f32
    %194 = vector.broadcast %cst_133 : f32 to vector<32x1xf32>
    %195 = arith.addf %191, %194 : vector<32x1xf32>
    %196 = math.rsqrt %195 : vector<32x1xf32>
    %197 = vector.broadcast %196 : vector<32x1xf32> to vector<32x32xf32>
    %198 = arith.mulf %193, %197 : vector<32x32xf32>
    %199 = vector.broadcast %178 : vector<1x32xf32> to vector<32x32xf32>
    %200 = arith.mulf %198, %199 : vector<32x32xf32>
    %201 = vector.broadcast %180 : vector<1x32xf32> to vector<32x32xf32>
    %202 = arith.addf %200, %201 : vector<32x32xf32>
    %c0_134 = arith.constant 0 : index
    %c0_135 = arith.constant 0 : index
    %c0_136 = arith.constant 0 : index
    %203 = vector.load %arg24[%c0_134, %c0_135, %c0_136] : memref<3x32x128xf32, #tpu.memory_space<vmem>>, vector<1x32x128xf32>
    %204 = vector.shape_cast %203 : vector<1x32x128xf32> to vector<32x128xf32>
    %cst_137 = arith.constant dense<0.000000e+00> : vector<32x128xf32>
    %205 = tpu.matmul %202, %204, %cst_137 {dimension_numbers = #tpu.dot_dimension_numbers<[1], [0], [0], [1], [0, 0, 1, 1], [], []>} : vector<32x32xf32>, vector<32x128xf32>, vector<32x128xf32> -> vector<32x128xf32>
    %c0_138 = arith.constant 0 : index
    %c0_139 = arith.constant 0 : index
    %c0_140 = arith.constant 0 : index
    %206 = vector.load %arg25[%c0_138, %c0_139, %c0_140] : memref<3x1x128xf32, #tpu.memory_space<vmem>>, vector<1x1x128xf32>
    %207 = vector.shape_cast %206 : vector<1x1x128xf32> to vector<1x128xf32>
    %208 = vector.broadcast %207 : vector<1x128xf32> to vector<32x128xf32>
    %209 = arith.addf %205, %208 : vector<32x128xf32>
    %cst_141 = arith.constant 0.000000e+00 : f32
    %210 = vector.broadcast %cst_141 : f32 to vector<32x128xf32>
    %211 = arith.maximumf %209, %210 : vector<32x128xf32>
    %c0_142 = arith.constant 0 : index
    %c0_143 = arith.constant 0 : index
    %c0_144 = arith.constant 0 : index
    %212 = vector.load %arg26[%c0_142, %c0_143, %c0_144] : memref<3x128x32xf32, #tpu.memory_space<vmem>>, vector<1x128x32xf32>
    %213 = vector.shape_cast %212 : vector<1x128x32xf32> to vector<128x32xf32>
    %cst_145 = arith.constant dense<0.000000e+00> : vector<32x32xf32>
    %214 = tpu.matmul %211, %213, %cst_145 {dimension_numbers = #tpu.dot_dimension_numbers<[1], [0], [0], [1], [0, 0, 1, 1], [], []>} : vector<32x128xf32>, vector<128x32xf32>, vector<32x32xf32> -> vector<32x32xf32>
    %c0_146 = arith.constant 0 : index
    %c0_147 = arith.constant 0 : index
    %c0_148 = arith.constant 0 : index
    %215 = vector.load %arg27[%c0_146, %c0_147, %c0_148] : memref<3x1x32xf32, #tpu.memory_space<vmem>>, vector<1x1x32xf32>
    %216 = vector.shape_cast %215 : vector<1x1x32xf32> to vector<1x32xf32>
    %217 = vector.broadcast %216 : vector<1x32xf32> to vector<32x32xf32>
    %218 = arith.addf %214, %217 : vector<32x32xf32>
    %219 = arith.addf %218, %202 : vector<32x32xf32>
    %c0_149 = arith.constant 0 : index
    %c0_150 = arith.constant 0 : index
    %c0_151 = arith.constant 0 : index
    %220 = vector.load %arg28[%c0_149, %c0_150, %c0_151] : memref<3x1x32xf32, #tpu.memory_space<vmem>>, vector<1x1x32xf32>
    %221 = vector.shape_cast %220 : vector<1x1x32xf32> to vector<1x32xf32>
    %c0_152 = arith.constant 0 : index
    %c0_153 = arith.constant 0 : index
    %c0_154 = arith.constant 0 : index
    %222 = vector.load %arg29[%c0_152, %c0_153, %c0_154] : memref<3x1x32xf32, #tpu.memory_space<vmem>>, vector<1x1x32xf32>
    %223 = vector.shape_cast %222 : vector<1x1x32xf32> to vector<1x32xf32>
    %cst_155 = arith.constant dense<0.000000e+00> : vector<32xf32>
    %224 = vector.multi_reduction <add>, %219, %cst_155 [1] : vector<32x32xf32> to vector<32xf32>
    %225 = vector.shape_cast %224 : vector<32xf32> to vector<32x1xf32>
    %cst_156 = arith.constant 3.200000e+01 : f32
    %226 = vector.broadcast %cst_156 : f32 to vector<32x1xf32>
    %227 = arith.divf %225, %226 : vector<32x1xf32>
    %228 = vector.broadcast %227 : vector<32x1xf32> to vector<32x32xf32>
    %229 = arith.subf %219, %228 : vector<32x32xf32>
    %230 = arith.mulf %229, %229 : vector<32x32xf32>
    %cst_157 = arith.constant dense<0.000000e+00> : vector<32xf32>
    %231 = vector.multi_reduction <add>, %230, %cst_157 [1] : vector<32x32xf32> to vector<32xf32>
    %232 = vector.shape_cast %231 : vector<32xf32> to vector<32x1xf32>
    %cst_158 = arith.constant 3.200000e+01 : f32
    %233 = vector.broadcast %cst_158 : f32 to vector<32x1xf32>
    %234 = arith.divf %232, %233 : vector<32x1xf32>
    %235 = vector.broadcast %227 : vector<32x1xf32> to vector<32x32xf32>
    %236 = arith.subf %219, %235 : vector<32x32xf32>
    %cst_159 = arith.constant 9.99999974E-6 : f32
    %237 = vector.broadcast %cst_159 : f32 to vector<32x1xf32>
    %238 = arith.addf %234, %237 : vector<32x1xf32>
    %239 = math.rsqrt %238 : vector<32x1xf32>
    %240 = vector.broadcast %239 : vector<32x1xf32> to vector<32x32xf32>
    %241 = arith.mulf %236, %240 : vector<32x32xf32>
    %242 = vector.broadcast %221 : vector<1x32xf32> to vector<32x32xf32>
    %243 = arith.mulf %241, %242 : vector<32x32xf32>
    %244 = vector.broadcast %223 : vector<1x32xf32> to vector<32x32xf32>
    %245 = arith.addf %243, %244 : vector<32x32xf32>
    %c1_160 = arith.constant 1 : index
    %c0_161 = arith.constant 0 : index
    %c0_162 = arith.constant 0 : index
    %246 = vector.load %arg18[%c1_160, %c0_161, %c0_162] : memref<3x32x96xf32, #tpu.memory_space<vmem>>, vector<1x32x96xf32>
    %247 = vector.shape_cast %246 : vector<1x32x96xf32> to vector<32x96xf32>
    %cst_163 = arith.constant dense<0.000000e+00> : vector<32x96xf32>
    %248 = tpu.matmul %245, %247, %cst_163 {dimension_numbers = #tpu.dot_dimension_numbers<[1], [0], [0], [1], [0, 0, 1, 1], [], []>} : vector<32x32xf32>, vector<32x96xf32>, vector<32x96xf32> -> vector<32x96xf32>
    %c1_164 = arith.constant 1 : index
    %c0_165 = arith.constant 0 : index
    %c0_166 = arith.constant 0 : index
    %249 = vector.load %arg19[%c1_164, %c0_165, %c0_166] : memref<3x1x96xf32, #tpu.memory_space<vmem>>, vector<1x1x96xf32>
    %250 = vector.shape_cast %249 : vector<1x1x96xf32> to vector<1x96xf32>
    %251 = vector.broadcast %250 : vector<1x96xf32> to vector<32x96xf32>
    %252 = arith.addf %248, %251 : vector<32x96xf32>
    %253 = vector.extract_strided_slice %252 {offsets = [0, 0], sizes = [32, 8], strides = [1, 1]} : vector<32x96xf32> to vector<32x8xf32>
    %254 = vector.extract_strided_slice %252 {offsets = [0, 32], sizes = [32, 8], strides = [1, 1]} : vector<32x96xf32> to vector<32x8xf32>
    %255 = vector.extract_strided_slice %252 {offsets = [0, 64], sizes = [32, 8], strides = [1, 1]} : vector<32x96xf32> to vector<32x8xf32>
    %cst_167 = arith.constant dense<0.000000e+00> : vector<32x32xf32>
    %256 = tpu.matmul %253, %254, %cst_167 {dimension_numbers = #tpu.dot_dimension_numbers<[1], [1], [0], [0], [0, 0, 1, 0], [], []>} : vector<32x8xf32>, vector<32x8xf32>, vector<32x32xf32> -> vector<32x32xf32>
    %257 = arith.addf %256, %96 : vector<32x32xf32>
    %cst_168 = arith.constant dense<0xFF800000> : vector<32xf32>
    %258 = vector.multi_reduction <maximumf>, %257, %cst_168 [1] : vector<32x32xf32> to vector<32xf32>
    %259 = vector.shape_cast %258 : vector<32xf32> to vector<32x1xf32>
    %260 = vector.broadcast %259 : vector<32x1xf32> to vector<32x32xf32>
    %261 = arith.subf %257, %260 : vector<32x32xf32>
    %262 = math.exp %261 : vector<32x32xf32>
    %cst_169 = arith.constant dense<0.000000e+00> : vector<32xf32>
    %263 = vector.multi_reduction <add>, %262, %cst_169 [1] : vector<32x32xf32> to vector<32xf32>
    %264 = vector.shape_cast %263 : vector<32xf32> to vector<32x1xf32>
    %265 = tpu.reciprocal %264 {approx = true} : vector<32x1xf32> -> vector<32x1xf32>
    %266 = vector.broadcast %265 : vector<32x1xf32> to vector<32x32xf32>
    %267 = arith.mulf %262, %266 : vector<32x32xf32>
    %cst_170 = arith.constant dense<0.000000e+00> : vector<32x8xf32>
    %268 = tpu.matmul %267, %255, %cst_170 {dimension_numbers = #tpu.dot_dimension_numbers<[1], [0], [0], [1], [0, 0, 1, 1], [], []>} : vector<32x32xf32>, vector<32x8xf32>, vector<32x8xf32> -> vector<32x8xf32>
    %269 = vector.extract_strided_slice %252 {offsets = [0, 8], sizes = [32, 8], strides = [1, 1]} : vector<32x96xf32> to vector<32x8xf32>
    %270 = vector.extract_strided_slice %252 {offsets = [0, 40], sizes = [32, 8], strides = [1, 1]} : vector<32x96xf32> to vector<32x8xf32>
    %271 = vector.extract_strided_slice %252 {offsets = [0, 72], sizes = [32, 8], strides = [1, 1]} : vector<32x96xf32> to vector<32x8xf32>
    %cst_171 = arith.constant dense<0.000000e+00> : vector<32x32xf32>
    %272 = tpu.matmul %269, %270, %cst_171 {dimension_numbers = #tpu.dot_dimension_numbers<[1], [1], [0], [0], [0, 0, 1, 0], [], []>} : vector<32x8xf32>, vector<32x8xf32>, vector<32x32xf32> -> vector<32x32xf32>
    %273 = arith.addf %272, %96 : vector<32x32xf32>
    %cst_172 = arith.constant dense<0xFF800000> : vector<32xf32>
    %274 = vector.multi_reduction <maximumf>, %273, %cst_172 [1] : vector<32x32xf32> to vector<32xf32>
    %275 = vector.shape_cast %274 : vector<32xf32> to vector<32x1xf32>
    %276 = vector.broadcast %275 : vector<32x1xf32> to vector<32x32xf32>
    %277 = arith.subf %273, %276 : vector<32x32xf32>
    %278 = math.exp %277 : vector<32x32xf32>
    %cst_173 = arith.constant dense<0.000000e+00> : vector<32xf32>
    %279 = vector.multi_reduction <add>, %278, %cst_173 [1] : vector<32x32xf32> to vector<32xf32>
    %280 = vector.shape_cast %279 : vector<32xf32> to vector<32x1xf32>
    %281 = tpu.reciprocal %280 {approx = true} : vector<32x1xf32> -> vector<32x1xf32>
    %282 = vector.broadcast %281 : vector<32x1xf32> to vector<32x32xf32>
    %283 = arith.mulf %278, %282 : vector<32x32xf32>
    %cst_174 = arith.constant dense<0.000000e+00> : vector<32x8xf32>
    %284 = tpu.matmul %283, %271, %cst_174 {dimension_numbers = #tpu.dot_dimension_numbers<[1], [0], [0], [1], [0, 0, 1, 1], [], []>} : vector<32x32xf32>, vector<32x8xf32>, vector<32x8xf32> -> vector<32x8xf32>
    %285 = vector.extract_strided_slice %252 {offsets = [0, 16], sizes = [32, 8], strides = [1, 1]} : vector<32x96xf32> to vector<32x8xf32>
    %286 = vector.extract_strided_slice %252 {offsets = [0, 48], sizes = [32, 8], strides = [1, 1]} : vector<32x96xf32> to vector<32x8xf32>
    %287 = vector.extract_strided_slice %252 {offsets = [0, 80], sizes = [32, 8], strides = [1, 1]} : vector<32x96xf32> to vector<32x8xf32>
    %cst_175 = arith.constant dense<0.000000e+00> : vector<32x32xf32>
    %288 = tpu.matmul %285, %286, %cst_175 {dimension_numbers = #tpu.dot_dimension_numbers<[1], [1], [0], [0], [0, 0, 1, 0], [], []>} : vector<32x8xf32>, vector<32x8xf32>, vector<32x32xf32> -> vector<32x32xf32>
    %289 = arith.addf %288, %96 : vector<32x32xf32>
    %cst_176 = arith.constant dense<0xFF800000> : vector<32xf32>
    %290 = vector.multi_reduction <maximumf>, %289, %cst_176 [1] : vector<32x32xf32> to vector<32xf32>
    %291 = vector.shape_cast %290 : vector<32xf32> to vector<32x1xf32>
    %292 = vector.broadcast %291 : vector<32x1xf32> to vector<32x32xf32>
    %293 = arith.subf %289, %292 : vector<32x32xf32>
    %294 = math.exp %293 : vector<32x32xf32>
    %cst_177 = arith.constant dense<0.000000e+00> : vector<32xf32>
    %295 = vector.multi_reduction <add>, %294, %cst_177 [1] : vector<32x32xf32> to vector<32xf32>
    %296 = vector.shape_cast %295 : vector<32xf32> to vector<32x1xf32>
    %297 = tpu.reciprocal %296 {approx = true} : vector<32x1xf32> -> vector<32x1xf32>
    %298 = vector.broadcast %297 : vector<32x1xf32> to vector<32x32xf32>
    %299 = arith.mulf %294, %298 : vector<32x32xf32>
    %cst_178 = arith.constant dense<0.000000e+00> : vector<32x8xf32>
    %300 = tpu.matmul %299, %287, %cst_178 {dimension_numbers = #tpu.dot_dimension_numbers<[1], [0], [0], [1], [0, 0, 1, 1], [], []>} : vector<32x32xf32>, vector<32x8xf32>, vector<32x8xf32> -> vector<32x8xf32>
    %301 = vector.extract_strided_slice %252 {offsets = [0, 24], sizes = [32, 8], strides = [1, 1]} : vector<32x96xf32> to vector<32x8xf32>
    %302 = vector.extract_strided_slice %252 {offsets = [0, 56], sizes = [32, 8], strides = [1, 1]} : vector<32x96xf32> to vector<32x8xf32>
    %303 = vector.extract_strided_slice %252 {offsets = [0, 88], sizes = [32, 8], strides = [1, 1]} : vector<32x96xf32> to vector<32x8xf32>
    %cst_179 = arith.constant dense<0.000000e+00> : vector<32x32xf32>
    %304 = tpu.matmul %301, %302, %cst_179 {dimension_numbers = #tpu.dot_dimension_numbers<[1], [1], [0], [0], [0, 0, 1, 0], [], []>} : vector<32x8xf32>, vector<32x8xf32>, vector<32x32xf32> -> vector<32x32xf32>
    %305 = arith.addf %304, %96 : vector<32x32xf32>
    %cst_180 = arith.constant dense<0xFF800000> : vector<32xf32>
    %306 = vector.multi_reduction <maximumf>, %305, %cst_180 [1] : vector<32x32xf32> to vector<32xf32>
    %307 = vector.shape_cast %306 : vector<32xf32> to vector<32x1xf32>
    %308 = vector.broadcast %307 : vector<32x1xf32> to vector<32x32xf32>
    %309 = arith.subf %305, %308 : vector<32x32xf32>
    %310 = math.exp %309 : vector<32x32xf32>
    %cst_181 = arith.constant dense<0.000000e+00> : vector<32xf32>
    %311 = vector.multi_reduction <add>, %310, %cst_181 [1] : vector<32x32xf32> to vector<32xf32>
    %312 = vector.shape_cast %311 : vector<32xf32> to vector<32x1xf32>
    %313 = tpu.reciprocal %312 {approx = true} : vector<32x1xf32> -> vector<32x1xf32>
    %314 = vector.broadcast %313 : vector<32x1xf32> to vector<32x32xf32>
    %315 = arith.mulf %310, %314 : vector<32x32xf32>
    %cst_182 = arith.constant dense<0.000000e+00> : vector<32x8xf32>
    %316 = tpu.matmul %315, %303, %cst_182 {dimension_numbers = #tpu.dot_dimension_numbers<[1], [0], [0], [1], [0, 0, 1, 1], [], []>} : vector<32x32xf32>, vector<32x8xf32>, vector<32x8xf32> -> vector<32x8xf32>
    %317 = tpu.concatenate %268, %284, %300, %316 in 1 : vector<32x8xf32>, vector<32x8xf32>, vector<32x8xf32>, vector<32x8xf32> -> vector<32x32xf32>
    %c1_183 = arith.constant 1 : index
    %c0_184 = arith.constant 0 : index
    %c0_185 = arith.constant 0 : index
    %318 = vector.load %arg20[%c1_183, %c0_184, %c0_185] : memref<3x32x32xf32, #tpu.memory_space<vmem>>, vector<1x32x32xf32>
    %319 = vector.shape_cast %318 : vector<1x32x32xf32> to vector<32x32xf32>
    %cst_186 = arith.constant dense<0.000000e+00> : vector<32x32xf32>
    %320 = tpu.matmul %317, %319, %cst_186 {dimension_numbers = #tpu.dot_dimension_numbers<[1], [0], [0], [1], [0, 0, 1, 1], [], []>} : vector<32x32xf32>, vector<32x32xf32>, vector<32x32xf32> -> vector<32x32xf32>
    %321 = arith.addf %245, %320 : vector<32x32xf32>
    %c1_187 = arith.constant 1 : index
    %c0_188 = arith.constant 0 : index
    %c0_189 = arith.constant 0 : index
    %322 = vector.load %arg21[%c1_187, %c0_188, %c0_189] : memref<3x1x32xf32, #tpu.memory_space<vmem>>, vector<1x1x32xf32>
    %323 = vector.shape_cast %322 : vector<1x1x32xf32> to vector<1x32xf32>
    %324 = vector.broadcast %323 : vector<1x32xf32> to vector<32x32xf32>
    %325 = arith.addf %321, %324 : vector<32x32xf32>
    %c1_190 = arith.constant 1 : index
    %c0_191 = arith.constant 0 : index
    %c0_192 = arith.constant 0 : index
    %326 = vector.load %arg22[%c1_190, %c0_191, %c0_192] : memref<3x1x32xf32, #tpu.memory_space<vmem>>, vector<1x1x32xf32>
    %327 = vector.shape_cast %326 : vector<1x1x32xf32> to vector<1x32xf32>
    %c1_193 = arith.constant 1 : index
    %c0_194 = arith.constant 0 : index
    %c0_195 = arith.constant 0 : index
    %328 = vector.load %arg23[%c1_193, %c0_194, %c0_195] : memref<3x1x32xf32, #tpu.memory_space<vmem>>, vector<1x1x32xf32>
    %329 = vector.shape_cast %328 : vector<1x1x32xf32> to vector<1x32xf32>
    %cst_196 = arith.constant dense<0.000000e+00> : vector<32xf32>
    %330 = vector.multi_reduction <add>, %325, %cst_196 [1] : vector<32x32xf32> to vector<32xf32>
    %331 = vector.shape_cast %330 : vector<32xf32> to vector<32x1xf32>
    %cst_197 = arith.constant 3.200000e+01 : f32
    %332 = vector.broadcast %cst_197 : f32 to vector<32x1xf32>
    %333 = arith.divf %331, %332 : vector<32x1xf32>
    %334 = vector.broadcast %333 : vector<32x1xf32> to vector<32x32xf32>
    %335 = arith.subf %325, %334 : vector<32x32xf32>
    %336 = arith.mulf %335, %335 : vector<32x32xf32>
    %cst_198 = arith.constant dense<0.000000e+00> : vector<32xf32>
    %337 = vector.multi_reduction <add>, %336, %cst_198 [1] : vector<32x32xf32> to vector<32xf32>
    %338 = vector.shape_cast %337 : vector<32xf32> to vector<32x1xf32>
    %cst_199 = arith.constant 3.200000e+01 : f32
    %339 = vector.broadcast %cst_199 : f32 to vector<32x1xf32>
    %340 = arith.divf %338, %339 : vector<32x1xf32>
    %341 = vector.broadcast %333 : vector<32x1xf32> to vector<32x32xf32>
    %342 = arith.subf %325, %341 : vector<32x32xf32>
    %cst_200 = arith.constant 9.99999974E-6 : f32
    %343 = vector.broadcast %cst_200 : f32 to vector<32x1xf32>
    %344 = arith.addf %340, %343 : vector<32x1xf32>
    %345 = math.rsqrt %344 : vector<32x1xf32>
    %346 = vector.broadcast %345 : vector<32x1xf32> to vector<32x32xf32>
    %347 = arith.mulf %342, %346 : vector<32x32xf32>
    %348 = vector.broadcast %327 : vector<1x32xf32> to vector<32x32xf32>
    %349 = arith.mulf %347, %348 : vector<32x32xf32>
    %350 = vector.broadcast %329 : vector<1x32xf32> to vector<32x32xf32>
    %351 = arith.addf %349, %350 : vector<32x32xf32>
    %c1_201 = arith.constant 1 : index
    %c0_202 = arith.constant 0 : index
    %c0_203 = arith.constant 0 : index
    %352 = vector.load %arg24[%c1_201, %c0_202, %c0_203] : memref<3x32x128xf32, #tpu.memory_space<vmem>>, vector<1x32x128xf32>
    %353 = vector.shape_cast %352 : vector<1x32x128xf32> to vector<32x128xf32>
    %cst_204 = arith.constant dense<0.000000e+00> : vector<32x128xf32>
    %354 = tpu.matmul %351, %353, %cst_204 {dimension_numbers = #tpu.dot_dimension_numbers<[1], [0], [0], [1], [0, 0, 1, 1], [], []>} : vector<32x32xf32>, vector<32x128xf32>, vector<32x128xf32> -> vector<32x128xf32>
    %c1_205 = arith.constant 1 : index
    %c0_206 = arith.constant 0 : index
    %c0_207 = arith.constant 0 : index
    %355 = vector.load %arg25[%c1_205, %c0_206, %c0_207] : memref<3x1x128xf32, #tpu.memory_space<vmem>>, vector<1x1x128xf32>
    %356 = vector.shape_cast %355 : vector<1x1x128xf32> to vector<1x128xf32>
    %357 = vector.broadcast %356 : vector<1x128xf32> to vector<32x128xf32>
    %358 = arith.addf %354, %357 : vector<32x128xf32>
    %cst_208 = arith.constant 0.000000e+00 : f32
    %359 = vector.broadcast %cst_208 : f32 to vector<32x128xf32>
    %360 = arith.maximumf %358, %359 : vector<32x128xf32>
    %c1_209 = arith.constant 1 : index
    %c0_210 = arith.constant 0 : index
    %c0_211 = arith.constant 0 : index
    %361 = vector.load %arg26[%c1_209, %c0_210, %c0_211] : memref<3x128x32xf32, #tpu.memory_space<vmem>>, vector<1x128x32xf32>
    %362 = vector.shape_cast %361 : vector<1x128x32xf32> to vector<128x32xf32>
    %cst_212 = arith.constant dense<0.000000e+00> : vector<32x32xf32>
    %363 = tpu.matmul %360, %362, %cst_212 {dimension_numbers = #tpu.dot_dimension_numbers<[1], [0], [0], [1], [0, 0, 1, 1], [], []>} : vector<32x128xf32>, vector<128x32xf32>, vector<32x32xf32> -> vector<32x32xf32>
    %c1_213 = arith.constant 1 : index
    %c0_214 = arith.constant 0 : index
    %c0_215 = arith.constant 0 : index
    %364 = vector.load %arg27[%c1_213, %c0_214, %c0_215] : memref<3x1x32xf32, #tpu.memory_space<vmem>>, vector<1x1x32xf32>
    %365 = vector.shape_cast %364 : vector<1x1x32xf32> to vector<1x32xf32>
    %366 = vector.broadcast %365 : vector<1x32xf32> to vector<32x32xf32>
    %367 = arith.addf %363, %366 : vector<32x32xf32>
    %368 = arith.addf %367, %351 : vector<32x32xf32>
    %c1_216 = arith.constant 1 : index
    %c0_217 = arith.constant 0 : index
    %c0_218 = arith.constant 0 : index
    %369 = vector.load %arg28[%c1_216, %c0_217, %c0_218] : memref<3x1x32xf32, #tpu.memory_space<vmem>>, vector<1x1x32xf32>
    %370 = vector.shape_cast %369 : vector<1x1x32xf32> to vector<1x32xf32>
    %c1_219 = arith.constant 1 : index
    %c0_220 = arith.constant 0 : index
    %c0_221 = arith.constant 0 : index
    %371 = vector.load %arg29[%c1_219, %c0_220, %c0_221] : memref<3x1x32xf32, #tpu.memory_space<vmem>>, vector<1x1x32xf32>
    %372 = vector.shape_cast %371 : vector<1x1x32xf32> to vector<1x32xf32>
    %cst_222 = arith.constant dense<0.000000e+00> : vector<32xf32>
    %373 = vector.multi_reduction <add>, %368, %cst_222 [1] : vector<32x32xf32> to vector<32xf32>
    %374 = vector.shape_cast %373 : vector<32xf32> to vector<32x1xf32>
    %cst_223 = arith.constant 3.200000e+01 : f32
    %375 = vector.broadcast %cst_223 : f32 to vector<32x1xf32>
    %376 = arith.divf %374, %375 : vector<32x1xf32>
    %377 = vector.broadcast %376 : vector<32x1xf32> to vector<32x32xf32>
    %378 = arith.subf %368, %377 : vector<32x32xf32>
    %379 = arith.mulf %378, %378 : vector<32x32xf32>
    %cst_224 = arith.constant dense<0.000000e+00> : vector<32xf32>
    %380 = vector.multi_reduction <add>, %379, %cst_224 [1] : vector<32x32xf32> to vector<32xf32>
    %381 = vector.shape_cast %380 : vector<32xf32> to vector<32x1xf32>
    %cst_225 = arith.constant 3.200000e+01 : f32
    %382 = vector.broadcast %cst_225 : f32 to vector<32x1xf32>
    %383 = arith.divf %381, %382 : vector<32x1xf32>
    %384 = vector.broadcast %376 : vector<32x1xf32> to vector<32x32xf32>
    %385 = arith.subf %368, %384 : vector<32x32xf32>
    %cst_226 = arith.constant 9.99999974E-6 : f32
    %386 = vector.broadcast %cst_226 : f32 to vector<32x1xf32>
    %387 = arith.addf %383, %386 : vector<32x1xf32>
    %388 = math.rsqrt %387 : vector<32x1xf32>
    %389 = vector.broadcast %388 : vector<32x1xf32> to vector<32x32xf32>
    %390 = arith.mulf %385, %389 : vector<32x32xf32>
    %391 = vector.broadcast %370 : vector<1x32xf32> to vector<32x32xf32>
    %392 = arith.mulf %390, %391 : vector<32x32xf32>
    %393 = vector.broadcast %372 : vector<1x32xf32> to vector<32x32xf32>
    %394 = arith.addf %392, %393 : vector<32x32xf32>
    %c2_227 = arith.constant 2 : index
    %c0_228 = arith.constant 0 : index
    %c0_229 = arith.constant 0 : index
    %395 = vector.load %arg18[%c2_227, %c0_228, %c0_229] : memref<3x32x96xf32, #tpu.memory_space<vmem>>, vector<1x32x96xf32>
    %396 = vector.shape_cast %395 : vector<1x32x96xf32> to vector<32x96xf32>
    %cst_230 = arith.constant dense<0.000000e+00> : vector<32x96xf32>
    %397 = tpu.matmul %394, %396, %cst_230 {dimension_numbers = #tpu.dot_dimension_numbers<[1], [0], [0], [1], [0, 0, 1, 1], [], []>} : vector<32x32xf32>, vector<32x96xf32>, vector<32x96xf32> -> vector<32x96xf32>
    %c2_231 = arith.constant 2 : index
    %c0_232 = arith.constant 0 : index
    %c0_233 = arith.constant 0 : index
    %398 = vector.load %arg19[%c2_231, %c0_232, %c0_233] : memref<3x1x96xf32, #tpu.memory_space<vmem>>, vector<1x1x96xf32>
    %399 = vector.shape_cast %398 : vector<1x1x96xf32> to vector<1x96xf32>
    %400 = vector.broadcast %399 : vector<1x96xf32> to vector<32x96xf32>
    %401 = arith.addf %397, %400 : vector<32x96xf32>
    %402 = vector.extract_strided_slice %401 {offsets = [0, 0], sizes = [32, 8], strides = [1, 1]} : vector<32x96xf32> to vector<32x8xf32>
    %403 = vector.extract_strided_slice %401 {offsets = [0, 32], sizes = [32, 8], strides = [1, 1]} : vector<32x96xf32> to vector<32x8xf32>
    %404 = vector.extract_strided_slice %401 {offsets = [0, 64], sizes = [32, 8], strides = [1, 1]} : vector<32x96xf32> to vector<32x8xf32>
    %cst_234 = arith.constant dense<0.000000e+00> : vector<32x32xf32>
    %405 = tpu.matmul %402, %403, %cst_234 {dimension_numbers = #tpu.dot_dimension_numbers<[1], [1], [0], [0], [0, 0, 1, 0], [], []>} : vector<32x8xf32>, vector<32x8xf32>, vector<32x32xf32> -> vector<32x32xf32>
    %406 = arith.addf %405, %96 : vector<32x32xf32>
    %cst_235 = arith.constant dense<0xFF800000> : vector<32xf32>
    %407 = vector.multi_reduction <maximumf>, %406, %cst_235 [1] : vector<32x32xf32> to vector<32xf32>
    %408 = vector.shape_cast %407 : vector<32xf32> to vector<32x1xf32>
    %409 = vector.broadcast %408 : vector<32x1xf32> to vector<32x32xf32>
    %410 = arith.subf %406, %409 : vector<32x32xf32>
    %411 = math.exp %410 : vector<32x32xf32>
    %cst_236 = arith.constant dense<0.000000e+00> : vector<32xf32>
    %412 = vector.multi_reduction <add>, %411, %cst_236 [1] : vector<32x32xf32> to vector<32xf32>
    %413 = vector.shape_cast %412 : vector<32xf32> to vector<32x1xf32>
    %414 = tpu.reciprocal %413 {approx = true} : vector<32x1xf32> -> vector<32x1xf32>
    %415 = vector.broadcast %414 : vector<32x1xf32> to vector<32x32xf32>
    %416 = arith.mulf %411, %415 : vector<32x32xf32>
    %cst_237 = arith.constant dense<0.000000e+00> : vector<32x8xf32>
    %417 = tpu.matmul %416, %404, %cst_237 {dimension_numbers = #tpu.dot_dimension_numbers<[1], [0], [0], [1], [0, 0, 1, 1], [], []>} : vector<32x32xf32>, vector<32x8xf32>, vector<32x8xf32> -> vector<32x8xf32>
    %418 = vector.extract_strided_slice %401 {offsets = [0, 8], sizes = [32, 8], strides = [1, 1]} : vector<32x96xf32> to vector<32x8xf32>
    %419 = vector.extract_strided_slice %401 {offsets = [0, 40], sizes = [32, 8], strides = [1, 1]} : vector<32x96xf32> to vector<32x8xf32>
    %420 = vector.extract_strided_slice %401 {offsets = [0, 72], sizes = [32, 8], strides = [1, 1]} : vector<32x96xf32> to vector<32x8xf32>
    %cst_238 = arith.constant dense<0.000000e+00> : vector<32x32xf32>
    %421 = tpu.matmul %418, %419, %cst_238 {dimension_numbers = #tpu.dot_dimension_numbers<[1], [1], [0], [0], [0, 0, 1, 0], [], []>} : vector<32x8xf32>, vector<32x8xf32>, vector<32x32xf32> -> vector<32x32xf32>
    %422 = arith.addf %421, %96 : vector<32x32xf32>
    %cst_239 = arith.constant dense<0xFF800000> : vector<32xf32>
    %423 = vector.multi_reduction <maximumf>, %422, %cst_239 [1] : vector<32x32xf32> to vector<32xf32>
    %424 = vector.shape_cast %423 : vector<32xf32> to vector<32x1xf32>
    %425 = vector.broadcast %424 : vector<32x1xf32> to vector<32x32xf32>
    %426 = arith.subf %422, %425 : vector<32x32xf32>
    %427 = math.exp %426 : vector<32x32xf32>
    %cst_240 = arith.constant dense<0.000000e+00> : vector<32xf32>
    %428 = vector.multi_reduction <add>, %427, %cst_240 [1] : vector<32x32xf32> to vector<32xf32>
    %429 = vector.shape_cast %428 : vector<32xf32> to vector<32x1xf32>
    %430 = tpu.reciprocal %429 {approx = true} : vector<32x1xf32> -> vector<32x1xf32>
    %431 = vector.broadcast %430 : vector<32x1xf32> to vector<32x32xf32>
    %432 = arith.mulf %427, %431 : vector<32x32xf32>
    %cst_241 = arith.constant dense<0.000000e+00> : vector<32x8xf32>
    %433 = tpu.matmul %432, %420, %cst_241 {dimension_numbers = #tpu.dot_dimension_numbers<[1], [0], [0], [1], [0, 0, 1, 1], [], []>} : vector<32x32xf32>, vector<32x8xf32>, vector<32x8xf32> -> vector<32x8xf32>
    %434 = vector.extract_strided_slice %401 {offsets = [0, 16], sizes = [32, 8], strides = [1, 1]} : vector<32x96xf32> to vector<32x8xf32>
    %435 = vector.extract_strided_slice %401 {offsets = [0, 48], sizes = [32, 8], strides = [1, 1]} : vector<32x96xf32> to vector<32x8xf32>
    %436 = vector.extract_strided_slice %401 {offsets = [0, 80], sizes = [32, 8], strides = [1, 1]} : vector<32x96xf32> to vector<32x8xf32>
    %cst_242 = arith.constant dense<0.000000e+00> : vector<32x32xf32>
    %437 = tpu.matmul %434, %435, %cst_242 {dimension_numbers = #tpu.dot_dimension_numbers<[1], [1], [0], [0], [0, 0, 1, 0], [], []>} : vector<32x8xf32>, vector<32x8xf32>, vector<32x32xf32> -> vector<32x32xf32>
    %438 = arith.addf %437, %96 : vector<32x32xf32>
    %cst_243 = arith.constant dense<0xFF800000> : vector<32xf32>
    %439 = vector.multi_reduction <maximumf>, %438, %cst_243 [1] : vector<32x32xf32> to vector<32xf32>
    %440 = vector.shape_cast %439 : vector<32xf32> to vector<32x1xf32>
    %441 = vector.broadcast %440 : vector<32x1xf32> to vector<32x32xf32>
    %442 = arith.subf %438, %441 : vector<32x32xf32>
    %443 = math.exp %442 : vector<32x32xf32>
    %cst_244 = arith.constant dense<0.000000e+00> : vector<32xf32>
    %444 = vector.multi_reduction <add>, %443, %cst_244 [1] : vector<32x32xf32> to vector<32xf32>
    %445 = vector.shape_cast %444 : vector<32xf32> to vector<32x1xf32>
    %446 = tpu.reciprocal %445 {approx = true} : vector<32x1xf32> -> vector<32x1xf32>
    %447 = vector.broadcast %446 : vector<32x1xf32> to vector<32x32xf32>
    %448 = arith.mulf %443, %447 : vector<32x32xf32>
    %cst_245 = arith.constant dense<0.000000e+00> : vector<32x8xf32>
    %449 = tpu.matmul %448, %436, %cst_245 {dimension_numbers = #tpu.dot_dimension_numbers<[1], [0], [0], [1], [0, 0, 1, 1], [], []>} : vector<32x32xf32>, vector<32x8xf32>, vector<32x8xf32> -> vector<32x8xf32>
    %450 = vector.extract_strided_slice %401 {offsets = [0, 24], sizes = [32, 8], strides = [1, 1]} : vector<32x96xf32> to vector<32x8xf32>
    %451 = vector.extract_strided_slice %401 {offsets = [0, 56], sizes = [32, 8], strides = [1, 1]} : vector<32x96xf32> to vector<32x8xf32>
    %452 = vector.extract_strided_slice %401 {offsets = [0, 88], sizes = [32, 8], strides = [1, 1]} : vector<32x96xf32> to vector<32x8xf32>
    %cst_246 = arith.constant dense<0.000000e+00> : vector<32x32xf32>
    %453 = tpu.matmul %450, %451, %cst_246 {dimension_numbers = #tpu.dot_dimension_numbers<[1], [1], [0], [0], [0, 0, 1, 0], [], []>} : vector<32x8xf32>, vector<32x8xf32>, vector<32x32xf32> -> vector<32x32xf32>
    %454 = arith.addf %453, %96 : vector<32x32xf32>
    %cst_247 = arith.constant dense<0xFF800000> : vector<32xf32>
    %455 = vector.multi_reduction <maximumf>, %454, %cst_247 [1] : vector<32x32xf32> to vector<32xf32>
    %456 = vector.shape_cast %455 : vector<32xf32> to vector<32x1xf32>
    %457 = vector.broadcast %456 : vector<32x1xf32> to vector<32x32xf32>
    %458 = arith.subf %454, %457 : vector<32x32xf32>
    %459 = math.exp %458 : vector<32x32xf32>
    %cst_248 = arith.constant dense<0.000000e+00> : vector<32xf32>
    %460 = vector.multi_reduction <add>, %459, %cst_248 [1] : vector<32x32xf32> to vector<32xf32>
    %461 = vector.shape_cast %460 : vector<32xf32> to vector<32x1xf32>
    %462 = tpu.reciprocal %461 {approx = true} : vector<32x1xf32> -> vector<32x1xf32>
    %463 = vector.broadcast %462 : vector<32x1xf32> to vector<32x32xf32>
    %464 = arith.mulf %459, %463 : vector<32x32xf32>
    %cst_249 = arith.constant dense<0.000000e+00> : vector<32x8xf32>
    %465 = tpu.matmul %464, %452, %cst_249 {dimension_numbers = #tpu.dot_dimension_numbers<[1], [0], [0], [1], [0, 0, 1, 1], [], []>} : vector<32x32xf32>, vector<32x8xf32>, vector<32x8xf32> -> vector<32x8xf32>
    %466 = tpu.concatenate %417, %433, %449, %465 in 1 : vector<32x8xf32>, vector<32x8xf32>, vector<32x8xf32>, vector<32x8xf32> -> vector<32x32xf32>
    %c2_250 = arith.constant 2 : index
    %c0_251 = arith.constant 0 : index
    %c0_252 = arith.constant 0 : index
    %467 = vector.load %arg20[%c2_250, %c0_251, %c0_252] : memref<3x32x32xf32, #tpu.memory_space<vmem>>, vector<1x32x32xf32>
    %468 = vector.shape_cast %467 : vector<1x32x32xf32> to vector<32x32xf32>
    %cst_253 = arith.constant dense<0.000000e+00> : vector<32x32xf32>
    %469 = tpu.matmul %466, %468, %cst_253 {dimension_numbers = #tpu.dot_dimension_numbers<[1], [0], [0], [1], [0, 0, 1, 1], [], []>} : vector<32x32xf32>, vector<32x32xf32>, vector<32x32xf32> -> vector<32x32xf32>
    %470 = arith.addf %394, %469 : vector<32x32xf32>
    %c2_254 = arith.constant 2 : index
    %c0_255 = arith.constant 0 : index
    %c0_256 = arith.constant 0 : index
    %471 = vector.load %arg21[%c2_254, %c0_255, %c0_256] : memref<3x1x32xf32, #tpu.memory_space<vmem>>, vector<1x1x32xf32>
    %472 = vector.shape_cast %471 : vector<1x1x32xf32> to vector<1x32xf32>
    %473 = vector.broadcast %472 : vector<1x32xf32> to vector<32x32xf32>
    %474 = arith.addf %470, %473 : vector<32x32xf32>
    %c2_257 = arith.constant 2 : index
    %c0_258 = arith.constant 0 : index
    %c0_259 = arith.constant 0 : index
    %475 = vector.load %arg22[%c2_257, %c0_258, %c0_259] : memref<3x1x32xf32, #tpu.memory_space<vmem>>, vector<1x1x32xf32>
    %476 = vector.shape_cast %475 : vector<1x1x32xf32> to vector<1x32xf32>
    %c2_260 = arith.constant 2 : index
    %c0_261 = arith.constant 0 : index
    %c0_262 = arith.constant 0 : index
    %477 = vector.load %arg23[%c2_260, %c0_261, %c0_262] : memref<3x1x32xf32, #tpu.memory_space<vmem>>, vector<1x1x32xf32>
    %478 = vector.shape_cast %477 : vector<1x1x32xf32> to vector<1x32xf32>
    %cst_263 = arith.constant dense<0.000000e+00> : vector<32xf32>
    %479 = vector.multi_reduction <add>, %474, %cst_263 [1] : vector<32x32xf32> to vector<32xf32>
    %480 = vector.shape_cast %479 : vector<32xf32> to vector<32x1xf32>
    %cst_264 = arith.constant 3.200000e+01 : f32
    %481 = vector.broadcast %cst_264 : f32 to vector<32x1xf32>
    %482 = arith.divf %480, %481 : vector<32x1xf32>
    %483 = vector.broadcast %482 : vector<32x1xf32> to vector<32x32xf32>
    %484 = arith.subf %474, %483 : vector<32x32xf32>
    %485 = arith.mulf %484, %484 : vector<32x32xf32>
    %cst_265 = arith.constant dense<0.000000e+00> : vector<32xf32>
    %486 = vector.multi_reduction <add>, %485, %cst_265 [1] : vector<32x32xf32> to vector<32xf32>
    %487 = vector.shape_cast %486 : vector<32xf32> to vector<32x1xf32>
    %cst_266 = arith.constant 3.200000e+01 : f32
    %488 = vector.broadcast %cst_266 : f32 to vector<32x1xf32>
    %489 = arith.divf %487, %488 : vector<32x1xf32>
    %490 = vector.broadcast %482 : vector<32x1xf32> to vector<32x32xf32>
    %491 = arith.subf %474, %490 : vector<32x32xf32>
    %cst_267 = arith.constant 9.99999974E-6 : f32
    %492 = vector.broadcast %cst_267 : f32 to vector<32x1xf32>
    %493 = arith.addf %489, %492 : vector<32x1xf32>
    %494 = math.rsqrt %493 : vector<32x1xf32>
    %495 = vector.broadcast %494 : vector<32x1xf32> to vector<32x32xf32>
    %496 = arith.mulf %491, %495 : vector<32x32xf32>
    %497 = vector.broadcast %476 : vector<1x32xf32> to vector<32x32xf32>
    %498 = arith.mulf %496, %497 : vector<32x32xf32>
    %499 = vector.broadcast %478 : vector<1x32xf32> to vector<32x32xf32>
    %500 = arith.addf %498, %499 : vector<32x32xf32>
    %c2_268 = arith.constant 2 : index
    %c0_269 = arith.constant 0 : index
    %c0_270 = arith.constant 0 : index
    %501 = vector.load %arg24[%c2_268, %c0_269, %c0_270] : memref<3x32x128xf32, #tpu.memory_space<vmem>>, vector<1x32x128xf32>
    %502 = vector.shape_cast %501 : vector<1x32x128xf32> to vector<32x128xf32>
    %cst_271 = arith.constant dense<0.000000e+00> : vector<32x128xf32>
    %503 = tpu.matmul %500, %502, %cst_271 {dimension_numbers = #tpu.dot_dimension_numbers<[1], [0], [0], [1], [0, 0, 1, 1], [], []>} : vector<32x32xf32>, vector<32x128xf32>, vector<32x128xf32> -> vector<32x128xf32>
    %c2_272 = arith.constant 2 : index
    %c0_273 = arith.constant 0 : index
    %c0_274 = arith.constant 0 : index
    %504 = vector.load %arg25[%c2_272, %c0_273, %c0_274] : memref<3x1x128xf32, #tpu.memory_space<vmem>>, vector<1x1x128xf32>
    %505 = vector.shape_cast %504 : vector<1x1x128xf32> to vector<1x128xf32>
    %506 = vector.broadcast %505 : vector<1x128xf32> to vector<32x128xf32>
    %507 = arith.addf %503, %506 : vector<32x128xf32>
    %cst_275 = arith.constant 0.000000e+00 : f32
    %508 = vector.broadcast %cst_275 : f32 to vector<32x128xf32>
    %509 = arith.maximumf %507, %508 : vector<32x128xf32>
    %c2_276 = arith.constant 2 : index
    %c0_277 = arith.constant 0 : index
    %c0_278 = arith.constant 0 : index
    %510 = vector.load %arg26[%c2_276, %c0_277, %c0_278] : memref<3x128x32xf32, #tpu.memory_space<vmem>>, vector<1x128x32xf32>
    %511 = vector.shape_cast %510 : vector<1x128x32xf32> to vector<128x32xf32>
    %cst_279 = arith.constant dense<0.000000e+00> : vector<32x32xf32>
    %512 = tpu.matmul %509, %511, %cst_279 {dimension_numbers = #tpu.dot_dimension_numbers<[1], [0], [0], [1], [0, 0, 1, 1], [], []>} : vector<32x128xf32>, vector<128x32xf32>, vector<32x32xf32> -> vector<32x32xf32>
    %c2_280 = arith.constant 2 : index
    %c0_281 = arith.constant 0 : index
    %c0_282 = arith.constant 0 : index
    %513 = vector.load %arg27[%c2_280, %c0_281, %c0_282] : memref<3x1x32xf32, #tpu.memory_space<vmem>>, vector<1x1x32xf32>
    %514 = vector.shape_cast %513 : vector<1x1x32xf32> to vector<1x32xf32>
    %515 = vector.broadcast %514 : vector<1x32xf32> to vector<32x32xf32>
    %516 = arith.addf %512, %515 : vector<32x32xf32>
    %517 = arith.addf %516, %500 : vector<32x32xf32>
    %c2_283 = arith.constant 2 : index
    %c0_284 = arith.constant 0 : index
    %c0_285 = arith.constant 0 : index
    %518 = vector.load %arg28[%c2_283, %c0_284, %c0_285] : memref<3x1x32xf32, #tpu.memory_space<vmem>>, vector<1x1x32xf32>
    %519 = vector.shape_cast %518 : vector<1x1x32xf32> to vector<1x32xf32>
    %c2_286 = arith.constant 2 : index
    %c0_287 = arith.constant 0 : index
    %c0_288 = arith.constant 0 : index
    %520 = vector.load %arg29[%c2_286, %c0_287, %c0_288] : memref<3x1x32xf32, #tpu.memory_space<vmem>>, vector<1x1x32xf32>
    %521 = vector.shape_cast %520 : vector<1x1x32xf32> to vector<1x32xf32>
    %cst_289 = arith.constant dense<0.000000e+00> : vector<32xf32>
    %522 = vector.multi_reduction <add>, %517, %cst_289 [1] : vector<32x32xf32> to vector<32xf32>
    %523 = vector.shape_cast %522 : vector<32xf32> to vector<32x1xf32>
    %cst_290 = arith.constant 3.200000e+01 : f32
    %524 = vector.broadcast %cst_290 : f32 to vector<32x1xf32>
    %525 = arith.divf %523, %524 : vector<32x1xf32>
    %526 = vector.broadcast %525 : vector<32x1xf32> to vector<32x32xf32>
    %527 = arith.subf %517, %526 : vector<32x32xf32>
    %528 = arith.mulf %527, %527 : vector<32x32xf32>
    %cst_291 = arith.constant dense<0.000000e+00> : vector<32xf32>
    %529 = vector.multi_reduction <add>, %528, %cst_291 [1] : vector<32x32xf32> to vector<32xf32>
    %530 = vector.shape_cast %529 : vector<32xf32> to vector<32x1xf32>
    %cst_292 = arith.constant 3.200000e+01 : f32
    %531 = vector.broadcast %cst_292 : f32 to vector<32x1xf32>
    %532 = arith.divf %530, %531 : vector<32x1xf32>
    %533 = vector.broadcast %525 : vector<32x1xf32> to vector<32x32xf32>
    %534 = arith.subf %517, %533 : vector<32x32xf32>
    %cst_293 = arith.constant 9.99999974E-6 : f32
    %535 = vector.broadcast %cst_293 : f32 to vector<32x1xf32>
    %536 = arith.addf %532, %535 : vector<32x1xf32>
    %537 = math.rsqrt %536 : vector<32x1xf32>
    %538 = vector.broadcast %537 : vector<32x1xf32> to vector<32x32xf32>
    %539 = arith.mulf %534, %538 : vector<32x32xf32>
    %540 = vector.broadcast %519 : vector<1x32xf32> to vector<32x32xf32>
    %541 = arith.mulf %539, %540 : vector<32x32xf32>
    %542 = vector.broadcast %521 : vector<1x32xf32> to vector<32x32xf32>
    %543 = arith.addf %541, %542 : vector<32x32xf32>
    %c0_294 = arith.constant 0 : index
    %c0_295 = arith.constant 0 : index
    %544 = vector.load %arg30[%c0_294, %c0_295] : memref<32x8xf32, #tpu.memory_space<vmem>>, vector<32x8xf32>
    %cst_296 = arith.constant dense<0.000000e+00> : vector<32x8xf32>
    %545 = tpu.matmul %543, %544, %cst_296 {dimension_numbers = #tpu.dot_dimension_numbers<[1], [0], [0], [1], [0, 0, 1, 1], [], []>} : vector<32x32xf32>, vector<32x8xf32>, vector<32x8xf32> -> vector<32x8xf32>
    %c0_297 = arith.constant 0 : index
    %c0_298 = arith.constant 0 : index
    %546 = vector.load %arg31[%c0_297, %c0_298] : memref<1x8xf32, #tpu.memory_space<vmem>>, vector<1x8xf32>
    %547 = vector.broadcast %546 : vector<1x8xf32> to vector<32x8xf32>
    %548 = arith.addf %545, %547 : vector<32x8xf32>
    %cst_299 = arith.constant 0.000000e+00 : f32
    %549 = vector.broadcast %cst_299 : f32 to vector<32x8xf32>
    %550 = arith.maximumf %548, %549 : vector<32x8xf32>
    %c0_300 = arith.constant 0 : index
    %c0_301 = arith.constant 0 : index
    %551 = vector.load %arg32[%c0_300, %c0_301] : memref<32x8xf32, #tpu.memory_space<vmem>>, vector<32x8xf32>
    tpu.vector_store %arg32[%c0_300, %c0_301], %550 {strides = array<i32>} : memref<32x8xf32, #tpu.memory_space<vmem>>, vector<32x8xf32>,
    return
  }
}

</mosaic_0001>

<llo_original>
// kernel: _lambda_.1
$region0: #{_lambda_.1}
  #allocation0 [shape = 'u32[]', space=smem, size = 0x4, offset = 0x4, fixed_abs, tag = 'smem constant byte address 0x4 - core index']
  #allocation1 [shape = 'u32[144,128]{1,0:T(1,128)}', space=vmem, size = 0x12000, scoped, tag = 'internal scratch']
  %s0 = inlined_call_operand.smem [shape: u32[33], index: -1, kind: input, shape index: {}]
  %s1 = sld [smem:[%s0]]
  %s2 = scalar_lea.smem %s0, 1
  %s3 = sld [smem:[%s2]]
  %s4 = scalar_lea.smem %s0, 2
  %s5 = sld [smem:[%s4]]
  %s6 = scalar_lea.smem %s0, 3
  %s7 = sld [smem:[%s6]]
  %s8 = scalar_lea.smem %s0, 4
  %s9 = sld [smem:[%s8]]
  %s10 = scalar_lea.smem %s0, 5
  %s11 = sld [smem:[%s10]]
  %s12 = scalar_lea.smem %s0, 6
  %s13 = sld [smem:[%s12]]
  %s14 = scalar_lea.smem %s0, 7
  %s15 = sld [smem:[%s14]]
  %s16 = scalar_lea.smem %s0, 8
  %s17 = sld [smem:[%s16]]
  %s18 = scalar_lea.smem %s0, 9
  %s19 = sld [smem:[%s18]]
  %s20 = scalar_lea.smem %s0, 10
  %s21 = sld [smem:[%s20]]
  %s22 = scalar_lea.smem %s0, 11
  %s23 = sld [smem:[%s22]]
  %s24 = scalar_lea.smem %s0, 12
  %s25 = sld [smem:[%s24]]
  %s26 = scalar_lea.smem %s0, 13
  %s27 = sld [smem:[%s26]]
  %s28 = scalar_lea.smem %s0, 14
  %s29 = sld [smem:[%s28]]
  %s30 = scalar_lea.smem %s0, 15
  %s31 = sld [smem:[%s30]]
  %s32 = scalar_lea.smem %s0, 16
  %s33 = sld [smem:[%s32]]
  %s34 = scalar_lea.smem %s0, 17
  %s35 = sld [smem:[%s34]]
  %s36 = scalar_lea.smem %s0, 18
  %s37 = sld [smem:[%s36]]
  %s38 = scalar_lea.smem %s0, 19
  %s39 = sld [smem:[%s38]]
  %s40 = scalar_lea.smem %s0, 20
  %s41 = sld [smem:[%s40]]
  %s42 = scalar_lea.smem %s0, 21
  %s43 = sld [smem:[%s42]]
  %s44 = scalar_lea.smem %s0, 22
  %s45 = sld [smem:[%s44]]
  %s46 = scalar_lea.smem %s0, 23
  %s47 = sld [smem:[%s46]]
  %s48 = scalar_lea.smem %s0, 24
  %s49 = sld [smem:[%s48]]
  %s50 = scalar_lea.smem %s0, 25
  %s51 = sld [smem:[%s50]]
  %s52 = scalar_lea.smem %s0, 26
  %s53 = sld [smem:[%s52]]
  %s54 = scalar_lea.smem %s0, 27
  %s55 = sld [smem:[%s54]]
  %s56 = scalar_lea.smem %s0, 28
  %s57 = sld [smem:[%s56]]
  %s58 = scalar_lea.smem %s0, 29
  %s59 = sld [smem:[%s58]]
  %s60 = scalar_lea.smem %s0, 30
  %s61 = sld [smem:[%s60]]
  %s62 = scalar_lea.smem %s0, 31
  %s63 = sld [smem:[%s62]]
  %s64 = scalar_lea.smem %s0, 32
  %s65 = sld [smem:[%s64]]
  %s66 = sld [smem:[#allocation0]]
  $region234: #{_lambda_.1} parent=0
    _
  %s68 = ssub.s32 1, %s66
  %s69 = scalar_select 0, %s68, %s66
  $region1: #{_lambda_.1} parent=0
    #allocation2 [shape = 'u8[16384]{0}', space=vmem, size = 0x4000, scoped, tag = 'input window, operand 0, single buffered']
    #allocation3 [shape = 's32[1]{0}', space=sflag, size = 0x4, scoped, tag = 'scoped memory for _lambda_.1']
    #allocation4 [shape = 'u8[49152]{0}', space=vmem, size = 0xc000, scoped, tag = 'input window, operand 1, single buffered']
    #allocation5 [shape = 's32[1]{0}', space=sflag, size = 0x4, scoped, tag = 'scoped memory for _lambda_.1']
    #allocation6 [shape = 'u8[512]{0}', space=vmem, size = 0x400, scoped, tag = 'input window, operand 2, single buffered']
    #allocation7 [shape = 'u8[16384]{0}', space=vmem, size = 0x4000, scoped, tag = 'input window, operand 3, single buffered']
    #allocation8 [shape = 's32[1]{0}', space=sflag, size = 0x4, scoped, tag = 'scoped memory for _lambda_.1']
    #allocation9 [shape = 'u8[512]{0}', space=vmem, size = 0x400, scoped, tag = 'input window, operand 4, single buffered']
    #allocation10 [shape = 'u8[196608]{0}', space=vmem, size = 0x30000, scoped, tag = 'input window, operand 5, single buffered']
    #allocation11 [shape = 's32[1]{0}', space=sflag, size = 0x4, scoped, tag = 'scoped memory for _lambda_.1']
    #allocation12 [shape = 'u8[512]{0}', space=vmem, size = 0x400, scoped, tag = 'input window, operand 6, single buffered']
    #allocation13 [shape = 'u8[65536]{0}', space=vmem, size = 0x10000, scoped, tag = 'input window, operand 7, single buffered']
    #allocation14 [shape = 's32[1]{0}', space=sflag, size = 0x4, scoped, tag = 'scoped memory for _lambda_.1']
    #allocation15 [shape = 'u8[65536]{0}', space=vmem, size = 0x10000, scoped, tag = 'input window, operand 8, single buffered']
    #allocation16 [shape = 'u8[98304]{0}', space=vmem, size = 0x18000, scoped, tag = 'input window, operand 9, single buffered']
    #allocation17 [shape = 's32[1]{0}', space=sflag, size = 0x4, scoped, tag = 'scoped memory for _lambda_.1']
    #allocation18 [shape = 'u8[512]{0}', space=vmem, size = 0x400, scoped, tag = 'input window, operand 10, single buffered']
    #allocation19 [shape = 'u8[98304]{0}', space=vmem, size = 0x18000, scoped, tag = 'input window, operand 11, single buffered']
    #allocation20 [shape = 's32[1]{0}', space=sflag, size = 0x4, scoped, tag = 'scoped memory for _lambda_.1']
    #allocation21 [shape = 'u8[512]{0}', space=vmem, size = 0x400, scoped, tag = 'input window, operand 12, single buffered']
    #allocation22 [shape = 'u8[32768]{0}', space=vmem, size = 0x8000, scoped, tag = 'input window, operand 13, single buffered']
    #allocation23 [shape = 's32[1]{0}', space=sflag, size = 0x4, scoped, tag = 'scoped memory for _lambda_.1']
    #allocation24 [shape = 'u8[32768]{0}', space=vmem, size = 0x8000, scoped, tag = 'input window, operand 14, single buffered']
    #allocation25 [shape = 'u8[32768]{0}', space=vmem, size = 0x8000, scoped, tag = 'input window, operand 15, single buffered']
    #allocation26 [shape = 's32[1]{0}', space=sflag, size = 0x4, scoped, tag = 'scoped memory for _lambda_.1']
    #allocation27 [shape = 'u8[16384]{0}', space=vmem, size = 0x4000, scoped, tag = 'input window, operand 16, single buffered']
    #allocation28 [shape = 'u8[16384]{0}', space=vmem, size = 0x4000, scoped, tag = 'input window, operand 17, single buffered']
    #allocation29 [shape = 's32[1]{0}', space=sflag, size = 0x4, scoped, tag = 'scoped memory for _lambda_.1']
    #allocation30 [shape = 'u8[49152]{0}', space=vmem, size = 0xc000, scoped, tag = 'input window, operand 18, single buffered']
    #allocation31 [shape = 'u8[1536]{0}', space=vmem, size = 0x800, scoped, tag = 'input window, operand 19, single buffered']
    #allocation32 [shape = 's32[1]{0}', space=sflag, size = 0x4, scoped, tag = 'scoped memory for _lambda_.1']
    #allocation33 [shape = 'u8[49152]{0}', space=vmem, size = 0xc000, scoped, tag = 'input window, operand 20, single buffered']
    #allocation34 [shape = 'u8[1536]{0}', space=vmem, size = 0x800, scoped, tag = 'input window, operand 21, single buffered']
    #allocation35 [shape = 's32[1]{0}', space=sflag, size = 0x4, scoped, tag = 'scoped memory for _lambda_.1']
    #allocation36 [shape = 'u8[196608]{0}', space=vmem, size = 0x30000, scoped, tag = 'input window, operand 26, single buffered']
    #allocation37 [shape = 'u8[16384]{0}', space=vmem, size = 0x4000, scoped, tag = 'input window, operand 30, single buffered']
    #allocation38 [shape = 's32[1]{0}', space=sflag, size = 0x4, scoped, tag = 'scoped memory for _lambda_.1']
    %70 = vsyncpa [#allocation3], 0
    %71 = vsyncpa [#allocation5], 0
    %72 = vsyncpa [#allocation8], 0
    %73 = vsyncpa [#allocation11], 0
    %74 = vsyncpa [#allocation14], 0
    %75 = vsyncpa [#allocation17], 0
    %76 = vsyncpa [#allocation20], 0
    %77 = vsyncpa [#allocation23], 0
    %78 = vsyncpa [#allocation26], 0
    %79 = vsyncpa [#allocation29], 0
    %80 = vsyncpa [#allocation32], 0
    %81 = vsyncpa [#allocation35], 0
    %82 = vsyncpa [#allocation38], 0
    // Predicated region
    $region2: #{_lambda_.1} parent=1 // pred_check
      _
    $region3: #{_lambda_.1} parent=1 // pred_check_branch
      %84 = sbr.rel (0) target = $region5
    $region4: #{_lambda_.1} parent=1 // pred_region
      %s86 = ssub.s32 512, 512
      %87 = vsyncadd [#allocation3], %s86
      %s88 = sshll.u32 [#allocation2], 4
      %s89 = int_to_ptr.vmem [resolvable:$true] %s88
      %94 = dma.hbm_to_vmem [thread:$0]  %s1, 512, %s89, [#allocation3], 128, 128, 8
    $region5: #{_lambda_.1} parent=1 // pred_fallthru
      _
    // Predicated region
    $region6: #{_lambda_.1} parent=1 // pred_check
      _
    $region7: #{_lambda_.1} parent=1 // pred_check_branch
      %96 = sbr.rel (0) target = $region9
    $region8: #{_lambda_.1} parent=1 // pred_region
      %s98 = ssub.s32 1536, 1536
      %99 = vsyncadd [#allocation5], %s98
      %s100 = sshll.u32 [#allocation4], 4
      %s101 = int_to_ptr.vmem [resolvable:$true] %s100
      %106 = dma.hbm_to_vmem [thread:$0]  %s3, 1536, %s101, [#allocation5], 128, 128, 8
    $region9: #{_lambda_.1} parent=1 // pred_fallthru
      _
    // Predicated region
    $region10: #{_lambda_.1} parent=1 // pred_check
      _
    $region11: #{_lambda_.1} parent=1 // pred_check_branch
      %108 = sbr.rel (0) target = $region13
    $region12: #{_lambda_.1} parent=1 // pred_region
      %s110 = ssub.s32 16, 16
      %111 = vsyncadd [#allocation5], %s110
      %s113 = sshll.u32 [#allocation6], 4
      %s114 = int_to_ptr.vmem [resolvable:$true] %s113
      %116 = dma.hbm_to_vmem [thread:$0]  %s5, 16, %s114, [#allocation5]
    $region13: #{_lambda_.1} parent=1 // pred_fallthru
      _
    // Predicated region
    $region14: #{_lambda_.1} parent=1 // pred_check
      _
    $region15: #{_lambda_.1} parent=1 // pred_check_branch
      %118 = sbr.rel (0) target = $region17
    $region16: #{_lambda_.1} parent=1 // pred_region
      %s120 = ssub.s32 512, 512
      %121 = vsyncadd [#allocation8], %s120
      %s122 = sshll.u32 [#allocation7], 4
      %s123 = int_to_ptr.vmem [resolvable:$true] %s122
      %128 = dma.hbm_to_vmem [thread:$0]  %s7, 512, %s123, [#allocation8], 128, 128, 8
    $region17: #{_lambda_.1} parent=1 // pred_fallthru
      _
    // Predicated region
    $region18: #{_lambda_.1} parent=1 // pred_check
      _
    $region19: #{_lambda_.1} parent=1 // pred_check_branch
      %130 = sbr.rel (0) target = $region21
    $region20: #{_lambda_.1} parent=1 // pred_region
      %s132 = ssub.s32 16, 16
      %133 = vsyncadd [#allocation8], %s132
      %s135 = sshll.u32 [#allocation9], 4
      %s136 = int_to_ptr.vmem [resolvable:$true] %s135
      %138 = dma.hbm_to_vmem [thread:$0]  %s9, 16, %s136, [#allocation8]
    $region21: #{_lambda_.1} parent=1 // pred_fallthru
      _
    // Predicated region
    $region22: #{_lambda_.1} parent=1 // pred_check
      _
    $region23: #{_lambda_.1} parent=1 // pred_check_branch
      %140 = sbr.rel (0) target = $region25
    $region24: #{_lambda_.1} parent=1 // pred_region
      %s142 = ssub.s32 6144, 6144
      %143 = vsyncadd [#allocation11], %s142
      %s144 = sshll.u32 [#allocation10], 4
      %s145 = int_to_ptr.vmem [resolvable:$true] %s144
      %150 = dma.hbm_to_vmem [thread:$0]  %s11, 6144, %s145, [#allocation11], 128, 128, 8
    $region25: #{_lambda_.1} parent=1 // pred_fallthru
      _
    // Predicated region
    $region26: #{_lambda_.1} parent=1 // pred_check
      _
    $region27: #{_lambda_.1} parent=1 // pred_check_branch
      %152 = sbr.rel (0) target = $region29
    $region28: #{_lambda_.1} parent=1 // pred_region
      %s154 = ssub.s32 16, 16
      %155 = vsyncadd [#allocation11], %s154
      %s157 = sshll.u32 [#allocation12], 4
      %s158 = int_to_ptr.vmem [resolvable:$true] %s157
      %160 = dma.hbm_to_vmem [thread:$0]  %s13, 16, %s158, [#allocation11]
    $region29: #{_lambda_.1} parent=1 // pred_fallthru
      _
    // Predicated region
    $region30: #{_lambda_.1} parent=1 // pred_check
      _
    $region31: #{_lambda_.1} parent=1 // pred_check_branch
      %162 = sbr.rel (0) target = $region33
    $region32: #{_lambda_.1} parent=1 // pred_region
      %s164 = ssub.s32 2048, 2048
      %165 = vsyncadd [#allocation14], %s164
      %s166 = sshll.u32 [#allocation13], 4
      %s167 = int_to_ptr.vmem [resolvable:$true] %s166
      %172 = dma.hbm_to_vmem [thread:$0]  %s15, 2048, %s167, [#allocation14], 128, 128, 8
    $region33: #{_lambda_.1} parent=1 // pred_fallthru
      _
    // Predicated region
    $region34: #{_lambda_.1} parent=1 // pred_check
      _
    $region35: #{_lambda_.1} parent=1 // pred_check_branch
      %174 = sbr.rel (0) target = $region37
    $region36: #{_lambda_.1} parent=1 // pred_region
      %s176 = ssub.s32 2048, 2048
      %177 = vsyncadd [#allocation14], %s176
      %s178 = sshll.u32 [#allocation15], 4
      %s179 = int_to_ptr.vmem [resolvable:$true] %s178
      %184 = dma.hbm_to_vmem [thread:$0]  %s17, 2048, %s179, [#allocation14], 128, 128, 8
    $region37: #{_lambda_.1} parent=1 // pred_fallthru
      _
    // Predicated region
    $region38: #{_lambda_.1} parent=1 // pred_check
      _
    $region39: #{_lambda_.1} parent=1 // pred_check_branch
      %186 = sbr.rel (0) target = $region41
    $region40: #{_lambda_.1} parent=1 // pred_region
      %s188 = ssub.s32 3072, 3072
      %189 = vsyncadd [#allocation17], %s188
      %s190 = sshll.u32 [#allocation16], 4
      %s191 = int_to_ptr.vmem [resolvable:$true] %s190
      %196 = dma.hbm_to_vmem [thread:$0]  %s19, 3072, %s191, [#allocation17], 128, 128, 8
    $region41: #{_lambda_.1} parent=1 // pred_fallthru
      _
    // Predicated region
    $region42: #{_lambda_.1} parent=1 // pred_check
      _
    $region43: #{_lambda_.1} parent=1 // pred_check_branch
      %198 = sbr.rel (0) target = $region45
    $region44: #{_lambda_.1} parent=1 // pred_region
      %s200 = ssub.s32 16, 16
      %201 = vsyncadd [#allocation17], %s200
      %s203 = sshll.u32 [#allocation18], 4
      %s204 = int_to_ptr.vmem [resolvable:$true] %s203
      %206 = dma.hbm_to_vmem [thread:$0]  %s21, 16, %s204, [#allocation17]
    $region45: #{_lambda_.1} parent=1 // pred_fallthru
      _
    // Predicated region
    $region46: #{_lambda_.1} parent=1 // pred_check
      _
    $region47: #{_lambda_.1} parent=1 // pred_check_branch
      %208 = sbr.rel (0) target = $region49
    $region48: #{_lambda_.1} parent=1 // pred_region
      %s210 = ssub.s32 3072, 3072
      %211 = vsyncadd [#allocation20], %s210
      %s212 = sshll.u32 [#allocation19], 4
      %s213 = int_to_ptr.vmem [resolvable:$true] %s212
      %218 = dma.hbm_to_vmem [thread:$0]  %s23, 3072, %s213, [#allocation20], 128, 128, 8
    $region49: #{_lambda_.1} parent=1 // pred_fallthru
      _
    // Predicated region
    $region50: #{_lambda_.1} parent=1 // pred_check
      _
    $region51: #{_lambda_.1} parent=1 // pred_check_branch
      %220 = sbr.rel (0) target = $region53
    $region52: #{_lambda_.1} parent=1 // pred_region
      %s222 = ssub.s32 16, 16
      %223 = vsyncadd [#allocation20], %s222
      %s225 = sshll.u32 [#allocation21], 4
      %s226 = int_to_ptr.vmem [resolvable:$true] %s225
      %228 = dma.hbm_to_vmem [thread:$0]  %s25, 16, %s226, [#allocation20]
    $region53: #{_lambda_.1} parent=1 // pred_fallthru
      _
    // Predicated region
    $region54: #{_lambda_.1} parent=1 // pred_check
      _
    $region55: #{_lambda_.1} parent=1 // pred_check_branch
      %230 = sbr.rel (0) target = $region57
    $region56: #{_lambda_.1} parent=1 // pred_region
      %s232 = ssub.s32 1024, 1024
      %233 = vsyncadd [#allocation23], %s232
      %s234 = sshll.u32 [#allocation22], 4
      %s235 = int_to_ptr.vmem [resolvable:$true] %s234
      %240 = dma.hbm_to_vmem [thread:$0]  %s27, 1024, %s235, [#allocation23], 128, 128, 8
    $region57: #{_lambda_.1} parent=1 // pred_fallthru
      _
    // Predicated region
    $region58: #{_lambda_.1} parent=1 // pred_check
      _
    $region59: #{_lambda_.1} parent=1 // pred_check_branch
      %242 = sbr.rel (0) target = $region61
    $region60: #{_lambda_.1} parent=1 // pred_region
      %s244 = ssub.s32 1024, 1024
      %245 = vsyncadd [#allocation23], %s244
      %s246 = sshll.u32 [#allocation24], 4
      %s247 = int_to_ptr.vmem [resolvable:$true] %s246
      %252 = dma.hbm_to_vmem [thread:$0]  %s29, 1024, %s247, [#allocation23], 128, 128, 8
    $region61: #{_lambda_.1} parent=1 // pred_fallthru
      _
    // Predicated region
    $region62: #{_lambda_.1} parent=1 // pred_check
      _
    $region63: #{_lambda_.1} parent=1 // pred_check_branch
      %254 = sbr.rel (0) target = $region65
    $region64: #{_lambda_.1} parent=1 // pred_region
      %s256 = ssub.s32 1024, 1024
      %257 = vsyncadd [#allocation26], %s256
      %s258 = sshll.u32 [#allocation25], 4
      %s259 = int_to_ptr.vmem [resolvable:$true] %s258
      %264 = dma.hbm_to_vmem [thread:$0]  %s31, 1024, %s259, [#allocation26], 128, 128, 8
    $region65: #{_lambda_.1} parent=1 // pred_fallthru
      _
    // Predicated region
    $region66: #{_lambda_.1} parent=1 // pred_check
      _
    $region67: #{_lambda_.1} parent=1 // pred_check_branch
      %266 = sbr.rel (0) target = $region69
    $region68: #{_lambda_.1} parent=1 // pred_region
      %s268 = ssub.s32 512, 512
      %269 = vsyncadd [#allocation26], %s268
      %s270 = sshll.u32 [#allocation27], 4
      %s271 = int_to_ptr.vmem [resolvable:$true] %s270
      %276 = dma.hbm_to_vmem [thread:$0]  %s33, 512, %s271, [#allocation26], 128, 128, 8
    $region69: #{_lambda_.1} parent=1 // pred_fallthru
      _
    // Predicated region
    $region70: #{_lambda_.1} parent=1 // pred_check
      _
    $region71: #{_lambda_.1} parent=1 // pred_check_branch
      %278 = sbr.rel (0) target = $region73
    $region72: #{_lambda_.1} parent=1 // pred_region
      %s280 = ssub.s32 512, 512
      %281 = vsyncadd [#allocation29], %s280
      %s282 = sshll.u32 [#allocation28], 4
      %s283 = int_to_ptr.vmem [resolvable:$true] %s282
      %288 = dma.hbm_to_vmem [thread:$0]  %s35, 512, %s283, [#allocation29], 128, 128, 8
    $region73: #{_lambda_.1} parent=1 // pred_fallthru
      _
    // Predicated region
    $region74: #{_lambda_.1} parent=1 // pred_check
      _
    $region75: #{_lambda_.1} parent=1 // pred_check_branch
      %290 = sbr.rel (0) target = $region77
    $region76: #{_lambda_.1} parent=1 // pred_region
      %s292 = ssub.s32 1536, 1536
      %293 = vsyncadd [#allocation29], %s292
      %s294 = sshll.u32 [#allocation30], 4
      %s295 = int_to_ptr.vmem [resolvable:$true] %s294
      %300 = dma.hbm_to_vmem [thread:$0]  %s37, 1536, %s295, [#allocation29], 128, 128, 8
    $region77: #{_lambda_.1} parent=1 // pred_fallthru
      _
    // Predicated region
    $region78: #{_lambda_.1} parent=1 // pred_check
      _
    $region79: #{_lambda_.1} parent=1 // pred_check_branch
      %302 = sbr.rel (0) target = $region81
    $region80: #{_lambda_.1} parent=1 // pred_region
      %s304 = ssub.s32 48, 48
      %305 = vsyncadd [#allocation32], %s304
      %s306 = sshll.u32 [#allocation31], 4
      %s307 = int_to_ptr.vmem [resolvable:$true] %s306
      %312 = dma.hbm_to_vmem [thread:$0]  %s39, 48, %s307, [#allocation32], 16, 16, 1
    $region81: #{_lambda_.1} parent=1 // pred_fallthru
      _
    // Predicated region
    $region82: #{_lambda_.1} parent=1 // pred_check
      _
    $region83: #{_lambda_.1} parent=1 // pred_check_branch
      %314 = sbr.rel (0) target = $region85
    $region84: #{_lambda_.1} parent=1 // pred_region
      %s316 = ssub.s32 1536, 1536
      %317 = vsyncadd [#allocation32], %s316
      %s318 = sshll.u32 [#allocation33], 4
      %s319 = int_to_ptr.vmem [resolvable:$true] %s318
      %324 = dma.hbm_to_vmem [thread:$0]  %s41, 1536, %s319, [#allocation32], 128, 128, 8
    $region85: #{_lambda_.1} parent=1 // pred_fallthru
      _
    // Predicated region
    $region86: #{_lambda_.1} parent=1 // pred_check
      _
    $region87: #{_lambda_.1} parent=1 // pred_check_branch
      %326 = sbr.rel (0) target = $region89
    $region88: #{_lambda_.1} parent=1 // pred_region
      %s328 = ssub.s32 48, 48
      %329 = vsyncadd [#allocation35], %s328
      %s330 = sshll.u32 [#allocation34], 4
      %s331 = int_to_ptr.vmem [resolvable:$true] %s330
      %336 = dma.hbm_to_vmem [thread:$0]  %s43, 48, %s331, [#allocation35], 16, 16, 1
    $region89: #{_lambda_.1} parent=1 // pred_fallthru
      _
    // Predicated region
    $region90: #{_lambda_.1} parent=1 // pred_check
      _
    $region91: #{_lambda_.1} parent=1 // pred_check_branch
      %338 = sbr.rel (0) target = $region93
    $region92: #{_lambda_.1} parent=1 // pred_region
      _
    $region93: #{_lambda_.1} parent=1 // pred_fallthru
      _
    // Predicated region
    $region94: #{_lambda_.1} parent=1 // pred_check
      _
    $region95: #{_lambda_.1} parent=1 // pred_check_branch
      %340 = sbr.rel (0) target = $region97
    $region96: #{_lambda_.1} parent=1 // pred_region
      _
    $region97: #{_lambda_.1} parent=1 // pred_fallthru
      _
    // Predicated region
    $region98: #{_lambda_.1} parent=1 // pred_check
      _
    $region99: #{_lambda_.1} parent=1 // pred_check_branch
      %342 = sbr.rel (0) target = $region101
    $region100: #{_lambda_.1} parent=1 // pred_region
      _
    $region101: #{_lambda_.1} parent=1 // pred_fallthru
      _
    // Predicated region
    $region102: #{_lambda_.1} parent=1 // pred_check
      _
    $region103: #{_lambda_.1} parent=1 // pred_check_branch
      %344 = sbr.rel (0) target = $region105
    $region104: #{_lambda_.1} parent=1 // pred_region
      _
    $region105: #{_lambda_.1} parent=1 // pred_fallthru
      _
    // Predicated region
    $region106: #{_lambda_.1} parent=1 // pred_check
      _
    $region107: #{_lambda_.1} parent=1 // pred_check_branch
      %346 = sbr.rel (0) target = $region109
    $region108: #{_lambda_.1} parent=1 // pred_region
      %s348 = ssub.s32 6144, 6144
      %349 = vsyncadd [#allocation35], %s348
      %s350 = sshll.u32 [#allocation36], 4
      %s351 = int_to_ptr.vmem [resolvable:$true] %s350
      %356 = dma.hbm_to_vmem [thread:$0]  %s53, 6144, %s351, [#allocation35], 128, 128, 8
    $region109: #{_lambda_.1} parent=1 // pred_fallthru
      _
    // Predicated region
    $region110: #{_lambda_.1} parent=1 // pred_check
      _
    $region111: #{_lambda_.1} parent=1 // pred_check_branch
      %358 = sbr.rel (0) target = $region113
    $region112: #{_lambda_.1} parent=1 // pred_region
      _
    $region113: #{_lambda_.1} parent=1 // pred_fallthru
      _
    // Predicated region
    $region114: #{_lambda_.1} parent=1 // pred_check
      _
    $region115: #{_lambda_.1} parent=1 // pred_check_branch
      %360 = sbr.rel (0) target = $region117
    $region116: #{_lambda_.1} parent=1 // pred_region
      _
    $region117: #{_lambda_.1} parent=1 // pred_fallthru
      _
    // Predicated region
    $region118: #{_lambda_.1} parent=1 // pred_check
      _
    $region119: #{_lambda_.1} parent=1 // pred_check_branch
      %362 = sbr.rel (0) target = $region121
    $region120: #{_lambda_.1} parent=1 // pred_region
      _
    $region121: #{_lambda_.1} parent=1 // pred_fallthru
      _
    // Predicated region
    $region122: #{_lambda_.1} parent=1 // pred_check
      _
    $region123: #{_lambda_.1} parent=1 // pred_check_branch
      %364 = sbr.rel (0) target = $region125
    $region124: #{_lambda_.1} parent=1 // pred_region
      %s366 = ssub.s32 512, 512
      %367 = vsyncadd [#allocation38], %s366
      %s368 = sshll.u32 [#allocation37], 4
      %s369 = int_to_ptr.vmem [resolvable:$true] %s368
      %374 = dma.hbm_to_vmem [thread:$0]  %s61, 512, %s369, [#allocation38], 128, 128, 8
    $region125: #{_lambda_.1} parent=1 // pred_fallthru
      _
    // Predicated region
    $region126: #{_lambda_.1} parent=1 // pred_check
      _
    $region127: #{_lambda_.1} parent=1 // pred_check_branch
      %376 = sbr.rel (0) target = $region129
    $region128: #{_lambda_.1} parent=1 // pred_region
      _
    $region129: #{_lambda_.1} parent=1 // pred_fallthru
      _
    // Predicated region
    $region130: #{_lambda_.1} parent=1 // pred_check
      _
    $region131: #{_lambda_.1} parent=1 // pred_check_branch
      %378 = sbr.rel (0) target = $region133
    $region132: #{_lambda_.1} parent=1 // pred_region
      %379 = dma.done [#allocation3], 512
    $region133: #{_lambda_.1} parent=1 // pred_fallthru
      _
    // Predicated region
    $region134: #{_lambda_.1} parent=1 // pred_check
      _
    $region135: #{_lambda_.1} parent=1 // pred_check_branch
      %381 = sbr.rel (0) target = $region137
    $region136: #{_lambda_.1} parent=1 // pred_region
      %382 = dma.done [#allocation5], 1536
    $region137: #{_lambda_.1} parent=1 // pred_fallthru
      _
    // Predicated region
    $region138: #{_lambda_.1} parent=1 // pred_check
      _
    $region139: #{_lambda_.1} parent=1 // pred_check_branch
      %384 = sbr.rel (0) target = $region141
    $region140: #{_lambda_.1} parent=1 // pred_region
      %385 = dma.done [#allocation5], 16
    $region141: #{_lambda_.1} parent=1 // pred_fallthru
      _
    // Predicated region
    $region142: #{_lambda_.1} parent=1 // pred_check
      _
    $region143: #{_lambda_.1} parent=1 // pred_check_branch
      %387 = sbr.rel (0) target = $region145
    $region144: #{_lambda_.1} parent=1 // pred_region
      %388 = dma.done [#allocation8], 512
    $region145: #{_lambda_.1} parent=1 // pred_fallthru
      _
    // Predicated region
    $region146: #{_lambda_.1} parent=1 // pred_check
      _
    $region147: #{_lambda_.1} parent=1 // pred_check_branch
      %390 = sbr.rel (0) target = $region149
    $region148: #{_lambda_.1} parent=1 // pred_region
      %391 = dma.done [#allocation8], 16
    $region149: #{_lambda_.1} parent=1 // pred_fallthru
      _
    // Predicated region
    $region150: #{_lambda_.1} parent=1 // pred_check
      _
    $region151: #{_lambda_.1} parent=1 // pred_check_branch
      %393 = sbr.rel (0) target = $region153
    $region152: #{_lambda_.1} parent=1 // pred_region
      %394 = dma.done [#allocation11], 6144
    $region153: #{_lambda_.1} parent=1 // pred_fallthru
      _
    // Predicated region
    $region154: #{_lambda_.1} parent=1 // pred_check
      _
    $region155: #{_lambda_.1} parent=1 // pred_check_branch
      %396 = sbr.rel (0) target = $region157
    $region156: #{_lambda_.1} parent=1 // pred_region
      %397 = dma.done [#allocation11], 16
    $region157: #{_lambda_.1} parent=1 // pred_fallthru
      _
    // Predicated region
    $region158: #{_lambda_.1} parent=1 // pred_check
      _
    $region159: #{_lambda_.1} parent=1 // pred_check_branch
      %399 = sbr.rel (0) target = $region161
    $region160: #{_lambda_.1} parent=1 // pred_region
      %400 = dma.done [#allocation14], 2048
    $region161: #{_lambda_.1} parent=1 // pred_fallthru
      _
    // Predicated region
    $region162: #{_lambda_.1} parent=1 // pred_check
      _
    $region163: #{_lambda_.1} parent=1 // pred_check_branch
      %402 = sbr.rel (0) target = $region165
    $region164: #{_lambda_.1} parent=1 // pred_region
      %403 = dma.done [#allocation14], 2048
    $region165: #{_lambda_.1} parent=1 // pred_fallthru
      _
    // Predicated region
    $region166: #{_lambda_.1} parent=1 // pred_check
      _
    $region167: #{_lambda_.1} parent=1 // pred_check_branch
      %405 = sbr.rel (0) target = $region169
    $region168: #{_lambda_.1} parent=1 // pred_region
      %406 = dma.done [#allocation17], 3072
    $region169: #{_lambda_.1} parent=1 // pred_fallthru
      _
    // Predicated region
    $region170: #{_lambda_.1} parent=1 // pred_check
      _
    $region171: #{_lambda_.1} parent=1 // pred_check_branch
      %408 = sbr.rel (0) target = $region173
    $region172: #{_lambda_.1} parent=1 // pred_region
      %409 = dma.done [#allocation17], 16
    $region173: #{_lambda_.1} parent=1 // pred_fallthru
      _
    // Predicated region
    $region174: #{_lambda_.1} parent=1 // pred_check
      _
    $region175: #{_lambda_.1} parent=1 // pred_check_branch
      %411 = sbr.rel (0) target = $region177
    $region176: #{_lambda_.1} parent=1 // pred_region
      %412 = dma.done [#allocation20], 3072
    $region177: #{_lambda_.1} parent=1 // pred_fallthru
      _
    // Predicated region
    $region178: #{_lambda_.1} parent=1 // pred_check
      _
    $region179: #{_lambda_.1} parent=1 // pred_check_branch
      %414 = sbr.rel (0) target = $region181
    $region180: #{_lambda_.1} parent=1 // pred_region
      %415 = dma.done [#allocation20], 16
    $region181: #{_lambda_.1} parent=1 // pred_fallthru
      _
    // Predicated region
    $region182: #{_lambda_.1} parent=1 // pred_check
      _
    $region183: #{_lambda_.1} parent=1 // pred_check_branch
      %417 = sbr.rel (0) target = $region185
    $region184: #{_lambda_.1} parent=1 // pred_region
      %418 = dma.done [#allocation23], 1024
    $region185: #{_lambda_.1} parent=1 // pred_fallthru
      _
    // Predicated region
    $region186: #{_lambda_.1} parent=1 // pred_check
      _
    $region187: #{_lambda_.1} parent=1 // pred_check_branch
      %420 = sbr.rel (0) target = $region189
    $region188: #{_lambda_.1} parent=1 // pred_region
      %421 = dma.done [#allocation23], 1024
    $region189: #{_lambda_.1} parent=1 // pred_fallthru
      _
    // Predicated region
    $region190: #{_lambda_.1} parent=1 // pred_check
      _
    $region191: #{_lambda_.1} parent=1 // pred_check_branch
      %423 = sbr.rel (0) target = $region193
    $region192: #{_lambda_.1} parent=1 // pred_region
      %424 = dma.done [#allocation26], 1024
    $region193: #{_lambda_.1} parent=1 // pred_fallthru
      _
    // Predicated region
    $region194: #{_lambda_.1} parent=1 // pred_check
      _
    $region195: #{_lambda_.1} parent=1 // pred_check_branch
      %426 = sbr.rel (0) target = $region197
    $region196: #{_lambda_.1} parent=1 // pred_region
      %427 = dma.done [#allocation26], 512
    $region197: #{_lambda_.1} parent=1 // pred_fallthru
      _
    // Predicated region
    $region198: #{_lambda_.1} parent=1 // pred_check
      _
    $region199: #{_lambda_.1} parent=1 // pred_check_branch
      %429 = sbr.rel (0) target = $region201
    $region200: #{_lambda_.1} parent=1 // pred_region
      %430 = dma.done [#allocation29], 512
    $region201: #{_lambda_.1} parent=1 // pred_fallthru
      _
    // Predicated region
    $region202: #{_lambda_.1} parent=1 // pred_check
      _
    $region203: #{_lambda_.1} parent=1 // pred_check_branch
      %432 = sbr.rel (0) target = $region205
    $region204: #{_lambda_.1} parent=1 // pred_region
      %433 = dma.done [#allocation29], 1536
    $region205: #{_lambda_.1} parent=1 // pred_fallthru
      _
    // Predicated region
    $region206: #{_lambda_.1} parent=1 // pred_check
      _
    $region207: #{_lambda_.1} parent=1 // pred_check_branch
      %435 = sbr.rel (0) target = $region209
    $region208: #{_lambda_.1} parent=1 // pred_region
      %436 = dma.done [#allocation32], 48
    $region209: #{_lambda_.1} parent=1 // pred_fallthru
      _
    // Predicated region
    $region210: #{_lambda_.1} parent=1 // pred_check
      _
    $region211: #{_lambda_.1} parent=1 // pred_check_branch
      %438 = sbr.rel (0) target = $region213
    $region212: #{_lambda_.1} parent=1 // pred_region
      %439 = dma.done [#allocation32], 1536
    $region213: #{_lambda_.1} parent=1 // pred_fallthru
      _
    // Predicated region
    $region214: #{_lambda_.1} parent=1 // pred_check
      _
    $region215: #{_lambda_.1} parent=1 // pred_check_branch
      %441 = sbr.rel (0) target = $region217
    $region216: #{_lambda_.1} parent=1 // pred_region
      %442 = dma.done [#allocation35], 48
    $region217: #{_lambda_.1} parent=1 // pred_fallthru
      _
    // Predicated region
    $region218: #{_lambda_.1} parent=1 // pred_check
      _
    $region219: #{_lambda_.1} parent=1 // pred_check_branch
      %444 = sbr.rel (0) target = $region221
    $region220: #{_lambda_.1} parent=1 // pred_region
      %445 = dma.done [#allocation35], 6144
    $region221: #{_lambda_.1} parent=1 // pred_fallthru
      _
    // Predicated region
    $region222: #{_lambda_.1} parent=1 // pred_check
      _
    $region223: #{_lambda_.1} parent=1 // pred_check_branch
      %447 = sbr.rel (0) target = $region225
    $region224: #{_lambda_.1} parent=1 // pred_region
      %448 = dma.done [#allocation38], 512
    $region225: #{_lambda_.1} parent=1 // pred_fallthru
      _
    %v449 = vld [vmem:[#allocation25] sm:$0xff]
    %v450 = vld [vmem:[#allocation25 + $0x8] sm:$0xff]
    %v451 = vld [vmem:[#allocation25 + $0x10] sm:$0xff]
    %v452 = vld [vmem:[#allocation25 + $0x18] sm:$0xff]
    %s453 = scalar_lea.vmem [#allocation25], 32
    %v454 = vld [vmem:[%s453] sm:$0xff]
    %v455 = vld [vmem:[%s453 + $0x8] sm:$0xff]
    %v456 = vld [vmem:[%s453 + $0x10] sm:$0xff]
    %v457 = vld [vmem:[%s453 + $0x18] sm:$0xff]
    %v458 = vld [vmem:[#allocation2] sm:$0xff]
    %v459 = vld [vmem:[#allocation2 + $0x8] sm:$0xff]
    %v460 = vld [vmem:[#allocation2 + $0x10] sm:$0xff]
    %v461 = vld [vmem:[#allocation2 + $0x18] sm:$0xff]
    %v462 = vld [vmem:[#allocation4] sm:$0xff]
    %v463 = vld [vmem:[#allocation4 + $0x8] sm:$0xff]
    %v464 = vld [vmem:[#allocation4 + $0x10] sm:$0xff]
    %v465 = vld [vmem:[#allocation4 + $0x18] sm:$0xff]
    %vm466 = vcmask 261120
    %v468 = vsel %vm466, %v458, 0
    %v471 = vsel %vm466, %v459, 0
    %v474 = vsel %vm466, %v460, 0
    %v477 = vsel %vm466, %v461, 0
    %479 = vmatprep.subr.mxu0 0.0
    %480 = vmatpush1.msra.mxu0 %v462
    %481 = vmatprep.subr.mxu0 0.0
    %482 = vmatpush1.msra.mxu0 %v463
    %483 = vmatprep.subr.mxu0 0.0
    %484 = vmatpush1.msra.mxu0 %v464
    %485 = vmatprep.subr.mxu0 0.0
    %486 = vmatpush1.msra.mxu0 %v465
    %487 = vmatprep.subr.mxu0 0.0
    %488 = vmatpush1.msra.mxu0 0.0
    %489 = vmatprep.subr.mxu0 0.0
    %490 = vmatpush1.msra.mxu0 0.0
    %491 = vmatprep.subr.mxu0 0.0
    %492 = vmatpush1.msra.mxu0 0.0
    %493 = vmatprep.subr.mxu0 0.0
    %494 = vmatpush1.msra.mxu0 0.0
    %495 = vmatprep.subr.mxu0 0.0
    %496 = vmatpush1.msra.mxu0 0.0
    %497 = vmatprep.subr.mxu0 0.0
    %498 = vmatpush1.msra.mxu0 0.0
    %499 = vmatprep.subr.mxu0 0.0
    %500 = vmatpush1.msra.mxu0 0.0
    %501 = vmatprep.subr.mxu0 0.0
    %502 = vmatpush1.msra.mxu0 0.0
    %503 = vmatprep.subr.mxu0 0.0
    %504 = vmatpush1.msra.mxu0 0.0
    %505 = vmatprep.subr.mxu0 0.0
    %506 = vmatpush1.msra.mxu0 0.0
    %507 = vmatprep.subr.mxu0 0.0
    %508 = vmatpush1.msra.mxu0 0.0
    %509 = vmatprep.subr.mxu0 0.0
    %510 = vmatpush1.msra.mxu0 0.0
    %511 = vmatprep.subr.mxu0 0.0
    %512 = vmatpush1.msra.mxu0 0.0
    %513 = vmatprep.subr.mxu0 0.0
    %514 = vmatpush1.msra.mxu0 0.0
    %515 = vmatprep.subr.mxu0 0.0
    %516 = vmatpush1.msra.mxu0 0.0
    %517 = vmatprep.subr.mxu0 0.0
    %518 = vmatpush1.msra.mxu0 0.0
    %519 = vmatprep.subr.mxu0 0.0
    %520 = vmatpush1.msra.mxu0 0.0
    %521 = vmatprep.subr.mxu0 0.0
    %522 = vmatpush1.msra.mxu0 0.0
    %523 = vmatprep.subr.mxu0 0.0
    %524 = vmatpush1.msra.mxu0 0.0
    %525 = vmatprep.subr.mxu0 0.0
    %526 = vmatpush1.msra.mxu0 0.0
    %527 = vmatprep.subr.mxu0 0.0
    %528 = vmatpush1.msra.mxu0 0.0
    %529 = vmatprep.subr.mxu0 0.0
    %530 = vmatpush1.msra.mxu0 0.0
    %531 = vmatprep.subr.mxu0 0.0
    %532 = vmatpush1.msra.mxu0 0.0
    %533 = vmatprep.subr.mxu0 0.0
    %534 = vmatpush1.msra.mxu0 0.0
    %535 = vmatprep.subr.mxu0 0.0
    %536 = vmatpush1.msra.mxu0 0.0
    %537 = vmatprep.subr.mxu0 0.0
    %538 = vmatpush1.msra.mxu0 0.0
    %539 = vmatprep.subr.mxu0 0.0
    %540 = vmatpush1.msra.mxu0 0.0
    %541 = vmatprep.subr.mxu0 0.0
    %542 = vmatpush1.msra.mxu0 0.0
    %543 = vmatprep.mubr.f32.mxu0 0.0
    %544 = vmatmul.mubr.f32.gmra.mrb[0].mxu0 %v468
    %v545 = vpop.f32.mrb[0].mxu0
    %v546 = vadd.f32 0.0, %v545
    %v547 = vpop.f32.mrb[0].mxu0
    %548 = vmatprep.mubr.f32.mxu0 0.0
    %549 = vmatmul.mubr.f32.gmra.mrb[0].mxu0 %v471
    %v550 = vpop.f32.mrb[0].mxu0
    %v551 = vadd.f32 0.0, %v550
    %v552 = vpop.f32.mrb[0].mxu0
    %553 = vmatprep.mubr.f32.mxu0 0.0
    %554 = vmatmul.mubr.f32.gmra.mrb[0].mxu0 %v474
    %v555 = vpop.f32.mrb[0].mxu0
    %v556 = vadd.f32 0.0, %v555
    %v557 = vpop.f32.mrb[0].mxu0
    %558 = vmatprep.mubr.f32.mxu0 0.0
    %559 = vmatmul.mubr.f32.gmra.mrb[0].mxu0 %v477
    %v560 = vpop.f32.mrb[0].mxu0
    %v561 = vadd.f32 0.0, %v560
    %v562 = vpop.f32.mrb[0].mxu0
    %563 = vdwg.mxu0
    %s564 = scalar_lea.vmem [#allocation4], 32
    %v565 = vld [vmem:[%s564] sm:$0xff]
    %v566 = vld [vmem:[%s564 + $0x8] sm:$0xff]
    %v567 = vld [vmem:[%s564 + $0x10] sm:$0xff]
    %v568 = vld [vmem:[%s564 + $0x18] sm:$0xff]
    %s569 = scalar_lea.vmem [#allocation4], 64
    %v570 = vld [vmem:[%s569] sm:$0xff]
    %v571 = vld [vmem:[%s569 + $0x8] sm:$0xff]
    %v572 = vld [vmem:[%s569 + $0x10] sm:$0xff]
    %v573 = vld [vmem:[%s569 + $0x18] sm:$0xff]
    %574 = vmatprep.subr.mxu0 0.0
    %575 = vmatpush1.msra.mxu0 %v570
    %576 = vmatprep.subr.mxu0 0.0
    %577 = vmatpush1.msra.mxu0 %v571
    %578 = vmatprep.subr.mxu0 0.0
    %579 = vmatpush1.msra.mxu0 %v572
    %580 = vmatprep.subr.mxu0 0.0
    %581 = vmatpush1.msra.mxu0 %v573
    %582 = vmatprep.subr.mxu0 0.0
    %583 = vmatpush1.msra.mxu0 0.0
    %584 = vmatprep.subr.mxu0 0.0
    %585 = vmatpush1.msra.mxu0 0.0
    %586 = vmatprep.subr.mxu0 0.0
    %587 = vmatpush1.msra.mxu0 0.0
    %588 = vmatprep.subr.mxu0 0.0
    %589 = vmatpush1.msra.mxu0 0.0
    %590 = vmatprep.subr.mxu0 0.0
    %591 = vmatpush1.msra.mxu0 0.0
    %592 = vmatprep.subr.mxu0 0.0
    %593 = vmatpush1.msra.mxu0 0.0
    %594 = vmatprep.subr.mxu0 0.0
    %595 = vmatpush1.msra.mxu0 0.0
    %596 = vmatprep.subr.mxu0 0.0
    %597 = vmatpush1.msra.mxu0 0.0
    %598 = vmatprep.subr.mxu0 0.0
    %599 = vmatpush1.msra.mxu0 0.0
    %600 = vmatprep.subr.mxu0 0.0
    %601 = vmatpush1.msra.mxu0 0.0
    %602 = vmatprep.subr.mxu0 0.0
    %603 = vmatpush1.msra.mxu0 0.0
    %604 = vmatprep.subr.mxu0 0.0
    %605 = vmatpush1.msra.mxu0 0.0
    %606 = vmatprep.subr.mxu0 0.0
    %607 = vmatpush1.msra.mxu0 0.0
    %608 = vmatprep.subr.mxu0 0.0
    %609 = vmatpush1.msra.mxu0 0.0
    %610 = vmatprep.subr.mxu0 0.0
    %611 = vmatpush1.msra.mxu0 0.0
    %612 = vmatprep.subr.mxu0 0.0
    %613 = vmatpush1.msra.mxu0 0.0
    %614 = vmatprep.subr.mxu0 0.0
    %615 = vmatpush1.msra.mxu0 0.0
    %616 = vmatprep.subr.mxu0 0.0
    %617 = vmatpush1.msra.mxu0 0.0
    %618 = vmatprep.subr.mxu0 0.0
    %619 = vmatpush1.msra.mxu0 0.0
    %620 = vmatprep.subr.mxu0 0.0
    %621 = vmatpush1.msra.mxu0 0.0
    %622 = vmatprep.subr.mxu0 0.0
    %623 = vmatpush1.msra.mxu0 0.0
    %624 = vmatprep.subr.mxu0 0.0
    %625 = vmatpush1.msra.mxu0 0.0
    %626 = vmatprep.subr.mxu0 0.0
    %627 = vmatpush1.msra.mxu0 0.0
    %628 = vmatprep.subr.mxu0 0.0
    %629 = vmatpush1.msra.mxu0 0.0
    %630 = vmatprep.subr.mxu0 0.0
    %631 = vmatpush1.msra.mxu0 0.0
    %632 = vmatprep.subr.mxu0 0.0
    %633 = vmatpush1.msra.mxu0 0.0
    %634 = vmatprep.subr.mxu0 0.0
    %635 = vmatpush1.msra.mxu0 0.0
    %636 = vmatprep.subr.mxu0 0.0
    %637 = vmatpush1.msra.mxu0 0.0
    %638 = vmatprep.mubr.f32.mxu0 0.0
    %639 = vmatmul.mubr.f32.gmra.mrb[0].mxu0 %v468
    %v640 = vpop.f32.mrb[0].mxu0
    %v641 = vadd.f32 0.0, %v640
    %v642 = vpop.f32.mrb[0].mxu0
    %643 = vmatprep.mubr.f32.mxu0 0.0
    %644 = vmatmul.mubr.f32.gmra.mrb[0].mxu0 %v471
    %v645 = vpop.f32.mrb[0].mxu0
    %v646 = vadd.f32 0.0, %v645
    %v647 = vpop.f32.mrb[0].mxu0
    %648 = vmatprep.mubr.f32.mxu0 0.0
    %649 = vmatmul.mubr.f32.gmra.mrb[0].mxu0 %v474
    %v650 = vpop.f32.mrb[0].mxu0
    %v651 = vadd.f32 0.0, %v650
    %v652 = vpop.f32.mrb[0].mxu0
    %653 = vmatprep.mubr.f32.mxu0 0.0
    %654 = vmatmul.mubr.f32.gmra.mrb[0].mxu0 %v477
    %v655 = vpop.f32.mrb[0].mxu0
    %v656 = vadd.f32 0.0, %v655
    %v657 = vpop.f32.mrb[0].mxu0
    %658 = vdwg.mxu0
    %v660 = vsel %vm466, %v449, 0
    %v663 = vsel %vm466, %v450, 0
    %v666 = vsel %vm466, %v451, 0
    %v669 = vsel %vm466, %v452, 0
    %671 = vmatprep.subr.mxu0 0.0
    %672 = vmatpush1.msra.mxu0 %v546
    %673 = vmatprep.subr.mxu0 0.0
    %674 = vmatpush1.msra.mxu0 %v551
    %675 = vmatprep.subr.mxu0 0.0
    %676 = vmatpush1.msra.mxu0 %v556
    %677 = vmatprep.subr.mxu0 0.0
    %678 = vmatpush1.msra.mxu0 %v561
    %679 = vmatprep.subr.mxu0 0.0
    %680 = vmatpush1.msra.mxu0 0.0
    %681 = vmatprep.subr.mxu0 0.0
    %682 = vmatpush1.msra.mxu0 0.0
    %683 = vmatprep.subr.mxu0 0.0
    %684 = vmatpush1.msra.mxu0 0.0
    %685 = vmatprep.subr.mxu0 0.0
    %686 = vmatpush1.msra.mxu0 0.0
    %687 = vmatprep.subr.mxu0 0.0
    %688 = vmatpush1.msra.mxu0 0.0
    %689 = vmatprep.subr.mxu0 0.0
    %690 = vmatpush1.msra.mxu0 0.0
    %691 = vmatprep.subr.mxu0 0.0
    %692 = vmatpush1.msra.mxu0 0.0
    %693 = vmatprep.subr.mxu0 0.0
    %694 = vmatpush1.msra.mxu0 0.0
    %695 = vmatprep.subr.mxu0 0.0
    %696 = vmatpush1.msra.mxu0 0.0
    %697 = vmatprep.subr.mxu0 0.0
    %698 = vmatpush1.msra.mxu0 0.0
    %699 = vmatprep.subr.mxu0 0.0
    %700 = vmatpush1.msra.mxu0 0.0
    %701 = vmatprep.subr.mxu0 0.0
    %702 = vmatpush1.msra.mxu0 0.0
    %703 = vmatprep.subr.mxu0 0.0
    %704 = vmatpush1.msra.mxu0 0.0
    %705 = vmatprep.subr.mxu0 0.0
    %706 = vmatpush1.msra.mxu0 0.0
    %707 = vmatprep.subr.mxu0 0.0
    %708 = vmatpush1.msra.mxu0 0.0
    %709 = vmatprep.subr.mxu0 0.0
    %710 = vmatpush1.msra.mxu0 0.0
    %711 = vmatprep.subr.mxu0 0.0
    %712 = vmatpush1.msra.mxu0 0.0
    %713 = vmatprep.subr.mxu0 0.0
    %714 = vmatpush1.msra.mxu0 0.0
    %715 = vmatprep.subr.mxu0 0.0
    %716 = vmatpush1.msra.mxu0 0.0
    %717 = vmatprep.subr.mxu0 0.0
    %718 = vmatpush1.msra.mxu0 0.0
    %719 = vmatprep.subr.mxu0 0.0
    %720 = vmatpush1.msra.mxu0 0.0
    %721 = vmatprep.subr.mxu0 0.0
    %722 = vmatpush1.msra.mxu0 0.0
    %723 = vmatprep.subr.mxu0 0.0
    %724 = vmatpush1.msra.mxu0 0.0
    %725 = vmatprep.subr.mxu0 0.0
    %726 = vmatpush1.msra.mxu0 0.0
    %727 = vmatprep.subr.mxu0 0.0
    %728 = vmatpush1.msra.mxu0 0.0
    %729 = vmatprep.subr.mxu0 0.0
    %730 = vmatpush1.msra.mxu0 0.0
    %731 = vmatprep.subr.mxu0 0.0
    %732 = vmatpush1.msra.mxu0 0.0
    %733 = vmatprep.subr.mxu0 0.0
    %734 = vmatpush1.msra.mxu0 0.0
    %735 = vmatprep.mubr.f32.mxu0 0.0
    %736 = vmatmul.mubr.f32.gmra.mrb[0].mxu0 %v660
    %v737 = vpop.f32.mrb[0].mxu0
    %v738 = vadd.f32 0.0, %v737
    %v739 = vpop.f32.mrb[0].mxu0
    %740 = vmatprep.mubr.f32.mxu0 0.0
    %741 = vmatmul.mubr.f32.gmra.mrb[0].mxu0 %v663
    %v742 = vpop.f32.mrb[0].mxu0
    %v743 = vadd.f32 0.0, %v742
    %v744 = vpop.f32.mrb[0].mxu0
    %745 = vmatprep.mubr.f32.mxu0 0.0
    %746 = vmatmul.mubr.f32.gmra.mrb[0].mxu0 %v666
    %v747 = vpop.f32.mrb[0].mxu0
    %v748 = vadd.f32 0.0, %v747
    %v749 = vpop.f32.mrb[0].mxu0
    %750 = vmatprep.mubr.f32.mxu0 0.0
    %751 = vmatmul.mubr.f32.gmra.mrb[0].mxu0 %v669
    %v752 = vpop.f32.mrb[0].mxu0
    %v753 = vadd.f32 0.0, %v752
    %v754 = vpop.f32.mrb[0].mxu0
    %755 = vdwg.mxu0
    %756 = vmatprep.subr.mxu0 0.0
    %757 = vmatpush1.msra.mxu0 %v565
    %758 = vmatprep.subr.mxu0 0.0
    %759 = vmatpush1.msra.mxu0 %v566
    %760 = vmatprep.subr.mxu0 0.0
    %761 = vmatpush1.msra.mxu0 %v567
    %762 = vmatprep.subr.mxu0 0.0
    %763 = vmatpush1.msra.mxu0 %v568
    %764 = vmatprep.subr.mxu0 0.0
    %765 = vmatpush1.msra.mxu0 0.0
    %766 = vmatprep.subr.mxu0 0.0
    %767 = vmatpush1.msra.mxu0 0.0
    %768 = vmatprep.subr.mxu0 0.0
    %769 = vmatpush1.msra.mxu0 0.0
    %770 = vmatprep.subr.mxu0 0.0
    %771 = vmatpush1.msra.mxu0 0.0
    %772 = vmatprep.subr.mxu0 0.0
    %773 = vmatpush1.msra.mxu0 0.0
    %774 = vmatprep.subr.mxu0 0.0
    %775 = vmatpush1.msra.mxu0 0.0
    %776 = vmatprep.subr.mxu0 0.0
    %777 = vmatpush1.msra.mxu0 0.0
    %778 = vmatprep.subr.mxu0 0.0
    %779 = vmatpush1.msra.mxu0 0.0
    %780 = vmatprep.subr.mxu0 0.0
    %781 = vmatpush1.msra.mxu0 0.0
    %782 = vmatprep.subr.mxu0 0.0
    %783 = vmatpush1.msra.mxu0 0.0
    %784 = vmatprep.subr.mxu0 0.0
    %785 = vmatpush1.msra.mxu0 0.0
    %786 = vmatprep.subr.mxu0 0.0
    %787 = vmatpush1.msra.mxu0 0.0
    %788 = vmatprep.subr.mxu0 0.0
    %789 = vmatpush1.msra.mxu0 0.0
    %790 = vmatprep.subr.mxu0 0.0
    %791 = vmatpush1.msra.mxu0 0.0
    %792 = vmatprep.subr.mxu0 0.0
    %793 = vmatpush1.msra.mxu0 0.0
    %794 = vmatprep.subr.mxu0 0.0
    %795 = vmatpush1.msra.mxu0 0.0
    %796 = vmatprep.subr.mxu0 0.0
    %797 = vmatpush1.msra.mxu0 0.0
    %798 = vmatprep.subr.mxu0 0.0
    %799 = vmatpush1.msra.mxu0 0.0
    %800 = vmatprep.subr.mxu0 0.0
    %801 = vmatpush1.msra.mxu0 0.0
    %802 = vmatprep.subr.mxu0 0.0
    %803 = vmatpush1.msra.mxu0 0.0
    %804 = vmatprep.subr.mxu0 0.0
    %805 = vmatpush1.msra.mxu0 0.0
    %806 = vmatprep.subr.mxu0 0.0
    %807 = vmatpush1.msra.mxu0 0.0
    %808 = vmatprep.subr.mxu0 0.0
    %809 = vmatpush1.msra.mxu0 0.0
    %810 = vmatprep.subr.mxu0 0.0
    %811 = vmatpush1.msra.mxu0 0.0
    %812 = vmatprep.subr.mxu0 0.0
    %813 = vmatpush1.msra.mxu0 0.0
    %814 = vmatprep.subr.mxu0 0.0
    %815 = vmatpush1.msra.mxu0 0.0
    %816 = vmatprep.subr.mxu0 0.0
    %817 = vmatpush1.msra.mxu0 0.0
    %818 = vmatprep.subr.mxu0 0.0
    %819 = vmatpush1.msra.mxu0 0.0
    %820 = vmatprep.mubr.f32.mxu0 0.0
    %821 = vmatmul.mubr.f32.gmra.mrb[0].mxu0 %v468
    %v822 = vpop.f32.mrb[0].mxu0
    %v823 = vadd.f32 %v738, %v822
    %v824 = vpop.f32.mrb[0].mxu0
    %825 = vmatprep.mubr.f32.mxu0 0.0
    %826 = vmatmul.mubr.f32.gmra.mrb[0].mxu0 %v471
    %v827 = vpop.f32.mrb[0].mxu0
    %v828 = vadd.f32 %v743, %v827
    %v829 = vpop.f32.mrb[0].mxu0
    %830 = vmatprep.mubr.f32.mxu0 0.0
    %831 = vmatmul.mubr.f32.gmra.mrb[0].mxu0 %v474
    %v832 = vpop.f32.mrb[0].mxu0
    %v833 = vadd.f32 %v748, %v832
    %v834 = vpop.f32.mrb[0].mxu0
    %835 = vmatprep.mubr.f32.mxu0 0.0
    %836 = vmatmul.mubr.f32.gmra.mrb[0].mxu0 %v477
    %v837 = vpop.f32.mrb[0].mxu0
    %v838 = vadd.f32 %v753, %v837
    %v839 = vpop.f32.mrb[0].mxu0
    %840 = vdwg.mxu0
    %v842 = vsel %vm466, %v454, 0
    %v845 = vsel %vm466, %v455, 0
    %v848 = vsel %vm466, %v456, 0
    %v851 = vsel %vm466, %v457, 0
    %853 = vmatprep.subr.mxu0 0.0
    %854 = vmatpush1.msra.mxu0 %v641
    %855 = vmatprep.subr.mxu0 0.0
    %856 = vmatpush1.msra.mxu0 %v646
    %857 = vmatprep.subr.mxu0 0.0
    %858 = vmatpush1.msra.mxu0 %v651
    %859 = vmatprep.subr.mxu0 0.0
    %860 = vmatpush1.msra.mxu0 %v656
    %861 = vmatprep.subr.mxu0 0.0
    %862 = vmatpush1.msra.mxu0 0.0
    %863 = vmatprep.subr.mxu0 0.0
    %864 = vmatpush1.msra.mxu0 0.0
    %865 = vmatprep.subr.mxu0 0.0
    %866 = vmatpush1.msra.mxu0 0.0
    %867 = vmatprep.subr.mxu0 0.0
    %868 = vmatpush1.msra.mxu0 0.0
    %869 = vmatprep.subr.mxu0 0.0
    %870 = vmatpush1.msra.mxu0 0.0
    %871 = vmatprep.subr.mxu0 0.0
    %872 = vmatpush1.msra.mxu0 0.0
    %873 = vmatprep.subr.mxu0 0.0
    %874 = vmatpush1.msra.mxu0 0.0
    %875 = vmatprep.subr.mxu0 0.0
    %876 = vmatpush1.msra.mxu0 0.0
    %877 = vmatprep.subr.mxu0 0.0
    %878 = vmatpush1.msra.mxu0 0.0
    %879 = vmatprep.subr.mxu0 0.0
    %880 = vmatpush1.msra.mxu0 0.0
    %881 = vmatprep.subr.mxu0 0.0
    %882 = vmatpush1.msra.mxu0 0.0
    %883 = vmatprep.subr.mxu0 0.0
    %884 = vmatpush1.msra.mxu0 0.0
    %885 = vmatprep.subr.mxu0 0.0
    %886 = vmatpush1.msra.mxu0 0.0
    %887 = vmatprep.subr.mxu0 0.0
    %888 = vmatpush1.msra.mxu0 0.0
    %889 = vmatprep.subr.mxu0 0.0
    %890 = vmatpush1.msra.mxu0 0.0
    %891 = vmatprep.subr.mxu0 0.0
    %892 = vmatpush1.msra.mxu0 0.0
    %893 = vmatprep.subr.mxu0 0.0
    %894 = vmatpush1.msra.mxu0 0.0
    %895 = vmatprep.subr.mxu0 0.0
    %896 = vmatpush1.msra.mxu0 0.0
    %897 = vmatprep.subr.mxu0 0.0
    %898 = vmatpush1.msra.mxu0 0.0
    %899 = vmatprep.subr.mxu0 0.0
    %900 = vmatpush1.msra.mxu0 0.0
    %901 = vmatprep.subr.mxu0 0.0
    %902 = vmatpush1.msra.mxu0 0.0
    %903 = vmatprep.subr.mxu0 0.0
    %904 = vmatpush1.msra.mxu0 0.0
    %905 = vmatprep.subr.mxu0 0.0
    %906 = vmatpush1.msra.mxu0 0.0
    %907 = vmatprep.subr.mxu0 0.0
    %908 = vmatpush1.msra.mxu0 0.0
    %909 = vmatprep.subr.mxu0 0.0
    %910 = vmatpush1.msra.mxu0 0.0
    %911 = vmatprep.subr.mxu0 0.0
    %912 = vmatpush1.msra.mxu0 0.0
    %913 = vmatprep.subr.mxu0 0.0
    %914 = vmatpush1.msra.mxu0 0.0
    %915 = vmatprep.subr.mxu0 0.0
    %916 = vmatpush1.msra.mxu0 0.0
    %917 = vmatprep.mubr.f32.mxu0 0.0
    %918 = vmatmul.mubr.f32.gmra.mrb[0].mxu0 %v842
    %v919 = vpop.f32.mrb[0].mxu0
    %v920 = vadd.f32 0.0, %v919
    %v921 = vpop.f32.mrb[0].mxu0
    %922 = vmatprep.mubr.f32.mxu0 0.0
    %923 = vmatmul.mubr.f32.gmra.mrb[0].mxu0 %v845
    %v924 = vpop.f32.mrb[0].mxu0
    %v925 = vadd.f32 0.0, %v924
    %v926 = vpop.f32.mrb[0].mxu0
    %927 = vmatprep.mubr.f32.mxu0 0.0
    %928 = vmatmul.mubr.f32.gmra.mrb[0].mxu0 %v848
    %v929 = vpop.f32.mrb[0].mxu0
    %v930 = vadd.f32 0.0, %v929
    %v931 = vpop.f32.mrb[0].mxu0
    %932 = vmatprep.mubr.f32.mxu0 0.0
    %933 = vmatmul.mubr.f32.gmra.mrb[0].mxu0 %v851
    %v934 = vpop.f32.mrb[0].mxu0
    %v935 = vadd.f32 0.0, %v934
    %v936 = vpop.f32.mrb[0].mxu0
    %937 = vdwg.mxu0
    %v938 = vadd.f32 %v823, %v920
    %v939 = vadd.f32 %v828, %v925
    %v940 = vadd.f32 %v833, %v930
    %v941 = vadd.f32 %v838, %v935
    %v942 = vld [vmem:[#allocation6] sm:$0x1]
    %v944 = vlaneseq
    %v945 = vshrl.u32 %v944, 7
    %v946 = vsub.s32 0, %v945
    %v947 = vrot.slane %v942, %v946
    %v949 = vadd.f32 %v938, %v947
    %v950 = vadd.f32 %v939, %v947
    %v951 = vadd.f32 %v940, %v947
    %v952 = vadd.f32 %v941, %v947
    %v953 = vmax.f32 %v949, 0.0
    %v954 = vmax.f32 %v950, 0.0
    %v955 = vmax.f32 %v951, 0.0
    %v956 = vmax.f32 %v952, 0.0
    %v957 = vld [vmem:[#allocation7] sm:$0xff]
    %v958 = vld [vmem:[#allocation7 + $0x8] sm:$0xff]
    %v959 = vld [vmem:[#allocation7 + $0x10] sm:$0xff]
    %v960 = vld [vmem:[#allocation7 + $0x18] sm:$0xff]
    %v961 = vld [vmem:[#allocation9] sm:$0x1]
    %v963 = vlaneseq
    %v964 = vshrl.u32 %v963, 7
    %v965 = vsub.s32 0, %v964
    %v966 = vrot.slane %v961, %v965
    %968 = vmatprep.subr.mxu0 0.0
    %969 = vmatpush1.msra.mxu0 %v957
    %970 = vmatprep.subr.mxu0 0.0
    %971 = vmatpush1.msra.mxu0 %v958
    %972 = vmatprep.subr.mxu0 0.0
    %973 = vmatpush1.msra.mxu0 %v959
    %974 = vmatprep.subr.mxu0 0.0
    %975 = vmatpush1.msra.mxu0 %v960
    %976 = vmatprep.subr.mxu0 0.0
    %977 = vmatpush1.msra.mxu0 0.0
    %978 = vmatprep.subr.mxu0 0.0
    %979 = vmatpush1.msra.mxu0 0.0
    %980 = vmatprep.subr.mxu0 0.0
    %981 = vmatpush1.msra.mxu0 0.0
    %982 = vmatprep.subr.mxu0 0.0
    %983 = vmatpush1.msra.mxu0 0.0
    %984 = vmatprep.subr.mxu0 0.0
    %985 = vmatpush1.msra.mxu0 0.0
    %986 = vmatprep.subr.mxu0 0.0
    %987 = vmatpush1.msra.mxu0 0.0
    %988 = vmatprep.subr.mxu0 0.0
    %989 = vmatpush1.msra.mxu0 0.0
    %990 = vmatprep.subr.mxu0 0.0
    %991 = vmatpush1.msra.mxu0 0.0
    %992 = vmatprep.subr.mxu0 0.0
    %993 = vmatpush1.msra.mxu0 0.0
    %994 = vmatprep.subr.mxu0 0.0
    %995 = vmatpush1.msra.mxu0 0.0
    %996 = vmatprep.subr.mxu0 0.0
    %997 = vmatpush1.msra.mxu0 0.0
    %998 = vmatprep.subr.mxu0 0.0
    %999 = vmatpush1.msra.mxu0 0.0
    %1000 = vmatprep.subr.mxu0 0.0
    %1001 = vmatpush1.msra.mxu0 0.0
    %1002 = vmatprep.subr.mxu0 0.0
    %1003 = vmatpush1.msra.mxu0 0.0
    %1004 = vmatprep.subr.mxu0 0.0
    %1005 = vmatpush1.msra.mxu0 0.0
    %1006 = vmatprep.subr.mxu0 0.0
    %1007 = vmatpush1.msra.mxu0 0.0
    %1008 = vmatprep.subr.mxu0 0.0
    %1009 = vmatpush1.msra.mxu0 0.0
    %1010 = vmatprep.subr.mxu0 0.0
    %1011 = vmatpush1.msra.mxu0 0.0
    %1012 = vmatprep.subr.mxu0 0.0
    %1013 = vmatpush1.msra.mxu0 0.0
    %1014 = vmatprep.subr.mxu0 0.0
    %1015 = vmatpush1.msra.mxu0 0.0
    %1016 = vmatprep.subr.mxu0 0.0
    %1017 = vmatpush1.msra.mxu0 0.0
    %1018 = vmatprep.subr.mxu0 0.0
    %1019 = vmatpush1.msra.mxu0 0.0
    %1020 = vmatprep.subr.mxu0 0.0
    %1021 = vmatpush1.msra.mxu0 0.0
    %1022 = vmatprep.subr.mxu0 0.0
    %1023 = vmatpush1.msra.mxu0 0.0
    %1024 = vmatprep.subr.mxu0 0.0
    %1025 = vmatpush1.msra.mxu0 0.0
    %1026 = vmatprep.subr.mxu0 0.0
    %1027 = vmatpush1.msra.mxu0 0.0
    %1028 = vmatprep.subr.mxu0 0.0
    %1029 = vmatpush1.msra.mxu0 0.0
    %1030 = vmatprep.subr.mxu0 0.0
    %1031 = vmatpush1.msra.mxu0 0.0
    %1032 = vmatprep.mubr.f32.mxu0 0.0
    %1033 = vmatmul.mubr.f32.gmra.mrb[0].mxu0 %v468
    %v1034 = vpop.f32.mrb[0].mxu0
    %v1035 = vadd.f32 %v966, %v1034
    %v1036 = vpop.f32.mrb[0].mxu0
    %1037 = vmatprep.mubr.f32.mxu0 0.0
    %1038 = vmatmul.mubr.f32.gmra.mrb[0].mxu0 %v471
    %v1039 = vpop.f32.mrb[0].mxu0
    %v1040 = vadd.f32 %v966, %v1039
    %v1041 = vpop.f32.mrb[0].mxu0
    %1042 = vmatprep.mubr.f32.mxu0 0.0
    %1043 = vmatmul.mubr.f32.gmra.mrb[0].mxu0 %v474
    %v1044 = vpop.f32.mrb[0].mxu0
    %v1045 = vadd.f32 %v966, %v1044
    %v1046 = vpop.f32.mrb[0].mxu0
    %1047 = vmatprep.mubr.f32.mxu0 0.0
    %1048 = vmatmul.mubr.f32.gmra.mrb[0].mxu0 %v477
    %v1049 = vpop.f32.mrb[0].mxu0
    %v1050 = vadd.f32 %v966, %v1049
    %v1051 = vpop.f32.mrb[0].mxu0
    %1052 = vdwg.mxu0
    %v1053 = vld [vmem:[#allocation10] sm:$0xff]
    %v1054 = vld [vmem:[#allocation10 + $0x8] sm:$0xff]
    %v1055 = vld [vmem:[#allocation10 + $0x10] sm:$0xff]
    %v1056 = vld [vmem:[#allocation10 + $0x18] sm:$0xff]
    %v1057 = vld [vmem:[#allocation10 + $0x20] sm:$0xff]
    %v1058 = vld [vmem:[#allocation10 + $0x28] sm:$0xff]
    %v1059 = vld [vmem:[#allocation10 + $0x30] sm:$0xff]
    %v1060 = vld [vmem:[#allocation10 + $0x38] sm:$0xff]
    %v1061 = vld [vmem:[#allocation10 + $0x40] sm:$0xff]
    %v1062 = vld [vmem:[#allocation10 + $0x48] sm:$0xff]
    %v1063 = vld [vmem:[#allocation10 + $0x50] sm:$0xff]
    %v1064 = vld [vmem:[#allocation10 + $0x58] sm:$0xff]
    %v1065 = vld [vmem:[#allocation10 + $0x60] sm:$0xff]
    %v1066 = vld [vmem:[#allocation10 + $0x68] sm:$0xff]
    %v1067 = vld [vmem:[#allocation10 + $0x70] sm:$0xff]
    %v1068 = vld [vmem:[#allocation10 + $0x78] sm:$0xff]
    %1069 = vmatprep.subr.mxu0 0.0
    %1070 = vmatpush1.msra.mxu0 %v1053
    %1071 = vmatprep.subr.mxu0 0.0
    %1072 = vmatpush1.msra.mxu0 %v1054
    %1073 = vmatprep.subr.mxu0 0.0
    %1074 = vmatpush1.msra.mxu0 %v1055
    %1075 = vmatprep.subr.mxu0 0.0
    %1076 = vmatpush1.msra.mxu0 %v1056
    %1077 = vmatprep.subr.mxu0 0.0
    %1078 = vmatpush1.msra.mxu0 %v1057
    %1079 = vmatprep.subr.mxu0 0.0
    %1080 = vmatpush1.msra.mxu0 %v1058
    %1081 = vmatprep.subr.mxu0 0.0
    %1082 = vmatpush1.msra.mxu0 %v1059
    %1083 = vmatprep.subr.mxu0 0.0
    %1084 = vmatpush1.msra.mxu0 %v1060
    %1085 = vmatprep.subr.mxu0 0.0
    %1086 = vmatpush1.msra.mxu0 %v1061
    %1087 = vmatprep.subr.mxu0 0.0
    %1088 = vmatpush1.msra.mxu0 %v1062
    %1089 = vmatprep.subr.mxu0 0.0
    %1090 = vmatpush1.msra.mxu0 %v1063
    %1091 = vmatprep.subr.mxu0 0.0
    %1092 = vmatpush1.msra.mxu0 %v1064
    %1093 = vmatprep.subr.mxu0 0.0
    %1094 = vmatpush1.msra.mxu0 %v1065
    %1095 = vmatprep.subr.mxu0 0.0
    %1096 = vmatpush1.msra.mxu0 %v1066
    %1097 = vmatprep.subr.mxu0 0.0
    %1098 = vmatpush1.msra.mxu0 %v1067
    %1099 = vmatprep.subr.mxu0 0.0
    %1100 = vmatpush1.msra.mxu0 %v1068
    %1101 = vmatprep.subr.mxu0 0.0
    %1102 = vmatpush1.msra.mxu0 0.0
    %1103 = vmatprep.subr.mxu0 0.0
    %1104 = vmatpush1.msra.mxu0 0.0
    %1105 = vmatprep.subr.mxu0 0.0
    %1106 = vmatpush1.msra.mxu0 0.0
    %1107 = vmatprep.subr.mxu0 0.0
    %1108 = vmatpush1.msra.mxu0 0.0
    %1109 = vmatprep.subr.mxu0 0.0
    %1110 = vmatpush1.msra.mxu0 0.0
    %1111 = vmatprep.subr.mxu0 0.0
    %1112 = vmatpush1.msra.mxu0 0.0
    %1113 = vmatprep.subr.mxu0 0.0
    %1114 = vmatpush1.msra.mxu0 0.0
    %1115 = vmatprep.subr.mxu0 0.0
    %1116 = vmatpush1.msra.mxu0 0.0
    %1117 = vmatprep.subr.mxu0 0.0
    %1118 = vmatpush1.msra.mxu0 0.0
    %1119 = vmatprep.subr.mxu0 0.0
    %1120 = vmatpush1.msra.mxu0 0.0
    %1121 = vmatprep.subr.mxu0 0.0
    %1122 = vmatpush1.msra.mxu0 0.0
    %1123 = vmatprep.subr.mxu0 0.0
    %1124 = vmatpush1.msra.mxu0 0.0
    %1125 = vmatprep.subr.mxu0 0.0
    %1126 = vmatpush1.msra.mxu0 0.0
    %1127 = vmatprep.subr.mxu0 0.0
    %1128 = vmatpush1.msra.mxu0 0.0
    %1129 = vmatprep.subr.mxu0 0.0
    %1130 = vmatpush1.msra.mxu0 0.0
    %1131 = vmatprep.subr.mxu0 0.0
    %1132 = vmatpush1.msra.mxu0 0.0
    %1133 = vmatprep.mubr.f32.mxu0 0.0
    %1134 = vmatmul.mubr.f32.gmra.mrb[0].mxu0 %v953
    %v1135 = vpop.f32.mrb[0].mxu0
    %v1136 = vadd.f32 0.0, %v1135
    %v1137 = vpop.f32.mrb[0].mxu0
    %1138 = vmatprep.mubr.f32.mxu0 0.0
    %1139 = vmatmul.mubr.f32.gmra.mrb[0].mxu0 %v954
    %v1140 = vpop.f32.mrb[0].mxu0
    %v1141 = vadd.f32 0.0, %v1140
    %v1142 = vpop.f32.mrb[0].mxu0
    %1143 = vmatprep.mubr.f32.mxu0 0.0
    %1144 = vmatmul.mubr.f32.gmra.mrb[0].mxu0 %v955
    %v1145 = vpop.f32.mrb[0].mxu0
    %v1146 = vadd.f32 0.0, %v1145
    %v1147 = vpop.f32.mrb[0].mxu0
    %1148 = vmatprep.mubr.f32.mxu0 0.0
    %1149 = vmatmul.mubr.f32.gmra.mrb[0].mxu0 %v956
    %v1150 = vpop.f32.mrb[0].mxu0
    %v1151 = vadd.f32 0.0, %v1150
    %v1152 = vpop.f32.mrb[0].mxu0
    %1153 = vdwg.mxu0
    %s1154 = scalar_lea.vmem [#allocation10], 128
    %v1155 = vld [vmem:[%s1154] sm:$0xff]
    %v1156 = vld [vmem:[%s1154 + $0x8] sm:$0xff]
    %v1157 = vld [vmem:[%s1154 + $0x10] sm:$0xff]
    %v1158 = vld [vmem:[%s1154 + $0x18] sm:$0xff]
    %v1159 = vld [vmem:[%s1154 + $0x20] sm:$0xff]
    %v1160 = vld [vmem:[%s1154 + $0x28] sm:$0xff]
    %v1161 = vld [vmem:[%s1154 + $0x30] sm:$0xff]
    %v1162 = vld [vmem:[%s1154 + $0x38] sm:$0xff]
    %v1163 = vld [vmem:[%s1154 + $0x40] sm:$0xff]
    %v1164 = vld [vmem:[%s1154 + $0x48] sm:$0xff]
    %v1165 = vld [vmem:[%s1154 + $0x50] sm:$0xff]
    %v1166 = vld [vmem:[%s1154 + $0x58] sm:$0xff]
    %v1167 = vld [vmem:[%s1154 + $0x60] sm:$0xff]
    %v1168 = vld [vmem:[%s1154 + $0x68] sm:$0xff]
    %v1169 = vld [vmem:[%s1154 + $0x70] sm:$0xff]
    %v1170 = vld [vmem:[%s1154 + $0x78] sm:$0xff]
    %s1171 = scalar_lea.vmem [#allocation10], 256
    %v1172 = vld [vmem:[%s1171] sm:$0xff]
    %v1173 = vld [vmem:[%s1171 + $0x8] sm:$0xff]
    %v1174 = vld [vmem:[%s1171 + $0x10] sm:$0xff]
    %v1175 = vld [vmem:[%s1171 + $0x18] sm:$0xff]
    %v1176 = vld [vmem:[%s1171 + $0x20] sm:$0xff]
    %v1177 = vld [vmem:[%s1171 + $0x28] sm:$0xff]
    %v1178 = vld [vmem:[%s1171 + $0x30] sm:$0xff]
    %v1179 = vld [vmem:[%s1171 + $0x38] sm:$0xff]
    %v1180 = vld [vmem:[%s1171 + $0x40] sm:$0xff]
    %v1181 = vld [vmem:[%s1171 + $0x48] sm:$0xff]
    %v1182 = vld [vmem:[%s1171 + $0x50] sm:$0xff]
    %v1183 = vld [vmem:[%s1171 + $0x58] sm:$0xff]
    %v1184 = vld [vmem:[%s1171 + $0x60] sm:$0xff]
    %v1185 = vld [vmem:[%s1171 + $0x68] sm:$0xff]
    %v1186 = vld [vmem:[%s1171 + $0x70] sm:$0xff]
    %v1187 = vld [vmem:[%s1171 + $0x78] sm:$0xff]
    %1188 = vmatprep.subr.mxu0 0.0
    %1189 = vmatpush1.msra.mxu0 %v1172
    %1190 = vmatprep.subr.mxu0 0.0
    %1191 = vmatpush1.msra.mxu0 %v1173
    %1192 = vmatprep.subr.mxu0 0.0
    %1193 = vmatpush1.msra.mxu0 %v1174
    %1194 = vmatprep.subr.mxu0 0.0
    %1195 = vmatpush1.msra.mxu0 %v1175
    %1196 = vmatprep.subr.mxu0 0.0
    %1197 = vmatpush1.msra.mxu0 %v1176
    %1198 = vmatprep.subr.mxu0 0.0
    %1199 = vmatpush1.msra.mxu0 %v1177
    %1200 = vmatprep.subr.mxu0 0.0
    %1201 = vmatpush1.msra.mxu0 %v1178
    %1202 = vmatprep.subr.mxu0 0.0
    %1203 = vmatpush1.msra.mxu0 %v1179
    %1204 = vmatprep.subr.mxu0 0.0
    %1205 = vmatpush1.msra.mxu0 %v1180
    %1206 = vmatprep.subr.mxu0 0.0
    %1207 = vmatpush1.msra.mxu0 %v1181
    %1208 = vmatprep.subr.mxu0 0.0
    %1209 = vmatpush1.msra.mxu0 %v1182
    %1210 = vmatprep.subr.mxu0 0.0
    %1211 = vmatpush1.msra.mxu0 %v1183
    %1212 = vmatprep.subr.mxu0 0.0
    %1213 = vmatpush1.msra.mxu0 %v1184
    %1214 = vmatprep.subr.mxu0 0.0
    %1215 = vmatpush1.msra.mxu0 %v1185
    %1216 = vmatprep.subr.mxu0 0.0
    %1217 = vmatpush1.msra.mxu0 %v1186
    %1218 = vmatprep.subr.mxu0 0.0
    %1219 = vmatpush1.msra.mxu0 %v1187
    %1220 = vmatprep.subr.mxu0 0.0
    %1221 = vmatpush1.msra.mxu0 0.0
    %1222 = vmatprep.subr.mxu0 0.0
    %1223 = vmatpush1.msra.mxu0 0.0
    %1224 = vmatprep.subr.mxu0 0.0
    %1225 = vmatpush1.msra.mxu0 0.0
    %1226 = vmatprep.subr.mxu0 0.0
    %1227 = vmatpush1.msra.mxu0 0.0
    %1228 = vmatprep.subr.mxu0 0.0
    %1229 = vmatpush1.msra.mxu0 0.0
    %1230 = vmatprep.subr.mxu0 0.0
    %1231 = vmatpush1.msra.mxu0 0.0
    %1232 = vmatprep.subr.mxu0 0.0
    %1233 = vmatpush1.msra.mxu0 0.0
    %1234 = vmatprep.subr.mxu0 0.0
    %1235 = vmatpush1.msra.mxu0 0.0
    %1236 = vmatprep.subr.mxu0 0.0
    %1237 = vmatpush1.msra.mxu0 0.0
    %1238 = vmatprep.subr.mxu0 0.0
    %1239 = vmatpush1.msra.mxu0 0.0
    %1240 = vmatprep.subr.mxu0 0.0
    %1241 = vmatpush1.msra.mxu0 0.0
    %1242 = vmatprep.subr.mxu0 0.0
    %1243 = vmatpush1.msra.mxu0 0.0
    %1244 = vmatprep.subr.mxu0 0.0
    %1245 = vmatpush1.msra.mxu0 0.0
    %1246 = vmatprep.subr.mxu0 0.0
    %1247 = vmatpush1.msra.mxu0 0.0
    %1248 = vmatprep.subr.mxu0 0.0
    %1249 = vmatpush1.msra.mxu0 0.0
    %1250 = vmatprep.subr.mxu0 0.0
    %1251 = vmatpush1.msra.mxu0 0.0
    %1252 = vmatprep.mubr.f32.mxu0 0.0
    %1253 = vmatmul.mubr.f32.gmra.mrb[0].mxu0 %v953
    %v1254 = vpop.f32.mrb[0].mxu0
    %v1255 = vadd.f32 0.0, %v1254
    %v1256 = vpop.f32.mrb[0].mxu0
    %1257 = vmatprep.mubr.f32.mxu0 0.0
    %1258 = vmatmul.mubr.f32.gmra.mrb[0].mxu0 %v954
    %v1259 = vpop.f32.mrb[0].mxu0
    %v1260 = vadd.f32 0.0, %v1259
    %v1261 = vpop.f32.mrb[0].mxu0
    %1262 = vmatprep.mubr.f32.mxu0 0.0
    %1263 = vmatmul.mubr.f32.gmra.mrb[0].mxu0 %v955
    %v1264 = vpop.f32.mrb[0].mxu0
    %v1265 = vadd.f32 0.0, %v1264
    %v1266 = vpop.f32.mrb[0].mxu0
    %1267 = vmatprep.mubr.f32.mxu0 0.0
    %1268 = vmatmul.mubr.f32.gmra.mrb[0].mxu0 %v956
    %v1269 = vpop.f32.mrb[0].mxu0
    %v1270 = vadd.f32 0.0, %v1269
    %v1271 = vpop.f32.mrb[0].mxu0
    %1272 = vdwg.mxu0
    %1273 = vmatprep.subr.mxu0 0.0
    %1274 = vmatpush1.msra.mxu0 %v1136
    %1275 = vmatprep.subr.mxu0 0.0
    %1276 = vmatpush1.msra.mxu0 %v1141
    %1277 = vmatprep.subr.mxu0 0.0
    %1278 = vmatpush1.msra.mxu0 %v1146
    %1279 = vmatprep.subr.mxu0 0.0
    %1280 = vmatpush1.msra.mxu0 %v1151
    %1281 = vmatprep.subr.mxu0 0.0
    %1282 = vmatpush1.msra.mxu0 0.0
    %1283 = vmatprep.subr.mxu0 0.0
    %1284 = vmatpush1.msra.mxu0 0.0
    %1285 = vmatprep.subr.mxu0 0.0
    %1286 = vmatpush1.msra.mxu0 0.0
    %1287 = vmatprep.subr.mxu0 0.0
    %1288 = vmatpush1.msra.mxu0 0.0
    %1289 = vmatprep.subr.mxu0 0.0
    %1290 = vmatpush1.msra.mxu0 0.0
    %1291 = vmatprep.subr.mxu0 0.0
    %1292 = vmatpush1.msra.mxu0 0.0
    %1293 = vmatprep.subr.mxu0 0.0
    %1294 = vmatpush1.msra.mxu0 0.0
    %1295 = vmatprep.subr.mxu0 0.0
    %1296 = vmatpush1.msra.mxu0 0.0
    %1297 = vmatprep.subr.mxu0 0.0
    %1298 = vmatpush1.msra.mxu0 0.0
    %1299 = vmatprep.subr.mxu0 0.0
    %1300 = vmatpush1.msra.mxu0 0.0
    %1301 = vmatprep.subr.mxu0 0.0
    %1302 = vmatpush1.msra.mxu0 0.0
    %1303 = vmatprep.subr.mxu0 0.0
    %1304 = vmatpush1.msra.mxu0 0.0
    %1305 = vmatprep.subr.mxu0 0.0
    %1306 = vmatpush1.msra.mxu0 0.0
    %1307 = vmatprep.subr.mxu0 0.0
    %1308 = vmatpush1.msra.mxu0 0.0
    %1309 = vmatprep.subr.mxu0 0.0
    %1310 = vmatpush1.msra.mxu0 0.0
    %1311 = vmatprep.subr.mxu0 0.0
    %1312 = vmatpush1.msra.mxu0 0.0
    %1313 = vmatprep.subr.mxu0 0.0
    %1314 = vmatpush1.msra.mxu0 0.0
    %1315 = vmatprep.subr.mxu0 0.0
    %1316 = vmatpush1.msra.mxu0 0.0
    %1317 = vmatprep.subr.mxu0 0.0
    %1318 = vmatpush1.msra.mxu0 0.0
    %1319 = vmatprep.subr.mxu0 0.0
    %1320 = vmatpush1.msra.mxu0 0.0
    %1321 = vmatprep.subr.mxu0 0.0
    %1322 = vmatpush1.msra.mxu0 0.0
    %1323 = vmatprep.subr.mxu0 0.0
    %1324 = vmatpush1.msra.mxu0 0.0
    %1325 = vmatprep.subr.mxu0 0.0
    %1326 = vmatpush1.msra.mxu0 0.0
    %1327 = vmatprep.subr.mxu0 0.0
    %1328 = vmatpush1.msra.mxu0 0.0
    %1329 = vmatprep.subr.mxu0 0.0
    %1330 = vmatpush1.msra.mxu0 0.0
    %1331 = vmatprep.subr.mxu0 0.0
    %1332 = vmatpush1.msra.mxu0 0.0
    %1333 = vmatprep.subr.mxu0 0.0
    %1334 = vmatpush1.msra.mxu0 0.0
    %1335 = vmatprep.subr.mxu0 0.0
    %1336 = vmatpush1.msra.mxu0 0.0
    %1337 = vmatprep.mubr.f32.mxu0 0.0
    %1338 = vmatmul.mubr.f32.gmra.mrb[0].mxu0 %v660
    %v1339 = vpop.f32.mrb[0].mxu0
    %v1340 = vadd.f32 0.0, %v1339
    %v1341 = vpop.f32.mrb[0].mxu0
    %1342 = vmatprep.mubr.f32.mxu0 0.0
    %1343 = vmatmul.mubr.f32.gmra.mrb[0].mxu0 %v663
    %v1344 = vpop.f32.mrb[0].mxu0
    %v1345 = vadd.f32 0.0, %v1344
    %v1346 = vpop.f32.mrb[0].mxu0
    %1347 = vmatprep.mubr.f32.mxu0 0.0
    %1348 = vmatmul.mubr.f32.gmra.mrb[0].mxu0 %v666
    %v1349 = vpop.f32.mrb[0].mxu0
    %v1350 = vadd.f32 0.0, %v1349
    %v1351 = vpop.f32.mrb[0].mxu0
    %1352 = vmatprep.mubr.f32.mxu0 0.0
    %1353 = vmatmul.mubr.f32.gmra.mrb[0].mxu0 %v669
    %v1354 = vpop.f32.mrb[0].mxu0
    %v1355 = vadd.f32 0.0, %v1354
    %v1356 = vpop.f32.mrb[0].mxu0
    %1357 = vdwg.mxu0
    %1358 = vmatprep.subr.mxu0 0.0
    %1359 = vmatpush1.msra.mxu0 %v1155
    %1360 = vmatprep.subr.mxu0 0.0
    %1361 = vmatpush1.msra.mxu0 %v1156
    %1362 = vmatprep.subr.mxu0 0.0
    %1363 = vmatpush1.msra.mxu0 %v1157
    %1364 = vmatprep.subr.mxu0 0.0
    %1365 = vmatpush1.msra.mxu0 %v1158
    %1366 = vmatprep.subr.mxu0 0.0
    %1367 = vmatpush1.msra.mxu0 %v1159
    %1368 = vmatprep.subr.mxu0 0.0
    %1369 = vmatpush1.msra.mxu0 %v1160
    %1370 = vmatprep.subr.mxu0 0.0
    %1371 = vmatpush1.msra.mxu0 %v1161
    %1372 = vmatprep.subr.mxu0 0.0
    %1373 = vmatpush1.msra.mxu0 %v1162
    %1374 = vmatprep.subr.mxu0 0.0
    %1375 = vmatpush1.msra.mxu0 %v1163
    %1376 = vmatprep.subr.mxu0 0.0
    %1377 = vmatpush1.msra.mxu0 %v1164
    %1378 = vmatprep.subr.mxu0 0.0
    %1379 = vmatpush1.msra.mxu0 %v1165
    %1380 = vmatprep.subr.mxu0 0.0
    %1381 = vmatpush1.msra.mxu0 %v1166
    %1382 = vmatprep.subr.mxu0 0.0
    %1383 = vmatpush1.msra.mxu0 %v1167
    %1384 = vmatprep.subr.mxu0 0.0
    %1385 = vmatpush1.msra.mxu0 %v1168
    %1386 = vmatprep.subr.mxu0 0.0
    %1387 = vmatpush1.msra.mxu0 %v1169
    %1388 = vmatprep.subr.mxu0 0.0
    %1389 = vmatpush1.msra.mxu0 %v1170
    %1390 = vmatprep.subr.mxu0 0.0
    %1391 = vmatpush1.msra.mxu0 0.0
    %1392 = vmatprep.subr.mxu0 0.0
    %1393 = vmatpush1.msra.mxu0 0.0
    %1394 = vmatprep.subr.mxu0 0.0
    %1395 = vmatpush1.msra.mxu0 0.0
    %1396 = vmatprep.subr.mxu0 0.0
    %1397 = vmatpush1.msra.mxu0 0.0
    %1398 = vmatprep.subr.mxu0 0.0
    %1399 = vmatpush1.msra.mxu0 0.0
    %1400 = vmatprep.subr.mxu0 0.0
    %1401 = vmatpush1.msra.mxu0 0.0
    %1402 = vmatprep.subr.mxu0 0.0
    %1403 = vmatpush1.msra.mxu0 0.0
    %1404 = vmatprep.subr.mxu0 0.0
    %1405 = vmatpush1.msra.mxu0 0.0
    %1406 = vmatprep.subr.mxu0 0.0
    %1407 = vmatpush1.msra.mxu0 0.0
    %1408 = vmatprep.subr.mxu0 0.0
    %1409 = vmatpush1.msra.mxu0 0.0
    %1410 = vmatprep.subr.mxu0 0.0
    %1411 = vmatpush1.msra.mxu0 0.0
    %1412 = vmatprep.subr.mxu0 0.0
    %1413 = vmatpush1.msra.mxu0 0.0
    %1414 = vmatprep.subr.mxu0 0.0
    %1415 = vmatpush1.msra.mxu0 0.0
    %1416 = vmatprep.subr.mxu0 0.0
    %1417 = vmatpush1.msra.mxu0 0.0
    %1418 = vmatprep.subr.mxu0 0.0
    %1419 = vmatpush1.msra.mxu0 0.0
    %1420 = vmatprep.subr.mxu0 0.0
    %1421 = vmatpush1.msra.mxu0 0.0
    %1422 = vmatprep.mubr.f32.mxu0 0.0
    %1423 = vmatmul.mubr.f32.gmra.mrb[0].mxu0 %v953
    %v1424 = vpop.f32.mrb[0].mxu0
    %v1425 = vadd.f32 %v1340, %v1424
    %v1426 = vpop.f32.mrb[0].mxu0
    %1427 = vmatprep.mubr.f32.mxu0 0.0
    %1428 = vmatmul.mubr.f32.gmra.mrb[0].mxu0 %v954
    %v1429 = vpop.f32.mrb[0].mxu0
    %v1430 = vadd.f32 %v1345, %v1429
    %v1431 = vpop.f32.mrb[0].mxu0
    %1432 = vmatprep.mubr.f32.mxu0 0.0
    %1433 = vmatmul.mubr.f32.gmra.mrb[0].mxu0 %v955
    %v1434 = vpop.f32.mrb[0].mxu0
    %v1435 = vadd.f32 %v1350, %v1434
    %v1436 = vpop.f32.mrb[0].mxu0
    %1437 = vmatprep.mubr.f32.mxu0 0.0
    %1438 = vmatmul.mubr.f32.gmra.mrb[0].mxu0 %v956
    %v1439 = vpop.f32.mrb[0].mxu0
    %v1440 = vadd.f32 %v1355, %v1439
    %v1441 = vpop.f32.mrb[0].mxu0
    %1442 = vdwg.mxu0
    %1443 = vmatprep.subr.mxu0 0.0
    %1444 = vmatpush1.msra.mxu0 %v1255
    %1445 = vmatprep.subr.mxu0 0.0
    %1446 = vmatpush1.msra.mxu0 %v1260
    %1447 = vmatprep.subr.mxu0 0.0
    %1448 = vmatpush1.msra.mxu0 %v1265
    %1449 = vmatprep.subr.mxu0 0.0
    %1450 = vmatpush1.msra.mxu0 %v1270
    %1451 = vmatprep.subr.mxu0 0.0
    %1452 = vmatpush1.msra.mxu0 0.0
    %1453 = vmatprep.subr.mxu0 0.0
    %1454 = vmatpush1.msra.mxu0 0.0
    %1455 = vmatprep.subr.mxu0 0.0
    %1456 = vmatpush1.msra.mxu0 0.0
    %1457 = vmatprep.subr.mxu0 0.0
    %1458 = vmatpush1.msra.mxu0 0.0
    %1459 = vmatprep.subr.mxu0 0.0
    %1460 = vmatpush1.msra.mxu0 0.0
    %1461 = vmatprep.subr.mxu0 0.0
    %1462 = vmatpush1.msra.mxu0 0.0
    %1463 = vmatprep.subr.mxu0 0.0
    %1464 = vmatpush1.msra.mxu0 0.0
    %1465 = vmatprep.subr.mxu0 0.0
    %1466 = vmatpush1.msra.mxu0 0.0
    %1467 = vmatprep.subr.mxu0 0.0
    %1468 = vmatpush1.msra.mxu0 0.0
    %1469 = vmatprep.subr.mxu0 0.0
    %1470 = vmatpush1.msra.mxu0 0.0
    %1471 = vmatprep.subr.mxu0 0.0
    %1472 = vmatpush1.msra.mxu0 0.0
    %1473 = vmatprep.subr.mxu0 0.0
    %1474 = vmatpush1.msra.mxu0 0.0
    %1475 = vmatprep.subr.mxu0 0.0
    %1476 = vmatpush1.msra.mxu0 0.0
    %1477 = vmatprep.subr.mxu0 0.0
    %1478 = vmatpush1.msra.mxu0 0.0
    %1479 = vmatprep.subr.mxu0 0.0
    %1480 = vmatpush1.msra.mxu0 0.0
    %1481 = vmatprep.subr.mxu0 0.0
    %1482 = vmatpush1.msra.mxu0 0.0
    %1483 = vmatprep.subr.mxu0 0.0
    %1484 = vmatpush1.msra.mxu0 0.0
    %1485 = vmatprep.subr.mxu0 0.0
    %1486 = vmatpush1.msra.mxu0 0.0
    %1487 = vmatprep.subr.mxu0 0.0
    %1488 = vmatpush1.msra.mxu0 0.0
    %1489 = vmatprep.subr.mxu0 0.0
    %1490 = vmatpush1.msra.mxu0 0.0
    %1491 = vmatprep.subr.mxu0 0.0
    %1492 = vmatpush1.msra.mxu0 0.0
    %1493 = vmatprep.subr.mxu0 0.0
    %1494 = vmatpush1.msra.mxu0 0.0
    %1495 = vmatprep.subr.mxu0 0.0
    %1496 = vmatpush1.msra.mxu0 0.0
    %1497 = vmatprep.subr.mxu0 0.0
    %1498 = vmatpush1.msra.mxu0 0.0
    %1499 = vmatprep.subr.mxu0 0.0
    %1500 = vmatpush1.msra.mxu0 0.0
    %1501 = vmatprep.subr.mxu0 0.0
    %1502 = vmatpush1.msra.mxu0 0.0
    %1503 = vmatprep.subr.mxu0 0.0
    %1504 = vmatpush1.msra.mxu0 0.0
    %1505 = vmatprep.subr.mxu0 0.0
    %1506 = vmatpush1.msra.mxu0 0.0
    %1507 = vmatprep.mubr.f32.mxu0 0.0
    %1508 = vmatmul.mubr.f32.gmra.mrb[0].mxu0 %v842
    %v1509 = vpop.f32.mrb[0].mxu0
    %v1510 = vadd.f32 0.0, %v1509
    %v1511 = vpop.f32.mrb[0].mxu0
    %1512 = vmatprep.mubr.f32.mxu0 0.0
    %1513 = vmatmul.mubr.f32.gmra.mrb[0].mxu0 %v845
    %v1514 = vpop.f32.mrb[0].mxu0
    %v1515 = vadd.f32 0.0, %v1514
    %v1516 = vpop.f32.mrb[0].mxu0
    %1517 = vmatprep.mubr.f32.mxu0 0.0
    %1518 = vmatmul.mubr.f32.gmra.mrb[0].mxu0 %v848
    %v1519 = vpop.f32.mrb[0].mxu0
    %v1520 = vadd.f32 0.0, %v1519
    %v1521 = vpop.f32.mrb[0].mxu0
    %1522 = vmatprep.mubr.f32.mxu0 0.0
    %1523 = vmatmul.mubr.f32.gmra.mrb[0].mxu0 %v851
    %v1524 = vpop.f32.mrb[0].mxu0
    %v1525 = vadd.f32 0.0, %v1524
    %v1526 = vpop.f32.mrb[0].mxu0
    %1527 = vdwg.mxu0
    %v1528 = vadd.f32 %v1425, %v1510
    %v1529 = vadd.f32 %v1430, %v1515
    %v1530 = vadd.f32 %v1435, %v1520
    %v1531 = vadd.f32 %v1440, %v1525
    %v1532 = vld [vmem:[#allocation12] sm:$0x1]
    %v1534 = vlaneseq
    %v1535 = vshrl.u32 %v1534, 7
    %v1536 = vsub.s32 0, %v1535
    %v1537 = vrot.slane %v1532, %v1536
    %v1539 = vadd.f32 %v1528, %v1537
    %v1540 = vadd.f32 %v1529, %v1537
    %v1541 = vadd.f32 %v1530, %v1537
    %v1542 = vadd.f32 %v1531, %v1537
    %v1543 = vadd.f32 %v1539, %v1035
    %v1544 = vadd.f32 %v1540, %v1040
    %v1545 = vadd.f32 %v1541, %v1045
    %v1546 = vadd.f32 %v1542, %v1050
    %v1547 = vmax.f32 %v1543, 0.0
    %v1548 = vmax.f32 %v1544, 0.0
    %v1549 = vmax.f32 %v1545, 0.0
    %v1550 = vmax.f32 %v1546, 0.0
    %v1551 = vld [vmem:[#allocation13] sm:$0xff]
    %v1552 = vld [vmem:[#allocation13 + $0x8] sm:$0xff]
    %v1553 = vld [vmem:[#allocation13 + $0x10] sm:$0xff]
    %v1554 = vld [vmem:[#allocation13 + $0x18] sm:$0xff]
    %v1555 = vld [vmem:[#allocation13 + $0x20] sm:$0xff]
    %v1556 = vld [vmem:[#allocation13 + $0x28] sm:$0xff]
    %v1557 = vld [vmem:[#allocation13 + $0x30] sm:$0xff]
    %v1558 = vld [vmem:[#allocation13 + $0x38] sm:$0xff]
    %v1559 = vld [vmem:[#allocation13 + $0x40] sm:$0xff]
    %v1560 = vld [vmem:[#allocation13 + $0x48] sm:$0xff]
    %v1561 = vld [vmem:[#allocation13 + $0x50] sm:$0xff]
    %v1562 = vld [vmem:[#allocation13 + $0x58] sm:$0xff]
    %v1563 = vld [vmem:[#allocation13 + $0x60] sm:$0xff]
    %v1564 = vld [vmem:[#allocation13 + $0x68] sm:$0xff]
    %v1565 = vld [vmem:[#allocation13 + $0x70] sm:$0xff]
    %v1566 = vld [vmem:[#allocation13 + $0x78] sm:$0xff]
    %1567 = vmatprep.subr.mxu0 0.0
    %1568 = vmatpush1.msra.mxu0 %v1551
    %1569 = vmatprep.subr.mxu0 0.0
    %1570 = vmatpush1.msra.mxu0 %v1552
    %1571 = vmatprep.subr.mxu0 0.0
    %1572 = vmatpush1.msra.mxu0 %v1553
    %1573 = vmatprep.subr.mxu0 0.0
    %1574 = vmatpush1.msra.mxu0 %v1554
    %1575 = vmatprep.subr.mxu0 0.0
    %1576 = vmatpush1.msra.mxu0 %v1555
    %1577 = vmatprep.subr.mxu0 0.0
    %1578 = vmatpush1.msra.mxu0 %v1556
    %1579 = vmatprep.subr.mxu0 0.0
    %1580 = vmatpush1.msra.mxu0 %v1557
    %1581 = vmatprep.subr.mxu0 0.0
    %1582 = vmatpush1.msra.mxu0 %v1558
    %1583 = vmatprep.subr.mxu0 0.0
    %1584 = vmatpush1.msra.mxu0 %v1559
    %1585 = vmatprep.subr.mxu0 0.0
    %1586 = vmatpush1.msra.mxu0 %v1560
    %1587 = vmatprep.subr.mxu0 0.0
    %1588 = vmatpush1.msra.mxu0 %v1561
    %1589 = vmatprep.subr.mxu0 0.0
    %1590 = vmatpush1.msra.mxu0 %v1562
    %1591 = vmatprep.subr.mxu0 0.0
    %1592 = vmatpush1.msra.mxu0 %v1563
    %1593 = vmatprep.subr.mxu0 0.0
    %1594 = vmatpush1.msra.mxu0 %v1564
    %1595 = vmatprep.subr.mxu0 0.0
    %1596 = vmatpush1.msra.mxu0 %v1565
    %1597 = vmatprep.subr.mxu0 0.0
    %1598 = vmatpush1.msra.mxu0 %v1566
    %1599 = vmatprep.subr.mxu0 0.0
    %1600 = vmatpush1.msra.mxu0 0.0
    %1601 = vmatprep.subr.mxu0 0.0
    %1602 = vmatpush1.msra.mxu0 0.0
    %1603 = vmatprep.subr.mxu0 0.0
    %1604 = vmatpush1.msra.mxu0 0.0
    %1605 = vmatprep.subr.mxu0 0.0
    %1606 = vmatpush1.msra.mxu0 0.0
    %1607 = vmatprep.subr.mxu0 0.0
    %1608 = vmatpush1.msra.mxu0 0.0
    %1609 = vmatprep.subr.mxu0 0.0
    %1610 = vmatpush1.msra.mxu0 0.0
    %1611 = vmatprep.subr.mxu0 0.0
    %1612 = vmatpush1.msra.mxu0 0.0
    %1613 = vmatprep.subr.mxu0 0.0
    %1614 = vmatpush1.msra.mxu0 0.0
    %1615 = vmatprep.subr.mxu0 0.0
    %1616 = vmatpush1.msra.mxu0 0.0
    %1617 = vmatprep.subr.mxu0 0.0
    %1618 = vmatpush1.msra.mxu0 0.0
    %1619 = vmatprep.subr.mxu0 0.0
    %1620 = vmatpush1.msra.mxu0 0.0
    %1621 = vmatprep.subr.mxu0 0.0
    %1622 = vmatpush1.msra.mxu0 0.0
    %1623 = vmatprep.subr.mxu0 0.0
    %1624 = vmatpush1.msra.mxu0 0.0
    %1625 = vmatprep.subr.mxu0 0.0
    %1626 = vmatpush1.msra.mxu0 0.0
    %1627 = vmatprep.subr.mxu0 0.0
    %1628 = vmatpush1.msra.mxu0 0.0
    %1629 = vmatprep.subr.mxu0 0.0
    %1630 = vmatpush1.msra.mxu0 0.0
    %1631 = vmatprep.mubr.f32.mxu0 0.0
    %1632 = vmatmul.mubr.f32.gmra.mrb[0].mxu0 %v1547
    %v1633 = vpop.f32.mrb[0].mxu0
    %v1634 = vadd.f32 0.0, %v1633
    %v1635 = vpop.f32.mrb[0].mxu0
    %1636 = vmatprep.mubr.f32.mxu0 0.0
    %1637 = vmatmul.mubr.f32.gmra.mrb[0].mxu0 %v1548
    %v1638 = vpop.f32.mrb[0].mxu0
    %v1639 = vadd.f32 0.0, %v1638
    %v1640 = vpop.f32.mrb[0].mxu0
    %1641 = vmatprep.mubr.f32.mxu0 0.0
    %1642 = vmatmul.mubr.f32.gmra.mrb[0].mxu0 %v1549
    %v1643 = vpop.f32.mrb[0].mxu0
    %v1644 = vadd.f32 0.0, %v1643
    %v1645 = vpop.f32.mrb[0].mxu0
    %1646 = vmatprep.mubr.f32.mxu0 0.0
    %1647 = vmatmul.mubr.f32.gmra.mrb[0].mxu0 %v1550
    %v1648 = vpop.f32.mrb[0].mxu0
    %v1649 = vadd.f32 0.0, %v1648
    %v1650 = vpop.f32.mrb[0].mxu0
    %1651 = vdwg.mxu0
    %v1652 = vld [vmem:[#allocation15] sm:$0xff]
    %v1653 = vld [vmem:[#allocation15 + $0x8] sm:$0xff]
    %v1654 = vld [vmem:[#allocation15 + $0x10] sm:$0xff]
    %v1655 = vld [vmem:[#allocation15 + $0x18] sm:$0xff]
    %v1656 = vld [vmem:[#allocation15 + $0x20] sm:$0xff]
    %v1657 = vld [vmem:[#allocation15 + $0x28] sm:$0xff]
    %v1658 = vld [vmem:[#allocation15 + $0x30] sm:$0xff]
    %v1659 = vld [vmem:[#allocation15 + $0x38] sm:$0xff]
    %v1660 = vld [vmem:[#allocation15 + $0x40] sm:$0xff]
    %v1661 = vld [vmem:[#allocation15 + $0x48] sm:$0xff]
    %v1662 = vld [vmem:[#allocation15 + $0x50] sm:$0xff]
    %v1663 = vld [vmem:[#allocation15 + $0x58] sm:$0xff]
    %v1664 = vld [vmem:[#allocation15 + $0x60] sm:$0xff]
    %v1665 = vld [vmem:[#allocation15 + $0x68] sm:$0xff]
    %v1666 = vld [vmem:[#allocation15 + $0x70] sm:$0xff]
    %v1667 = vld [vmem:[#allocation15 + $0x78] sm:$0xff]
    %1668 = vmatprep.subr.mxu0 0.0
    %1669 = vmatpush1.msra.mxu0 %v1652
    %1670 = vmatprep.subr.mxu0 0.0
    %1671 = vmatpush1.msra.mxu0 %v1653
    %1672 = vmatprep.subr.mxu0 0.0
    %1673 = vmatpush1.msra.mxu0 %v1654
    %1674 = vmatprep.subr.mxu0 0.0
    %1675 = vmatpush1.msra.mxu0 %v1655
    %1676 = vmatprep.subr.mxu0 0.0
    %1677 = vmatpush1.msra.mxu0 %v1656
    %1678 = vmatprep.subr.mxu0 0.0
    %1679 = vmatpush1.msra.mxu0 %v1657
    %1680 = vmatprep.subr.mxu0 0.0
    %1681 = vmatpush1.msra.mxu0 %v1658
    %1682 = vmatprep.subr.mxu0 0.0
    %1683 = vmatpush1.msra.mxu0 %v1659
    %1684 = vmatprep.subr.mxu0 0.0
    %1685 = vmatpush1.msra.mxu0 %v1660
    %1686 = vmatprep.subr.mxu0 0.0
    %1687 = vmatpush1.msra.mxu0 %v1661
    %1688 = vmatprep.subr.mxu0 0.0
    %1689 = vmatpush1.msra.mxu0 %v1662
    %1690 = vmatprep.subr.mxu0 0.0
    %1691 = vmatpush1.msra.mxu0 %v1663
    %1692 = vmatprep.subr.mxu0 0.0
    %1693 = vmatpush1.msra.mxu0 %v1664
    %1694 = vmatprep.subr.mxu0 0.0
    %1695 = vmatpush1.msra.mxu0 %v1665
    %1696 = vmatprep.subr.mxu0 0.0
    %1697 = vmatpush1.msra.mxu0 %v1666
    %1698 = vmatprep.subr.mxu0 0.0
    %1699 = vmatpush1.msra.mxu0 %v1667
    %1700 = vmatprep.subr.mxu0 0.0
    %1701 = vmatpush1.msra.mxu0 0.0
    %1702 = vmatprep.subr.mxu0 0.0
    %1703 = vmatpush1.msra.mxu0 0.0
    %1704 = vmatprep.subr.mxu0 0.0
    %1705 = vmatpush1.msra.mxu0 0.0
    %1706 = vmatprep.subr.mxu0 0.0
    %1707 = vmatpush1.msra.mxu0 0.0
    %1708 = vmatprep.subr.mxu0 0.0
    %1709 = vmatpush1.msra.mxu0 0.0
    %1710 = vmatprep.subr.mxu0 0.0
    %1711 = vmatpush1.msra.mxu0 0.0
    %1712 = vmatprep.subr.mxu0 0.0
    %1713 = vmatpush1.msra.mxu0 0.0
    %1714 = vmatprep.subr.mxu0 0.0
    %1715 = vmatpush1.msra.mxu0 0.0
    %1716 = vmatprep.subr.mxu0 0.0
    %1717 = vmatpush1.msra.mxu0 0.0
    %1718 = vmatprep.subr.mxu0 0.0
    %1719 = vmatpush1.msra.mxu0 0.0
    %1720 = vmatprep.subr.mxu0 0.0
    %1721 = vmatpush1.msra.mxu0 0.0
    %1722 = vmatprep.subr.mxu0 0.0
    %1723 = vmatpush1.msra.mxu0 0.0
    %1724 = vmatprep.subr.mxu0 0.0
    %1725 = vmatpush1.msra.mxu0 0.0
    %1726 = vmatprep.subr.mxu0 0.0
    %1727 = vmatpush1.msra.mxu0 0.0
    %1728 = vmatprep.subr.mxu0 0.0
    %1729 = vmatpush1.msra.mxu0 0.0
    %1730 = vmatprep.subr.mxu0 0.0
    %1731 = vmatpush1.msra.mxu0 0.0
    %1732 = vmatprep.mubr.f32.mxu0 0.0
    %1733 = vmatmul.mubr.f32.gmra.mrb[0].mxu0 %v1547
    %v1734 = vpop.f32.mrb[0].mxu0
    %v1735 = vadd.f32 0.0, %v1734
    %v1736 = vpop.f32.mrb[0].mxu0
    %1737 = vmatprep.mubr.f32.mxu0 0.0
    %1738 = vmatmul.mubr.f32.gmra.mrb[0].mxu0 %v1548
    %v1739 = vpop.f32.mrb[0].mxu0
    %v1740 = vadd.f32 0.0, %v1739
    %v1741 = vpop.f32.mrb[0].mxu0
    %1742 = vmatprep.mubr.f32.mxu0 0.0
    %1743 = vmatmul.mubr.f32.gmra.mrb[0].mxu0 %v1549
    %v1744 = vpop.f32.mrb[0].mxu0
    %v1745 = vadd.f32 0.0, %v1744
    %v1746 = vpop.f32.mrb[0].mxu0
    %1747 = vmatprep.mubr.f32.mxu0 0.0
    %1748 = vmatmul.mubr.f32.gmra.mrb[0].mxu0 %v1550
    %v1749 = vpop.f32.mrb[0].mxu0
    %v1750 = vadd.f32 0.0, %v1749
    %v1751 = vpop.f32.mrb[0].mxu0
    %1752 = vdwg.mxu0
    %v1753 = vmax.f32 %v1634, %v1735
    %v1754 = vmax.f32 %v1639, %v1740
    %v1755 = vmax.f32 %v1644, %v1745
    %v1756 = vmax.f32 %v1649, %v1750
    %v1757 = vld [vmem:[#allocation16] sm:$0xff]
    %v1758 = vld [vmem:[#allocation16 + $0x8] sm:$0xff]
    %v1759 = vld [vmem:[#allocation16 + $0x10] sm:$0xff]
    %v1760 = vld [vmem:[#allocation16 + $0x18] sm:$0xff]
    %v1761 = vld [vmem:[#allocation16 + $0x20] sm:$0xff]
    %v1762 = vld [vmem:[#allocation16 + $0x28] sm:$0xff]
    %v1763 = vld [vmem:[#allocation16 + $0x30] sm:$0xff]
    %v1764 = vld [vmem:[#allocation16 + $0x38] sm:$0xff]
    %vm1765 = vcmask 523264
    %v1767 = vsel %vm1765, %v1753, 0
    %v1770 = vsel %vm1765, %v1754, 0
    %v1773 = vsel %vm1765, %v1755, 0
    %v1776 = vsel %vm1765, %v1756, 0
    %1778 = vmatprep.subr.mxu0 0.0
    %1779 = vmatpush1.msra.mxu0 %v1757
    %1780 = vmatprep.subr.mxu0 0.0
    %1781 = vmatpush1.msra.mxu0 %v1758
    %1782 = vmatprep.subr.mxu0 0.0
    %1783 = vmatpush1.msra.mxu0 %v1759
    %1784 = vmatprep.subr.mxu0 0.0
    %1785 = vmatpush1.msra.mxu0 %v1760
    %1786 = vmatprep.subr.mxu0 0.0
    %1787 = vmatpush1.msra.mxu0 %v1761
    %1788 = vmatprep.subr.mxu0 0.0
    %1789 = vmatpush1.msra.mxu0 %v1762
    %1790 = vmatprep.subr.mxu0 0.0
    %1791 = vmatpush1.msra.mxu0 %v1763
    %1792 = vmatprep.subr.mxu0 0.0
    %1793 = vmatpush1.msra.mxu0 %v1764
    %1794 = vmatprep.subr.mxu0 0.0
    %1795 = vmatpush1.msra.mxu0 0.0
    %1796 = vmatprep.subr.mxu0 0.0
    %1797 = vmatpush1.msra.mxu0 0.0
    %1798 = vmatprep.subr.mxu0 0.0
    %1799 = vmatpush1.msra.mxu0 0.0
    %1800 = vmatprep.subr.mxu0 0.0
    %1801 = vmatpush1.msra.mxu0 0.0
    %1802 = vmatprep.subr.mxu0 0.0
    %1803 = vmatpush1.msra.mxu0 0.0
    %1804 = vmatprep.subr.mxu0 0.0
    %1805 = vmatpush1.msra.mxu0 0.0
    %1806 = vmatprep.subr.mxu0 0.0
    %1807 = vmatpush1.msra.mxu0 0.0
    %1808 = vmatprep.subr.mxu0 0.0
    %1809 = vmatpush1.msra.mxu0 0.0
    %1810 = vmatprep.subr.mxu0 0.0
    %1811 = vmatpush1.msra.mxu0 0.0
    %1812 = vmatprep.subr.mxu0 0.0
    %1813 = vmatpush1.msra.mxu0 0.0
    %1814 = vmatprep.subr.mxu0 0.0
    %1815 = vmatpush1.msra.mxu0 0.0
    %1816 = vmatprep.subr.mxu0 0.0
    %1817 = vmatpush1.msra.mxu0 0.0
    %1818 = vmatprep.subr.mxu0 0.0
    %1819 = vmatpush1.msra.mxu0 0.0
    %1820 = vmatprep.subr.mxu0 0.0
    %1821 = vmatpush1.msra.mxu0 0.0
    %1822 = vmatprep.subr.mxu0 0.0
    %1823 = vmatpush1.msra.mxu0 0.0
    %1824 = vmatprep.subr.mxu0 0.0
    %1825 = vmatpush1.msra.mxu0 0.0
    %1826 = vmatprep.subr.mxu0 0.0
    %1827 = vmatpush1.msra.mxu0 0.0
    %1828 = vmatprep.subr.mxu0 0.0
    %1829 = vmatpush1.msra.mxu0 0.0
    %1830 = vmatprep.subr.mxu0 0.0
    %1831 = vmatpush1.msra.mxu0 0.0
    %1832 = vmatprep.subr.mxu0 0.0
    %1833 = vmatpush1.msra.mxu0 0.0
    %1834 = vmatprep.subr.mxu0 0.0
    %1835 = vmatpush1.msra.mxu0 0.0
    %1836 = vmatprep.subr.mxu0 0.0
    %1837 = vmatpush1.msra.mxu0 0.0
    %1838 = vmatprep.subr.mxu0 0.0
    %1839 = vmatpush1.msra.mxu0 0.0
    %1840 = vmatprep.subr.mxu0 0.0
    %1841 = vmatpush1.msra.mxu0 0.0
    %1842 = vmatprep.mubr.f32.mxu0 0.0
    %1843 = vmatmul.mubr.f32.gmra.mrb[0].mxu0 %v1767
    %v1844 = vpop.f32.mrb[0].mxu0
    %v1845 = vadd.f32 0.0, %v1844
    %v1846 = vpop.f32.mrb[0].mxu0
    %1847 = vmatprep.mubr.f32.mxu0 0.0
    %1848 = vmatmul.mubr.f32.gmra.mrb[0].mxu0 %v1770
    %v1849 = vpop.f32.mrb[0].mxu0
    %v1850 = vadd.f32 0.0, %v1849
    %v1851 = vpop.f32.mrb[0].mxu0
    %1852 = vmatprep.mubr.f32.mxu0 0.0
    %1853 = vmatmul.mubr.f32.gmra.mrb[0].mxu0 %v1773
    %v1854 = vpop.f32.mrb[0].mxu0
    %v1855 = vadd.f32 0.0, %v1854
    %v1856 = vpop.f32.mrb[0].mxu0
    %1857 = vmatprep.mubr.f32.mxu0 0.0
    %1858 = vmatmul.mubr.f32.gmra.mrb[0].mxu0 %v1776
    %v1859 = vpop.f32.mrb[0].mxu0
    %v1860 = vadd.f32 0.0, %v1859
    %v1861 = vpop.f32.mrb[0].mxu0
    %1862 = vdwg.mxu0
    %s1863 = scalar_lea.vmem [#allocation16], 64
    %v1864 = vld [vmem:[%s1863] sm:$0xff]
    %v1865 = vld [vmem:[%s1863 + $0x8] sm:$0xff]
    %v1866 = vld [vmem:[%s1863 + $0x10] sm:$0xff]
    %v1867 = vld [vmem:[%s1863 + $0x18] sm:$0xff]
    %v1868 = vld [vmem:[%s1863 + $0x20] sm:$0xff]
    %v1869 = vld [vmem:[%s1863 + $0x28] sm:$0xff]
    %v1870 = vld [vmem:[%s1863 + $0x30] sm:$0xff]
    %v1871 = vld [vmem:[%s1863 + $0x38] sm:$0xff]
    %s1872 = scalar_lea.vmem [#allocation16], 128
    %v1873 = vld [vmem:[%s1872] sm:$0xff]
    %v1874 = vld [vmem:[%s1872 + $0x8] sm:$0xff]
    %v1875 = vld [vmem:[%s1872 + $0x10] sm:$0xff]
    %v1876 = vld [vmem:[%s1872 + $0x18] sm:$0xff]
    %v1877 = vld [vmem:[%s1872 + $0x20] sm:$0xff]
    %v1878 = vld [vmem:[%s1872 + $0x28] sm:$0xff]
    %v1879 = vld [vmem:[%s1872 + $0x30] sm:$0xff]
    %v1880 = vld [vmem:[%s1872 + $0x38] sm:$0xff]
    %1881 = vmatprep.subr.mxu0 0.0
    %1882 = vmatpush1.msra.mxu0 %v1873
    %1883 = vmatprep.subr.mxu0 0.0
    %1884 = vmatpush1.msra.mxu0 %v1874
    %1885 = vmatprep.subr.mxu0 0.0
    %1886 = vmatpush1.msra.mxu0 %v1875
    %1887 = vmatprep.subr.mxu0 0.0
    %1888 = vmatpush1.msra.mxu0 %v1876
    %1889 = vmatprep.subr.mxu0 0.0
    %1890 = vmatpush1.msra.mxu0 %v1877
    %1891 = vmatprep.subr.mxu0 0.0
    %1892 = vmatpush1.msra.mxu0 %v1878
    %1893 = vmatprep.subr.mxu0 0.0
    %1894 = vmatpush1.msra.mxu0 %v1879
    %1895 = vmatprep.subr.mxu0 0.0
    %1896 = vmatpush1.msra.mxu0 %v1880
    %1897 = vmatprep.subr.mxu0 0.0
    %1898 = vmatpush1.msra.mxu0 0.0
    %1899 = vmatprep.subr.mxu0 0.0
    %1900 = vmatpush1.msra.mxu0 0.0
    %1901 = vmatprep.subr.mxu0 0.0
    %1902 = vmatpush1.msra.mxu0 0.0
    %1903 = vmatprep.subr.mxu0 0.0
    %1904 = vmatpush1.msra.mxu0 0.0
    %1905 = vmatprep.subr.mxu0 0.0
    %1906 = vmatpush1.msra.mxu0 0.0
    %1907 = vmatprep.subr.mxu0 0.0
    %1908 = vmatpush1.msra.mxu0 0.0
    %1909 = vmatprep.subr.mxu0 0.0
    %1910 = vmatpush1.msra.mxu0 0.0
    %1911 = vmatprep.subr.mxu0 0.0
    %1912 = vmatpush1.msra.mxu0 0.0
    %1913 = vmatprep.subr.mxu0 0.0
    %1914 = vmatpush1.msra.mxu0 0.0
    %1915 = vmatprep.subr.mxu0 0.0
    %1916 = vmatpush1.msra.mxu0 0.0
    %1917 = vmatprep.subr.mxu0 0.0
    %1918 = vmatpush1.msra.mxu0 0.0
    %1919 = vmatprep.subr.mxu0 0.0
    %1920 = vmatpush1.msra.mxu0 0.0
    %1921 = vmatprep.subr.mxu0 0.0
    %1922 = vmatpush1.msra.mxu0 0.0
    %1923 = vmatprep.subr.mxu0 0.0
    %1924 = vmatpush1.msra.mxu0 0.0
    %1925 = vmatprep.subr.mxu0 0.0
    %1926 = vmatpush1.msra.mxu0 0.0
    %1927 = vmatprep.subr.mxu0 0.0
    %1928 = vmatpush1.msra.mxu0 0.0
    %1929 = vmatprep.subr.mxu0 0.0
    %1930 = vmatpush1.msra.mxu0 0.0
    %1931 = vmatprep.subr.mxu0 0.0
    %1932 = vmatpush1.msra.mxu0 0.0
    %1933 = vmatprep.subr.mxu0 0.0
    %1934 = vmatpush1.msra.mxu0 0.0
    %1935 = vmatprep.subr.mxu0 0.0
    %1936 = vmatpush1.msra.mxu0 0.0
    %1937 = vmatprep.subr.mxu0 0.0
    %1938 = vmatpush1.msra.mxu0 0.0
    %1939 = vmatprep.subr.mxu0 0.0
    %1940 = vmatpush1.msra.mxu0 0.0
    %1941 = vmatprep.subr.mxu0 0.0
    %1942 = vmatpush1.msra.mxu0 0.0
    %1943 = vmatprep.subr.mxu0 0.0
    %1944 = vmatpush1.msra.mxu0 0.0
    %1945 = vmatprep.mubr.f32.mxu0 0.0
    %1946 = vmatmul.mubr.f32.gmra.mrb[0].mxu0 %v1767
    %v1947 = vpop.f32.mrb[0].mxu0
    %v1948 = vadd.f32 0.0, %v1947
    %v1949 = vpop.f32.mrb[0].mxu0
    %1950 = vmatprep.mubr.f32.mxu0 0.0
    %1951 = vmatmul.mubr.f32.gmra.mrb[0].mxu0 %v1770
    %v1952 = vpop.f32.mrb[0].mxu0
    %v1953 = vadd.f32 0.0, %v1952
    %v1954 = vpop.f32.mrb[0].mxu0
    %1955 = vmatprep.mubr.f32.mxu0 0.0
    %1956 = vmatmul.mubr.f32.gmra.mrb[0].mxu0 %v1773
    %v1957 = vpop.f32.mrb[0].mxu0
    %v1958 = vadd.f32 0.0, %v1957
    %v1959 = vpop.f32.mrb[0].mxu0
    %1960 = vmatprep.mubr.f32.mxu0 0.0
    %1961 = vmatmul.mubr.f32.gmra.mrb[0].mxu0 %v1776
    %v1962 = vpop.f32.mrb[0].mxu0
    %v1963 = vadd.f32 0.0, %v1962
    %v1964 = vpop.f32.mrb[0].mxu0
    %1965 = vdwg.mxu0
    %1966 = vmatprep.subr.mxu0 0.0
    %1967 = vmatpush1.msra.mxu0 %v1845
    %1968 = vmatprep.subr.mxu0 0.0
    %1969 = vmatpush1.msra.mxu0 %v1850
    %1970 = vmatprep.subr.mxu0 0.0
    %1971 = vmatpush1.msra.mxu0 %v1855
    %1972 = vmatprep.subr.mxu0 0.0
    %1973 = vmatpush1.msra.mxu0 %v1860
    %1974 = vmatprep.subr.mxu0 0.0
    %1975 = vmatpush1.msra.mxu0 0.0
    %1976 = vmatprep.subr.mxu0 0.0
    %1977 = vmatpush1.msra.mxu0 0.0
    %1978 = vmatprep.subr.mxu0 0.0
    %1979 = vmatpush1.msra.mxu0 0.0
    %1980 = vmatprep.subr.mxu0 0.0
    %1981 = vmatpush1.msra.mxu0 0.0
    %1982 = vmatprep.subr.mxu0 0.0
    %1983 = vmatpush1.msra.mxu0 0.0
    %1984 = vmatprep.subr.mxu0 0.0
    %1985 = vmatpush1.msra.mxu0 0.0
    %1986 = vmatprep.subr.mxu0 0.0
    %1987 = vmatpush1.msra.mxu0 0.0
    %1988 = vmatprep.subr.mxu0 0.0
    %1989 = vmatpush1.msra.mxu0 0.0
    %1990 = vmatprep.subr.mxu0 0.0
    %1991 = vmatpush1.msra.mxu0 0.0
    %1992 = vmatprep.subr.mxu0 0.0
    %1993 = vmatpush1.msra.mxu0 0.0
    %1994 = vmatprep.subr.mxu0 0.0
    %1995 = vmatpush1.msra.mxu0 0.0
    %1996 = vmatprep.subr.mxu0 0.0
    %1997 = vmatpush1.msra.mxu0 0.0
    %1998 = vmatprep.subr.mxu0 0.0
    %1999 = vmatpush1.msra.mxu0 0.0
    %2000 = vmatprep.subr.mxu0 0.0
    %2001 = vmatpush1.msra.mxu0 0.0
    %2002 = vmatprep.subr.mxu0 0.0
    %2003 = vmatpush1.msra.mxu0 0.0
    %2004 = vmatprep.subr.mxu0 0.0
    %2005 = vmatpush1.msra.mxu0 0.0
    %2006 = vmatprep.subr.mxu0 0.0
    %2007 = vmatpush1.msra.mxu0 0.0
    %2008 = vmatprep.subr.mxu0 0.0
    %2009 = vmatpush1.msra.mxu0 0.0
    %2010 = vmatprep.subr.mxu0 0.0
    %2011 = vmatpush1.msra.mxu0 0.0
    %2012 = vmatprep.subr.mxu0 0.0
    %2013 = vmatpush1.msra.mxu0 0.0
    %2014 = vmatprep.subr.mxu0 0.0
    %2015 = vmatpush1.msra.mxu0 0.0
    %2016 = vmatprep.subr.mxu0 0.0
    %2017 = vmatpush1.msra.mxu0 0.0
    %2018 = vmatprep.subr.mxu0 0.0
    %2019 = vmatpush1.msra.mxu0 0.0
    %2020 = vmatprep.subr.mxu0 0.0
    %2021 = vmatpush1.msra.mxu0 0.0
    %2022 = vmatprep.subr.mxu0 0.0
    %2023 = vmatpush1.msra.mxu0 0.0
    %2024 = vmatprep.subr.mxu0 0.0
    %2025 = vmatpush1.msra.mxu0 0.0
    %2026 = vmatprep.subr.mxu0 0.0
    %2027 = vmatpush1.msra.mxu0 0.0
    %2028 = vmatprep.subr.mxu0 0.0
    %2029 = vmatpush1.msra.mxu0 0.0
    %2030 = vmatprep.mubr.f32.mxu0 0.0
    %2031 = vmatmul.mubr.f32.gmra.mrb[0].mxu0 %v660
    %v2032 = vpop.f32.mrb[0].mxu0
    %v2033 = vadd.f32 0.0, %v2032
    %v2034 = vpop.f32.mrb[0].mxu0
    %2035 = vmatprep.mubr.f32.mxu0 0.0
    %2036 = vmatmul.mubr.f32.gmra.mrb[0].mxu0 %v663
    %v2037 = vpop.f32.mrb[0].mxu0
    %v2038 = vadd.f32 0.0, %v2037
    %v2039 = vpop.f32.mrb[0].mxu0
    %2040 = vmatprep.mubr.f32.mxu0 0.0
    %2041 = vmatmul.mubr.f32.gmra.mrb[0].mxu0 %v666
    %v2042 = vpop.f32.mrb[0].mxu0
    %v2043 = vadd.f32 0.0, %v2042
    %v2044 = vpop.f32.mrb[0].mxu0
    %2045 = vmatprep.mubr.f32.mxu0 0.0
    %2046 = vmatmul.mubr.f32.gmra.mrb[0].mxu0 %v669
    %v2047 = vpop.f32.mrb[0].mxu0
    %v2048 = vadd.f32 0.0, %v2047
    %v2049 = vpop.f32.mrb[0].mxu0
    %2050 = vdwg.mxu0
    %2051 = vmatprep.subr.mxu0 0.0
    %2052 = vmatpush1.msra.mxu0 %v1864
    %2053 = vmatprep.subr.mxu0 0.0
    %2054 = vmatpush1.msra.mxu0 %v1865
    %2055 = vmatprep.subr.mxu0 0.0
    %2056 = vmatpush1.msra.mxu0 %v1866
    %2057 = vmatprep.subr.mxu0 0.0
    %2058 = vmatpush1.msra.mxu0 %v1867
    %2059 = vmatprep.subr.mxu0 0.0
    %2060 = vmatpush1.msra.mxu0 %v1868
    %2061 = vmatprep.subr.mxu0 0.0
    %2062 = vmatpush1.msra.mxu0 %v1869
    %2063 = vmatprep.subr.mxu0 0.0
    %2064 = vmatpush1.msra.mxu0 %v1870
    %2065 = vmatprep.subr.mxu0 0.0
    %2066 = vmatpush1.msra.mxu0 %v1871
    %2067 = vmatprep.subr.mxu0 0.0
    %2068 = vmatpush1.msra.mxu0 0.0
    %2069 = vmatprep.subr.mxu0 0.0
    %2070 = vmatpush1.msra.mxu0 0.0
    %2071 = vmatprep.subr.mxu0 0.0
    %2072 = vmatpush1.msra.mxu0 0.0
    %2073 = vmatprep.subr.mxu0 0.0
    %2074 = vmatpush1.msra.mxu0 0.0
    %2075 = vmatprep.subr.mxu0 0.0
    %2076 = vmatpush1.msra.mxu0 0.0
    %2077 = vmatprep.subr.mxu0 0.0
    %2078 = vmatpush1.msra.mxu0 0.0
    %2079 = vmatprep.subr.mxu0 0.0
    %2080 = vmatpush1.msra.mxu0 0.0
    %2081 = vmatprep.subr.mxu0 0.0
    %2082 = vmatpush1.msra.mxu0 0.0
    %2083 = vmatprep.subr.mxu0 0.0
    %2084 = vmatpush1.msra.mxu0 0.0
    %2085 = vmatprep.subr.mxu0 0.0
    %2086 = vmatpush1.msra.mxu0 0.0
    %2087 = vmatprep.subr.mxu0 0.0
    %2088 = vmatpush1.msra.mxu0 0.0
    %2089 = vmatprep.subr.mxu0 0.0
    %2090 = vmatpush1.msra.mxu0 0.0
    %2091 = vmatprep.subr.mxu0 0.0
    %2092 = vmatpush1.msra.mxu0 0.0
    %2093 = vmatprep.subr.mxu0 0.0
    %2094 = vmatpush1.msra.mxu0 0.0
    %2095 = vmatprep.subr.mxu0 0.0
    %2096 = vmatpush1.msra.mxu0 0.0
    %2097 = vmatprep.subr.mxu0 0.0
    %2098 = vmatpush1.msra.mxu0 0.0
    %2099 = vmatprep.subr.mxu0 0.0
    %2100 = vmatpush1.msra.mxu0 0.0
    %2101 = vmatprep.subr.mxu0 0.0
    %2102 = vmatpush1.msra.mxu0 0.0
    %2103 = vmatprep.subr.mxu0 0.0
    %2104 = vmatpush1.msra.mxu0 0.0
    %2105 = vmatprep.subr.mxu0 0.0
    %2106 = vmatpush1.msra.mxu0 0.0
    %2107 = vmatprep.subr.mxu0 0.0
    %2108 = vmatpush1.msra.mxu0 0.0
    %2109 = vmatprep.subr.mxu0 0.0
    %2110 = vmatpush1.msra.mxu0 0.0
    %2111 = vmatprep.subr.mxu0 0.0
    %2112 = vmatpush1.msra.mxu0 0.0
    %2113 = vmatprep.subr.mxu0 0.0
    %2114 = vmatpush1.msra.mxu0 0.0
    %2115 = vmatprep.mubr.f32.mxu0 0.0
    %2116 = vmatmul.mubr.f32.gmra.mrb[0].mxu0 %v1767
    %v2117 = vpop.f32.mrb[0].mxu0
    %v2118 = vadd.f32 %v2033, %v2117
    %v2119 = vpop.f32.mrb[0].mxu0
    %2120 = vmatprep.mubr.f32.mxu0 0.0
    %2121 = vmatmul.mubr.f32.gmra.mrb[0].mxu0 %v1770
    %v2122 = vpop.f32.mrb[0].mxu0
    %v2123 = vadd.f32 %v2038, %v2122
    %v2124 = vpop.f32.mrb[0].mxu0
    %2125 = vmatprep.mubr.f32.mxu0 0.0
    %2126 = vmatmul.mubr.f32.gmra.mrb[0].mxu0 %v1773
    %v2127 = vpop.f32.mrb[0].mxu0
    %v2128 = vadd.f32 %v2043, %v2127
    %v2129 = vpop.f32.mrb[0].mxu0
    %2130 = vmatprep.mubr.f32.mxu0 0.0
    %2131 = vmatmul.mubr.f32.gmra.mrb[0].mxu0 %v1776
    %v2132 = vpop.f32.mrb[0].mxu0
    %v2133 = vadd.f32 %v2048, %v2132
    %v2134 = vpop.f32.mrb[0].mxu0
    %2135 = vdwg.mxu0
    %2136 = vmatprep.subr.mxu0 0.0
    %2137 = vmatpush1.msra.mxu0 %v1948
    %2138 = vmatprep.subr.mxu0 0.0
    %2139 = vmatpush1.msra.mxu0 %v1953
    %2140 = vmatprep.subr.mxu0 0.0
    %2141 = vmatpush1.msra.mxu0 %v1958
    %2142 = vmatprep.subr.mxu0 0.0
    %2143 = vmatpush1.msra.mxu0 %v1963
    %2144 = vmatprep.subr.mxu0 0.0
    %2145 = vmatpush1.msra.mxu0 0.0
    %2146 = vmatprep.subr.mxu0 0.0
    %2147 = vmatpush1.msra.mxu0 0.0
    %2148 = vmatprep.subr.mxu0 0.0
    %2149 = vmatpush1.msra.mxu0 0.0
    %2150 = vmatprep.subr.mxu0 0.0
    %2151 = vmatpush1.msra.mxu0 0.0
    %2152 = vmatprep.subr.mxu0 0.0
    %2153 = vmatpush1.msra.mxu0 0.0
    %2154 = vmatprep.subr.mxu0 0.0
    %2155 = vmatpush1.msra.mxu0 0.0
    %2156 = vmatprep.subr.mxu0 0.0
    %2157 = vmatpush1.msra.mxu0 0.0
    %2158 = vmatprep.subr.mxu0 0.0
    %2159 = vmatpush1.msra.mxu0 0.0
    %2160 = vmatprep.subr.mxu0 0.0
    %2161 = vmatpush1.msra.mxu0 0.0
    %2162 = vmatprep.subr.mxu0 0.0
    %2163 = vmatpush1.msra.mxu0 0.0
    %2164 = vmatprep.subr.mxu0 0.0
    %2165 = vmatpush1.msra.mxu0 0.0
    %2166 = vmatprep.subr.mxu0 0.0
    %2167 = vmatpush1.msra.mxu0 0.0
    %2168 = vmatprep.subr.mxu0 0.0
    %2169 = vmatpush1.msra.mxu0 0.0
    %2170 = vmatprep.subr.mxu0 0.0
    %2171 = vmatpush1.msra.mxu0 0.0
    %2172 = vmatprep.subr.mxu0 0.0
    %2173 = vmatpush1.msra.mxu0 0.0
    %2174 = vmatprep.subr.mxu0 0.0
    %2175 = vmatpush1.msra.mxu0 0.0
    %2176 = vmatprep.subr.mxu0 0.0
    %2177 = vmatpush1.msra.mxu0 0.0
    %2178 = vmatprep.subr.mxu0 0.0
    %2179 = vmatpush1.msra.mxu0 0.0
    %2180 = vmatprep.subr.mxu0 0.0
    %2181 = vmatpush1.msra.mxu0 0.0
    %2182 = vmatprep.subr.mxu0 0.0
    %2183 = vmatpush1.msra.mxu0 0.0
    %2184 = vmatprep.subr.mxu0 0.0
    %2185 = vmatpush1.msra.mxu0 0.0
    %2186 = vmatprep.subr.mxu0 0.0
    %2187 = vmatpush1.msra.mxu0 0.0
    %2188 = vmatprep.subr.mxu0 0.0
    %2189 = vmatpush1.msra.mxu0 0.0
    %2190 = vmatprep.subr.mxu0 0.0
    %2191 = vmatpush1.msra.mxu0 0.0
    %2192 = vmatprep.subr.mxu0 0.0
    %2193 = vmatpush1.msra.mxu0 0.0
    %2194 = vmatprep.subr.mxu0 0.0
    %2195 = vmatpush1.msra.mxu0 0.0
    %2196 = vmatprep.subr.mxu0 0.0
    %2197 = vmatpush1.msra.mxu0 0.0
    %2198 = vmatprep.subr.mxu0 0.0
    %2199 = vmatpush1.msra.mxu0 0.0
    %2200 = vmatprep.mubr.f32.mxu0 0.0
    %2201 = vmatmul.mubr.f32.gmra.mrb[0].mxu0 %v842
    %v2202 = vpop.f32.mrb[0].mxu0
    %v2203 = vadd.f32 0.0, %v2202
    %v2204 = vpop.f32.mrb[0].mxu0
    %2205 = vmatprep.mubr.f32.mxu0 0.0
    %2206 = vmatmul.mubr.f32.gmra.mrb[0].mxu0 %v845
    %v2207 = vpop.f32.mrb[0].mxu0
    %v2208 = vadd.f32 0.0, %v2207
    %v2209 = vpop.f32.mrb[0].mxu0
    %2210 = vmatprep.mubr.f32.mxu0 0.0
    %2211 = vmatmul.mubr.f32.gmra.mrb[0].mxu0 %v848
    %v2212 = vpop.f32.mrb[0].mxu0
    %v2213 = vadd.f32 0.0, %v2212
    %v2214 = vpop.f32.mrb[0].mxu0
    %2215 = vmatprep.mubr.f32.mxu0 0.0
    %2216 = vmatmul.mubr.f32.gmra.mrb[0].mxu0 %v851
    %v2217 = vpop.f32.mrb[0].mxu0
    %v2218 = vadd.f32 0.0, %v2217
    %v2219 = vpop.f32.mrb[0].mxu0
    %2220 = vdwg.mxu0
    %v2221 = vadd.f32 %v2118, %v2203
    %v2222 = vadd.f32 %v2123, %v2208
    %v2223 = vadd.f32 %v2128, %v2213
    %v2224 = vadd.f32 %v2133, %v2218
    %v2225 = vld [vmem:[#allocation18] sm:$0x1]
    %v2227 = vlaneseq
    %v2228 = vshrl.u32 %v2227, 7
    %v2229 = vsub.s32 0, %v2228
    %v2230 = vrot.slane %v2225, %v2229
    %v2232 = vadd.f32 %v2221, %v2230
    %v2233 = vadd.f32 %v2222, %v2230
    %v2234 = vadd.f32 %v2223, %v2230
    %v2235 = vadd.f32 %v2224, %v2230
    %v2236 = vmax.f32 %v2232, 0.0
    %v2237 = vmax.f32 %v2233, 0.0
    %v2238 = vmax.f32 %v2234, 0.0
    %v2239 = vmax.f32 %v2235, 0.0
    %v2240 = vld [vmem:[#allocation19] sm:$0xff]
    %v2241 = vld [vmem:[#allocation19 + $0x8] sm:$0xff]
    %v2242 = vld [vmem:[#allocation19 + $0x10] sm:$0xff]
    %v2243 = vld [vmem:[#allocation19 + $0x18] sm:$0xff]
    %v2244 = vld [vmem:[#allocation19 + $0x20] sm:$0xff]
    %v2245 = vld [vmem:[#allocation19 + $0x28] sm:$0xff]
    %v2246 = vld [vmem:[#allocation19 + $0x30] sm:$0xff]
    %v2247 = vld [vmem:[#allocation19 + $0x38] sm:$0xff]
    %v2249 = vsel %vm1765, %v2236, 0
    %v2252 = vsel %vm1765, %v2237, 0
    %v2255 = vsel %vm1765, %v2238, 0
    %v2258 = vsel %vm1765, %v2239, 0
    %2260 = vmatprep.subr.mxu0 0.0
    %2261 = vmatpush1.msra.mxu0 %v2240
    %2262 = vmatprep.subr.mxu0 0.0
    %2263 = vmatpush1.msra.mxu0 %v2241
    %2264 = vmatprep.subr.mxu0 0.0
    %2265 = vmatpush1.msra.mxu0 %v2242
    %2266 = vmatprep.subr.mxu0 0.0
    %2267 = vmatpush1.msra.mxu0 %v2243
    %2268 = vmatprep.subr.mxu0 0.0
    %2269 = vmatpush1.msra.mxu0 %v2244
    %2270 = vmatprep.subr.mxu0 0.0
    %2271 = vmatpush1.msra.mxu0 %v2245
    %2272 = vmatprep.subr.mxu0 0.0
    %2273 = vmatpush1.msra.mxu0 %v2246
    %2274 = vmatprep.subr.mxu0 0.0
    %2275 = vmatpush1.msra.mxu0 %v2247
    %2276 = vmatprep.subr.mxu0 0.0
    %2277 = vmatpush1.msra.mxu0 0.0
    %2278 = vmatprep.subr.mxu0 0.0
    %2279 = vmatpush1.msra.mxu0 0.0
    %2280 = vmatprep.subr.mxu0 0.0
    %2281 = vmatpush1.msra.mxu0 0.0
    %2282 = vmatprep.subr.mxu0 0.0
    %2283 = vmatpush1.msra.mxu0 0.0
    %2284 = vmatprep.subr.mxu0 0.0
    %2285 = vmatpush1.msra.mxu0 0.0
    %2286 = vmatprep.subr.mxu0 0.0
    %2287 = vmatpush1.msra.mxu0 0.0
    %2288 = vmatprep.subr.mxu0 0.0
    %2289 = vmatpush1.msra.mxu0 0.0
    %2290 = vmatprep.subr.mxu0 0.0
    %2291 = vmatpush1.msra.mxu0 0.0
    %2292 = vmatprep.subr.mxu0 0.0
    %2293 = vmatpush1.msra.mxu0 0.0
    %2294 = vmatprep.subr.mxu0 0.0
    %2295 = vmatpush1.msra.mxu0 0.0
    %2296 = vmatprep.subr.mxu0 0.0
    %2297 = vmatpush1.msra.mxu0 0.0
    %2298 = vmatprep.subr.mxu0 0.0
    %2299 = vmatpush1.msra.mxu0 0.0
    %2300 = vmatprep.subr.mxu0 0.0
    %2301 = vmatpush1.msra.mxu0 0.0
    %2302 = vmatprep.subr.mxu0 0.0
    %2303 = vmatpush1.msra.mxu0 0.0
    %2304 = vmatprep.subr.mxu0 0.0
    %2305 = vmatpush1.msra.mxu0 0.0
    %2306 = vmatprep.subr.mxu0 0.0
    %2307 = vmatpush1.msra.mxu0 0.0
    %2308 = vmatprep.subr.mxu0 0.0
    %2309 = vmatpush1.msra.mxu0 0.0
    %2310 = vmatprep.subr.mxu0 0.0
    %2311 = vmatpush1.msra.mxu0 0.0
    %2312 = vmatprep.subr.mxu0 0.0
    %2313 = vmatpush1.msra.mxu0 0.0
    %2314 = vmatprep.subr.mxu0 0.0
    %2315 = vmatpush1.msra.mxu0 0.0
    %2316 = vmatprep.subr.mxu0 0.0
    %2317 = vmatpush1.msra.mxu0 0.0
    %2318 = vmatprep.subr.mxu0 0.0
    %2319 = vmatpush1.msra.mxu0 0.0
    %2320 = vmatprep.subr.mxu0 0.0
    %2321 = vmatpush1.msra.mxu0 0.0
    %2322 = vmatprep.subr.mxu0 0.0
    %2323 = vmatpush1.msra.mxu0 0.0
    %2324 = vmatprep.mubr.f32.mxu0 0.0
    %2325 = vmatmul.mubr.f32.gmra.mrb[0].mxu0 %v2249
    %v2326 = vpop.f32.mrb[0].mxu0
    %v2327 = vadd.f32 0.0, %v2326
    %v2328 = vpop.f32.mrb[0].mxu0
    %2329 = vmatprep.mubr.f32.mxu0 0.0
    %2330 = vmatmul.mubr.f32.gmra.mrb[0].mxu0 %v2252
    %v2331 = vpop.f32.mrb[0].mxu0
    %v2332 = vadd.f32 0.0, %v2331
    %v2333 = vpop.f32.mrb[0].mxu0
    %2334 = vmatprep.mubr.f32.mxu0 0.0
    %2335 = vmatmul.mubr.f32.gmra.mrb[0].mxu0 %v2255
    %v2336 = vpop.f32.mrb[0].mxu0
    %v2337 = vadd.f32 0.0, %v2336
    %v2338 = vpop.f32.mrb[0].mxu0
    %2339 = vmatprep.mubr.f32.mxu0 0.0
    %2340 = vmatmul.mubr.f32.gmra.mrb[0].mxu0 %v2258
    %v2341 = vpop.f32.mrb[0].mxu0
    %v2342 = vadd.f32 0.0, %v2341
    %v2343 = vpop.f32.mrb[0].mxu0
    %2344 = vdwg.mxu0
    %s2345 = scalar_lea.vmem [#allocation19], 64
    %v2346 = vld [vmem:[%s2345] sm:$0xff]
    %v2347 = vld [vmem:[%s2345 + $0x8] sm:$0xff]
    %v2348 = vld [vmem:[%s2345 + $0x10] sm:$0xff]
    %v2349 = vld [vmem:[%s2345 + $0x18] sm:$0xff]
    %v2350 = vld [vmem:[%s2345 + $0x20] sm:$0xff]
    %v2351 = vld [vmem:[%s2345 + $0x28] sm:$0xff]
    %v2352 = vld [vmem:[%s2345 + $0x30] sm:$0xff]
    %v2353 = vld [vmem:[%s2345 + $0x38] sm:$0xff]
    %s2354 = scalar_lea.vmem [#allocation19], 128
    %v2355 = vld [vmem:[%s2354] sm:$0xff]
    %v2356 = vld [vmem:[%s2354 + $0x8] sm:$0xff]
    %v2357 = vld [vmem:[%s2354 + $0x10] sm:$0xff]
    %v2358 = vld [vmem:[%s2354 + $0x18] sm:$0xff]
    %v2359 = vld [vmem:[%s2354 + $0x20] sm:$0xff]
    %v2360 = vld [vmem:[%s2354 + $0x28] sm:$0xff]
    %v2361 = vld [vmem:[%s2354 + $0x30] sm:$0xff]
    %v2362 = vld [vmem:[%s2354 + $0x38] sm:$0xff]
    %2363 = vmatprep.subr.mxu0 0.0
    %2364 = vmatpush1.msra.mxu0 %v2355
    %2365 = vmatprep.subr.mxu0 0.0
    %2366 = vmatpush1.msra.mxu0 %v2356
    %2367 = vmatprep.subr.mxu0 0.0
    %2368 = vmatpush1.msra.mxu0 %v2357
    %2369 = vmatprep.subr.mxu0 0.0
    %2370 = vmatpush1.msra.mxu0 %v2358
    %2371 = vmatprep.subr.mxu0 0.0
    %2372 = vmatpush1.msra.mxu0 %v2359
    %2373 = vmatprep.subr.mxu0 0.0
    %2374 = vmatpush1.msra.mxu0 %v2360
    %2375 = vmatprep.subr.mxu0 0.0
    %2376 = vmatpush1.msra.mxu0 %v2361
    %2377 = vmatprep.subr.mxu0 0.0
    %2378 = vmatpush1.msra.mxu0 %v2362
    %2379 = vmatprep.subr.mxu0 0.0
    %2380 = vmatpush1.msra.mxu0 0.0
    %2381 = vmatprep.subr.mxu0 0.0
    %2382 = vmatpush1.msra.mxu0 0.0
    %2383 = vmatprep.subr.mxu0 0.0
    %2384 = vmatpush1.msra.mxu0 0.0
    %2385 = vmatprep.subr.mxu0 0.0
    %2386 = vmatpush1.msra.mxu0 0.0
    %2387 = vmatprep.subr.mxu0 0.0
    %2388 = vmatpush1.msra.mxu0 0.0
    %2389 = vmatprep.subr.mxu0 0.0
    %2390 = vmatpush1.msra.mxu0 0.0
    %2391 = vmatprep.subr.mxu0 0.0
    %2392 = vmatpush1.msra.mxu0 0.0
    %2393 = vmatprep.subr.mxu0 0.0
    %2394 = vmatpush1.msra.mxu0 0.0
    %2395 = vmatprep.subr.mxu0 0.0
    %2396 = vmatpush1.msra.mxu0 0.0
    %2397 = vmatprep.subr.mxu0 0.0
    %2398 = vmatpush1.msra.mxu0 0.0
    %2399 = vmatprep.subr.mxu0 0.0
    %2400 = vmatpush1.msra.mxu0 0.0
    %2401 = vmatprep.subr.mxu0 0.0
    %2402 = vmatpush1.msra.mxu0 0.0
    %2403 = vmatprep.subr.mxu0 0.0
    %2404 = vmatpush1.msra.mxu0 0.0
    %2405 = vmatprep.subr.mxu0 0.0
    %2406 = vmatpush1.msra.mxu0 0.0
    %2407 = vmatprep.subr.mxu0 0.0
    %2408 = vmatpush1.msra.mxu0 0.0
    %2409 = vmatprep.subr.mxu0 0.0
    %2410 = vmatpush1.msra.mxu0 0.0
    %2411 = vmatprep.subr.mxu0 0.0
    %2412 = vmatpush1.msra.mxu0 0.0
    %2413 = vmatprep.subr.mxu0 0.0
    %2414 = vmatpush1.msra.mxu0 0.0
    %2415 = vmatprep.subr.mxu0 0.0
    %2416 = vmatpush1.msra.mxu0 0.0
    %2417 = vmatprep.subr.mxu0 0.0
    %2418 = vmatpush1.msra.mxu0 0.0
    %2419 = vmatprep.subr.mxu0 0.0
    %2420 = vmatpush1.msra.mxu0 0.0
    %2421 = vmatprep.subr.mxu0 0.0
    %2422 = vmatpush1.msra.mxu0 0.0
    %2423 = vmatprep.subr.mxu0 0.0
    %2424 = vmatpush1.msra.mxu0 0.0
    %2425 = vmatprep.subr.mxu0 0.0
    %2426 = vmatpush1.msra.mxu0 0.0
    %2427 = vmatprep.mubr.f32.mxu0 0.0
    %2428 = vmatmul.mubr.f32.gmra.mrb[0].mxu0 %v2249
    %v2429 = vpop.f32.mrb[0].mxu0
    %v2430 = vadd.f32 0.0, %v2429
    %v2431 = vpop.f32.mrb[0].mxu0
    %2432 = vmatprep.mubr.f32.mxu0 0.0
    %2433 = vmatmul.mubr.f32.gmra.mrb[0].mxu0 %v2252
    %v2434 = vpop.f32.mrb[0].mxu0
    %v2435 = vadd.f32 0.0, %v2434
    %v2436 = vpop.f32.mrb[0].mxu0
    %2437 = vmatprep.mubr.f32.mxu0 0.0
    %2438 = vmatmul.mubr.f32.gmra.mrb[0].mxu0 %v2255
    %v2439 = vpop.f32.mrb[0].mxu0
    %v2440 = vadd.f32 0.0, %v2439
    %v2441 = vpop.f32.mrb[0].mxu0
    %2442 = vmatprep.mubr.f32.mxu0 0.0
    %2443 = vmatmul.mubr.f32.gmra.mrb[0].mxu0 %v2258
    %v2444 = vpop.f32.mrb[0].mxu0
    %v2445 = vadd.f32 0.0, %v2444
    %v2446 = vpop.f32.mrb[0].mxu0
    %2447 = vdwg.mxu0
    %2448 = vmatprep.subr.mxu0 0.0
    %2449 = vmatpush1.msra.mxu0 %v2327
    %2450 = vmatprep.subr.mxu0 0.0
    %2451 = vmatpush1.msra.mxu0 %v2332
    %2452 = vmatprep.subr.mxu0 0.0
    %2453 = vmatpush1.msra.mxu0 %v2337
    %2454 = vmatprep.subr.mxu0 0.0
    %2455 = vmatpush1.msra.mxu0 %v2342
    %2456 = vmatprep.subr.mxu0 0.0
    %2457 = vmatpush1.msra.mxu0 0.0
    %2458 = vmatprep.subr.mxu0 0.0
    %2459 = vmatpush1.msra.mxu0 0.0
    %2460 = vmatprep.subr.mxu0 0.0
    %2461 = vmatpush1.msra.mxu0 0.0
    %2462 = vmatprep.subr.mxu0 0.0
    %2463 = vmatpush1.msra.mxu0 0.0
    %2464 = vmatprep.subr.mxu0 0.0
    %2465 = vmatpush1.msra.mxu0 0.0
    %2466 = vmatprep.subr.mxu0 0.0
    %2467 = vmatpush1.msra.mxu0 0.0
    %2468 = vmatprep.subr.mxu0 0.0
    %2469 = vmatpush1.msra.mxu0 0.0
    %2470 = vmatprep.subr.mxu0 0.0
    %2471 = vmatpush1.msra.mxu0 0.0
    %2472 = vmatprep.subr.mxu0 0.0
    %2473 = vmatpush1.msra.mxu0 0.0
    %2474 = vmatprep.subr.mxu0 0.0
    %2475 = vmatpush1.msra.mxu0 0.0
    %2476 = vmatprep.subr.mxu0 0.0
    %2477 = vmatpush1.msra.mxu0 0.0
    %2478 = vmatprep.subr.mxu0 0.0
    %2479 = vmatpush1.msra.mxu0 0.0
    %2480 = vmatprep.subr.mxu0 0.0
    %2481 = vmatpush1.msra.mxu0 0.0
    %2482 = vmatprep.subr.mxu0 0.0
    %2483 = vmatpush1.msra.mxu0 0.0
    %2484 = vmatprep.subr.mxu0 0.0
    %2485 = vmatpush1.msra.mxu0 0.0
    %2486 = vmatprep.subr.mxu0 0.0
    %2487 = vmatpush1.msra.mxu0 0.0
    %2488 = vmatprep.subr.mxu0 0.0
    %2489 = vmatpush1.msra.mxu0 0.0
    %2490 = vmatprep.subr.mxu0 0.0
    %2491 = vmatpush1.msra.mxu0 0.0
    %2492 = vmatprep.subr.mxu0 0.0
    %2493 = vmatpush1.msra.mxu0 0.0
    %2494 = vmatprep.subr.mxu0 0.0
    %2495 = vmatpush1.msra.mxu0 0.0
    %2496 = vmatprep.subr.mxu0 0.0
    %2497 = vmatpush1.msra.mxu0 0.0
    %2498 = vmatprep.subr.mxu0 0.0
    %2499 = vmatpush1.msra.mxu0 0.0
    %2500 = vmatprep.subr.mxu0 0.0
    %2501 = vmatpush1.msra.mxu0 0.0
    %2502 = vmatprep.subr.mxu0 0.0
    %2503 = vmatpush1.msra.mxu0 0.0
    %2504 = vmatprep.subr.mxu0 0.0
    %2505 = vmatpush1.msra.mxu0 0.0
    %2506 = vmatprep.subr.mxu0 0.0
    %2507 = vmatpush1.msra.mxu0 0.0
    %2508 = vmatprep.subr.mxu0 0.0
    %2509 = vmatpush1.msra.mxu0 0.0
    %2510 = vmatprep.subr.mxu0 0.0
    %2511 = vmatpush1.msra.mxu0 0.0
    %2512 = vmatprep.mubr.f32.mxu0 0.0
    %2513 = vmatmul.mubr.f32.gmra.mrb[0].mxu0 %v660
    %v2514 = vpop.f32.mrb[0].mxu0
    %v2515 = vadd.f32 0.0, %v2514
    %v2516 = vpop.f32.mrb[0].mxu0
    %2517 = vmatprep.mubr.f32.mxu0 0.0
    %2518 = vmatmul.mubr.f32.gmra.mrb[0].mxu0 %v663
    %v2519 = vpop.f32.mrb[0].mxu0
    %v2520 = vadd.f32 0.0, %v2519
    %v2521 = vpop.f32.mrb[0].mxu0
    %2522 = vmatprep.mubr.f32.mxu0 0.0
    %2523 = vmatmul.mubr.f32.gmra.mrb[0].mxu0 %v666
    %v2524 = vpop.f32.mrb[0].mxu0
    %v2525 = vadd.f32 0.0, %v2524
    %v2526 = vpop.f32.mrb[0].mxu0
    %2527 = vmatprep.mubr.f32.mxu0 0.0
    %2528 = vmatmul.mubr.f32.gmra.mrb[0].mxu0 %v669
    %v2529 = vpop.f32.mrb[0].mxu0
    %v2530 = vadd.f32 0.0, %v2529
    %v2531 = vpop.f32.mrb[0].mxu0
    %2532 = vdwg.mxu0
    %2533 = vmatprep.subr.mxu0 0.0
    %2534 = vmatpush1.msra.mxu0 %v2346
    %2535 = vmatprep.subr.mxu0 0.0
    %2536 = vmatpush1.msra.mxu0 %v2347
    %2537 = vmatprep.subr.mxu0 0.0
    %2538 = vmatpush1.msra.mxu0 %v2348
    %2539 = vmatprep.subr.mxu0 0.0
    %2540 = vmatpush1.msra.mxu0 %v2349
    %2541 = vmatprep.subr.mxu0 0.0
    %2542 = vmatpush1.msra.mxu0 %v2350
    %2543 = vmatprep.subr.mxu0 0.0
    %2544 = vmatpush1.msra.mxu0 %v2351
    %2545 = vmatprep.subr.mxu0 0.0
    %2546 = vmatpush1.msra.mxu0 %v2352
    %2547 = vmatprep.subr.mxu0 0.0
    %2548 = vmatpush1.msra.mxu0 %v2353
    %2549 = vmatprep.subr.mxu0 0.0
    %2550 = vmatpush1.msra.mxu0 0.0
    %2551 = vmatprep.subr.mxu0 0.0
    %2552 = vmatpush1.msra.mxu0 0.0
    %2553 = vmatprep.subr.mxu0 0.0
    %2554 = vmatpush1.msra.mxu0 0.0
    %2555 = vmatprep.subr.mxu0 0.0
    %2556 = vmatpush1.msra.mxu0 0.0
    %2557 = vmatprep.subr.mxu0 0.0
    %2558 = vmatpush1.msra.mxu0 0.0
    %2559 = vmatprep.subr.mxu0 0.0
    %2560 = vmatpush1.msra.mxu0 0.0
    %2561 = vmatprep.subr.mxu0 0.0
    %2562 = vmatpush1.msra.mxu0 0.0
    %2563 = vmatprep.subr.mxu0 0.0
    %2564 = vmatpush1.msra.mxu0 0.0
    %2565 = vmatprep.subr.mxu0 0.0
    %2566 = vmatpush1.msra.mxu0 0.0
    %2567 = vmatprep.subr.mxu0 0.0
    %2568 = vmatpush1.msra.mxu0 0.0
    %2569 = vmatprep.subr.mxu0 0.0
    %2570 = vmatpush1.msra.mxu0 0.0
    %2571 = vmatprep.subr.mxu0 0.0
    %2572 = vmatpush1.msra.mxu0 0.0
    %2573 = vmatprep.subr.mxu0 0.0
    %2574 = vmatpush1.msra.mxu0 0.0
    %2575 = vmatprep.subr.mxu0 0.0
    %2576 = vmatpush1.msra.mxu0 0.0
    %2577 = vmatprep.subr.mxu0 0.0
    %2578 = vmatpush1.msra.mxu0 0.0
    %2579 = vmatprep.subr.mxu0 0.0
    %2580 = vmatpush1.msra.mxu0 0.0
    %2581 = vmatprep.subr.mxu0 0.0
    %2582 = vmatpush1.msra.mxu0 0.0
    %2583 = vmatprep.subr.mxu0 0.0
    %2584 = vmatpush1.msra.mxu0 0.0
    %2585 = vmatprep.subr.mxu0 0.0
    %2586 = vmatpush1.msra.mxu0 0.0
    %2587 = vmatprep.subr.mxu0 0.0
    %2588 = vmatpush1.msra.mxu0 0.0
    %2589 = vmatprep.subr.mxu0 0.0
    %2590 = vmatpush1.msra.mxu0 0.0
    %2591 = vmatprep.subr.mxu0 0.0
    %2592 = vmatpush1.msra.mxu0 0.0
    %2593 = vmatprep.subr.mxu0 0.0
    %2594 = vmatpush1.msra.mxu0 0.0
    %2595 = vmatprep.subr.mxu0 0.0
    %2596 = vmatpush1.msra.mxu0 0.0
    %2597 = vmatprep.mubr.f32.mxu0 0.0
    %2598 = vmatmul.mubr.f32.gmra.mrb[0].mxu0 %v2249
    %v2599 = vpop.f32.mrb[0].mxu0
    %v2600 = vadd.f32 %v2515, %v2599
    %v2601 = vpop.f32.mrb[0].mxu0
    %2602 = vmatprep.mubr.f32.mxu0 0.0
    %2603 = vmatmul.mubr.f32.gmra.mrb[0].mxu0 %v2252
    %v2604 = vpop.f32.mrb[0].mxu0
    %v2605 = vadd.f32 %v2520, %v2604
    %v2606 = vpop.f32.mrb[0].mxu0
    %2607 = vmatprep.mubr.f32.mxu0 0.0
    %2608 = vmatmul.mubr.f32.gmra.mrb[0].mxu0 %v2255
    %v2609 = vpop.f32.mrb[0].mxu0
    %v2610 = vadd.f32 %v2525, %v2609
    %v2611 = vpop.f32.mrb[0].mxu0
    %2612 = vmatprep.mubr.f32.mxu0 0.0
    %2613 = vmatmul.mubr.f32.gmra.mrb[0].mxu0 %v2258
    %v2614 = vpop.f32.mrb[0].mxu0
    %v2615 = vadd.f32 %v2530, %v2614
    %v2616 = vpop.f32.mrb[0].mxu0
    %2617 = vdwg.mxu0
    %2618 = vmatprep.subr.mxu0 0.0
    %2619 = vmatpush1.msra.mxu0 %v2430
    %2620 = vmatprep.subr.mxu0 0.0
    %2621 = vmatpush1.msra.mxu0 %v2435
    %2622 = vmatprep.subr.mxu0 0.0
    %2623 = vmatpush1.msra.mxu0 %v2440
    %2624 = vmatprep.subr.mxu0 0.0
    %2625 = vmatpush1.msra.mxu0 %v2445
    %2626 = vmatprep.subr.mxu0 0.0
    %2627 = vmatpush1.msra.mxu0 0.0
    %2628 = vmatprep.subr.mxu0 0.0
    %2629 = vmatpush1.msra.mxu0 0.0
    %2630 = vmatprep.subr.mxu0 0.0
    %2631 = vmatpush1.msra.mxu0 0.0
    %2632 = vmatprep.subr.mxu0 0.0
    %2633 = vmatpush1.msra.mxu0 0.0
    %2634 = vmatprep.subr.mxu0 0.0
    %2635 = vmatpush1.msra.mxu0 0.0
    %2636 = vmatprep.subr.mxu0 0.0
    %2637 = vmatpush1.msra.mxu0 0.0
    %2638 = vmatprep.subr.mxu0 0.0
    %2639 = vmatpush1.msra.mxu0 0.0
    %2640 = vmatprep.subr.mxu0 0.0
    %2641 = vmatpush1.msra.mxu0 0.0
    %2642 = vmatprep.subr.mxu0 0.0
    %2643 = vmatpush1.msra.mxu0 0.0
    %2644 = vmatprep.subr.mxu0 0.0
    %2645 = vmatpush1.msra.mxu0 0.0
    %2646 = vmatprep.subr.mxu0 0.0
    %2647 = vmatpush1.msra.mxu0 0.0
    %2648 = vmatprep.subr.mxu0 0.0
    %2649 = vmatpush1.msra.mxu0 0.0
    %2650 = vmatprep.subr.mxu0 0.0
    %2651 = vmatpush1.msra.mxu0 0.0
    %2652 = vmatprep.subr.mxu0 0.0
    %2653 = vmatpush1.msra.mxu0 0.0
    %2654 = vmatprep.subr.mxu0 0.0
    %2655 = vmatpush1.msra.mxu0 0.0
    %2656 = vmatprep.subr.mxu0 0.0
    %2657 = vmatpush1.msra.mxu0 0.0
    %2658 = vmatprep.subr.mxu0 0.0
    %2659 = vmatpush1.msra.mxu0 0.0
    %2660 = vmatprep.subr.mxu0 0.0
    %2661 = vmatpush1.msra.mxu0 0.0
    %2662 = vmatprep.subr.mxu0 0.0
    %2663 = vmatpush1.msra.mxu0 0.0
    %2664 = vmatprep.subr.mxu0 0.0
    %2665 = vmatpush1.msra.mxu0 0.0
    %2666 = vmatprep.subr.mxu0 0.0
    %2667 = vmatpush1.msra.mxu0 0.0
    %2668 = vmatprep.subr.mxu0 0.0
    %2669 = vmatpush1.msra.mxu0 0.0
    %2670 = vmatprep.subr.mxu0 0.0
    %2671 = vmatpush1.msra.mxu0 0.0
    %2672 = vmatprep.subr.mxu0 0.0
    %2673 = vmatpush1.msra.mxu0 0.0
    %2674 = vmatprep.subr.mxu0 0.0
    %2675 = vmatpush1.msra.mxu0 0.0
    %2676 = vmatprep.subr.mxu0 0.0
    %2677 = vmatpush1.msra.mxu0 0.0
    %2678 = vmatprep.subr.mxu0 0.0
    %2679 = vmatpush1.msra.mxu0 0.0
    %2680 = vmatprep.subr.mxu0 0.0
    %2681 = vmatpush1.msra.mxu0 0.0
    %2682 = vmatprep.mubr.f32.mxu0 0.0
    %2683 = vmatmul.mubr.f32.gmra.mrb[0].mxu0 %v842
    %v2684 = vpop.f32.mrb[0].mxu0
    %v2685 = vadd.f32 0.0, %v2684
    %v2686 = vpop.f32.mrb[0].mxu0
    %2687 = vmatprep.mubr.f32.mxu0 0.0
    %2688 = vmatmul.mubr.f32.gmra.mrb[0].mxu0 %v845
    %v2689 = vpop.f32.mrb[0].mxu0
    %v2690 = vadd.f32 0.0, %v2689
    %v2691 = vpop.f32.mrb[0].mxu0
    %2692 = vmatprep.mubr.f32.mxu0 0.0
    %2693 = vmatmul.mubr.f32.gmra.mrb[0].mxu0 %v848
    %v2694 = vpop.f32.mrb[0].mxu0
    %v2695 = vadd.f32 0.0, %v2694
    %v2696 = vpop.f32.mrb[0].mxu0
    %2697 = vmatprep.mubr.f32.mxu0 0.0
    %2698 = vmatmul.mubr.f32.gmra.mrb[0].mxu0 %v851
    %v2699 = vpop.f32.mrb[0].mxu0
    %v2700 = vadd.f32 0.0, %v2699
    %v2701 = vpop.f32.mrb[0].mxu0
    %2702 = vdwg.mxu0
    %v2703 = vadd.f32 %v2600, %v2685
    %v2704 = vadd.f32 %v2605, %v2690
    %v2705 = vadd.f32 %v2610, %v2695
    %v2706 = vadd.f32 %v2615, %v2700
    %v2707 = vld [vmem:[#allocation21] sm:$0x1]
    %v2709 = vlaneseq
    %v2710 = vshrl.u32 %v2709, 7
    %v2711 = vsub.s32 0, %v2710
    %v2712 = vrot.slane %v2707, %v2711
    %v2714 = vadd.f32 %v2703, %v2712
    %v2715 = vadd.f32 %v2704, %v2712
    %v2716 = vadd.f32 %v2705, %v2712
    %v2717 = vadd.f32 %v2706, %v2712
    %v2718 = vadd.f32 %v2714, %v1753
    %v2719 = vadd.f32 %v2715, %v1754
    %v2720 = vadd.f32 %v2716, %v1755
    %v2721 = vadd.f32 %v2717, %v1756
    %v2722 = vmax.f32 %v2718, 0.0
    %v2723 = vmax.f32 %v2719, 0.0
    %v2724 = vmax.f32 %v2720, 0.0
    %v2725 = vmax.f32 %v2721, 0.0
    %v2726 = vld [vmem:[#allocation22] sm:$0xff]
    %v2727 = vld [vmem:[#allocation22 + $0x8] sm:$0xff]
    %v2728 = vld [vmem:[#allocation22 + $0x10] sm:$0xff]
    %v2729 = vld [vmem:[#allocation22 + $0x18] sm:$0xff]
    %v2730 = vld [vmem:[#allocation22 + $0x20] sm:$0xff]
    %v2731 = vld [vmem:[#allocation22 + $0x28] sm:$0xff]
    %v2732 = vld [vmem:[#allocation22 + $0x30] sm:$0xff]
    %v2733 = vld [vmem:[#allocation22 + $0x38] sm:$0xff]
    %v2735 = vsel %vm1765, %v2722, 0
    %v2738 = vsel %vm1765, %v2723, 0
    %v2741 = vsel %vm1765, %v2724, 0
    %v2744 = vsel %vm1765, %v2725, 0
    %2746 = vmatprep.subr.mxu0 0.0
    %2747 = vmatpush1.msra.mxu0 %v2726
    %2748 = vmatprep.subr.mxu0 0.0
    %2749 = vmatpush1.msra.mxu0 %v2727
    %2750 = vmatprep.subr.mxu0 0.0
    %2751 = vmatpush1.msra.mxu0 %v2728
    %2752 = vmatprep.subr.mxu0 0.0
    %2753 = vmatpush1.msra.mxu0 %v2729
    %2754 = vmatprep.subr.mxu0 0.0
    %2755 = vmatpush1.msra.mxu0 %v2730
    %2756 = vmatprep.subr.mxu0 0.0
    %2757 = vmatpush1.msra.mxu0 %v2731
    %2758 = vmatprep.subr.mxu0 0.0
    %2759 = vmatpush1.msra.mxu0 %v2732
    %2760 = vmatprep.subr.mxu0 0.0
    %2761 = vmatpush1.msra.mxu0 %v2733
    %2762 = vmatprep.subr.mxu0 0.0
    %2763 = vmatpush1.msra.mxu0 0.0
    %2764 = vmatprep.subr.mxu0 0.0
    %2765 = vmatpush1.msra.mxu0 0.0
    %2766 = vmatprep.subr.mxu0 0.0
    %2767 = vmatpush1.msra.mxu0 0.0
    %2768 = vmatprep.subr.mxu0 0.0
    %2769 = vmatpush1.msra.mxu0 0.0
    %2770 = vmatprep.subr.mxu0 0.0
    %2771 = vmatpush1.msra.mxu0 0.0
    %2772 = vmatprep.subr.mxu0 0.0
    %2773 = vmatpush1.msra.mxu0 0.0
    %2774 = vmatprep.subr.mxu0 0.0
    %2775 = vmatpush1.msra.mxu0 0.0
    %2776 = vmatprep.subr.mxu0 0.0
    %2777 = vmatpush1.msra.mxu0 0.0
    %2778 = vmatprep.subr.mxu0 0.0
    %2779 = vmatpush1.msra.mxu0 0.0
    %2780 = vmatprep.subr.mxu0 0.0
    %2781 = vmatpush1.msra.mxu0 0.0
    %2782 = vmatprep.subr.mxu0 0.0
    %2783 = vmatpush1.msra.mxu0 0.0
    %2784 = vmatprep.subr.mxu0 0.0
    %2785 = vmatpush1.msra.mxu0 0.0
    %2786 = vmatprep.subr.mxu0 0.0
    %2787 = vmatpush1.msra.mxu0 0.0
    %2788 = vmatprep.subr.mxu0 0.0
    %2789 = vmatpush1.msra.mxu0 0.0
    %2790 = vmatprep.subr.mxu0 0.0
    %2791 = vmatpush1.msra.mxu0 0.0
    %2792 = vmatprep.subr.mxu0 0.0
    %2793 = vmatpush1.msra.mxu0 0.0
    %2794 = vmatprep.subr.mxu0 0.0
    %2795 = vmatpush1.msra.mxu0 0.0
    %2796 = vmatprep.subr.mxu0 0.0
    %2797 = vmatpush1.msra.mxu0 0.0
    %2798 = vmatprep.subr.mxu0 0.0
    %2799 = vmatpush1.msra.mxu0 0.0
    %2800 = vmatprep.subr.mxu0 0.0
    %2801 = vmatpush1.msra.mxu0 0.0
    %2802 = vmatprep.subr.mxu0 0.0
    %2803 = vmatpush1.msra.mxu0 0.0
    %2804 = vmatprep.subr.mxu0 0.0
    %2805 = vmatpush1.msra.mxu0 0.0
    %2806 = vmatprep.subr.mxu0 0.0
    %2807 = vmatpush1.msra.mxu0 0.0
    %2808 = vmatprep.subr.mxu0 0.0
    %2809 = vmatpush1.msra.mxu0 0.0
    %2810 = vmatprep.mubr.f32.mxu0 0.0
    %2811 = vmatmul.mubr.f32.gmra.mrb[0].mxu0 %v2735
    %v2812 = vpop.f32.mrb[0].mxu0
    %v2813 = vadd.f32 0.0, %v2812
    %v2814 = vpop.f32.mrb[0].mxu0
    %2815 = vmatprep.mubr.f32.mxu0 0.0
    %2816 = vmatmul.mubr.f32.gmra.mrb[0].mxu0 %v2738
    %v2817 = vpop.f32.mrb[0].mxu0
    %v2818 = vadd.f32 0.0, %v2817
    %v2819 = vpop.f32.mrb[0].mxu0
    %2820 = vmatprep.mubr.f32.mxu0 0.0
    %2821 = vmatmul.mubr.f32.gmra.mrb[0].mxu0 %v2741
    %v2822 = vpop.f32.mrb[0].mxu0
    %v2823 = vadd.f32 0.0, %v2822
    %v2824 = vpop.f32.mrb[0].mxu0
    %2825 = vmatprep.mubr.f32.mxu0 0.0
    %2826 = vmatmul.mubr.f32.gmra.mrb[0].mxu0 %v2744
    %v2827 = vpop.f32.mrb[0].mxu0
    %v2828 = vadd.f32 0.0, %v2827
    %v2829 = vpop.f32.mrb[0].mxu0
    %2830 = vdwg.mxu0
    %v2831 = vld [vmem:[#allocation24] sm:$0xff]
    %v2832 = vld [vmem:[#allocation24 + $0x8] sm:$0xff]
    %v2833 = vld [vmem:[#allocation24 + $0x10] sm:$0xff]
    %v2834 = vld [vmem:[#allocation24 + $0x18] sm:$0xff]
    %v2835 = vld [vmem:[#allocation24 + $0x20] sm:$0xff]
    %v2836 = vld [vmem:[#allocation24 + $0x28] sm:$0xff]
    %v2837 = vld [vmem:[#allocation24 + $0x30] sm:$0xff]
    %v2838 = vld [vmem:[#allocation24 + $0x38] sm:$0xff]
    %2839 = vmatprep.subr.mxu0 0.0
    %2840 = vmatpush1.msra.mxu0 %v2831
    %2841 = vmatprep.subr.mxu0 0.0
    %2842 = vmatpush1.msra.mxu0 %v2832
    %2843 = vmatprep.subr.mxu0 0.0
    %2844 = vmatpush1.msra.mxu0 %v2833
    %2845 = vmatprep.subr.mxu0 0.0
    %2846 = vmatpush1.msra.mxu0 %v2834
    %2847 = vmatprep.subr.mxu0 0.0
    %2848 = vmatpush1.msra.mxu0 %v2835
    %2849 = vmatprep.subr.mxu0 0.0
    %2850 = vmatpush1.msra.mxu0 %v2836
    %2851 = vmatprep.subr.mxu0 0.0
    %2852 = vmatpush1.msra.mxu0 %v2837
    %2853 = vmatprep.subr.mxu0 0.0
    %2854 = vmatpush1.msra.mxu0 %v2838
    %2855 = vmatprep.subr.mxu0 0.0
    %2856 = vmatpush1.msra.mxu0 0.0
    %2857 = vmatprep.subr.mxu0 0.0
    %2858 = vmatpush1.msra.mxu0 0.0
    %2859 = vmatprep.subr.mxu0 0.0
    %2860 = vmatpush1.msra.mxu0 0.0
    %2861 = vmatprep.subr.mxu0 0.0
    %2862 = vmatpush1.msra.mxu0 0.0
    %2863 = vmatprep.subr.mxu0 0.0
    %2864 = vmatpush1.msra.mxu0 0.0
    %2865 = vmatprep.subr.mxu0 0.0
    %2866 = vmatpush1.msra.mxu0 0.0
    %2867 = vmatprep.subr.mxu0 0.0
    %2868 = vmatpush1.msra.mxu0 0.0
    %2869 = vmatprep.subr.mxu0 0.0
    %2870 = vmatpush1.msra.mxu0 0.0
    %2871 = vmatprep.subr.mxu0 0.0
    %2872 = vmatpush1.msra.mxu0 0.0
    %2873 = vmatprep.subr.mxu0 0.0
    %2874 = vmatpush1.msra.mxu0 0.0
    %2875 = vmatprep.subr.mxu0 0.0
    %2876 = vmatpush1.msra.mxu0 0.0
    %2877 = vmatprep.subr.mxu0 0.0
    %2878 = vmatpush1.msra.mxu0 0.0
    %2879 = vmatprep.subr.mxu0 0.0
    %2880 = vmatpush1.msra.mxu0 0.0
    %2881 = vmatprep.subr.mxu0 0.0
    %2882 = vmatpush1.msra.mxu0 0.0
    %2883 = vmatprep.subr.mxu0 0.0
    %2884 = vmatpush1.msra.mxu0 0.0
    %2885 = vmatprep.subr.mxu0 0.0
    %2886 = vmatpush1.msra.mxu0 0.0
    %2887 = vmatprep.subr.mxu0 0.0
    %2888 = vmatpush1.msra.mxu0 0.0
    %2889 = vmatprep.subr.mxu0 0.0
    %2890 = vmatpush1.msra.mxu0 0.0
    %2891 = vmatprep.subr.mxu0 0.0
    %2892 = vmatpush1.msra.mxu0 0.0
    %2893 = vmatprep.subr.mxu0 0.0
    %2894 = vmatpush1.msra.mxu0 0.0
    %2895 = vmatprep.subr.mxu0 0.0
    %2896 = vmatpush1.msra.mxu0 0.0
    %2897 = vmatprep.subr.mxu0 0.0
    %2898 = vmatpush1.msra.mxu0 0.0
    %2899 = vmatprep.subr.mxu0 0.0
    %2900 = vmatpush1.msra.mxu0 0.0
    %2901 = vmatprep.subr.mxu0 0.0
    %2902 = vmatpush1.msra.mxu0 0.0
    %2903 = vmatprep.mubr.f32.mxu0 0.0
    %2904 = vmatmul.mubr.f32.gmra.mrb[0].mxu0 %v2735
    %v2905 = vpop.f32.mrb[0].mxu0
    %v2906 = vadd.f32 0.0, %v2905
    %v2907 = vpop.f32.mrb[0].mxu0
    %2908 = vmatprep.mubr.f32.mxu0 0.0
    %2909 = vmatmul.mubr.f32.gmra.mrb[0].mxu0 %v2738
    %v2910 = vpop.f32.mrb[0].mxu0
    %v2911 = vadd.f32 0.0, %v2910
    %v2912 = vpop.f32.mrb[0].mxu0
    %2913 = vmatprep.mubr.f32.mxu0 0.0
    %2914 = vmatmul.mubr.f32.gmra.mrb[0].mxu0 %v2741
    %v2915 = vpop.f32.mrb[0].mxu0
    %v2916 = vadd.f32 0.0, %v2915
    %v2917 = vpop.f32.mrb[0].mxu0
    %2918 = vmatprep.mubr.f32.mxu0 0.0
    %2919 = vmatmul.mubr.f32.gmra.mrb[0].mxu0 %v2744
    %v2920 = vpop.f32.mrb[0].mxu0
    %v2921 = vadd.f32 0.0, %v2920
    %v2922 = vpop.f32.mrb[0].mxu0
    %2923 = vdwg.mxu0
    %v2924 = vmax.f32 %v2813, %v2906
    %v2925 = vmax.f32 %v2818, %v2911
    %v2926 = vmax.f32 %v2823, %v2916
    %v2927 = vmax.f32 %v2828, %v2921
    %v2928 = vld [vmem:[#allocation27] sm:$0xff]
    %v2929 = vld [vmem:[#allocation27 + $0x8] sm:$0xff]
    %v2930 = vld [vmem:[#allocation27 + $0x10] sm:$0xff]
    %v2931 = vld [vmem:[#allocation27 + $0x18] sm:$0xff]
    %v2932 = vadd.f32 %v2924, %v2928
    %v2933 = vadd.f32 %v2925, %v2929
    %v2934 = vadd.f32 %v2926, %v2930
    %v2935 = vadd.f32 %v2927, %v2931
    %v2936 = vld [vmem:[#allocation28] sm:$0xff]
    %v2937 = vld [vmem:[#allocation28 + $0x8] sm:$0xff]
    %v2938 = vld [vmem:[#allocation28 + $0x10] sm:$0xff]
    %v2939 = vld [vmem:[#allocation28 + $0x18] sm:$0xff]
    %v2940 = vld [vmem:[#allocation30] sm:$0xff]
    %v2941 = vld [vmem:[#allocation30 + $0x8] sm:$0xff]
    %v2942 = vld [vmem:[#allocation30 + $0x10] sm:$0xff]
    %v2943 = vld [vmem:[#allocation30 + $0x18] sm:$0xff]
    %v2944 = vld [vmem:[#allocation31] sm:$0x1]
    %v2946 = vlaneseq
    %v2947 = vshrl.u32 %v2946, 7
    %v2948 = vsub.s32 0, %v2947
    %v2949 = vrot.slane %v2944, %v2948
    %v2952 = vsel %vm466, %v2932, 0
    %v2955 = vsel %vm466, %v2933, 0
    %v2958 = vsel %vm466, %v2934, 0
    %v2961 = vsel %vm466, %v2935, 0
    %2963 = vmatprep.subr.mxu0 0.0
    %2964 = vmatpush1.msra.mxu0 %v2940
    %2965 = vmatprep.subr.mxu0 0.0
    %2966 = vmatpush1.msra.mxu0 %v2941
    %2967 = vmatprep.subr.mxu0 0.0
    %2968 = vmatpush1.msra.mxu0 %v2942
    %2969 = vmatprep.subr.mxu0 0.0
    %2970 = vmatpush1.msra.mxu0 %v2943
    %2971 = vmatprep.subr.mxu0 0.0
    %2972 = vmatpush1.msra.mxu0 0.0
    %2973 = vmatprep.subr.mxu0 0.0
    %2974 = vmatpush1.msra.mxu0 0.0
    %2975 = vmatprep.subr.mxu0 0.0
    %2976 = vmatpush1.msra.mxu0 0.0
    %2977 = vmatprep.subr.mxu0 0.0
    %2978 = vmatpush1.msra.mxu0 0.0
    %2979 = vmatprep.subr.mxu0 0.0
    %2980 = vmatpush1.msra.mxu0 0.0
    %2981 = vmatprep.subr.mxu0 0.0
    %2982 = vmatpush1.msra.mxu0 0.0
    %2983 = vmatprep.subr.mxu0 0.0
    %2984 = vmatpush1.msra.mxu0 0.0
    %2985 = vmatprep.subr.mxu0 0.0
    %2986 = vmatpush1.msra.mxu0 0.0
    %2987 = vmatprep.subr.mxu0 0.0
    %2988 = vmatpush1.msra.mxu0 0.0
    %2989 = vmatprep.subr.mxu0 0.0
    %2990 = vmatpush1.msra.mxu0 0.0
    %2991 = vmatprep.subr.mxu0 0.0
    %2992 = vmatpush1.msra.mxu0 0.0
    %2993 = vmatprep.subr.mxu0 0.0
    %2994 = vmatpush1.msra.mxu0 0.0
    %2995 = vmatprep.subr.mxu0 0.0
    %2996 = vmatpush1.msra.mxu0 0.0
    %2997 = vmatprep.subr.mxu0 0.0
    %2998 = vmatpush1.msra.mxu0 0.0
    %2999 = vmatprep.subr.mxu0 0.0
    %3000 = vmatpush1.msra.mxu0 0.0
    %3001 = vmatprep.subr.mxu0 0.0
    %3002 = vmatpush1.msra.mxu0 0.0
    %3003 = vmatprep.subr.mxu0 0.0
    %3004 = vmatpush1.msra.mxu0 0.0
    %3005 = vmatprep.subr.mxu0 0.0
    %3006 = vmatpush1.msra.mxu0 0.0
    %3007 = vmatprep.subr.mxu0 0.0
    %3008 = vmatpush1.msra.mxu0 0.0
    %3009 = vmatprep.subr.mxu0 0.0
    %3010 = vmatpush1.msra.mxu0 0.0
    %3011 = vmatprep.subr.mxu0 0.0
    %3012 = vmatpush1.msra.mxu0 0.0
    %3013 = vmatprep.subr.mxu0 0.0
    %3014 = vmatpush1.msra.mxu0 0.0
    %3015 = vmatprep.subr.mxu0 0.0
    %3016 = vmatpush1.msra.mxu0 0.0
    %3017 = vmatprep.subr.mxu0 0.0
    %3018 = vmatpush1.msra.mxu0 0.0
    %3019 = vmatprep.subr.mxu0 0.0
    %3020 = vmatpush1.msra.mxu0 0.0
    %3021 = vmatprep.subr.mxu0 0.0
    %3022 = vmatpush1.msra.mxu0 0.0
    %3023 = vmatprep.subr.mxu0 0.0
    %3024 = vmatpush1.msra.mxu0 0.0
    %3025 = vmatprep.subr.mxu0 0.0
    %3026 = vmatpush1.msra.mxu0 0.0
    %3027 = vmatprep.mubr.f32.mxu0 0.0
    %3028 = vmatmul.mubr.f32.gmra.mrb[0].mxu0 %v2952
    %v3029 = vpop.f32.mrb[0].mxu0
    %v3030 = vadd.f32 %v2949, %v3029
    %v3031 = vpop.f32.mrb[0].mxu0
    %3032 = vmatprep.mubr.f32.mxu0 0.0
    %3033 = vmatmul.mubr.f32.gmra.mrb[0].mxu0 %v2955
    %v3034 = vpop.f32.mrb[0].mxu0
    %v3035 = vadd.f32 %v2949, %v3034
    %v3036 = vpop.f32.mrb[0].mxu0
    %3037 = vmatprep.mubr.f32.mxu0 0.0
    %3038 = vmatmul.mubr.f32.gmra.mrb[0].mxu0 %v2958
    %v3039 = vpop.f32.mrb[0].mxu0
    %v3040 = vadd.f32 %v2949, %v3039
    %v3041 = vpop.f32.mrb[0].mxu0
    %3042 = vmatprep.mubr.f32.mxu0 0.0
    %3043 = vmatmul.mubr.f32.gmra.mrb[0].mxu0 %v2961
    %v3044 = vpop.f32.mrb[0].mxu0
    %v3045 = vadd.f32 %v2949, %v3044
    %v3046 = vpop.f32.mrb[0].mxu0
    %3047 = vdwg.mxu0
    %3052 = vrot.lane.b32.xlu0 %v3030, 96
    %v3053 = vpop.permute.xlu0 %3052
    %3054 = vrot.lane.b32.xlu0 %v3035, 96
    %v3055 = vpop.permute.xlu0 %3054
    %3056 = vrot.lane.b32.xlu0 %v3040, 96
    %v3057 = vpop.permute.xlu0 %3056
    %3058 = vrot.lane.b32.xlu0 %v3045, 96
    %v3059 = vpop.permute.xlu0 %3058
    %vm3060 = vcmask 64512
    %v3061 = vsel %vm3060, %v3030, 0
    %v3063 = vsel %vm3060, %v3035, 0
    %v3065 = vsel %vm3060, %v3040, 0
    %v3067 = vsel %vm3060, %v3045, 0
    %v3069 = vsel %vm3060, %v3053, 0
    %v3071 = vsel %vm3060, %v3055, 0
    %v3073 = vsel %vm3060, %v3057, 0
    %v3075 = vsel %vm3060, %v3059, 0
    %3077 = vmatprep.subr.mxu0 0.0
    %3078 = vmatpush1.xpose.msra.mxu0 %v3069
    %3079 = vmatprep.subr.mxu0 0.0
    %3080 = vmatpush1.xpose.msra.mxu0 %v3071
    %3081 = vmatprep.subr.mxu0 0.0
    %3082 = vmatpush1.xpose.msra.mxu0 %v3073
    %3083 = vmatprep.subr.mxu0 0.0
    %3084 = vmatpush1.xpose.msra.mxu0 %v3075
    %3085 = vmatprep.subr.mxu0 0.0
    %3086 = vmatpush1.xpose.msra.mxu0 0.0
    %3087 = vmatprep.subr.mxu0 0.0
    %3088 = vmatpush1.xpose.msra.mxu0 0.0
    %3089 = vmatprep.subr.mxu0 0.0
    %3090 = vmatpush1.xpose.msra.mxu0 0.0
    %3091 = vmatprep.subr.mxu0 0.0
    %3092 = vmatpush1.xpose.msra.mxu0 0.0
    %3093 = vmatprep.subr.mxu0 0.0
    %3094 = vmatpush1.xpose.msra.mxu0 0.0
    %3095 = vmatprep.subr.mxu0 0.0
    %3096 = vmatpush1.xpose.msra.mxu0 0.0
    %3097 = vmatprep.subr.mxu0 0.0
    %3098 = vmatpush1.xpose.msra.mxu0 0.0
    %3099 = vmatprep.subr.mxu0 0.0
    %3100 = vmatpush1.xpose.msra.mxu0 0.0
    %3101 = vmatprep.subr.mxu0 0.0
    %3102 = vmatpush1.xpose.msra.mxu0 0.0
    %3103 = vmatprep.subr.mxu0 0.0
    %3104 = vmatpush1.xpose.msra.mxu0 0.0
    %3105 = vmatprep.subr.mxu0 0.0
    %3106 = vmatpush1.xpose.msra.mxu0 0.0
    %3107 = vmatprep.subr.mxu0 0.0
    %3108 = vmatpush1.xpose.msra.mxu0 0.0
    %3109 = vmatprep.subr.mxu0 0.0
    %3110 = vmatpush1.xpose.msra.mxu0 0.0
    %3111 = vmatprep.subr.mxu0 0.0
    %3112 = vmatpush1.xpose.msra.mxu0 0.0
    %3113 = vmatprep.subr.mxu0 0.0
    %3114 = vmatpush1.xpose.msra.mxu0 0.0
    %3115 = vmatprep.subr.mxu0 0.0
    %3116 = vmatpush1.xpose.msra.mxu0 0.0
    %3117 = vmatprep.subr.mxu0 0.0
    %3118 = vmatpush1.xpose.msra.mxu0 0.0
    %3119 = vmatprep.subr.mxu0 0.0
    %3120 = vmatpush1.xpose.msra.mxu0 0.0
    %3121 = vmatprep.subr.mxu0 0.0
    %3122 = vmatpush1.xpose.msra.mxu0 0.0
    %3123 = vmatprep.subr.mxu0 0.0
    %3124 = vmatpush1.xpose.msra.mxu0 0.0
    %3125 = vmatprep.subr.mxu0 0.0
    %3126 = vmatpush1.xpose.msra.mxu0 0.0
    %3127 = vmatprep.subr.mxu0 0.0
    %3128 = vmatpush1.xpose.msra.mxu0 0.0
    %3129 = vmatprep.subr.mxu0 0.0
    %3130 = vmatpush1.xpose.msra.mxu0 0.0
    %3131 = vmatprep.subr.mxu0 0.0
    %3132 = vmatpush1.xpose.msra.mxu0 0.0
    %3133 = vmatprep.subr.mxu0 0.0
    %3134 = vmatpush1.xpose.msra.mxu0 0.0
    %3135 = vmatprep.subr.mxu0 0.0
    %3136 = vmatpush1.xpose.msra.mxu0 0.0
    %3137 = vmatprep.subr.mxu0 0.0
    %3138 = vmatpush1.xpose.msra.mxu0 0.0
    %3139 = vmatprep.subr.mxu0 0.0
    %3140 = vmatpush1.xpose.msra.mxu0 0.0
    %3141 = vmatprep.mubr.f32.mxu0 0.0
    %3142 = vmatmul.mubr.f32.gmra.mrb[0].mxu0 %v3061
    %v3143 = vpop.f32.mrb[0].mxu0
    %v3144 = vadd.f32 %v2936, %v3143
    %v3145 = vpop.f32.mrb[0].mxu0
    %3146 = vmatprep.mubr.f32.mxu0 0.0
    %3147 = vmatmul.mubr.f32.gmra.mrb[0].mxu0 %v3063
    %v3148 = vpop.f32.mrb[0].mxu0
    %v3149 = vadd.f32 %v2937, %v3148
    %v3150 = vpop.f32.mrb[0].mxu0
    %3151 = vmatprep.mubr.f32.mxu0 0.0
    %3152 = vmatmul.mubr.f32.gmra.mrb[0].mxu0 %v3065
    %v3153 = vpop.f32.mrb[0].mxu0
    %v3154 = vadd.f32 %v2938, %v3153
    %v3155 = vpop.f32.mrb[0].mxu0
    %3156 = vmatprep.mubr.f32.mxu0 0.0
    %3157 = vmatmul.mubr.f32.gmra.mrb[0].mxu0 %v3067
    %v3158 = vpop.f32.mrb[0].mxu0
    %v3159 = vadd.f32 %v2939, %v3158
    %v3160 = vpop.f32.mrb[0].mxu0
    %3161 = vdwg.mxu0
    %v3162 = vsel %vm466, %v3144, -inf
    %3163 = vmax.xlane.f32.xlu0 %v3162
    %v3164 = vpop.xlane.xlu0 %3163
    %v3165 = vsel %vm466, %v3149, -inf
    %3166 = vmax.xlane.f32.xlu0 %v3165
    %v3167 = vpop.xlane.xlu0 %3166
    %v3168 = vsel %vm466, %v3154, -inf
    %3169 = vmax.xlane.f32.xlu0 %v3168
    %v3170 = vpop.xlane.xlu0 %3169
    %v3171 = vsel %vm466, %v3159, -inf
    %3172 = vmax.xlane.f32.xlu0 %v3171
    %v3173 = vpop.xlane.xlu0 %3172
    %v3174 = vsub.f32 %v3144, %v3164
    %v3175 = vsub.f32 %v3149, %v3167
    %v3176 = vsub.f32 %v3154, %v3170
    %v3177 = vsub.f32 %v3159, %v3173
    %v3178 = vmul.f32 %v3174, 1.442695
    %v3179 = vpow.pop %v3178
    %v3180 = vmul.f32 %v3175, 1.442695
    %v3181 = vpow.pop %v3180
    %v3182 = vmul.f32 %v3176, 1.442695
    %v3183 = vpow.pop %v3182
    %v3184 = vmul.f32 %v3177, 1.442695
    %v3185 = vpow.pop %v3184
    %v3186 = vsel %vm466, %v3179, 0.0
    %3187 = vadd.xlane.f32.xlu0 %v3186
    %v3188 = vpop.xlane.xlu0 %3187
    %v3189 = vsel %vm466, %v3181, 0.0
    %3190 = vadd.xlane.f32.xlu0 %v3189
    %v3191 = vpop.xlane.xlu0 %3190
    %v3192 = vsel %vm466, %v3183, 0.0
    %3193 = vadd.xlane.f32.xlu0 %v3192
    %v3194 = vpop.xlane.xlu0 %3193
    %v3195 = vsel %vm466, %v3185, 0.0
    %3196 = vadd.xlane.f32.xlu0 %v3195
    %v3197 = vpop.xlane.xlu0 %3196
    %v3198 = vrcp.pop %v3188
    %v3199 = vrcp.pop %v3191
    %v3200 = vrcp.pop %v3194
    %v3201 = vrcp.pop %v3197
    %v3202 = vmul.f32 %v3179, %v3198
    %v3203 = vmul.f32 %v3181, %v3199
    %v3204 = vmul.f32 %v3183, %v3200
    %v3205 = vmul.f32 %v3185, %v3201
    %3206 = vrot.lane.b32.xlu0 %v3030, 64
    %v3207 = vpop.permute.xlu0 %3206
    %3208 = vrot.lane.b32.xlu0 %v3035, 64
    %v3209 = vpop.permute.xlu0 %3208
    %3210 = vrot.lane.b32.xlu0 %v3040, 64
    %v3211 = vpop.permute.xlu0 %3210
    %3212 = vrot.lane.b32.xlu0 %v3045, 64
    %v3213 = vpop.permute.xlu0 %3212
    %v3219 = vsel %vm466, %v3202, 0
    %v3222 = vsel %vm466, %v3203, 0
    %v3225 = vsel %vm466, %v3204, 0
    %v3228 = vsel %vm466, %v3205, 0
    %3230 = vmatprep.subr.mxu0 0.0
    %3231 = vmatpush1.msra.mxu0 %v3207
    %3232 = vmatprep.subr.mxu0 0.0
    %3233 = vmatpush1.msra.mxu0 %v3209
    %3234 = vmatprep.subr.mxu0 0.0
    %3235 = vmatpush1.msra.mxu0 %v3211
    %3236 = vmatprep.subr.mxu0 0.0
    %3237 = vmatpush1.msra.mxu0 %v3213
    %3238 = vmatprep.subr.mxu0 0.0
    %3239 = vmatpush1.msra.mxu0 0.0
    %3240 = vmatprep.subr.mxu0 0.0
    %3241 = vmatpush1.msra.mxu0 0.0
    %3242 = vmatprep.subr.mxu0 0.0
    %3243 = vmatpush1.msra.mxu0 0.0
    %3244 = vmatprep.subr.mxu0 0.0
    %3245 = vmatpush1.msra.mxu0 0.0
    %3246 = vmatprep.subr.mxu0 0.0
    %3247 = vmatpush1.msra.mxu0 0.0
    %3248 = vmatprep.subr.mxu0 0.0
    %3249 = vmatpush1.msra.mxu0 0.0
    %3250 = vmatprep.subr.mxu0 0.0
    %3251 = vmatpush1.msra.mxu0 0.0
    %3252 = vmatprep.subr.mxu0 0.0
    %3253 = vmatpush1.msra.mxu0 0.0
    %3254 = vmatprep.subr.mxu0 0.0
    %3255 = vmatpush1.msra.mxu0 0.0
    %3256 = vmatprep.subr.mxu0 0.0
    %3257 = vmatpush1.msra.mxu0 0.0
    %3258 = vmatprep.subr.mxu0 0.0
    %3259 = vmatpush1.msra.mxu0 0.0
    %3260 = vmatprep.subr.mxu0 0.0
    %3261 = vmatpush1.msra.mxu0 0.0
    %3262 = vmatprep.subr.mxu0 0.0
    %3263 = vmatpush1.msra.mxu0 0.0
    %3264 = vmatprep.subr.mxu0 0.0
    %3265 = vmatpush1.msra.mxu0 0.0
    %3266 = vmatprep.subr.mxu0 0.0
    %3267 = vmatpush1.msra.mxu0 0.0
    %3268 = vmatprep.subr.mxu0 0.0
    %3269 = vmatpush1.msra.mxu0 0.0
    %3270 = vmatprep.subr.mxu0 0.0
    %3271 = vmatpush1.msra.mxu0 0.0
    %3272 = vmatprep.subr.mxu0 0.0
    %3273 = vmatpush1.msra.mxu0 0.0
    %3274 = vmatprep.subr.mxu0 0.0
    %3275 = vmatpush1.msra.mxu0 0.0
    %3276 = vmatprep.subr.mxu0 0.0
    %3277 = vmatpush1.msra.mxu0 0.0
    %3278 = vmatprep.subr.mxu0 0.0
    %3279 = vmatpush1.msra.mxu0 0.0
    %3280 = vmatprep.subr.mxu0 0.0
    %3281 = vmatpush1.msra.mxu0 0.0
    %3282 = vmatprep.subr.mxu0 0.0
    %3283 = vmatpush1.msra.mxu0 0.0
    %3284 = vmatprep.subr.mxu0 0.0
    %3285 = vmatpush1.msra.mxu0 0.0
    %3286 = vmatprep.subr.mxu0 0.0
    %3287 = vmatpush1.msra.mxu0 0.0
    %3288 = vmatprep.subr.mxu0 0.0
    %3289 = vmatpush1.msra.mxu0 0.0
    %3290 = vmatprep.subr.mxu0 0.0
    %3291 = vmatpush1.msra.mxu0 0.0
    %3292 = vmatprep.subr.mxu0 0.0
    %3293 = vmatpush1.msra.mxu0 0.0
    %3294 = vmatprep.mubr.f32.mxu0 0.0
    %3295 = vmatmul.mubr.f32.gmra.mrb[0].mxu0 %v3219
    %v3296 = vpop.f32.mrb[0].mxu0
    %v3297 = vadd.f32 0.0, %v3296
    %v3298 = vpop.f32.mrb[0].mxu0
    %3299 = vmatprep.mubr.f32.mxu0 0.0
    %3300 = vmatmul.mubr.f32.gmra.mrb[0].mxu0 %v3222
    %v3301 = vpop.f32.mrb[0].mxu0
    %v3302 = vadd.f32 0.0, %v3301
    %v3303 = vpop.f32.mrb[0].mxu0
    %3304 = vmatprep.mubr.f32.mxu0 0.0
    %3305 = vmatmul.mubr.f32.gmra.mrb[0].mxu0 %v3225
    %v3306 = vpop.f32.mrb[0].mxu0
    %v3307 = vadd.f32 0.0, %v3306
    %v3308 = vpop.f32.mrb[0].mxu0
    %3309 = vmatprep.mubr.f32.mxu0 0.0
    %3310 = vmatmul.mubr.f32.gmra.mrb[0].mxu0 %v3228
    %v3311 = vpop.f32.mrb[0].mxu0
    %v3312 = vadd.f32 0.0, %v3311
    %v3313 = vpop.f32.mrb[0].mxu0
    %3314 = vdwg.mxu0
    %3315 = vrot.lane.b32.xlu0 %v3030, 120
    %v3316 = vpop.permute.xlu0 %3315
    %3317 = vrot.lane.b32.xlu0 %v3035, 120
    %v3318 = vpop.permute.xlu0 %3317
    %3319 = vrot.lane.b32.xlu0 %v3040, 120
    %v3320 = vpop.permute.xlu0 %3319
    %3321 = vrot.lane.b32.xlu0 %v3045, 120
    %v3322 = vpop.permute.xlu0 %3321
    %3323 = vrot.lane.b32.xlu0 %v3030, 88
    %v3324 = vpop.permute.xlu0 %3323
    %3325 = vrot.lane.b32.xlu0 %v3035, 88
    %v3326 = vpop.permute.xlu0 %3325
    %3327 = vrot.lane.b32.xlu0 %v3040, 88
    %v3328 = vpop.permute.xlu0 %3327
    %3329 = vrot.lane.b32.xlu0 %v3045, 88
    %v3330 = vpop.permute.xlu0 %3329
    %v3331 = vsel %vm3060, %v3316, 0
    %v3333 = vsel %vm3060, %v3318, 0
    %v3335 = vsel %vm3060, %v3320, 0
    %v3337 = vsel %vm3060, %v3322, 0
    %v3339 = vsel %vm3060, %v3324, 0
    %v3341 = vsel %vm3060, %v3326, 0
    %v3343 = vsel %vm3060, %v3328, 0
    %v3345 = vsel %vm3060, %v3330, 0
    %3347 = vmatprep.subr.mxu0 0.0
    %3348 = vmatpush1.xpose.msra.mxu0 %v3339
    %3349 = vmatprep.subr.mxu0 0.0
    %3350 = vmatpush1.xpose.msra.mxu0 %v3341
    %3351 = vmatprep.subr.mxu0 0.0
    %3352 = vmatpush1.xpose.msra.mxu0 %v3343
    %3353 = vmatprep.subr.mxu0 0.0
    %3354 = vmatpush1.xpose.msra.mxu0 %v3345
    %3355 = vmatprep.subr.mxu0 0.0
    %3356 = vmatpush1.xpose.msra.mxu0 0.0
    %3357 = vmatprep.subr.mxu0 0.0
    %3358 = vmatpush1.xpose.msra.mxu0 0.0
    %3359 = vmatprep.subr.mxu0 0.0
    %3360 = vmatpush1.xpose.msra.mxu0 0.0
    %3361 = vmatprep.subr.mxu0 0.0
    %3362 = vmatpush1.xpose.msra.mxu0 0.0
    %3363 = vmatprep.subr.mxu0 0.0
    %3364 = vmatpush1.xpose.msra.mxu0 0.0
    %3365 = vmatprep.subr.mxu0 0.0
    %3366 = vmatpush1.xpose.msra.mxu0 0.0
    %3367 = vmatprep.subr.mxu0 0.0
    %3368 = vmatpush1.xpose.msra.mxu0 0.0
    %3369 = vmatprep.subr.mxu0 0.0
    %3370 = vmatpush1.xpose.msra.mxu0 0.0
    %3371 = vmatprep.subr.mxu0 0.0
    %3372 = vmatpush1.xpose.msra.mxu0 0.0
    %3373 = vmatprep.subr.mxu0 0.0
    %3374 = vmatpush1.xpose.msra.mxu0 0.0
    %3375 = vmatprep.subr.mxu0 0.0
    %3376 = vmatpush1.xpose.msra.mxu0 0.0
    %3377 = vmatprep.subr.mxu0 0.0
    %3378 = vmatpush1.xpose.msra.mxu0 0.0
    %3379 = vmatprep.subr.mxu0 0.0
    %3380 = vmatpush1.xpose.msra.mxu0 0.0
    %3381 = vmatprep.subr.mxu0 0.0
    %3382 = vmatpush1.xpose.msra.mxu0 0.0
    %3383 = vmatprep.subr.mxu0 0.0
    %3384 = vmatpush1.xpose.msra.mxu0 0.0
    %3385 = vmatprep.subr.mxu0 0.0
    %3386 = vmatpush1.xpose.msra.mxu0 0.0
    %3387 = vmatprep.subr.mxu0 0.0
    %3388 = vmatpush1.xpose.msra.mxu0 0.0
    %3389 = vmatprep.subr.mxu0 0.0
    %3390 = vmatpush1.xpose.msra.mxu0 0.0
    %3391 = vmatprep.subr.mxu0 0.0
    %3392 = vmatpush1.xpose.msra.mxu0 0.0
    %3393 = vmatprep.subr.mxu0 0.0
    %3394 = vmatpush1.xpose.msra.mxu0 0.0
    %3395 = vmatprep.subr.mxu0 0.0
    %3396 = vmatpush1.xpose.msra.mxu0 0.0
    %3397 = vmatprep.subr.mxu0 0.0
    %3398 = vmatpush1.xpose.msra.mxu0 0.0
    %3399 = vmatprep.subr.mxu0 0.0
    %3400 = vmatpush1.xpose.msra.mxu0 0.0
    %3401 = vmatprep.subr.mxu0 0.0
    %3402 = vmatpush1.xpose.msra.mxu0 0.0
    %3403 = vmatprep.subr.mxu0 0.0
    %3404 = vmatpush1.xpose.msra.mxu0 0.0
    %3405 = vmatprep.subr.mxu0 0.0
    %3406 = vmatpush1.xpose.msra.mxu0 0.0
    %3407 = vmatprep.subr.mxu0 0.0
    %3408 = vmatpush1.xpose.msra.mxu0 0.0
    %3409 = vmatprep.subr.mxu0 0.0
    %3410 = vmatpush1.xpose.msra.mxu0 0.0
    %3411 = vmatprep.mubr.f32.mxu0 0.0
    %3412 = vmatmul.mubr.f32.gmra.mrb[0].mxu0 %v3331
    %v3413 = vpop.f32.mrb[0].mxu0
    %v3414 = vadd.f32 %v2936, %v3413
    %v3415 = vpop.f32.mrb[0].mxu0
    %3416 = vmatprep.mubr.f32.mxu0 0.0
    %3417 = vmatmul.mubr.f32.gmra.mrb[0].mxu0 %v3333
    %v3418 = vpop.f32.mrb[0].mxu0
    %v3419 = vadd.f32 %v2937, %v3418
    %v3420 = vpop.f32.mrb[0].mxu0
    %3421 = vmatprep.mubr.f32.mxu0 0.0
    %3422 = vmatmul.mubr.f32.gmra.mrb[0].mxu0 %v3335
    %v3423 = vpop.f32.mrb[0].mxu0
    %v3424 = vadd.f32 %v2938, %v3423
    %v3425 = vpop.f32.mrb[0].mxu0
    %3426 = vmatprep.mubr.f32.mxu0 0.0
    %3427 = vmatmul.mubr.f32.gmra.mrb[0].mxu0 %v3337
    %v3428 = vpop.f32.mrb[0].mxu0
    %v3429 = vadd.f32 %v2939, %v3428
    %v3430 = vpop.f32.mrb[0].mxu0
    %3431 = vdwg.mxu0
    %v3432 = vsel %vm466, %v3414, -inf
    %3433 = vmax.xlane.f32.xlu0 %v3432
    %v3434 = vpop.xlane.xlu0 %3433
    %v3435 = vsel %vm466, %v3419, -inf
    %3436 = vmax.xlane.f32.xlu0 %v3435
    %v3437 = vpop.xlane.xlu0 %3436
    %v3438 = vsel %vm466, %v3424, -inf
    %3439 = vmax.xlane.f32.xlu0 %v3438
    %v3440 = vpop.xlane.xlu0 %3439
    %v3441 = vsel %vm466, %v3429, -inf
    %3442 = vmax.xlane.f32.xlu0 %v3441
    %v3443 = vpop.xlane.xlu0 %3442
    %v3444 = vsub.f32 %v3414, %v3434
    %v3445 = vsub.f32 %v3419, %v3437
    %v3446 = vsub.f32 %v3424, %v3440
    %v3447 = vsub.f32 %v3429, %v3443
    %v3448 = vmul.f32 %v3444, 1.442695
    %v3449 = vpow.pop %v3448
    %v3450 = vmul.f32 %v3445, 1.442695
    %v3451 = vpow.pop %v3450
    %v3452 = vmul.f32 %v3446, 1.442695
    %v3453 = vpow.pop %v3452
    %v3454 = vmul.f32 %v3447, 1.442695
    %v3455 = vpow.pop %v3454
    %v3456 = vsel %vm466, %v3449, 0.0
    %3457 = vadd.xlane.f32.xlu0 %v3456
    %v3458 = vpop.xlane.xlu0 %3457
    %v3459 = vsel %vm466, %v3451, 0.0
    %3460 = vadd.xlane.f32.xlu0 %v3459
    %v3461 = vpop.xlane.xlu0 %3460
    %v3462 = vsel %vm466, %v3453, 0.0
    %3463 = vadd.xlane.f32.xlu0 %v3462
    %v3464 = vpop.xlane.xlu0 %3463
    %v3465 = vsel %vm466, %v3455, 0.0
    %3466 = vadd.xlane.f32.xlu0 %v3465
    %v3467 = vpop.xlane.xlu0 %3466
    %v3468 = vrcp.pop %v3458
    %v3469 = vrcp.pop %v3461
    %v3470 = vrcp.pop %v3464
    %v3471 = vrcp.pop %v3467
    %v3472 = vmul.f32 %v3449, %v3468
    %v3473 = vmul.f32 %v3451, %v3469
    %v3474 = vmul.f32 %v3453, %v3470
    %v3475 = vmul.f32 %v3455, %v3471
    %3476 = vrot.lane.b32.xlu0 %v3030, 56
    %v3477 = vpop.permute.xlu0 %3476
    %3478 = vrot.lane.b32.xlu0 %v3035, 56
    %v3479 = vpop.permute.xlu0 %3478
    %3480 = vrot.lane.b32.xlu0 %v3040, 56
    %v3481 = vpop.permute.xlu0 %3480
    %3482 = vrot.lane.b32.xlu0 %v3045, 56
    %v3483 = vpop.permute.xlu0 %3482
    %v3489 = vsel %vm466, %v3472, 0
    %v3492 = vsel %vm466, %v3473, 0
    %v3495 = vsel %vm466, %v3474, 0
    %v3498 = vsel %vm466, %v3475, 0
    %3500 = vmatprep.subr.mxu0 0.0
    %3501 = vmatpush1.msra.mxu0 %v3477
    %3502 = vmatprep.subr.mxu0 0.0
    %3503 = vmatpush1.msra.mxu0 %v3479
    %3504 = vmatprep.subr.mxu0 0.0
    %3505 = vmatpush1.msra.mxu0 %v3481
    %3506 = vmatprep.subr.mxu0 0.0
    %3507 = vmatpush1.msra.mxu0 %v3483
    %3508 = vmatprep.subr.mxu0 0.0
    %3509 = vmatpush1.msra.mxu0 0.0
    %3510 = vmatprep.subr.mxu0 0.0
    %3511 = vmatpush1.msra.mxu0 0.0
    %3512 = vmatprep.subr.mxu0 0.0
    %3513 = vmatpush1.msra.mxu0 0.0
    %3514 = vmatprep.subr.mxu0 0.0
    %3515 = vmatpush1.msra.mxu0 0.0
    %3516 = vmatprep.subr.mxu0 0.0
    %3517 = vmatpush1.msra.mxu0 0.0
    %3518 = vmatprep.subr.mxu0 0.0
    %3519 = vmatpush1.msra.mxu0 0.0
    %3520 = vmatprep.subr.mxu0 0.0
    %3521 = vmatpush1.msra.mxu0 0.0
    %3522 = vmatprep.subr.mxu0 0.0
    %3523 = vmatpush1.msra.mxu0 0.0
    %3524 = vmatprep.subr.mxu0 0.0
    %3525 = vmatpush1.msra.mxu0 0.0
    %3526 = vmatprep.subr.mxu0 0.0
    %3527 = vmatpush1.msra.mxu0 0.0
    %3528 = vmatprep.subr.mxu0 0.0
    %3529 = vmatpush1.msra.mxu0 0.0
    %3530 = vmatprep.subr.mxu0 0.0
    %3531 = vmatpush1.msra.mxu0 0.0
    %3532 = vmatprep.subr.mxu0 0.0
    %3533 = vmatpush1.msra.mxu0 0.0
    %3534 = vmatprep.subr.mxu0 0.0
    %3535 = vmatpush1.msra.mxu0 0.0
    %3536 = vmatprep.subr.mxu0 0.0
    %3537 = vmatpush1.msra.mxu0 0.0
    %3538 = vmatprep.subr.mxu0 0.0
    %3539 = vmatpush1.msra.mxu0 0.0
    %3540 = vmatprep.subr.mxu0 0.0
    %3541 = vmatpush1.msra.mxu0 0.0
    %3542 = vmatprep.subr.mxu0 0.0
    %3543 = vmatpush1.msra.mxu0 0.0
    %3544 = vmatprep.subr.mxu0 0.0
    %3545 = vmatpush1.msra.mxu0 0.0
    %3546 = vmatprep.subr.mxu0 0.0
    %3547 = vmatpush1.msra.mxu0 0.0
    %3548 = vmatprep.subr.mxu0 0.0
    %3549 = vmatpush1.msra.mxu0 0.0
    %3550 = vmatprep.subr.mxu0 0.0
    %3551 = vmatpush1.msra.mxu0 0.0
    %3552 = vmatprep.subr.mxu0 0.0
    %3553 = vmatpush1.msra.mxu0 0.0
    %3554 = vmatprep.subr.mxu0 0.0
    %3555 = vmatpush1.msra.mxu0 0.0
    %3556 = vmatprep.subr.mxu0 0.0
    %3557 = vmatpush1.msra.mxu0 0.0
    %3558 = vmatprep.subr.mxu0 0.0
    %3559 = vmatpush1.msra.mxu0 0.0
    %3560 = vmatprep.subr.mxu0 0.0
    %3561 = vmatpush1.msra.mxu0 0.0
    %3562 = vmatprep.subr.mxu0 0.0
    %3563 = vmatpush1.msra.mxu0 0.0
    %3564 = vmatprep.mubr.f32.mxu0 0.0
    %3565 = vmatmul.mubr.f32.gmra.mrb[0].mxu0 %v3489
    %v3566 = vpop.f32.mrb[0].mxu0
    %v3567 = vadd.f32 0.0, %v3566
    %v3568 = vpop.f32.mrb[0].mxu0
    %3569 = vmatprep.mubr.f32.mxu0 0.0
    %3570 = vmatmul.mubr.f32.gmra.mrb[0].mxu0 %v3492
    %v3571 = vpop.f32.mrb[0].mxu0
    %v3572 = vadd.f32 0.0, %v3571
    %v3573 = vpop.f32.mrb[0].mxu0
    %3574 = vmatprep.mubr.f32.mxu0 0.0
    %3575 = vmatmul.mubr.f32.gmra.mrb[0].mxu0 %v3495
    %v3576 = vpop.f32.mrb[0].mxu0
    %v3577 = vadd.f32 0.0, %v3576
    %v3578 = vpop.f32.mrb[0].mxu0
    %3579 = vmatprep.mubr.f32.mxu0 0.0
    %3580 = vmatmul.mubr.f32.gmra.mrb[0].mxu0 %v3498
    %v3581 = vpop.f32.mrb[0].mxu0
    %v3582 = vadd.f32 0.0, %v3581
    %v3583 = vpop.f32.mrb[0].mxu0
    %3584 = vdwg.mxu0
    %3585 = vrot.lane.b32.xlu0 %v3030, 112
    %v3586 = vpop.permute.xlu0 %3585
    %3587 = vrot.lane.b32.xlu0 %v3035, 112
    %v3588 = vpop.permute.xlu0 %3587
    %3589 = vrot.lane.b32.xlu0 %v3040, 112
    %v3590 = vpop.permute.xlu0 %3589
    %3591 = vrot.lane.b32.xlu0 %v3045, 112
    %v3592 = vpop.permute.xlu0 %3591
    %3593 = vrot.lane.b32.xlu0 %v3030, 80
    %v3594 = vpop.permute.xlu0 %3593
    %3595 = vrot.lane.b32.xlu0 %v3035, 80
    %v3596 = vpop.permute.xlu0 %3595
    %3597 = vrot.lane.b32.xlu0 %v3040, 80
    %v3598 = vpop.permute.xlu0 %3597
    %3599 = vrot.lane.b32.xlu0 %v3045, 80
    %v3600 = vpop.permute.xlu0 %3599
    %v3601 = vsel %vm3060, %v3586, 0
    %v3603 = vsel %vm3060, %v3588, 0
    %v3605 = vsel %vm3060, %v3590, 0
    %v3607 = vsel %vm3060, %v3592, 0
    %v3609 = vsel %vm3060, %v3594, 0
    %v3611 = vsel %vm3060, %v3596, 0
    %v3613 = vsel %vm3060, %v3598, 0
    %v3615 = vsel %vm3060, %v3600, 0
    %3617 = vmatprep.subr.mxu0 0.0
    %3618 = vmatpush1.xpose.msra.mxu0 %v3609
    %3619 = vmatprep.subr.mxu0 0.0
    %3620 = vmatpush1.xpose.msra.mxu0 %v3611
    %3621 = vmatprep.subr.mxu0 0.0
    %3622 = vmatpush1.xpose.msra.mxu0 %v3613
    %3623 = vmatprep.subr.mxu0 0.0
    %3624 = vmatpush1.xpose.msra.mxu0 %v3615
    %3625 = vmatprep.subr.mxu0 0.0
    %3626 = vmatpush1.xpose.msra.mxu0 0.0
    %3627 = vmatprep.subr.mxu0 0.0
    %3628 = vmatpush1.xpose.msra.mxu0 0.0
    %3629 = vmatprep.subr.mxu0 0.0
    %3630 = vmatpush1.xpose.msra.mxu0 0.0
    %3631 = vmatprep.subr.mxu0 0.0
    %3632 = vmatpush1.xpose.msra.mxu0 0.0
    %3633 = vmatprep.subr.mxu0 0.0
    %3634 = vmatpush1.xpose.msra.mxu0 0.0
    %3635 = vmatprep.subr.mxu0 0.0
    %3636 = vmatpush1.xpose.msra.mxu0 0.0
    %3637 = vmatprep.subr.mxu0 0.0
    %3638 = vmatpush1.xpose.msra.mxu0 0.0
    %3639 = vmatprep.subr.mxu0 0.0
    %3640 = vmatpush1.xpose.msra.mxu0 0.0
    %3641 = vmatprep.subr.mxu0 0.0
    %3642 = vmatpush1.xpose.msra.mxu0 0.0
    %3643 = vmatprep.subr.mxu0 0.0
    %3644 = vmatpush1.xpose.msra.mxu0 0.0
    %3645 = vmatprep.subr.mxu0 0.0
    %3646 = vmatpush1.xpose.msra.mxu0 0.0
    %3647 = vmatprep.subr.mxu0 0.0
    %3648 = vmatpush1.xpose.msra.mxu0 0.0
    %3649 = vmatprep.subr.mxu0 0.0
    %3650 = vmatpush1.xpose.msra.mxu0 0.0
    %3651 = vmatprep.subr.mxu0 0.0
    %3652 = vmatpush1.xpose.msra.mxu0 0.0
    %3653 = vmatprep.subr.mxu0 0.0
    %3654 = vmatpush1.xpose.msra.mxu0 0.0
    %3655 = vmatprep.subr.mxu0 0.0
    %3656 = vmatpush1.xpose.msra.mxu0 0.0
    %3657 = vmatprep.subr.mxu0 0.0
    %3658 = vmatpush1.xpose.msra.mxu0 0.0
    %3659 = vmatprep.subr.mxu0 0.0
    %3660 = vmatpush1.xpose.msra.mxu0 0.0
    %3661 = vmatprep.subr.mxu0 0.0
    %3662 = vmatpush1.xpose.msra.mxu0 0.0
    %3663 = vmatprep.subr.mxu0 0.0
    %3664 = vmatpush1.xpose.msra.mxu0 0.0
    %3665 = vmatprep.subr.mxu0 0.0
    %3666 = vmatpush1.xpose.msra.mxu0 0.0
    %3667 = vmatprep.subr.mxu0 0.0
    %3668 = vmatpush1.xpose.msra.mxu0 0.0
    %3669 = vmatprep.subr.mxu0 0.0
    %3670 = vmatpush1.xpose.msra.mxu0 0.0
    %3671 = vmatprep.subr.mxu0 0.0
    %3672 = vmatpush1.xpose.msra.mxu0 0.0
    %3673 = vmatprep.subr.mxu0 0.0
    %3674 = vmatpush1.xpose.msra.mxu0 0.0
    %3675 = vmatprep.subr.mxu0 0.0
    %3676 = vmatpush1.xpose.msra.mxu0 0.0
    %3677 = vmatprep.subr.mxu0 0.0
    %3678 = vmatpush1.xpose.msra.mxu0 0.0
    %3679 = vmatprep.subr.mxu0 0.0
    %3680 = vmatpush1.xpose.msra.mxu0 0.0
    %3681 = vmatprep.mubr.f32.mxu0 0.0
    %3682 = vmatmul.mubr.f32.gmra.mrb[0].mxu0 %v3601
    %v3683 = vpop.f32.mrb[0].mxu0
    %v3684 = vadd.f32 %v2936, %v3683
    %v3685 = vpop.f32.mrb[0].mxu0
    %3686 = vmatprep.mubr.f32.mxu0 0.0
    %3687 = vmatmul.mubr.f32.gmra.mrb[0].mxu0 %v3603
    %v3688 = vpop.f32.mrb[0].mxu0
    %v3689 = vadd.f32 %v2937, %v3688
    %v3690 = vpop.f32.mrb[0].mxu0
    %3691 = vmatprep.mubr.f32.mxu0 0.0
    %3692 = vmatmul.mubr.f32.gmra.mrb[0].mxu0 %v3605
    %v3693 = vpop.f32.mrb[0].mxu0
    %v3694 = vadd.f32 %v2938, %v3693
    %v3695 = vpop.f32.mrb[0].mxu0
    %3696 = vmatprep.mubr.f32.mxu0 0.0
    %3697 = vmatmul.mubr.f32.gmra.mrb[0].mxu0 %v3607
    %v3698 = vpop.f32.mrb[0].mxu0
    %v3699 = vadd.f32 %v2939, %v3698
    %v3700 = vpop.f32.mrb[0].mxu0
    %3701 = vdwg.mxu0
    %v3702 = vsel %vm466, %v3684, -inf
    %3703 = vmax.xlane.f32.xlu0 %v3702
    %v3704 = vpop.xlane.xlu0 %3703
    %v3705 = vsel %vm466, %v3689, -inf
    %3706 = vmax.xlane.f32.xlu0 %v3705
    %v3707 = vpop.xlane.xlu0 %3706
    %v3708 = vsel %vm466, %v3694, -inf
    %3709 = vmax.xlane.f32.xlu0 %v3708
    %v3710 = vpop.xlane.xlu0 %3709
    %v3711 = vsel %vm466, %v3699, -inf
    %3712 = vmax.xlane.f32.xlu0 %v3711
    %v3713 = vpop.xlane.xlu0 %3712
    %v3714 = vsub.f32 %v3684, %v3704
    %v3715 = vsub.f32 %v3689, %v3707
    %v3716 = vsub.f32 %v3694, %v3710
    %v3717 = vsub.f32 %v3699, %v3713
    %v3718 = vmul.f32 %v3714, 1.442695
    %v3719 = vpow.pop %v3718
    %v3720 = vmul.f32 %v3715, 1.442695
    %v3721 = vpow.pop %v3720
    %v3722 = vmul.f32 %v3716, 1.442695
    %v3723 = vpow.pop %v3722
    %v3724 = vmul.f32 %v3717, 1.442695
    %v3725 = vpow.pop %v3724
    %v3726 = vsel %vm466, %v3719, 0.0
    %3727 = vadd.xlane.f32.xlu0 %v3726
    %v3728 = vpop.xlane.xlu0 %3727
    %v3729 = vsel %vm466, %v3721, 0.0
    %3730 = vadd.xlane.f32.xlu0 %v3729
    %v3731 = vpop.xlane.xlu0 %3730
    %v3732 = vsel %vm466, %v3723, 0.0
    %3733 = vadd.xlane.f32.xlu0 %v3732
    %v3734 = vpop.xlane.xlu0 %3733
    %v3735 = vsel %vm466, %v3725, 0.0
    %3736 = vadd.xlane.f32.xlu0 %v3735
    %v3737 = vpop.xlane.xlu0 %3736
    %v3738 = vrcp.pop %v3728
    %v3739 = vrcp.pop %v3731
    %v3740 = vrcp.pop %v3734
    %v3741 = vrcp.pop %v3737
    %v3742 = vmul.f32 %v3719, %v3738
    %v3743 = vmul.f32 %v3721, %v3739
    %v3744 = vmul.f32 %v3723, %v3740
    %v3745 = vmul.f32 %v3725, %v3741
    %3746 = vrot.lane.b32.xlu0 %v3030, 48
    %v3747 = vpop.permute.xlu0 %3746
    %3748 = vrot.lane.b32.xlu0 %v3035, 48
    %v3749 = vpop.permute.xlu0 %3748
    %3750 = vrot.lane.b32.xlu0 %v3040, 48
    %v3751 = vpop.permute.xlu0 %3750
    %3752 = vrot.lane.b32.xlu0 %v3045, 48
    %v3753 = vpop.permute.xlu0 %3752
    %v3759 = vsel %vm466, %v3742, 0
    %v3762 = vsel %vm466, %v3743, 0
    %v3765 = vsel %vm466, %v3744, 0
    %v3768 = vsel %vm466, %v3745, 0
    %3770 = vmatprep.subr.mxu0 0.0
    %3771 = vmatpush1.msra.mxu0 %v3747
    %3772 = vmatprep.subr.mxu0 0.0
    %3773 = vmatpush1.msra.mxu0 %v3749
    %3774 = vmatprep.subr.mxu0 0.0
    %3775 = vmatpush1.msra.mxu0 %v3751
    %3776 = vmatprep.subr.mxu0 0.0
    %3777 = vmatpush1.msra.mxu0 %v3753
    %3778 = vmatprep.subr.mxu0 0.0
    %3779 = vmatpush1.msra.mxu0 0.0
    %3780 = vmatprep.subr.mxu0 0.0
    %3781 = vmatpush1.msra.mxu0 0.0
    %3782 = vmatprep.subr.mxu0 0.0
    %3783 = vmatpush1.msra.mxu0 0.0
    %3784 = vmatprep.subr.mxu0 0.0
    %3785 = vmatpush1.msra.mxu0 0.0
    %3786 = vmatprep.subr.mxu0 0.0
    %3787 = vmatpush1.msra.mxu0 0.0
    %3788 = vmatprep.subr.mxu0 0.0
    %3789 = vmatpush1.msra.mxu0 0.0
    %3790 = vmatprep.subr.mxu0 0.0
    %3791 = vmatpush1.msra.mxu0 0.0
    %3792 = vmatprep.subr.mxu0 0.0
    %3793 = vmatpush1.msra.mxu0 0.0
    %3794 = vmatprep.subr.mxu0 0.0
    %3795 = vmatpush1.msra.mxu0 0.0
    %3796 = vmatprep.subr.mxu0 0.0
    %3797 = vmatpush1.msra.mxu0 0.0
    %3798 = vmatprep.subr.mxu0 0.0
    %3799 = vmatpush1.msra.mxu0 0.0
    %3800 = vmatprep.subr.mxu0 0.0
    %3801 = vmatpush1.msra.mxu0 0.0
    %3802 = vmatprep.subr.mxu0 0.0
    %3803 = vmatpush1.msra.mxu0 0.0
    %3804 = vmatprep.subr.mxu0 0.0
    %3805 = vmatpush1.msra.mxu0 0.0
    %3806 = vmatprep.subr.mxu0 0.0
    %3807 = vmatpush1.msra.mxu0 0.0
    %3808 = vmatprep.subr.mxu0 0.0
    %3809 = vmatpush1.msra.mxu0 0.0
    %3810 = vmatprep.subr.mxu0 0.0
    %3811 = vmatpush1.msra.mxu0 0.0
    %3812 = vmatprep.subr.mxu0 0.0
    %3813 = vmatpush1.msra.mxu0 0.0
    %3814 = vmatprep.subr.mxu0 0.0
    %3815 = vmatpush1.msra.mxu0 0.0
    %3816 = vmatprep.subr.mxu0 0.0
    %3817 = vmatpush1.msra.mxu0 0.0
    %3818 = vmatprep.subr.mxu0 0.0
    %3819 = vmatpush1.msra.mxu0 0.0
    %3820 = vmatprep.subr.mxu0 0.0
    %3821 = vmatpush1.msra.mxu0 0.0
    %3822 = vmatprep.subr.mxu0 0.0
    %3823 = vmatpush1.msra.mxu0 0.0
    %3824 = vmatprep.subr.mxu0 0.0
    %3825 = vmatpush1.msra.mxu0 0.0
    %3826 = vmatprep.subr.mxu0 0.0
    %3827 = vmatpush1.msra.mxu0 0.0
    %3828 = vmatprep.subr.mxu0 0.0
    %3829 = vmatpush1.msra.mxu0 0.0
    %3830 = vmatprep.subr.mxu0 0.0
    %3831 = vmatpush1.msra.mxu0 0.0
    %3832 = vmatprep.subr.mxu0 0.0
    %3833 = vmatpush1.msra.mxu0 0.0
    %3834 = vmatprep.mubr.f32.mxu0 0.0
    %3835 = vmatmul.mubr.f32.gmra.mrb[0].mxu0 %v3759
    %v3836 = vpop.f32.mrb[0].mxu0
    %v3837 = vadd.f32 0.0, %v3836
    %v3838 = vpop.f32.mrb[0].mxu0
    %3839 = vmatprep.mubr.f32.mxu0 0.0
    %3840 = vmatmul.mubr.f32.gmra.mrb[0].mxu0 %v3762
    %v3841 = vpop.f32.mrb[0].mxu0
    %v3842 = vadd.f32 0.0, %v3841
    %v3843 = vpop.f32.mrb[0].mxu0
    %3844 = vmatprep.mubr.f32.mxu0 0.0
    %3845 = vmatmul.mubr.f32.gmra.mrb[0].mxu0 %v3765
    %v3846 = vpop.f32.mrb[0].mxu0
    %v3847 = vadd.f32 0.0, %v3846
    %v3848 = vpop.f32.mrb[0].mxu0
    %3849 = vmatprep.mubr.f32.mxu0 0.0
    %3850 = vmatmul.mubr.f32.gmra.mrb[0].mxu0 %v3768
    %v3851 = vpop.f32.mrb[0].mxu0
    %v3852 = vadd.f32 0.0, %v3851
    %v3853 = vpop.f32.mrb[0].mxu0
    %3854 = vdwg.mxu0
    %3855 = vrot.lane.b32.xlu0 %v3030, 104
    %v3856 = vpop.permute.xlu0 %3855
    %3857 = vrot.lane.b32.xlu0 %v3035, 104
    %v3858 = vpop.permute.xlu0 %3857
    %3859 = vrot.lane.b32.xlu0 %v3040, 104
    %v3860 = vpop.permute.xlu0 %3859
    %3861 = vrot.lane.b32.xlu0 %v3045, 104
    %v3862 = vpop.permute.xlu0 %3861
    %3863 = vrot.lane.b32.xlu0 %v3030, 72
    %v3864 = vpop.permute.xlu0 %3863
    %3865 = vrot.lane.b32.xlu0 %v3035, 72
    %v3866 = vpop.permute.xlu0 %3865
    %3867 = vrot.lane.b32.xlu0 %v3040, 72
    %v3868 = vpop.permute.xlu0 %3867
    %3869 = vrot.lane.b32.xlu0 %v3045, 72
    %v3870 = vpop.permute.xlu0 %3869
    %v3871 = vsel %vm3060, %v3856, 0
    %v3873 = vsel %vm3060, %v3858, 0
    %v3875 = vsel %vm3060, %v3860, 0
    %v3877 = vsel %vm3060, %v3862, 0
    %v3879 = vsel %vm3060, %v3864, 0
    %v3881 = vsel %vm3060, %v3866, 0
    %v3883 = vsel %vm3060, %v3868, 0
    %v3885 = vsel %vm3060, %v3870, 0
    %3887 = vmatprep.subr.mxu0 0.0
    %3888 = vmatpush1.xpose.msra.mxu0 %v3879
    %3889 = vmatprep.subr.mxu0 0.0
    %3890 = vmatpush1.xpose.msra.mxu0 %v3881
    %3891 = vmatprep.subr.mxu0 0.0
    %3892 = vmatpush1.xpose.msra.mxu0 %v3883
    %3893 = vmatprep.subr.mxu0 0.0
    %3894 = vmatpush1.xpose.msra.mxu0 %v3885
    %3895 = vmatprep.subr.mxu0 0.0
    %3896 = vmatpush1.xpose.msra.mxu0 0.0
    %3897 = vmatprep.subr.mxu0 0.0
    %3898 = vmatpush1.xpose.msra.mxu0 0.0
    %3899 = vmatprep.subr.mxu0 0.0
    %3900 = vmatpush1.xpose.msra.mxu0 0.0
    %3901 = vmatprep.subr.mxu0 0.0
    %3902 = vmatpush1.xpose.msra.mxu0 0.0
    %3903 = vmatprep.subr.mxu0 0.0
    %3904 = vmatpush1.xpose.msra.mxu0 0.0
    %3905 = vmatprep.subr.mxu0 0.0
    %3906 = vmatpush1.xpose.msra.mxu0 0.0
    %3907 = vmatprep.subr.mxu0 0.0
    %3908 = vmatpush1.xpose.msra.mxu0 0.0
    %3909 = vmatprep.subr.mxu0 0.0
    %3910 = vmatpush1.xpose.msra.mxu0 0.0
    %3911 = vmatprep.subr.mxu0 0.0
    %3912 = vmatpush1.xpose.msra.mxu0 0.0
    %3913 = vmatprep.subr.mxu0 0.0
    %3914 = vmatpush1.xpose.msra.mxu0 0.0
    %3915 = vmatprep.subr.mxu0 0.0
    %3916 = vmatpush1.xpose.msra.mxu0 0.0
    %3917 = vmatprep.subr.mxu0 0.0
    %3918 = vmatpush1.xpose.msra.mxu0 0.0
    %3919 = vmatprep.subr.mxu0 0.0
    %3920 = vmatpush1.xpose.msra.mxu0 0.0
    %3921 = vmatprep.subr.mxu0 0.0
    %3922 = vmatpush1.xpose.msra.mxu0 0.0
    %3923 = vmatprep.subr.mxu0 0.0
    %3924 = vmatpush1.xpose.msra.mxu0 0.0
    %3925 = vmatprep.subr.mxu0 0.0
    %3926 = vmatpush1.xpose.msra.mxu0 0.0
    %3927 = vmatprep.subr.mxu0 0.0
    %3928 = vmatpush1.xpose.msra.mxu0 0.0
    %3929 = vmatprep.subr.mxu0 0.0
    %3930 = vmatpush1.xpose.msra.mxu0 0.0
    %3931 = vmatprep.subr.mxu0 0.0
    %3932 = vmatpush1.xpose.msra.mxu0 0.0
    %3933 = vmatprep.subr.mxu0 0.0
    %3934 = vmatpush1.xpose.msra.mxu0 0.0
    %3935 = vmatprep.subr.mxu0 0.0
    %3936 = vmatpush1.xpose.msra.mxu0 0.0
    %3937 = vmatprep.subr.mxu0 0.0
    %3938 = vmatpush1.xpose.msra.mxu0 0.0
    %3939 = vmatprep.subr.mxu0 0.0
    %3940 = vmatpush1.xpose.msra.mxu0 0.0
    %3941 = vmatprep.subr.mxu0 0.0
    %3942 = vmatpush1.xpose.msra.mxu0 0.0
    %3943 = vmatprep.subr.mxu0 0.0
    %3944 = vmatpush1.xpose.msra.mxu0 0.0
    %3945 = vmatprep.subr.mxu0 0.0
    %3946 = vmatpush1.xpose.msra.mxu0 0.0
    %3947 = vmatprep.subr.mxu0 0.0
    %3948 = vmatpush1.xpose.msra.mxu0 0.0
    %3949 = vmatprep.subr.mxu0 0.0
    %3950 = vmatpush1.xpose.msra.mxu0 0.0
    %3951 = vmatprep.mubr.f32.mxu0 0.0
    %3952 = vmatmul.mubr.f32.gmra.mrb[0].mxu0 %v3871
    %v3953 = vpop.f32.mrb[0].mxu0
    %v3954 = vadd.f32 %v2936, %v3953
    %v3955 = vpop.f32.mrb[0].mxu0
    %3956 = vmatprep.mubr.f32.mxu0 0.0
    %3957 = vmatmul.mubr.f32.gmra.mrb[0].mxu0 %v3873
    %v3958 = vpop.f32.mrb[0].mxu0
    %v3959 = vadd.f32 %v2937, %v3958
    %v3960 = vpop.f32.mrb[0].mxu0
    %3961 = vmatprep.mubr.f32.mxu0 0.0
    %3962 = vmatmul.mubr.f32.gmra.mrb[0].mxu0 %v3875
    %v3963 = vpop.f32.mrb[0].mxu0
    %v3964 = vadd.f32 %v2938, %v3963
    %v3965 = vpop.f32.mrb[0].mxu0
    %3966 = vmatprep.mubr.f32.mxu0 0.0
    %3967 = vmatmul.mubr.f32.gmra.mrb[0].mxu0 %v3877
    %v3968 = vpop.f32.mrb[0].mxu0
    %v3969 = vadd.f32 %v2939, %v3968
    %v3970 = vpop.f32.mrb[0].mxu0
    %3971 = vdwg.mxu0
    %v3972 = vsel %vm466, %v3954, -inf
    %3973 = vmax.xlane.f32.xlu0 %v3972
    %v3974 = vpop.xlane.xlu0 %3973
    %v3975 = vsel %vm466, %v3959, -inf
    %3976 = vmax.xlane.f32.xlu0 %v3975
    %v3977 = vpop.xlane.xlu0 %3976
    %v3978 = vsel %vm466, %v3964, -inf
    %3979 = vmax.xlane.f32.xlu0 %v3978
    %v3980 = vpop.xlane.xlu0 %3979
    %v3981 = vsel %vm466, %v3969, -inf
    %3982 = vmax.xlane.f32.xlu0 %v3981
    %v3983 = vpop.xlane.xlu0 %3982
    %v3984 = vsub.f32 %v3954, %v3974
    %v3985 = vsub.f32 %v3959, %v3977
    %v3986 = vsub.f32 %v3964, %v3980
    %v3987 = vsub.f32 %v3969, %v3983
    %v3988 = vmul.f32 %v3984, 1.442695
    %v3989 = vpow.pop %v3988
    %v3990 = vmul.f32 %v3985, 1.442695
    %v3991 = vpow.pop %v3990
    %v3992 = vmul.f32 %v3986, 1.442695
    %v3993 = vpow.pop %v3992
    %v3994 = vmul.f32 %v3987, 1.442695
    %v3995 = vpow.pop %v3994
    %v3996 = vsel %vm466, %v3989, 0.0
    %3997 = vadd.xlane.f32.xlu0 %v3996
    %v3998 = vpop.xlane.xlu0 %3997
    %v3999 = vsel %vm466, %v3991, 0.0
    %4000 = vadd.xlane.f32.xlu0 %v3999
    %v4001 = vpop.xlane.xlu0 %4000
    %v4002 = vsel %vm466, %v3993, 0.0
    %4003 = vadd.xlane.f32.xlu0 %v4002
    %v4004 = vpop.xlane.xlu0 %4003
    %v4005 = vsel %vm466, %v3995, 0.0
    %4006 = vadd.xlane.f32.xlu0 %v4005
    %v4007 = vpop.xlane.xlu0 %4006
    %v4008 = vrcp.pop %v3998
    %v4009 = vrcp.pop %v4001
    %v4010 = vrcp.pop %v4004
    %v4011 = vrcp.pop %v4007
    %v4012 = vmul.f32 %v3989, %v4008
    %v4013 = vmul.f32 %v3991, %v4009
    %v4014 = vmul.f32 %v3993, %v4010
    %v4015 = vmul.f32 %v3995, %v4011
    %4016 = vrot.lane.b32.xlu0 %v3030, 40
    %v4017 = vpop.permute.xlu0 %4016
    %4018 = vrot.lane.b32.xlu0 %v3035, 40
    %v4019 = vpop.permute.xlu0 %4018
    %4020 = vrot.lane.b32.xlu0 %v3040, 40
    %v4021 = vpop.permute.xlu0 %4020
    %4022 = vrot.lane.b32.xlu0 %v3045, 40
    %v4023 = vpop.permute.xlu0 %4022
    %v4029 = vsel %vm466, %v4012, 0
    %v4032 = vsel %vm466, %v4013, 0
    %v4035 = vsel %vm466, %v4014, 0
    %v4038 = vsel %vm466, %v4015, 0
    %4040 = vmatprep.subr.mxu0 0.0
    %4041 = vmatpush1.msra.mxu0 %v4017
    %4042 = vmatprep.subr.mxu0 0.0
    %4043 = vmatpush1.msra.mxu0 %v4019
    %4044 = vmatprep.subr.mxu0 0.0
    %4045 = vmatpush1.msra.mxu0 %v4021
    %4046 = vmatprep.subr.mxu0 0.0
    %4047 = vmatpush1.msra.mxu0 %v4023
    %4048 = vmatprep.subr.mxu0 0.0
    %4049 = vmatpush1.msra.mxu0 0.0
    %4050 = vmatprep.subr.mxu0 0.0
    %4051 = vmatpush1.msra.mxu0 0.0
    %4052 = vmatprep.subr.mxu0 0.0
    %4053 = vmatpush1.msra.mxu0 0.0
    %4054 = vmatprep.subr.mxu0 0.0
    %4055 = vmatpush1.msra.mxu0 0.0
    %4056 = vmatprep.subr.mxu0 0.0
    %4057 = vmatpush1.msra.mxu0 0.0
    %4058 = vmatprep.subr.mxu0 0.0
    %4059 = vmatpush1.msra.mxu0 0.0
    %4060 = vmatprep.subr.mxu0 0.0
    %4061 = vmatpush1.msra.mxu0 0.0
    %4062 = vmatprep.subr.mxu0 0.0
    %4063 = vmatpush1.msra.mxu0 0.0
    %4064 = vmatprep.subr.mxu0 0.0
    %4065 = vmatpush1.msra.mxu0 0.0
    %4066 = vmatprep.subr.mxu0 0.0
    %4067 = vmatpush1.msra.mxu0 0.0
    %4068 = vmatprep.subr.mxu0 0.0
    %4069 = vmatpush1.msra.mxu0 0.0
    %4070 = vmatprep.subr.mxu0 0.0
    %4071 = vmatpush1.msra.mxu0 0.0
    %4072 = vmatprep.subr.mxu0 0.0
    %4073 = vmatpush1.msra.mxu0 0.0
    %4074 = vmatprep.subr.mxu0 0.0
    %4075 = vmatpush1.msra.mxu0 0.0
    %4076 = vmatprep.subr.mxu0 0.0
    %4077 = vmatpush1.msra.mxu0 0.0
    %4078 = vmatprep.subr.mxu0 0.0
    %4079 = vmatpush1.msra.mxu0 0.0
    %4080 = vmatprep.subr.mxu0 0.0
    %4081 = vmatpush1.msra.mxu0 0.0
    %4082 = vmatprep.subr.mxu0 0.0
    %4083 = vmatpush1.msra.mxu0 0.0
    %4084 = vmatprep.subr.mxu0 0.0
    %4085 = vmatpush1.msra.mxu0 0.0
    %4086 = vmatprep.subr.mxu0 0.0
    %4087 = vmatpush1.msra.mxu0 0.0
    %4088 = vmatprep.subr.mxu0 0.0
    %4089 = vmatpush1.msra.mxu0 0.0
    %4090 = vmatprep.subr.mxu0 0.0
    %4091 = vmatpush1.msra.mxu0 0.0
    %4092 = vmatprep.subr.mxu0 0.0
    %4093 = vmatpush1.msra.mxu0 0.0
    %4094 = vmatprep.subr.mxu0 0.0
    %4095 = vmatpush1.msra.mxu0 0.0
    %4096 = vmatprep.subr.mxu0 0.0
    %4097 = vmatpush1.msra.mxu0 0.0
    %4098 = vmatprep.subr.mxu0 0.0
    %4099 = vmatpush1.msra.mxu0 0.0
    %4100 = vmatprep.subr.mxu0 0.0
    %4101 = vmatpush1.msra.mxu0 0.0
    %4102 = vmatprep.subr.mxu0 0.0
    %4103 = vmatpush1.msra.mxu0 0.0
    %4104 = vmatprep.mubr.f32.mxu0 0.0
    %4105 = vmatmul.mubr.f32.gmra.mrb[0].mxu0 %v4029
    %v4106 = vpop.f32.mrb[0].mxu0
    %v4107 = vadd.f32 0.0, %v4106
    %v4108 = vpop.f32.mrb[0].mxu0
    %4109 = vmatprep.mubr.f32.mxu0 0.0
    %4110 = vmatmul.mubr.f32.gmra.mrb[0].mxu0 %v4032
    %v4111 = vpop.f32.mrb[0].mxu0
    %v4112 = vadd.f32 0.0, %v4111
    %v4113 = vpop.f32.mrb[0].mxu0
    %4114 = vmatprep.mubr.f32.mxu0 0.0
    %4115 = vmatmul.mubr.f32.gmra.mrb[0].mxu0 %v4035
    %v4116 = vpop.f32.mrb[0].mxu0
    %v4117 = vadd.f32 0.0, %v4116
    %v4118 = vpop.f32.mrb[0].mxu0
    %4119 = vmatprep.mubr.f32.mxu0 0.0
    %4120 = vmatmul.mubr.f32.gmra.mrb[0].mxu0 %v4038
    %v4121 = vpop.f32.mrb[0].mxu0
    %v4122 = vadd.f32 0.0, %v4121
    %v4123 = vpop.f32.mrb[0].mxu0
    %4124 = vdwg.mxu0
    %4129 = vrot.lane.b32.xlu0 %v3567, 8
    %v4130 = vpop.permute.xlu0 %4129
    %4131 = vrot.lane.b32.xlu0 %v3572, 8
    %v4132 = vpop.permute.xlu0 %4131
    %4133 = vrot.lane.b32.xlu0 %v3577, 8
    %v4134 = vpop.permute.xlu0 %4133
    %4135 = vrot.lane.b32.xlu0 %v3582, 8
    %v4136 = vpop.permute.xlu0 %4135
    %4145 = vrot.lane.b32.xlu0 %v3837, 16
    %v4146 = vpop.permute.xlu0 %4145
    %4147 = vrot.lane.b32.xlu0 %v3842, 16
    %v4148 = vpop.permute.xlu0 %4147
    %4149 = vrot.lane.b32.xlu0 %v3847, 16
    %v4150 = vpop.permute.xlu0 %4149
    %4151 = vrot.lane.b32.xlu0 %v3852, 16
    %v4152 = vpop.permute.xlu0 %4151
    %4161 = vrot.lane.b32.xlu0 %v4107, 24
    %v4162 = vpop.permute.xlu0 %4161
    %4163 = vrot.lane.b32.xlu0 %v4112, 24
    %v4164 = vpop.permute.xlu0 %4163
    %4165 = vrot.lane.b32.xlu0 %v4117, 24
    %v4166 = vpop.permute.xlu0 %4165
    %4167 = vrot.lane.b32.xlu0 %v4122, 24
    %v4168 = vpop.permute.xlu0 %4167
    %v4173 = vsel %vm3060, %v3297, %v4130
    %v4174 = vsel %vm3060, %v3302, %v4132
    %v4175 = vsel %vm3060, %v3307, %v4134
    %v4176 = vsel %vm3060, %v3312, %v4136
    %vm4177 = vcmask 130048
    %v4178 = vsel %vm4177, %v4173, %v4146
    %v4179 = vsel %vm4177, %v4174, %v4148
    %v4180 = vsel %vm4177, %v4175, %v4150
    %v4181 = vsel %vm4177, %v4176, %v4152
    %vm4182 = vcmask 195584
    %v4183 = vsel %vm4182, %v4178, %v4162
    %v4184 = vsel %vm4182, %v4179, %v4164
    %v4185 = vsel %vm4182, %v4180, %v4166
    %v4186 = vsel %vm4182, %v4181, %v4168
    %v4187 = vld [vmem:[#allocation33] sm:$0xff]
    %v4188 = vld [vmem:[#allocation33 + $0x8] sm:$0xff]
    %v4189 = vld [vmem:[#allocation33 + $0x10] sm:$0xff]
    %v4190 = vld [vmem:[#allocation33 + $0x18] sm:$0xff]
    %v4192 = vsel %vm466, %v4183, 0
    %v4195 = vsel %vm466, %v4184, 0
    %v4198 = vsel %vm466, %v4185, 0
    %v4201 = vsel %vm466, %v4186, 0
    %4203 = vmatprep.subr.mxu0 0.0
    %4204 = vmatpush1.msra.mxu0 %v4187
    %4205 = vmatprep.subr.mxu0 0.0
    %4206 = vmatpush1.msra.mxu0 %v4188
    %4207 = vmatprep.subr.mxu0 0.0
    %4208 = vmatpush1.msra.mxu0 %v4189
    %4209 = vmatprep.subr.mxu0 0.0
    %4210 = vmatpush1.msra.mxu0 %v4190
    %4211 = vmatprep.subr.mxu0 0.0
    %4212 = vmatpush1.msra.mxu0 0.0
    %4213 = vmatprep.subr.mxu0 0.0
    %4214 = vmatpush1.msra.mxu0 0.0
    %4215 = vmatprep.subr.mxu0 0.0
    %4216 = vmatpush1.msra.mxu0 0.0
    %4217 = vmatprep.subr.mxu0 0.0
    %4218 = vmatpush1.msra.mxu0 0.0
    %4219 = vmatprep.subr.mxu0 0.0
    %4220 = vmatpush1.msra.mxu0 0.0
    %4221 = vmatprep.subr.mxu0 0.0
    %4222 = vmatpush1.msra.mxu0 0.0
    %4223 = vmatprep.subr.mxu0 0.0
    %4224 = vmatpush1.msra.mxu0 0.0
    %4225 = vmatprep.subr.mxu0 0.0
    %4226 = vmatpush1.msra.mxu0 0.0
    %4227 = vmatprep.subr.mxu0 0.0
    %4228 = vmatpush1.msra.mxu0 0.0
    %4229 = vmatprep.subr.mxu0 0.0
    %4230 = vmatpush1.msra.mxu0 0.0
    %4231 = vmatprep.subr.mxu0 0.0
    %4232 = vmatpush1.msra.mxu0 0.0
    %4233 = vmatprep.subr.mxu0 0.0
    %4234 = vmatpush1.msra.mxu0 0.0
    %4235 = vmatprep.subr.mxu0 0.0
    %4236 = vmatpush1.msra.mxu0 0.0
    %4237 = vmatprep.subr.mxu0 0.0
    %4238 = vmatpush1.msra.mxu0 0.0
    %4239 = vmatprep.subr.mxu0 0.0
    %4240 = vmatpush1.msra.mxu0 0.0
    %4241 = vmatprep.subr.mxu0 0.0
    %4242 = vmatpush1.msra.mxu0 0.0
    %4243 = vmatprep.subr.mxu0 0.0
    %4244 = vmatpush1.msra.mxu0 0.0
    %4245 = vmatprep.subr.mxu0 0.0
    %4246 = vmatpush1.msra.mxu0 0.0
    %4247 = vmatprep.subr.mxu0 0.0
    %4248 = vmatpush1.msra.mxu0 0.0
    %4249 = vmatprep.subr.mxu0 0.0
    %4250 = vmatpush1.msra.mxu0 0.0
    %4251 = vmatprep.subr.mxu0 0.0
    %4252 = vmatpush1.msra.mxu0 0.0
    %4253 = vmatprep.subr.mxu0 0.0
    %4254 = vmatpush1.msra.mxu0 0.0
    %4255 = vmatprep.subr.mxu0 0.0
    %4256 = vmatpush1.msra.mxu0 0.0
    %4257 = vmatprep.subr.mxu0 0.0
    %4258 = vmatpush1.msra.mxu0 0.0
    %4259 = vmatprep.subr.mxu0 0.0
    %4260 = vmatpush1.msra.mxu0 0.0
    %4261 = vmatprep.subr.mxu0 0.0
    %4262 = vmatpush1.msra.mxu0 0.0
    %4263 = vmatprep.subr.mxu0 0.0
    %4264 = vmatpush1.msra.mxu0 0.0
    %4265 = vmatprep.subr.mxu0 0.0
    %4266 = vmatpush1.msra.mxu0 0.0
    %4267 = vmatprep.mubr.f32.mxu0 0.0
    %4268 = vmatmul.mubr.f32.gmra.mrb[0].mxu0 %v4192
    %v4269 = vpop.f32.mrb[0].mxu0
    %v4270 = vadd.f32 0.0, %v4269
    %v4271 = vpop.f32.mrb[0].mxu0
    %4272 = vmatprep.mubr.f32.mxu0 0.0
    %4273 = vmatmul.mubr.f32.gmra.mrb[0].mxu0 %v4195
    %v4274 = vpop.f32.mrb[0].mxu0
    %v4275 = vadd.f32 0.0, %v4274
    %v4276 = vpop.f32.mrb[0].mxu0
    %4277 = vmatprep.mubr.f32.mxu0 0.0
    %4278 = vmatmul.mubr.f32.gmra.mrb[0].mxu0 %v4198
    %v4279 = vpop.f32.mrb[0].mxu0
    %v4280 = vadd.f32 0.0, %v4279
    %v4281 = vpop.f32.mrb[0].mxu0
    %4282 = vmatprep.mubr.f32.mxu0 0.0
    %4283 = vmatmul.mubr.f32.gmra.mrb[0].mxu0 %v4201
    %v4284 = vpop.f32.mrb[0].mxu0
    %v4285 = vadd.f32 0.0, %v4284
    %v4286 = vpop.f32.mrb[0].mxu0
    %4287 = vdwg.mxu0
    %v4288 = vadd.f32 %v2932, %v4270
    %v4289 = vadd.f32 %v2933, %v4275
    %v4290 = vadd.f32 %v2934, %v4280
    %v4291 = vadd.f32 %v2935, %v4285
    %v4292 = vld [vmem:[#allocation34] sm:$0x1]
    %v4294 = vlaneseq
    %v4295 = vshrl.u32 %v4294, 7
    %v4296 = vsub.s32 0, %v4295
    %v4297 = vrot.slane %v4292, %v4296
    %v4299 = vadd.f32 %v4288, %v4297
    %v4300 = vadd.f32 %v4289, %v4297
    %v4301 = vadd.f32 %v4290, %v4297
    %v4302 = vadd.f32 %v4291, %v4297
    %v4303 = vld [vmem:[%s45] sm:$0x1]
    %v4304 = vld [vmem:[%s47] sm:$0x1]
    %v4305 = vsel %vm466, %v4299, 0.0
    %4306 = vadd.xlane.f32.xlu0 %v4305
    %v4307 = vpop.xlane.xlu0 %4306
    %v4308 = vsel %vm466, %v4300, 0.0
    %4309 = vadd.xlane.f32.xlu0 %v4308
    %v4310 = vpop.xlane.xlu0 %4309
    %v4311 = vsel %vm466, %v4301, 0.0
    %4312 = vadd.xlane.f32.xlu0 %v4311
    %v4313 = vpop.xlane.xlu0 %4312
    %v4314 = vsel %vm466, %v4302, 0.0
    %4315 = vadd.xlane.f32.xlu0 %v4314
    %v4316 = vpop.xlane.xlu0 %4315
    %v4317 = vrcp.pop 32.0
    %v4318 = vmul.f32 %v4307, %v4317
    %v4319 = vmul.f32 %v4310, %v4317
    %v4320 = vmul.f32 %v4313, %v4317
    %v4321 = vmul.f32 %v4316, %v4317
    %v4322 = vsub.f32 %v4299, %v4318
    %v4323 = vsub.f32 %v4300, %v4319
    %v4324 = vsub.f32 %v4301, %v4320
    %v4325 = vsub.f32 %v4302, %v4321
    %v4326 = vmul.f32 %v4322, %v4322
    %v4327 = vmul.f32 %v4323, %v4323
    %v4328 = vmul.f32 %v4324, %v4324
    %v4329 = vmul.f32 %v4325, %v4325
    %v4330 = vsel %vm466, %v4326, 0.0
    %4331 = vadd.xlane.f32.xlu0 %v4330
    %v4332 = vpop.xlane.xlu0 %4331
    %v4333 = vsel %vm466, %v4327, 0.0
    %4334 = vadd.xlane.f32.xlu0 %v4333
    %v4335 = vpop.xlane.xlu0 %4334
    %v4336 = vsel %vm466, %v4328, 0.0
    %4337 = vadd.xlane.f32.xlu0 %v4336
    %v4338 = vpop.xlane.xlu0 %4337
    %v4339 = vsel %vm466, %v4329, 0.0
    %4340 = vadd.xlane.f32.xlu0 %v4339
    %v4341 = vpop.xlane.xlu0 %4340
    %v4342 = vmul.f32 %v4332, %v4317
    %v4343 = vmul.f32 %v4335, %v4317
    %v4344 = vmul.f32 %v4338, %v4317
    %v4345 = vmul.f32 %v4341, %v4317
    %v4346 = vadd.f32 %v4342, 1e-05
    %v4347 = vadd.f32 %v4343, 1e-05
    %v4348 = vadd.f32 %v4344, 1e-05
    %v4349 = vadd.f32 %v4345, 1e-05
    %v4350 = vrsqrt.pop %v4346
    %v4351 = vrsqrt.pop %v4347
    %v4352 = vrsqrt.pop %v4348
    %v4353 = vrsqrt.pop %v4349
    %v4354 = vmul.f32 %v4322, %v4350
    %v4355 = vmul.f32 %v4323, %v4351
    %v4356 = vmul.f32 %v4324, %v4352
    %v4357 = vmul.f32 %v4325, %v4353
    %v4359 = vlaneseq
    %v4360 = vshrl.u32 %v4359, 7
    %v4361 = vsub.s32 0, %v4360
    %v4362 = vrot.slane %v4303, %v4361
    %v4364 = vmul.f32 %v4354, %v4362
    %v4365 = vmul.f32 %v4355, %v4362
    %v4366 = vmul.f32 %v4356, %v4362
    %v4367 = vmul.f32 %v4357, %v4362
    %v4369 = vlaneseq
    %v4370 = vshrl.u32 %v4369, 7
    %v4371 = vsub.s32 0, %v4370
    %v4372 = vrot.slane %v4304, %v4371
    %v4374 = vadd.f32 %v4364, %v4372
    %v4375 = vadd.f32 %v4365, %v4372
    %v4376 = vadd.f32 %v4366, %v4372
    %v4377 = vadd.f32 %v4367, %v4372
    %v4378 = vld [vmem:[%s49] sm:$0xff]
    %v4379 = vld [vmem:[%s49 + $0x8] sm:$0xff]
    %v4380 = vld [vmem:[%s49 + $0x10] sm:$0xff]
    %v4381 = vld [vmem:[%s49 + $0x18] sm:$0xff]
    %v4382 = vld [vmem:[%s51] sm:$0x1]
    %v4384 = vlaneseq
    %v4385 = vshrl.u32 %v4384, 7
    %v4386 = vsub.s32 0, %v4385
    %v4387 = vrot.slane %v4382, %v4386
    %v4390 = vsel %vm466, %v4374, 0
    %v4393 = vsel %vm466, %v4375, 0
    %v4396 = vsel %vm466, %v4376, 0
    %v4399 = vsel %vm466, %v4377, 0
    %4401 = vmatprep.subr.mxu0 0.0
    %4402 = vmatpush1.msra.mxu0 %v4378
    %4403 = vmatprep.subr.mxu0 0.0
    %4404 = vmatpush1.msra.mxu0 %v4379
    %4405 = vmatprep.subr.mxu0 0.0
    %4406 = vmatpush1.msra.mxu0 %v4380
    %4407 = vmatprep.subr.mxu0 0.0
    %4408 = vmatpush1.msra.mxu0 %v4381
    %4409 = vmatprep.subr.mxu0 0.0
    %4410 = vmatpush1.msra.mxu0 0.0
    %4411 = vmatprep.subr.mxu0 0.0
    %4412 = vmatpush1.msra.mxu0 0.0
    %4413 = vmatprep.subr.mxu0 0.0
    %4414 = vmatpush1.msra.mxu0 0.0
    %4415 = vmatprep.subr.mxu0 0.0
    %4416 = vmatpush1.msra.mxu0 0.0
    %4417 = vmatprep.subr.mxu0 0.0
    %4418 = vmatpush1.msra.mxu0 0.0
    %4419 = vmatprep.subr.mxu0 0.0
    %4420 = vmatpush1.msra.mxu0 0.0
    %4421 = vmatprep.subr.mxu0 0.0
    %4422 = vmatpush1.msra.mxu0 0.0
    %4423 = vmatprep.subr.mxu0 0.0
    %4424 = vmatpush1.msra.mxu0 0.0
    %4425 = vmatprep.subr.mxu0 0.0
    %4426 = vmatpush1.msra.mxu0 0.0
    %4427 = vmatprep.subr.mxu0 0.0
    %4428 = vmatpush1.msra.mxu0 0.0
    %4429 = vmatprep.subr.mxu0 0.0
    %4430 = vmatpush1.msra.mxu0 0.0
    %4431 = vmatprep.subr.mxu0 0.0
    %4432 = vmatpush1.msra.mxu0 0.0
    %4433 = vmatprep.subr.mxu0 0.0
    %4434 = vmatpush1.msra.mxu0 0.0
    %4435 = vmatprep.subr.mxu0 0.0
    %4436 = vmatpush1.msra.mxu0 0.0
    %4437 = vmatprep.subr.mxu0 0.0
    %4438 = vmatpush1.msra.mxu0 0.0
    %4439 = vmatprep.subr.mxu0 0.0
    %4440 = vmatpush1.msra.mxu0 0.0
    %4441 = vmatprep.subr.mxu0 0.0
    %4442 = vmatpush1.msra.mxu0 0.0
    %4443 = vmatprep.subr.mxu0 0.0
    %4444 = vmatpush1.msra.mxu0 0.0
    %4445 = vmatprep.subr.mxu0 0.0
    %4446 = vmatpush1.msra.mxu0 0.0
    %4447 = vmatprep.subr.mxu0 0.0
    %4448 = vmatpush1.msra.mxu0 0.0
    %4449 = vmatprep.subr.mxu0 0.0
    %4450 = vmatpush1.msra.mxu0 0.0
    %4451 = vmatprep.subr.mxu0 0.0
    %4452 = vmatpush1.msra.mxu0 0.0
    %4453 = vmatprep.subr.mxu0 0.0
    %4454 = vmatpush1.msra.mxu0 0.0
    %4455 = vmatprep.subr.mxu0 0.0
    %4456 = vmatpush1.msra.mxu0 0.0
    %4457 = vmatprep.subr.mxu0 0.0
    %4458 = vmatpush1.msra.mxu0 0.0
    %4459 = vmatprep.subr.mxu0 0.0
    %4460 = vmatpush1.msra.mxu0 0.0
    %4461 = vmatprep.subr.mxu0 0.0
    %4462 = vmatpush1.msra.mxu0 0.0
    %4463 = vmatprep.subr.mxu0 0.0
    %4464 = vmatpush1.msra.mxu0 0.0
    %4465 = vmatprep.mubr.f32.mxu0 0.0
    %4466 = vmatmul.mubr.f32.gmra.mrb[0].mxu0 %v4390
    %v4467 = vpop.f32.mrb[0].mxu0
    %v4468 = vadd.f32 %v4387, %v4467
    %v4469 = vpop.f32.mrb[0].mxu0
    %4470 = vmatprep.mubr.f32.mxu0 0.0
    %4471 = vmatmul.mubr.f32.gmra.mrb[0].mxu0 %v4393
    %v4472 = vpop.f32.mrb[0].mxu0
    %v4473 = vadd.f32 %v4387, %v4472
    %v4474 = vpop.f32.mrb[0].mxu0
    %4475 = vmatprep.mubr.f32.mxu0 0.0
    %4476 = vmatmul.mubr.f32.gmra.mrb[0].mxu0 %v4396
    %v4477 = vpop.f32.mrb[0].mxu0
    %v4478 = vadd.f32 %v4387, %v4477
    %v4479 = vpop.f32.mrb[0].mxu0
    %4480 = vmatprep.mubr.f32.mxu0 0.0
    %4481 = vmatmul.mubr.f32.gmra.mrb[0].mxu0 %v4399
    %v4482 = vpop.f32.mrb[0].mxu0
    %v4483 = vadd.f32 %v4387, %v4482
    %v4484 = vpop.f32.mrb[0].mxu0
    %4485 = vdwg.mxu0
    %v4486 = vmax.f32 %v4468, 0.0
    %v4487 = vmax.f32 %v4473, 0.0
    %v4488 = vmax.f32 %v4478, 0.0
    %v4489 = vmax.f32 %v4483, 0.0
    %v4490 = vld [vmem:[#allocation36] sm:$0xff]
    %v4491 = vld [vmem:[#allocation36 + $0x8] sm:$0xff]
    %v4492 = vld [vmem:[#allocation36 + $0x10] sm:$0xff]
    %v4493 = vld [vmem:[#allocation36 + $0x18] sm:$0xff]
    %v4494 = vld [vmem:[#allocation36 + $0x20] sm:$0xff]
    %v4495 = vld [vmem:[#allocation36 + $0x28] sm:$0xff]
    %v4496 = vld [vmem:[#allocation36 + $0x30] sm:$0xff]
    %v4497 = vld [vmem:[#allocation36 + $0x38] sm:$0xff]
    %v4498 = vld [vmem:[#allocation36 + $0x40] sm:$0xff]
    %v4499 = vld [vmem:[#allocation36 + $0x48] sm:$0xff]
    %v4500 = vld [vmem:[#allocation36 + $0x50] sm:$0xff]
    %v4501 = vld [vmem:[#allocation36 + $0x58] sm:$0xff]
    %v4502 = vld [vmem:[#allocation36 + $0x60] sm:$0xff]
    %v4503 = vld [vmem:[#allocation36 + $0x68] sm:$0xff]
    %v4504 = vld [vmem:[#allocation36 + $0x70] sm:$0xff]
    %v4505 = vld [vmem:[#allocation36 + $0x78] sm:$0xff]
    %v4506 = vld [vmem:[%s55] sm:$0x1]
    %v4508 = vlaneseq
    %v4509 = vshrl.u32 %v4508, 7
    %v4510 = vsub.s32 0, %v4509
    %v4511 = vrot.slane %v4506, %v4510
    %4513 = vmatprep.subr.mxu0 0.0
    %4514 = vmatpush1.msra.mxu0 %v4490
    %4515 = vmatprep.subr.mxu0 0.0
    %4516 = vmatpush1.msra.mxu0 %v4491
    %4517 = vmatprep.subr.mxu0 0.0
    %4518 = vmatpush1.msra.mxu0 %v4492
    %4519 = vmatprep.subr.mxu0 0.0
    %4520 = vmatpush1.msra.mxu0 %v4493
    %4521 = vmatprep.subr.mxu0 0.0
    %4522 = vmatpush1.msra.mxu0 %v4494
    %4523 = vmatprep.subr.mxu0 0.0
    %4524 = vmatpush1.msra.mxu0 %v4495
    %4525 = vmatprep.subr.mxu0 0.0
    %4526 = vmatpush1.msra.mxu0 %v4496
    %4527 = vmatprep.subr.mxu0 0.0
    %4528 = vmatpush1.msra.mxu0 %v4497
    %4529 = vmatprep.subr.mxu0 0.0
    %4530 = vmatpush1.msra.mxu0 %v4498
    %4531 = vmatprep.subr.mxu0 0.0
    %4532 = vmatpush1.msra.mxu0 %v4499
    %4533 = vmatprep.subr.mxu0 0.0
    %4534 = vmatpush1.msra.mxu0 %v4500
    %4535 = vmatprep.subr.mxu0 0.0
    %4536 = vmatpush1.msra.mxu0 %v4501
    %4537 = vmatprep.subr.mxu0 0.0
    %4538 = vmatpush1.msra.mxu0 %v4502
    %4539 = vmatprep.subr.mxu0 0.0
    %4540 = vmatpush1.msra.mxu0 %v4503
    %4541 = vmatprep.subr.mxu0 0.0
    %4542 = vmatpush1.msra.mxu0 %v4504
    %4543 = vmatprep.subr.mxu0 0.0
    %4544 = vmatpush1.msra.mxu0 %v4505
    %4545 = vmatprep.subr.mxu0 0.0
    %4546 = vmatpush1.msra.mxu0 0.0
    %4547 = vmatprep.subr.mxu0 0.0
    %4548 = vmatpush1.msra.mxu0 0.0
    %4549 = vmatprep.subr.mxu0 0.0
    %4550 = vmatpush1.msra.mxu0 0.0
    %4551 = vmatprep.subr.mxu0 0.0
    %4552 = vmatpush1.msra.mxu0 0.0
    %4553 = vmatprep.subr.mxu0 0.0
    %4554 = vmatpush1.msra.mxu0 0.0
    %4555 = vmatprep.subr.mxu0 0.0
    %4556 = vmatpush1.msra.mxu0 0.0
    %4557 = vmatprep.subr.mxu0 0.0
    %4558 = vmatpush1.msra.mxu0 0.0
    %4559 = vmatprep.subr.mxu0 0.0
    %4560 = vmatpush1.msra.mxu0 0.0
    %4561 = vmatprep.subr.mxu0 0.0
    %4562 = vmatpush1.msra.mxu0 0.0
    %4563 = vmatprep.subr.mxu0 0.0
    %4564 = vmatpush1.msra.mxu0 0.0
    %4565 = vmatprep.subr.mxu0 0.0
    %4566 = vmatpush1.msra.mxu0 0.0
    %4567 = vmatprep.subr.mxu0 0.0
    %4568 = vmatpush1.msra.mxu0 0.0
    %4569 = vmatprep.subr.mxu0 0.0
    %4570 = vmatpush1.msra.mxu0 0.0
    %4571 = vmatprep.subr.mxu0 0.0
    %4572 = vmatpush1.msra.mxu0 0.0
    %4573 = vmatprep.subr.mxu0 0.0
    %4574 = vmatpush1.msra.mxu0 0.0
    %4575 = vmatprep.subr.mxu0 0.0
    %4576 = vmatpush1.msra.mxu0 0.0
    %4577 = vmatprep.mubr.f32.mxu0 0.0
    %4578 = vmatmul.mubr.f32.gmra.mrb[0].mxu0 %v4486
    %v4579 = vpop.f32.mrb[0].mxu0
    %v4580 = vadd.f32 %v4511, %v4579
    %v4581 = vpop.f32.mrb[0].mxu0
    %4582 = vmatprep.mubr.f32.mxu0 0.0
    %4583 = vmatmul.mubr.f32.gmra.mrb[0].mxu0 %v4487
    %v4584 = vpop.f32.mrb[0].mxu0
    %v4585 = vadd.f32 %v4511, %v4584
    %v4586 = vpop.f32.mrb[0].mxu0
    %4587 = vmatprep.mubr.f32.mxu0 0.0
    %4588 = vmatmul.mubr.f32.gmra.mrb[0].mxu0 %v4488
    %v4589 = vpop.f32.mrb[0].mxu0
    %v4590 = vadd.f32 %v4511, %v4589
    %v4591 = vpop.f32.mrb[0].mxu0
    %4592 = vmatprep.mubr.f32.mxu0 0.0
    %4593 = vmatmul.mubr.f32.gmra.mrb[0].mxu0 %v4489
    %v4594 = vpop.f32.mrb[0].mxu0
    %v4595 = vadd.f32 %v4511, %v4594
    %v4596 = vpop.f32.mrb[0].mxu0
    %4597 = vdwg.mxu0
    %v4598 = vadd.f32 %v4580, %v4374
    %v4599 = vadd.f32 %v4585, %v4375
    %v4600 = vadd.f32 %v4590, %v4376
    %v4601 = vadd.f32 %v4595, %v4377
    %v4602 = vld [vmem:[%s57] sm:$0x1]
    %v4603 = vld [vmem:[%s59] sm:$0x1]
    %v4604 = vsel %vm466, %v4598, 0.0
    %4605 = vadd.xlane.f32.xlu0 %v4604
    %v4606 = vpop.xlane.xlu0 %4605
    %v4607 = vsel %vm466, %v4599, 0.0
    %4608 = vadd.xlane.f32.xlu0 %v4607
    %v4609 = vpop.xlane.xlu0 %4608
    %v4610 = vsel %vm466, %v4600, 0.0
    %4611 = vadd.xlane.f32.xlu0 %v4610
    %v4612 = vpop.xlane.xlu0 %4611
    %v4613 = vsel %vm466, %v4601, 0.0
    %4614 = vadd.xlane.f32.xlu0 %v4613
    %v4615 = vpop.xlane.xlu0 %4614
    %v4616 = vmul.f32 %v4606, %v4317
    %v4617 = vmul.f32 %v4609, %v4317
    %v4618 = vmul.f32 %v4612, %v4317
    %v4619 = vmul.f32 %v4615, %v4317
    %v4620 = vsub.f32 %v4598, %v4616
    %v4621 = vsub.f32 %v4599, %v4617
    %v4622 = vsub.f32 %v4600, %v4618
    %v4623 = vsub.f32 %v4601, %v4619
    %v4624 = vmul.f32 %v4620, %v4620
    %v4625 = vmul.f32 %v4621, %v4621
    %v4626 = vmul.f32 %v4622, %v4622
    %v4627 = vmul.f32 %v4623, %v4623
    %v4628 = vsel %vm466, %v4624, 0.0
    %4629 = vadd.xlane.f32.xlu0 %v4628
    %v4630 = vpop.xlane.xlu0 %4629
    %v4631 = vsel %vm466, %v4625, 0.0
    %4632 = vadd.xlane.f32.xlu0 %v4631
    %v4633 = vpop.xlane.xlu0 %4632
    %v4634 = vsel %vm466, %v4626, 0.0
    %4635 = vadd.xlane.f32.xlu0 %v4634
    %v4636 = vpop.xlane.xlu0 %4635
    %v4637 = vsel %vm466, %v4627, 0.0
    %4638 = vadd.xlane.f32.xlu0 %v4637
    %v4639 = vpop.xlane.xlu0 %4638
    %v4640 = vmul.f32 %v4630, %v4317
    %v4641 = vmul.f32 %v4633, %v4317
    %v4642 = vmul.f32 %v4636, %v4317
    %v4643 = vmul.f32 %v4639, %v4317
    %v4644 = vadd.f32 %v4640, 1e-05
    %v4645 = vadd.f32 %v4641, 1e-05
    %v4646 = vadd.f32 %v4642, 1e-05
    %v4647 = vadd.f32 %v4643, 1e-05
    %v4648 = vrsqrt.pop %v4644
    %v4649 = vrsqrt.pop %v4645
    %v4650 = vrsqrt.pop %v4646
    %v4651 = vrsqrt.pop %v4647
    %v4652 = vmul.f32 %v4620, %v4648
    %v4653 = vmul.f32 %v4621, %v4649
    %v4654 = vmul.f32 %v4622, %v4650
    %v4655 = vmul.f32 %v4623, %v4651
    %v4657 = vlaneseq
    %v4658 = vshrl.u32 %v4657, 7
    %v4659 = vsub.s32 0, %v4658
    %v4660 = vrot.slane %v4602, %v4659
    %v4662 = vmul.f32 %v4652, %v4660
    %v4663 = vmul.f32 %v4653, %v4660
    %v4664 = vmul.f32 %v4654, %v4660
    %v4665 = vmul.f32 %v4655, %v4660
    %v4667 = vlaneseq
    %v4668 = vshrl.u32 %v4667, 7
    %v4669 = vsub.s32 0, %v4668
    %v4670 = vrot.slane %v4603, %v4669
    %v4672 = vadd.f32 %v4662, %v4670
    %v4673 = vadd.f32 %v4663, %v4670
    %v4674 = vadd.f32 %v4664, %v4670
    %v4675 = vadd.f32 %v4665, %v4670
    %s4676 = scalar_lea.vmem [#allocation30], 32
    %v4677 = vld [vmem:[%s4676] sm:$0xff]
    %v4678 = vld [vmem:[%s4676 + $0x8] sm:$0xff]
    %v4679 = vld [vmem:[%s4676 + $0x10] sm:$0xff]
    %v4680 = vld [vmem:[%s4676 + $0x18] sm:$0xff]
    %s4681 = scalar_lea.vmem [#allocation31], 1
    %v4682 = vld [vmem:[%s4681] sm:$0x1]
    %v4684 = vlaneseq
    %v4685 = vshrl.u32 %v4684, 7
    %v4686 = vsub.s32 0, %v4685
    %v4687 = vrot.slane %v4682, %v4686
    %v4690 = vsel %vm466, %v4672, 0
    %v4693 = vsel %vm466, %v4673, 0
    %v4696 = vsel %vm466, %v4674, 0
    %v4699 = vsel %vm466, %v4675, 0
    %4701 = vmatprep.subr.mxu0 0.0
    %4702 = vmatpush1.msra.mxu0 %v4677
    %4703 = vmatprep.subr.mxu0 0.0
    %4704 = vmatpush1.msra.mxu0 %v4678
    %4705 = vmatprep.subr.mxu0 0.0
    %4706 = vmatpush1.msra.mxu0 %v4679
    %4707 = vmatprep.subr.mxu0 0.0
    %4708 = vmatpush1.msra.mxu0 %v4680
    %4709 = vmatprep.subr.mxu0 0.0
    %4710 = vmatpush1.msra.mxu0 0.0
    %4711 = vmatprep.subr.mxu0 0.0
    %4712 = vmatpush1.msra.mxu0 0.0
    %4713 = vmatprep.subr.mxu0 0.0
    %4714 = vmatpush1.msra.mxu0 0.0
    %4715 = vmatprep.subr.mxu0 0.0
    %4716 = vmatpush1.msra.mxu0 0.0
    %4717 = vmatprep.subr.mxu0 0.0
    %4718 = vmatpush1.msra.mxu0 0.0
    %4719 = vmatprep.subr.mxu0 0.0
    %4720 = vmatpush1.msra.mxu0 0.0
    %4721 = vmatprep.subr.mxu0 0.0
    %4722 = vmatpush1.msra.mxu0 0.0
    %4723 = vmatprep.subr.mxu0 0.0
    %4724 = vmatpush1.msra.mxu0 0.0
    %4725 = vmatprep.subr.mxu0 0.0
    %4726 = vmatpush1.msra.mxu0 0.0
    %4727 = vmatprep.subr.mxu0 0.0
    %4728 = vmatpush1.msra.mxu0 0.0
    %4729 = vmatprep.subr.mxu0 0.0
    %4730 = vmatpush1.msra.mxu0 0.0
    %4731 = vmatprep.subr.mxu0 0.0
    %4732 = vmatpush1.msra.mxu0 0.0
    %4733 = vmatprep.subr.mxu0 0.0
    %4734 = vmatpush1.msra.mxu0 0.0
    %4735 = vmatprep.subr.mxu0 0.0
    %4736 = vmatpush1.msra.mxu0 0.0
    %4737 = vmatprep.subr.mxu0 0.0
    %4738 = vmatpush1.msra.mxu0 0.0
    %4739 = vmatprep.subr.mxu0 0.0
    %4740 = vmatpush1.msra.mxu0 0.0
    %4741 = vmatprep.subr.mxu0 0.0
    %4742 = vmatpush1.msra.mxu0 0.0
    %4743 = vmatprep.subr.mxu0 0.0
    %4744 = vmatpush1.msra.mxu0 0.0
    %4745 = vmatprep.subr.mxu0 0.0
    %4746 = vmatpush1.msra.mxu0 0.0
    %4747 = vmatprep.subr.mxu0 0.0
    %4748 = vmatpush1.msra.mxu0 0.0
    %4749 = vmatprep.subr.mxu0 0.0
    %4750 = vmatpush1.msra.mxu0 0.0
    %4751 = vmatprep.subr.mxu0 0.0
    %4752 = vmatpush1.msra.mxu0 0.0
    %4753 = vmatprep.subr.mxu0 0.0
    %4754 = vmatpush1.msra.mxu0 0.0
    %4755 = vmatprep.subr.mxu0 0.0
    %4756 = vmatpush1.msra.mxu0 0.0
    %4757 = vmatprep.subr.mxu0 0.0
    %4758 = vmatpush1.msra.mxu0 0.0
    %4759 = vmatprep.subr.mxu0 0.0
    %4760 = vmatpush1.msra.mxu0 0.0
    %4761 = vmatprep.subr.mxu0 0.0
    %4762 = vmatpush1.msra.mxu0 0.0
    %4763 = vmatprep.subr.mxu0 0.0
    %4764 = vmatpush1.msra.mxu0 0.0
    %4765 = vmatprep.mubr.f32.mxu0 0.0
    %4766 = vmatmul.mubr.f32.gmra.mrb[0].mxu0 %v4690
    %v4767 = vpop.f32.mrb[0].mxu0
    %v4768 = vadd.f32 %v4687, %v4767
    %v4769 = vpop.f32.mrb[0].mxu0
    %4770 = vmatprep.mubr.f32.mxu0 0.0
    %4771 = vmatmul.mubr.f32.gmra.mrb[0].mxu0 %v4693
    %v4772 = vpop.f32.mrb[0].mxu0
    %v4773 = vadd.f32 %v4687, %v4772
    %v4774 = vpop.f32.mrb[0].mxu0
    %4775 = vmatprep.mubr.f32.mxu0 0.0
    %4776 = vmatmul.mubr.f32.gmra.mrb[0].mxu0 %v4696
    %v4777 = vpop.f32.mrb[0].mxu0
    %v4778 = vadd.f32 %v4687, %v4777
    %v4779 = vpop.f32.mrb[0].mxu0
    %4780 = vmatprep.mubr.f32.mxu0 0.0
    %4781 = vmatmul.mubr.f32.gmra.mrb[0].mxu0 %v4699
    %v4782 = vpop.f32.mrb[0].mxu0
    %v4783 = vadd.f32 %v4687, %v4782
    %v4784 = vpop.f32.mrb[0].mxu0
    %4785 = vdwg.mxu0
    %4790 = vrot.lane.b32.xlu0 %v4768, 96
    %v4791 = vpop.permute.xlu0 %4790
    %4792 = vrot.lane.b32.xlu0 %v4773, 96
    %v4793 = vpop.permute.xlu0 %4792
    %4794 = vrot.lane.b32.xlu0 %v4778, 96
    %v4795 = vpop.permute.xlu0 %4794
    %4796 = vrot.lane.b32.xlu0 %v4783, 96
    %v4797 = vpop.permute.xlu0 %4796
    %v4798 = vsel %vm3060, %v4768, 0
    %v4800 = vsel %vm3060, %v4773, 0
    %v4802 = vsel %vm3060, %v4778, 0
    %v4804 = vsel %vm3060, %v4783, 0
    %v4806 = vsel %vm3060, %v4791, 0
    %v4808 = vsel %vm3060, %v4793, 0
    %v4810 = vsel %vm3060, %v4795, 0
    %v4812 = vsel %vm3060, %v4797, 0
    %4814 = vmatprep.subr.mxu0 0.0
    %4815 = vmatpush1.xpose.msra.mxu0 %v4806
    %4816 = vmatprep.subr.mxu0 0.0
    %4817 = vmatpush1.xpose.msra.mxu0 %v4808
    %4818 = vmatprep.subr.mxu0 0.0
    %4819 = vmatpush1.xpose.msra.mxu0 %v4810
    %4820 = vmatprep.subr.mxu0 0.0
    %4821 = vmatpush1.xpose.msra.mxu0 %v4812
    %4822 = vmatprep.subr.mxu0 0.0
    %4823 = vmatpush1.xpose.msra.mxu0 0.0
    %4824 = vmatprep.subr.mxu0 0.0
    %4825 = vmatpush1.xpose.msra.mxu0 0.0
    %4826 = vmatprep.subr.mxu0 0.0
    %4827 = vmatpush1.xpose.msra.mxu0 0.0
    %4828 = vmatprep.subr.mxu0 0.0
    %4829 = vmatpush1.xpose.msra.mxu0 0.0
    %4830 = vmatprep.subr.mxu0 0.0
    %4831 = vmatpush1.xpose.msra.mxu0 0.0
    %4832 = vmatprep.subr.mxu0 0.0
    %4833 = vmatpush1.xpose.msra.mxu0 0.0
    %4834 = vmatprep.subr.mxu0 0.0
    %4835 = vmatpush1.xpose.msra.mxu0 0.0
    %4836 = vmatprep.subr.mxu0 0.0
    %4837 = vmatpush1.xpose.msra.mxu0 0.0
    %4838 = vmatprep.subr.mxu0 0.0
    %4839 = vmatpush1.xpose.msra.mxu0 0.0
    %4840 = vmatprep.subr.mxu0 0.0
    %4841 = vmatpush1.xpose.msra.mxu0 0.0
    %4842 = vmatprep.subr.mxu0 0.0
    %4843 = vmatpush1.xpose.msra.mxu0 0.0
    %4844 = vmatprep.subr.mxu0 0.0
    %4845 = vmatpush1.xpose.msra.mxu0 0.0
    %4846 = vmatprep.subr.mxu0 0.0
    %4847 = vmatpush1.xpose.msra.mxu0 0.0
    %4848 = vmatprep.subr.mxu0 0.0
    %4849 = vmatpush1.xpose.msra.mxu0 0.0
    %4850 = vmatprep.subr.mxu0 0.0
    %4851 = vmatpush1.xpose.msra.mxu0 0.0
    %4852 = vmatprep.subr.mxu0 0.0
    %4853 = vmatpush1.xpose.msra.mxu0 0.0
    %4854 = vmatprep.subr.mxu0 0.0
    %4855 = vmatpush1.xpose.msra.mxu0 0.0
    %4856 = vmatprep.subr.mxu0 0.0
    %4857 = vmatpush1.xpose.msra.mxu0 0.0
    %4858 = vmatprep.subr.mxu0 0.0
    %4859 = vmatpush1.xpose.msra.mxu0 0.0
    %4860 = vmatprep.subr.mxu0 0.0
    %4861 = vmatpush1.xpose.msra.mxu0 0.0
    %4862 = vmatprep.subr.mxu0 0.0
    %4863 = vmatpush1.xpose.msra.mxu0 0.0
    %4864 = vmatprep.subr.mxu0 0.0
    %4865 = vmatpush1.xpose.msra.mxu0 0.0
    %4866 = vmatprep.subr.mxu0 0.0
    %4867 = vmatpush1.xpose.msra.mxu0 0.0
    %4868 = vmatprep.subr.mxu0 0.0
    %4869 = vmatpush1.xpose.msra.mxu0 0.0
    %4870 = vmatprep.subr.mxu0 0.0
    %4871 = vmatpush1.xpose.msra.mxu0 0.0
    %4872 = vmatprep.subr.mxu0 0.0
    %4873 = vmatpush1.xpose.msra.mxu0 0.0
    %4874 = vmatprep.subr.mxu0 0.0
    %4875 = vmatpush1.xpose.msra.mxu0 0.0
    %4876 = vmatprep.subr.mxu0 0.0
    %4877 = vmatpush1.xpose.msra.mxu0 0.0
    %4878 = vmatprep.mubr.f32.mxu0 0.0
    %4879 = vmatmul.mubr.f32.gmra.mrb[0].mxu0 %v4798
    %v4880 = vpop.f32.mrb[0].mxu0
    %v4881 = vadd.f32 %v2936, %v4880
    %v4882 = vpop.f32.mrb[0].mxu0
    %4883 = vmatprep.mubr.f32.mxu0 0.0
    %4884 = vmatmul.mubr.f32.gmra.mrb[0].mxu0 %v4800
    %v4885 = vpop.f32.mrb[0].mxu0
    %v4886 = vadd.f32 %v2937, %v4885
    %v4887 = vpop.f32.mrb[0].mxu0
    %4888 = vmatprep.mubr.f32.mxu0 0.0
    %4889 = vmatmul.mubr.f32.gmra.mrb[0].mxu0 %v4802
    %v4890 = vpop.f32.mrb[0].mxu0
    %v4891 = vadd.f32 %v2938, %v4890
    %v4892 = vpop.f32.mrb[0].mxu0
    %4893 = vmatprep.mubr.f32.mxu0 0.0
    %4894 = vmatmul.mubr.f32.gmra.mrb[0].mxu0 %v4804
    %v4895 = vpop.f32.mrb[0].mxu0
    %v4896 = vadd.f32 %v2939, %v4895
    %v4897 = vpop.f32.mrb[0].mxu0
    %4898 = vdwg.mxu0
    %v4899 = vsel %vm466, %v4881, -inf
    %4900 = vmax.xlane.f32.xlu0 %v4899
    %v4901 = vpop.xlane.xlu0 %4900
    %v4902 = vsel %vm466, %v4886, -inf
    %4903 = vmax.xlane.f32.xlu0 %v4902
    %v4904 = vpop.xlane.xlu0 %4903
    %v4905 = vsel %vm466, %v4891, -inf
    %4906 = vmax.xlane.f32.xlu0 %v4905
    %v4907 = vpop.xlane.xlu0 %4906
    %v4908 = vsel %vm466, %v4896, -inf
    %4909 = vmax.xlane.f32.xlu0 %v4908
    %v4910 = vpop.xlane.xlu0 %4909
    %v4911 = vsub.f32 %v4881, %v4901
    %v4912 = vsub.f32 %v4886, %v4904
    %v4913 = vsub.f32 %v4891, %v4907
    %v4914 = vsub.f32 %v4896, %v4910
    %v4915 = vmul.f32 %v4911, 1.442695
    %v4916 = vpow.pop %v4915
    %v4917 = vmul.f32 %v4912, 1.442695
    %v4918 = vpow.pop %v4917
    %v4919 = vmul.f32 %v4913, 1.442695
    %v4920 = vpow.pop %v4919
    %v4921 = vmul.f32 %v4914, 1.442695
    %v4922 = vpow.pop %v4921
    %v4923 = vsel %vm466, %v4916, 0.0
    %4924 = vadd.xlane.f32.xlu0 %v4923
    %v4925 = vpop.xlane.xlu0 %4924
    %v4926 = vsel %vm466, %v4918, 0.0
    %4927 = vadd.xlane.f32.xlu0 %v4926
    %v4928 = vpop.xlane.xlu0 %4927
    %v4929 = vsel %vm466, %v4920, 0.0
    %4930 = vadd.xlane.f32.xlu0 %v4929
    %v4931 = vpop.xlane.xlu0 %4930
    %v4932 = vsel %vm466, %v4922, 0.0
    %4933 = vadd.xlane.f32.xlu0 %v4932
    %v4934 = vpop.xlane.xlu0 %4933
    %v4935 = vrcp.pop %v4925
    %v4936 = vrcp.pop %v4928
    %v4937 = vrcp.pop %v4931
    %v4938 = vrcp.pop %v4934
    %v4939 = vmul.f32 %v4916, %v4935
    %v4940 = vmul.f32 %v4918, %v4936
    %v4941 = vmul.f32 %v4920, %v4937
    %v4942 = vmul.f32 %v4922, %v4938
    %4943 = vrot.lane.b32.xlu0 %v4768, 64
    %v4944 = vpop.permute.xlu0 %4943
    %4945 = vrot.lane.b32.xlu0 %v4773, 64
    %v4946 = vpop.permute.xlu0 %4945
    %4947 = vrot.lane.b32.xlu0 %v4778, 64
    %v4948 = vpop.permute.xlu0 %4947
    %4949 = vrot.lane.b32.xlu0 %v4783, 64
    %v4950 = vpop.permute.xlu0 %4949
    %v4956 = vsel %vm466, %v4939, 0
    %v4959 = vsel %vm466, %v4940, 0
    %v4962 = vsel %vm466, %v4941, 0
    %v4965 = vsel %vm466, %v4942, 0
    %4967 = vmatprep.subr.mxu0 0.0
    %4968 = vmatpush1.msra.mxu0 %v4944
    %4969 = vmatprep.subr.mxu0 0.0
    %4970 = vmatpush1.msra.mxu0 %v4946
    %4971 = vmatprep.subr.mxu0 0.0
    %4972 = vmatpush1.msra.mxu0 %v4948
    %4973 = vmatprep.subr.mxu0 0.0
    %4974 = vmatpush1.msra.mxu0 %v4950
    %4975 = vmatprep.subr.mxu0 0.0
    %4976 = vmatpush1.msra.mxu0 0.0
    %4977 = vmatprep.subr.mxu0 0.0
    %4978 = vmatpush1.msra.mxu0 0.0
    %4979 = vmatprep.subr.mxu0 0.0
    %4980 = vmatpush1.msra.mxu0 0.0
    %4981 = vmatprep.subr.mxu0 0.0
    %4982 = vmatpush1.msra.mxu0 0.0
    %4983 = vmatprep.subr.mxu0 0.0
    %4984 = vmatpush1.msra.mxu0 0.0
    %4985 = vmatprep.subr.mxu0 0.0
    %4986 = vmatpush1.msra.mxu0 0.0
    %4987 = vmatprep.subr.mxu0 0.0
    %4988 = vmatpush1.msra.mxu0 0.0
    %4989 = vmatprep.subr.mxu0 0.0
    %4990 = vmatpush1.msra.mxu0 0.0
    %4991 = vmatprep.subr.mxu0 0.0
    %4992 = vmatpush1.msra.mxu0 0.0
    %4993 = vmatprep.subr.mxu0 0.0
    %4994 = vmatpush1.msra.mxu0 0.0
    %4995 = vmatprep.subr.mxu0 0.0
    %4996 = vmatpush1.msra.mxu0 0.0
    %4997 = vmatprep.subr.mxu0 0.0
    %4998 = vmatpush1.msra.mxu0 0.0
    %4999 = vmatprep.subr.mxu0 0.0
    %5000 = vmatpush1.msra.mxu0 0.0
    %5001 = vmatprep.subr.mxu0 0.0
    %5002 = vmatpush1.msra.mxu0 0.0
    %5003 = vmatprep.subr.mxu0 0.0
    %5004 = vmatpush1.msra.mxu0 0.0
    %5005 = vmatprep.subr.mxu0 0.0
    %5006 = vmatpush1.msra.mxu0 0.0
    %5007 = vmatprep.subr.mxu0 0.0
    %5008 = vmatpush1.msra.mxu0 0.0
    %5009 = vmatprep.subr.mxu0 0.0
    %5010 = vmatpush1.msra.mxu0 0.0
    %5011 = vmatprep.subr.mxu0 0.0
    %5012 = vmatpush1.msra.mxu0 0.0
    %5013 = vmatprep.subr.mxu0 0.0
    %5014 = vmatpush1.msra.mxu0 0.0
    %5015 = vmatprep.subr.mxu0 0.0
    %5016 = vmatpush1.msra.mxu0 0.0
    %5017 = vmatprep.subr.mxu0 0.0
    %5018 = vmatpush1.msra.mxu0 0.0
    %5019 = vmatprep.subr.mxu0 0.0
    %5020 = vmatpush1.msra.mxu0 0.0
    %5021 = vmatprep.subr.mxu0 0.0
    %5022 = vmatpush1.msra.mxu0 0.0
    %5023 = vmatprep.subr.mxu0 0.0
    %5024 = vmatpush1.msra.mxu0 0.0
    %5025 = vmatprep.subr.mxu0 0.0
    %5026 = vmatpush1.msra.mxu0 0.0
    %5027 = vmatprep.subr.mxu0 0.0
    %5028 = vmatpush1.msra.mxu0 0.0
    %5029 = vmatprep.subr.mxu0 0.0
    %5030 = vmatpush1.msra.mxu0 0.0
    %5031 = vmatprep.mubr.f32.mxu0 0.0
    %5032 = vmatmul.mubr.f32.gmra.mrb[0].mxu0 %v4956
    %v5033 = vpop.f32.mrb[0].mxu0
    %v5034 = vadd.f32 0.0, %v5033
    %v5035 = vpop.f32.mrb[0].mxu0
    %5036 = vmatprep.mubr.f32.mxu0 0.0
    %5037 = vmatmul.mubr.f32.gmra.mrb[0].mxu0 %v4959
    %v5038 = vpop.f32.mrb[0].mxu0
    %v5039 = vadd.f32 0.0, %v5038
    %v5040 = vpop.f32.mrb[0].mxu0
    %5041 = vmatprep.mubr.f32.mxu0 0.0
    %5042 = vmatmul.mubr.f32.gmra.mrb[0].mxu0 %v4962
    %v5043 = vpop.f32.mrb[0].mxu0
    %v5044 = vadd.f32 0.0, %v5043
    %v5045 = vpop.f32.mrb[0].mxu0
    %5046 = vmatprep.mubr.f32.mxu0 0.0
    %5047 = vmatmul.mubr.f32.gmra.mrb[0].mxu0 %v4965
    %v5048 = vpop.f32.mrb[0].mxu0
    %v5049 = vadd.f32 0.0, %v5048
    %v5050 = vpop.f32.mrb[0].mxu0
    %5051 = vdwg.mxu0
    %5052 = vrot.lane.b32.xlu0 %v4768, 120
    %v5053 = vpop.permute.xlu0 %5052
    %5054 = vrot.lane.b32.xlu0 %v4773, 120
    %v5055 = vpop.permute.xlu0 %5054
    %5056 = vrot.lane.b32.xlu0 %v4778, 120
    %v5057 = vpop.permute.xlu0 %5056
    %5058 = vrot.lane.b32.xlu0 %v4783, 120
    %v5059 = vpop.permute.xlu0 %5058
    %5060 = vrot.lane.b32.xlu0 %v4768, 88
    %v5061 = vpop.permute.xlu0 %5060
    %5062 = vrot.lane.b32.xlu0 %v4773, 88
    %v5063 = vpop.permute.xlu0 %5062
    %5064 = vrot.lane.b32.xlu0 %v4778, 88
    %v5065 = vpop.permute.xlu0 %5064
    %5066 = vrot.lane.b32.xlu0 %v4783, 88
    %v5067 = vpop.permute.xlu0 %5066
    %v5068 = vsel %vm3060, %v5053, 0
    %v5070 = vsel %vm3060, %v5055, 0
    %v5072 = vsel %vm3060, %v5057, 0
    %v5074 = vsel %vm3060, %v5059, 0
    %v5076 = vsel %vm3060, %v5061, 0
    %v5078 = vsel %vm3060, %v5063, 0
    %v5080 = vsel %vm3060, %v5065, 0
    %v5082 = vsel %vm3060, %v5067, 0
    %5084 = vmatprep.subr.mxu0 0.0
    %5085 = vmatpush1.xpose.msra.mxu0 %v5076
    %5086 = vmatprep.subr.mxu0 0.0
    %5087 = vmatpush1.xpose.msra.mxu0 %v5078
    %5088 = vmatprep.subr.mxu0 0.0
    %5089 = vmatpush1.xpose.msra.mxu0 %v5080
    %5090 = vmatprep.subr.mxu0 0.0
    %5091 = vmatpush1.xpose.msra.mxu0 %v5082
    %5092 = vmatprep.subr.mxu0 0.0
    %5093 = vmatpush1.xpose.msra.mxu0 0.0
    %5094 = vmatprep.subr.mxu0 0.0
    %5095 = vmatpush1.xpose.msra.mxu0 0.0
    %5096 = vmatprep.subr.mxu0 0.0
    %5097 = vmatpush1.xpose.msra.mxu0 0.0
    %5098 = vmatprep.subr.mxu0 0.0
    %5099 = vmatpush1.xpose.msra.mxu0 0.0
    %5100 = vmatprep.subr.mxu0 0.0
    %5101 = vmatpush1.xpose.msra.mxu0 0.0
    %5102 = vmatprep.subr.mxu0 0.0
    %5103 = vmatpush1.xpose.msra.mxu0 0.0
    %5104 = vmatprep.subr.mxu0 0.0
    %5105 = vmatpush1.xpose.msra.mxu0 0.0
    %5106 = vmatprep.subr.mxu0 0.0
    %5107 = vmatpush1.xpose.msra.mxu0 0.0
    %5108 = vmatprep.subr.mxu0 0.0
    %5109 = vmatpush1.xpose.msra.mxu0 0.0
    %5110 = vmatprep.subr.mxu0 0.0
    %5111 = vmatpush1.xpose.msra.mxu0 0.0
    %5112 = vmatprep.subr.mxu0 0.0
    %5113 = vmatpush1.xpose.msra.mxu0 0.0
    %5114 = vmatprep.subr.mxu0 0.0
    %5115 = vmatpush1.xpose.msra.mxu0 0.0
    %5116 = vmatprep.subr.mxu0 0.0
    %5117 = vmatpush1.xpose.msra.mxu0 0.0
    %5118 = vmatprep.subr.mxu0 0.0
    %5119 = vmatpush1.xpose.msra.mxu0 0.0
    %5120 = vmatprep.subr.mxu0 0.0
    %5121 = vmatpush1.xpose.msra.mxu0 0.0
    %5122 = vmatprep.subr.mxu0 0.0
    %5123 = vmatpush1.xpose.msra.mxu0 0.0
    %5124 = vmatprep.subr.mxu0 0.0
    %5125 = vmatpush1.xpose.msra.mxu0 0.0
    %5126 = vmatprep.subr.mxu0 0.0
    %5127 = vmatpush1.xpose.msra.mxu0 0.0
    %5128 = vmatprep.subr.mxu0 0.0
    %5129 = vmatpush1.xpose.msra.mxu0 0.0
    %5130 = vmatprep.subr.mxu0 0.0
    %5131 = vmatpush1.xpose.msra.mxu0 0.0
    %5132 = vmatprep.subr.mxu0 0.0
    %5133 = vmatpush1.xpose.msra.mxu0 0.0
    %5134 = vmatprep.subr.mxu0 0.0
    %5135 = vmatpush1.xpose.msra.mxu0 0.0
    %5136 = vmatprep.subr.mxu0 0.0
    %5137 = vmatpush1.xpose.msra.mxu0 0.0
    %5138 = vmatprep.subr.mxu0 0.0
    %5139 = vmatpush1.xpose.msra.mxu0 0.0
    %5140 = vmatprep.subr.mxu0 0.0
    %5141 = vmatpush1.xpose.msra.mxu0 0.0
    %5142 = vmatprep.subr.mxu0 0.0
    %5143 = vmatpush1.xpose.msra.mxu0 0.0
    %5144 = vmatprep.subr.mxu0 0.0
    %5145 = vmatpush1.xpose.msra.mxu0 0.0
    %5146 = vmatprep.subr.mxu0 0.0
    %5147 = vmatpush1.xpose.msra.mxu0 0.0
    %5148 = vmatprep.mubr.f32.mxu0 0.0
    %5149 = vmatmul.mubr.f32.gmra.mrb[0].mxu0 %v5068
    %v5150 = vpop.f32.mrb[0].mxu0
    %v5151 = vadd.f32 %v2936, %v5150
    %v5152 = vpop.f32.mrb[0].mxu0
    %5153 = vmatprep.mubr.f32.mxu0 0.0
    %5154 = vmatmul.mubr.f32.gmra.mrb[0].mxu0 %v5070
    %v5155 = vpop.f32.mrb[0].mxu0
    %v5156 = vadd.f32 %v2937, %v5155
    %v5157 = vpop.f32.mrb[0].mxu0
    %5158 = vmatprep.mubr.f32.mxu0 0.0
    %5159 = vmatmul.mubr.f32.gmra.mrb[0].mxu0 %v5072
    %v5160 = vpop.f32.mrb[0].mxu0
    %v5161 = vadd.f32 %v2938, %v5160
    %v5162 = vpop.f32.mrb[0].mxu0
    %5163 = vmatprep.mubr.f32.mxu0 0.0
    %5164 = vmatmul.mubr.f32.gmra.mrb[0].mxu0 %v5074
    %v5165 = vpop.f32.mrb[0].mxu0
    %v5166 = vadd.f32 %v2939, %v5165
    %v5167 = vpop.f32.mrb[0].mxu0
    %5168 = vdwg.mxu0
    %v5169 = vsel %vm466, %v5151, -inf
    %5170 = vmax.xlane.f32.xlu0 %v5169
    %v5171 = vpop.xlane.xlu0 %5170
    %v5172 = vsel %vm466, %v5156, -inf
    %5173 = vmax.xlane.f32.xlu0 %v5172
    %v5174 = vpop.xlane.xlu0 %5173
    %v5175 = vsel %vm466, %v5161, -inf
    %5176 = vmax.xlane.f32.xlu0 %v5175
    %v5177 = vpop.xlane.xlu0 %5176
    %v5178 = vsel %vm466, %v5166, -inf
    %5179 = vmax.xlane.f32.xlu0 %v5178
    %v5180 = vpop.xlane.xlu0 %5179
    %v5181 = vsub.f32 %v5151, %v5171
    %v5182 = vsub.f32 %v5156, %v5174
    %v5183 = vsub.f32 %v5161, %v5177
    %v5184 = vsub.f32 %v5166, %v5180
    %v5185 = vmul.f32 %v5181, 1.442695
    %v5186 = vpow.pop %v5185
    %v5187 = vmul.f32 %v5182, 1.442695
    %v5188 = vpow.pop %v5187
    %v5189 = vmul.f32 %v5183, 1.442695
    %v5190 = vpow.pop %v5189
    %v5191 = vmul.f32 %v5184, 1.442695
    %v5192 = vpow.pop %v5191
    %v5193 = vsel %vm466, %v5186, 0.0
    %5194 = vadd.xlane.f32.xlu0 %v5193
    %v5195 = vpop.xlane.xlu0 %5194
    %v5196 = vsel %vm466, %v5188, 0.0
    %5197 = vadd.xlane.f32.xlu0 %v5196
    %v5198 = vpop.xlane.xlu0 %5197
    %v5199 = vsel %vm466, %v5190, 0.0
    %5200 = vadd.xlane.f32.xlu0 %v5199
    %v5201 = vpop.xlane.xlu0 %5200
    %v5202 = vsel %vm466, %v5192, 0.0
    %5203 = vadd.xlane.f32.xlu0 %v5202
    %v5204 = vpop.xlane.xlu0 %5203
    %v5205 = vrcp.pop %v5195
    %v5206 = vrcp.pop %v5198
    %v5207 = vrcp.pop %v5201
    %v5208 = vrcp.pop %v5204
    %v5209 = vmul.f32 %v5186, %v5205
    %v5210 = vmul.f32 %v5188, %v5206
    %v5211 = vmul.f32 %v5190, %v5207
    %v5212 = vmul.f32 %v5192, %v5208
    %5213 = vrot.lane.b32.xlu0 %v4768, 56
    %v5214 = vpop.permute.xlu0 %5213
    %5215 = vrot.lane.b32.xlu0 %v4773, 56
    %v5216 = vpop.permute.xlu0 %5215
    %5217 = vrot.lane.b32.xlu0 %v4778, 56
    %v5218 = vpop.permute.xlu0 %5217
    %5219 = vrot.lane.b32.xlu0 %v4783, 56
    %v5220 = vpop.permute.xlu0 %5219
    %v5226 = vsel %vm466, %v5209, 0
    %v5229 = vsel %vm466, %v5210, 0
    %v5232 = vsel %vm466, %v5211, 0
    %v5235 = vsel %vm466, %v5212, 0
    %5237 = vmatprep.subr.mxu0 0.0
    %5238 = vmatpush1.msra.mxu0 %v5214
    %5239 = vmatprep.subr.mxu0 0.0
    %5240 = vmatpush1.msra.mxu0 %v5216
    %5241 = vmatprep.subr.mxu0 0.0
    %5242 = vmatpush1.msra.mxu0 %v5218
    %5243 = vmatprep.subr.mxu0 0.0
    %5244 = vmatpush1.msra.mxu0 %v5220
    %5245 = vmatprep.subr.mxu0 0.0
    %5246 = vmatpush1.msra.mxu0 0.0
    %5247 = vmatprep.subr.mxu0 0.0
    %5248 = vmatpush1.msra.mxu0 0.0
    %5249 = vmatprep.subr.mxu0 0.0
    %5250 = vmatpush1.msra.mxu0 0.0
    %5251 = vmatprep.subr.mxu0 0.0
    %5252 = vmatpush1.msra.mxu0 0.0
    %5253 = vmatprep.subr.mxu0 0.0
    %5254 = vmatpush1.msra.mxu0 0.0
    %5255 = vmatprep.subr.mxu0 0.0
    %5256 = vmatpush1.msra.mxu0 0.0
    %5257 = vmatprep.subr.mxu0 0.0
    %5258 = vmatpush1.msra.mxu0 0.0
    %5259 = vmatprep.subr.mxu0 0.0
    %5260 = vmatpush1.msra.mxu0 0.0
    %5261 = vmatprep.subr.mxu0 0.0
    %5262 = vmatpush1.msra.mxu0 0.0
    %5263 = vmatprep.subr.mxu0 0.0
    %5264 = vmatpush1.msra.mxu0 0.0
    %5265 = vmatprep.subr.mxu0 0.0
    %5266 = vmatpush1.msra.mxu0 0.0
    %5267 = vmatprep.subr.mxu0 0.0
    %5268 = vmatpush1.msra.mxu0 0.0
    %5269 = vmatprep.subr.mxu0 0.0
    %5270 = vmatpush1.msra.mxu0 0.0
    %5271 = vmatprep.subr.mxu0 0.0
    %5272 = vmatpush1.msra.mxu0 0.0
    %5273 = vmatprep.subr.mxu0 0.0
    %5274 = vmatpush1.msra.mxu0 0.0
    %5275 = vmatprep.subr.mxu0 0.0
    %5276 = vmatpush1.msra.mxu0 0.0
    %5277 = vmatprep.subr.mxu0 0.0
    %5278 = vmatpush1.msra.mxu0 0.0
    %5279 = vmatprep.subr.mxu0 0.0
    %5280 = vmatpush1.msra.mxu0 0.0
    %5281 = vmatprep.subr.mxu0 0.0
    %5282 = vmatpush1.msra.mxu0 0.0
    %5283 = vmatprep.subr.mxu0 0.0
    %5284 = vmatpush1.msra.mxu0 0.0
    %5285 = vmatprep.subr.mxu0 0.0
    %5286 = vmatpush1.msra.mxu0 0.0
    %5287 = vmatprep.subr.mxu0 0.0
    %5288 = vmatpush1.msra.mxu0 0.0
    %5289 = vmatprep.subr.mxu0 0.0
    %5290 = vmatpush1.msra.mxu0 0.0
    %5291 = vmatprep.subr.mxu0 0.0
    %5292 = vmatpush1.msra.mxu0 0.0
    %5293 = vmatprep.subr.mxu0 0.0
    %5294 = vmatpush1.msra.mxu0 0.0
    %5295 = vmatprep.subr.mxu0 0.0
    %5296 = vmatpush1.msra.mxu0 0.0
    %5297 = vmatprep.subr.mxu0 0.0
    %5298 = vmatpush1.msra.mxu0 0.0
    %5299 = vmatprep.subr.mxu0 0.0
    %5300 = vmatpush1.msra.mxu0 0.0
    %5301 = vmatprep.mubr.f32.mxu0 0.0
    %5302 = vmatmul.mubr.f32.gmra.mrb[0].mxu0 %v5226
    %v5303 = vpop.f32.mrb[0].mxu0
    %v5304 = vadd.f32 0.0, %v5303
    %v5305 = vpop.f32.mrb[0].mxu0
    %5306 = vmatprep.mubr.f32.mxu0 0.0
    %5307 = vmatmul.mubr.f32.gmra.mrb[0].mxu0 %v5229
    %v5308 = vpop.f32.mrb[0].mxu0
    %v5309 = vadd.f32 0.0, %v5308
    %v5310 = vpop.f32.mrb[0].mxu0
    %5311 = vmatprep.mubr.f32.mxu0 0.0
    %5312 = vmatmul.mubr.f32.gmra.mrb[0].mxu0 %v5232
    %v5313 = vpop.f32.mrb[0].mxu0
    %v5314 = vadd.f32 0.0, %v5313
    %v5315 = vpop.f32.mrb[0].mxu0
    %5316 = vmatprep.mubr.f32.mxu0 0.0
    %5317 = vmatmul.mubr.f32.gmra.mrb[0].mxu0 %v5235
    %v5318 = vpop.f32.mrb[0].mxu0
    %v5319 = vadd.f32 0.0, %v5318
    %v5320 = vpop.f32.mrb[0].mxu0
    %5321 = vdwg.mxu0
    %5322 = vrot.lane.b32.xlu0 %v4768, 112
    %v5323 = vpop.permute.xlu0 %5322
    %5324 = vrot.lane.b32.xlu0 %v4773, 112
    %v5325 = vpop.permute.xlu0 %5324
    %5326 = vrot.lane.b32.xlu0 %v4778, 112
    %v5327 = vpop.permute.xlu0 %5326
    %5328 = vrot.lane.b32.xlu0 %v4783, 112
    %v5329 = vpop.permute.xlu0 %5328
    %5330 = vrot.lane.b32.xlu0 %v4768, 80
    %v5331 = vpop.permute.xlu0 %5330
    %5332 = vrot.lane.b32.xlu0 %v4773, 80
    %v5333 = vpop.permute.xlu0 %5332
    %5334 = vrot.lane.b32.xlu0 %v4778, 80
    %v5335 = vpop.permute.xlu0 %5334
    %5336 = vrot.lane.b32.xlu0 %v4783, 80
    %v5337 = vpop.permute.xlu0 %5336
    %v5338 = vsel %vm3060, %v5323, 0
    %v5340 = vsel %vm3060, %v5325, 0
    %v5342 = vsel %vm3060, %v5327, 0
    %v5344 = vsel %vm3060, %v5329, 0
    %v5346 = vsel %vm3060, %v5331, 0
    %v5348 = vsel %vm3060, %v5333, 0
    %v5350 = vsel %vm3060, %v5335, 0
    %v5352 = vsel %vm3060, %v5337, 0
    %5354 = vmatprep.subr.mxu0 0.0
    %5355 = vmatpush1.xpose.msra.mxu0 %v5346
    %5356 = vmatprep.subr.mxu0 0.0
    %5357 = vmatpush1.xpose.msra.mxu0 %v5348
    %5358 = vmatprep.subr.mxu0 0.0
    %5359 = vmatpush1.xpose.msra.mxu0 %v5350
    %5360 = vmatprep.subr.mxu0 0.0
    %5361 = vmatpush1.xpose.msra.mxu0 %v5352
    %5362 = vmatprep.subr.mxu0 0.0
    %5363 = vmatpush1.xpose.msra.mxu0 0.0
    %5364 = vmatprep.subr.mxu0 0.0
    %5365 = vmatpush1.xpose.msra.mxu0 0.0
    %5366 = vmatprep.subr.mxu0 0.0
    %5367 = vmatpush1.xpose.msra.mxu0 0.0
    %5368 = vmatprep.subr.mxu0 0.0
    %5369 = vmatpush1.xpose.msra.mxu0 0.0
    %5370 = vmatprep.subr.mxu0 0.0
    %5371 = vmatpush1.xpose.msra.mxu0 0.0
    %5372 = vmatprep.subr.mxu0 0.0
    %5373 = vmatpush1.xpose.msra.mxu0 0.0
    %5374 = vmatprep.subr.mxu0 0.0
    %5375 = vmatpush1.xpose.msra.mxu0 0.0
    %5376 = vmatprep.subr.mxu0 0.0
    %5377 = vmatpush1.xpose.msra.mxu0 0.0
    %5378 = vmatprep.subr.mxu0 0.0
    %5379 = vmatpush1.xpose.msra.mxu0 0.0
    %5380 = vmatprep.subr.mxu0 0.0
    %5381 = vmatpush1.xpose.msra.mxu0 0.0
    %5382 = vmatprep.subr.mxu0 0.0
    %5383 = vmatpush1.xpose.msra.mxu0 0.0
    %5384 = vmatprep.subr.mxu0 0.0
    %5385 = vmatpush1.xpose.msra.mxu0 0.0
    %5386 = vmatprep.subr.mxu0 0.0
    %5387 = vmatpush1.xpose.msra.mxu0 0.0
    %5388 = vmatprep.subr.mxu0 0.0
    %5389 = vmatpush1.xpose.msra.mxu0 0.0
    %5390 = vmatprep.subr.mxu0 0.0
    %5391 = vmatpush1.xpose.msra.mxu0 0.0
    %5392 = vmatprep.subr.mxu0 0.0
    %5393 = vmatpush1.xpose.msra.mxu0 0.0
    %5394 = vmatprep.subr.mxu0 0.0
    %5395 = vmatpush1.xpose.msra.mxu0 0.0
    %5396 = vmatprep.subr.mxu0 0.0
    %5397 = vmatpush1.xpose.msra.mxu0 0.0
    %5398 = vmatprep.subr.mxu0 0.0
    %5399 = vmatpush1.xpose.msra.mxu0 0.0
    %5400 = vmatprep.subr.mxu0 0.0
    %5401 = vmatpush1.xpose.msra.mxu0 0.0
    %5402 = vmatprep.subr.mxu0 0.0
    %5403 = vmatpush1.xpose.msra.mxu0 0.0
    %5404 = vmatprep.subr.mxu0 0.0
    %5405 = vmatpush1.xpose.msra.mxu0 0.0
    %5406 = vmatprep.subr.mxu0 0.0
    %5407 = vmatpush1.xpose.msra.mxu0 0.0
    %5408 = vmatprep.subr.mxu0 0.0
    %5409 = vmatpush1.xpose.msra.mxu0 0.0
    %5410 = vmatprep.subr.mxu0 0.0
    %5411 = vmatpush1.xpose.msra.mxu0 0.0
    %5412 = vmatprep.subr.mxu0 0.0
    %5413 = vmatpush1.xpose.msra.mxu0 0.0
    %5414 = vmatprep.subr.mxu0 0.0
    %5415 = vmatpush1.xpose.msra.mxu0 0.0
    %5416 = vmatprep.subr.mxu0 0.0
    %5417 = vmatpush1.xpose.msra.mxu0 0.0
    %5418 = vmatprep.mubr.f32.mxu0 0.0
    %5419 = vmatmul.mubr.f32.gmra.mrb[0].mxu0 %v5338
    %v5420 = vpop.f32.mrb[0].mxu0
    %v5421 = vadd.f32 %v2936, %v5420
    %v5422 = vpop.f32.mrb[0].mxu0
    %5423 = vmatprep.mubr.f32.mxu0 0.0
    %5424 = vmatmul.mubr.f32.gmra.mrb[0].mxu0 %v5340
    %v5425 = vpop.f32.mrb[0].mxu0
    %v5426 = vadd.f32 %v2937, %v5425
    %v5427 = vpop.f32.mrb[0].mxu0
    %5428 = vmatprep.mubr.f32.mxu0 0.0
    %5429 = vmatmul.mubr.f32.gmra.mrb[0].mxu0 %v5342
    %v5430 = vpop.f32.mrb[0].mxu0
    %v5431 = vadd.f32 %v2938, %v5430
    %v5432 = vpop.f32.mrb[0].mxu0
    %5433 = vmatprep.mubr.f32.mxu0 0.0
    %5434 = vmatmul.mubr.f32.gmra.mrb[0].mxu0 %v5344
    %v5435 = vpop.f32.mrb[0].mxu0
    %v5436 = vadd.f32 %v2939, %v5435
    %v5437 = vpop.f32.mrb[0].mxu0
    %5438 = vdwg.mxu0
    %v5439 = vsel %vm466, %v5421, -inf
    %5440 = vmax.xlane.f32.xlu0 %v5439
    %v5441 = vpop.xlane.xlu0 %5440
    %v5442 = vsel %vm466, %v5426, -inf
    %5443 = vmax.xlane.f32.xlu0 %v5442
    %v5444 = vpop.xlane.xlu0 %5443
    %v5445 = vsel %vm466, %v5431, -inf
    %5446 = vmax.xlane.f32.xlu0 %v5445
    %v5447 = vpop.xlane.xlu0 %5446
    %v5448 = vsel %vm466, %v5436, -inf
    %5449 = vmax.xlane.f32.xlu0 %v5448
    %v5450 = vpop.xlane.xlu0 %5449
    %v5451 = vsub.f32 %v5421, %v5441
    %v5452 = vsub.f32 %v5426, %v5444
    %v5453 = vsub.f32 %v5431, %v5447
    %v5454 = vsub.f32 %v5436, %v5450
    %v5455 = vmul.f32 %v5451, 1.442695
    %v5456 = vpow.pop %v5455
    %v5457 = vmul.f32 %v5452, 1.442695
    %v5458 = vpow.pop %v5457
    %v5459 = vmul.f32 %v5453, 1.442695
    %v5460 = vpow.pop %v5459
    %v5461 = vmul.f32 %v5454, 1.442695
    %v5462 = vpow.pop %v5461
    %v5463 = vsel %vm466, %v5456, 0.0
    %5464 = vadd.xlane.f32.xlu0 %v5463
    %v5465 = vpop.xlane.xlu0 %5464
    %v5466 = vsel %vm466, %v5458, 0.0
    %5467 = vadd.xlane.f32.xlu0 %v5466
    %v5468 = vpop.xlane.xlu0 %5467
    %v5469 = vsel %vm466, %v5460, 0.0
    %5470 = vadd.xlane.f32.xlu0 %v5469
    %v5471 = vpop.xlane.xlu0 %5470
    %v5472 = vsel %vm466, %v5462, 0.0
    %5473 = vadd.xlane.f32.xlu0 %v5472
    %v5474 = vpop.xlane.xlu0 %5473
    %v5475 = vrcp.pop %v5465
    %v5476 = vrcp.pop %v5468
    %v5477 = vrcp.pop %v5471
    %v5478 = vrcp.pop %v5474
    %v5479 = vmul.f32 %v5456, %v5475
    %v5480 = vmul.f32 %v5458, %v5476
    %v5481 = vmul.f32 %v5460, %v5477
    %v5482 = vmul.f32 %v5462, %v5478
    %5483 = vrot.lane.b32.xlu0 %v4768, 48
    %v5484 = vpop.permute.xlu0 %5483
    %5485 = vrot.lane.b32.xlu0 %v4773, 48
    %v5486 = vpop.permute.xlu0 %5485
    %5487 = vrot.lane.b32.xlu0 %v4778, 48
    %v5488 = vpop.permute.xlu0 %5487
    %5489 = vrot.lane.b32.xlu0 %v4783, 48
    %v5490 = vpop.permute.xlu0 %5489
    %v5496 = vsel %vm466, %v5479, 0
    %v5499 = vsel %vm466, %v5480, 0
    %v5502 = vsel %vm466, %v5481, 0
    %v5505 = vsel %vm466, %v5482, 0
    %5507 = vmatprep.subr.mxu0 0.0
    %5508 = vmatpush1.msra.mxu0 %v5484
    %5509 = vmatprep.subr.mxu0 0.0
    %5510 = vmatpush1.msra.mxu0 %v5486
    %5511 = vmatprep.subr.mxu0 0.0
    %5512 = vmatpush1.msra.mxu0 %v5488
    %5513 = vmatprep.subr.mxu0 0.0
    %5514 = vmatpush1.msra.mxu0 %v5490
    %5515 = vmatprep.subr.mxu0 0.0
    %5516 = vmatpush1.msra.mxu0 0.0
    %5517 = vmatprep.subr.mxu0 0.0
    %5518 = vmatpush1.msra.mxu0 0.0
    %5519 = vmatprep.subr.mxu0 0.0
    %5520 = vmatpush1.msra.mxu0 0.0
    %5521 = vmatprep.subr.mxu0 0.0
    %5522 = vmatpush1.msra.mxu0 0.0
    %5523 = vmatprep.subr.mxu0 0.0
    %5524 = vmatpush1.msra.mxu0 0.0
    %5525 = vmatprep.subr.mxu0 0.0
    %5526 = vmatpush1.msra.mxu0 0.0
    %5527 = vmatprep.subr.mxu0 0.0
    %5528 = vmatpush1.msra.mxu0 0.0
    %5529 = vmatprep.subr.mxu0 0.0
    %5530 = vmatpush1.msra.mxu0 0.0
    %5531 = vmatprep.subr.mxu0 0.0
    %5532 = vmatpush1.msra.mxu0 0.0
    %5533 = vmatprep.subr.mxu0 0.0
    %5534 = vmatpush1.msra.mxu0 0.0
    %5535 = vmatprep.subr.mxu0 0.0
    %5536 = vmatpush1.msra.mxu0 0.0
    %5537 = vmatprep.subr.mxu0 0.0
    %5538 = vmatpush1.msra.mxu0 0.0
    %5539 = vmatprep.subr.mxu0 0.0
    %5540 = vmatpush1.msra.mxu0 0.0
    %5541 = vmatprep.subr.mxu0 0.0
    %5542 = vmatpush1.msra.mxu0 0.0
    %5543 = vmatprep.subr.mxu0 0.0
    %5544 = vmatpush1.msra.mxu0 0.0
    %5545 = vmatprep.subr.mxu0 0.0
    %5546 = vmatpush1.msra.mxu0 0.0
    %5547 = vmatprep.subr.mxu0 0.0
    %5548 = vmatpush1.msra.mxu0 0.0
    %5549 = vmatprep.subr.mxu0 0.0
    %5550 = vmatpush1.msra.mxu0 0.0
    %5551 = vmatprep.subr.mxu0 0.0
    %5552 = vmatpush1.msra.mxu0 0.0
    %5553 = vmatprep.subr.mxu0 0.0
    %5554 = vmatpush1.msra.mxu0 0.0
    %5555 = vmatprep.subr.mxu0 0.0
    %5556 = vmatpush1.msra.mxu0 0.0
    %5557 = vmatprep.subr.mxu0 0.0
    %5558 = vmatpush1.msra.mxu0 0.0
    %5559 = vmatprep.subr.mxu0 0.0
    %5560 = vmatpush1.msra.mxu0 0.0
    %5561 = vmatprep.subr.mxu0 0.0
    %5562 = vmatpush1.msra.mxu0 0.0
    %5563 = vmatprep.subr.mxu0 0.0
    %5564 = vmatpush1.msra.mxu0 0.0
    %5565 = vmatprep.subr.mxu0 0.0
    %5566 = vmatpush1.msra.mxu0 0.0
    %5567 = vmatprep.subr.mxu0 0.0
    %5568 = vmatpush1.msra.mxu0 0.0
    %5569 = vmatprep.subr.mxu0 0.0
    %5570 = vmatpush1.msra.mxu0 0.0
    %5571 = vmatprep.mubr.f32.mxu0 0.0
    %5572 = vmatmul.mubr.f32.gmra.mrb[0].mxu0 %v5496
    %v5573 = vpop.f32.mrb[0].mxu0
    %v5574 = vadd.f32 0.0, %v5573
    %v5575 = vpop.f32.mrb[0].mxu0
    %5576 = vmatprep.mubr.f32.mxu0 0.0
    %5577 = vmatmul.mubr.f32.gmra.mrb[0].mxu0 %v5499
    %v5578 = vpop.f32.mrb[0].mxu0
    %v5579 = vadd.f32 0.0, %v5578
    %v5580 = vpop.f32.mrb[0].mxu0
    %5581 = vmatprep.mubr.f32.mxu0 0.0
    %5582 = vmatmul.mubr.f32.gmra.mrb[0].mxu0 %v5502
    %v5583 = vpop.f32.mrb[0].mxu0
    %v5584 = vadd.f32 0.0, %v5583
    %v5585 = vpop.f32.mrb[0].mxu0
    %5586 = vmatprep.mubr.f32.mxu0 0.0
    %5587 = vmatmul.mubr.f32.gmra.mrb[0].mxu0 %v5505
    %v5588 = vpop.f32.mrb[0].mxu0
    %v5589 = vadd.f32 0.0, %v5588
    %v5590 = vpop.f32.mrb[0].mxu0
    %5591 = vdwg.mxu0
    %5592 = vrot.lane.b32.xlu0 %v4768, 104
    %v5593 = vpop.permute.xlu0 %5592
    %5594 = vrot.lane.b32.xlu0 %v4773, 104
    %v5595 = vpop.permute.xlu0 %5594
    %5596 = vrot.lane.b32.xlu0 %v4778, 104
    %v5597 = vpop.permute.xlu0 %5596
    %5598 = vrot.lane.b32.xlu0 %v4783, 104
    %v5599 = vpop.permute.xlu0 %5598
    %5600 = vrot.lane.b32.xlu0 %v4768, 72
    %v5601 = vpop.permute.xlu0 %5600
    %5602 = vrot.lane.b32.xlu0 %v4773, 72
    %v5603 = vpop.permute.xlu0 %5602
    %5604 = vrot.lane.b32.xlu0 %v4778, 72
    %v5605 = vpop.permute.xlu0 %5604
    %5606 = vrot.lane.b32.xlu0 %v4783, 72
    %v5607 = vpop.permute.xlu0 %5606
    %v5608 = vsel %vm3060, %v5593, 0
    %v5610 = vsel %vm3060, %v5595, 0
    %v5612 = vsel %vm3060, %v5597, 0
    %v5614 = vsel %vm3060, %v5599, 0
    %v5616 = vsel %vm3060, %v5601, 0
    %v5618 = vsel %vm3060, %v5603, 0
    %v5620 = vsel %vm3060, %v5605, 0
    %v5622 = vsel %vm3060, %v5607, 0
    %5624 = vmatprep.subr.mxu0 0.0
    %5625 = vmatpush1.xpose.msra.mxu0 %v5616
    %5626 = vmatprep.subr.mxu0 0.0
    %5627 = vmatpush1.xpose.msra.mxu0 %v5618
    %5628 = vmatprep.subr.mxu0 0.0
    %5629 = vmatpush1.xpose.msra.mxu0 %v5620
    %5630 = vmatprep.subr.mxu0 0.0
    %5631 = vmatpush1.xpose.msra.mxu0 %v5622
    %5632 = vmatprep.subr.mxu0 0.0
    %5633 = vmatpush1.xpose.msra.mxu0 0.0
    %5634 = vmatprep.subr.mxu0 0.0
    %5635 = vmatpush1.xpose.msra.mxu0 0.0
    %5636 = vmatprep.subr.mxu0 0.0
    %5637 = vmatpush1.xpose.msra.mxu0 0.0
    %5638 = vmatprep.subr.mxu0 0.0
    %5639 = vmatpush1.xpose.msra.mxu0 0.0
    %5640 = vmatprep.subr.mxu0 0.0
    %5641 = vmatpush1.xpose.msra.mxu0 0.0
    %5642 = vmatprep.subr.mxu0 0.0
    %5643 = vmatpush1.xpose.msra.mxu0 0.0
    %5644 = vmatprep.subr.mxu0 0.0
    %5645 = vmatpush1.xpose.msra.mxu0 0.0
    %5646 = vmatprep.subr.mxu0 0.0
    %5647 = vmatpush1.xpose.msra.mxu0 0.0
    %5648 = vmatprep.subr.mxu0 0.0
    %5649 = vmatpush1.xpose.msra.mxu0 0.0
    %5650 = vmatprep.subr.mxu0 0.0
    %5651 = vmatpush1.xpose.msra.mxu0 0.0
    %5652 = vmatprep.subr.mxu0 0.0
    %5653 = vmatpush1.xpose.msra.mxu0 0.0
    %5654 = vmatprep.subr.mxu0 0.0
    %5655 = vmatpush1.xpose.msra.mxu0 0.0
    %5656 = vmatprep.subr.mxu0 0.0
    %5657 = vmatpush1.xpose.msra.mxu0 0.0
    %5658 = vmatprep.subr.mxu0 0.0
    %5659 = vmatpush1.xpose.msra.mxu0 0.0
    %5660 = vmatprep.subr.mxu0 0.0
    %5661 = vmatpush1.xpose.msra.mxu0 0.0
    %5662 = vmatprep.subr.mxu0 0.0
    %5663 = vmatpush1.xpose.msra.mxu0 0.0
    %5664 = vmatprep.subr.mxu0 0.0
    %5665 = vmatpush1.xpose.msra.mxu0 0.0
    %5666 = vmatprep.subr.mxu0 0.0
    %5667 = vmatpush1.xpose.msra.mxu0 0.0
    %5668 = vmatprep.subr.mxu0 0.0
    %5669 = vmatpush1.xpose.msra.mxu0 0.0
    %5670 = vmatprep.subr.mxu0 0.0
    %5671 = vmatpush1.xpose.msra.mxu0 0.0
    %5672 = vmatprep.subr.mxu0 0.0
    %5673 = vmatpush1.xpose.msra.mxu0 0.0
    %5674 = vmatprep.subr.mxu0 0.0
    %5675 = vmatpush1.xpose.msra.mxu0 0.0
    %5676 = vmatprep.subr.mxu0 0.0
    %5677 = vmatpush1.xpose.msra.mxu0 0.0
    %5678 = vmatprep.subr.mxu0 0.0
    %5679 = vmatpush1.xpose.msra.mxu0 0.0
    %5680 = vmatprep.subr.mxu0 0.0
    %5681 = vmatpush1.xpose.msra.mxu0 0.0
    %5682 = vmatprep.subr.mxu0 0.0
    %5683 = vmatpush1.xpose.msra.mxu0 0.0
    %5684 = vmatprep.subr.mxu0 0.0
    %5685 = vmatpush1.xpose.msra.mxu0 0.0
    %5686 = vmatprep.subr.mxu0 0.0
    %5687 = vmatpush1.xpose.msra.mxu0 0.0
    %5688 = vmatprep.mubr.f32.mxu0 0.0
    %5689 = vmatmul.mubr.f32.gmra.mrb[0].mxu0 %v5608
    %v5690 = vpop.f32.mrb[0].mxu0
    %v5691 = vadd.f32 %v2936, %v5690
    %v5692 = vpop.f32.mrb[0].mxu0
    %5693 = vmatprep.mubr.f32.mxu0 0.0
    %5694 = vmatmul.mubr.f32.gmra.mrb[0].mxu0 %v5610
    %v5695 = vpop.f32.mrb[0].mxu0
    %v5696 = vadd.f32 %v2937, %v5695
    %v5697 = vpop.f32.mrb[0].mxu0
    %5698 = vmatprep.mubr.f32.mxu0 0.0
    %5699 = vmatmul.mubr.f32.gmra.mrb[0].mxu0 %v5612
    %v5700 = vpop.f32.mrb[0].mxu0
    %v5701 = vadd.f32 %v2938, %v5700
    %v5702 = vpop.f32.mrb[0].mxu0
    %5703 = vmatprep.mubr.f32.mxu0 0.0
    %5704 = vmatmul.mubr.f32.gmra.mrb[0].mxu0 %v5614
    %v5705 = vpop.f32.mrb[0].mxu0
    %v5706 = vadd.f32 %v2939, %v5705
    %v5707 = vpop.f32.mrb[0].mxu0
    %5708 = vdwg.mxu0
    %v5709 = vsel %vm466, %v5691, -inf
    %5710 = vmax.xlane.f32.xlu0 %v5709
    %v5711 = vpop.xlane.xlu0 %5710
    %v5712 = vsel %vm466, %v5696, -inf
    %5713 = vmax.xlane.f32.xlu0 %v5712
    %v5714 = vpop.xlane.xlu0 %5713
    %v5715 = vsel %vm466, %v5701, -inf
    %5716 = vmax.xlane.f32.xlu0 %v5715
    %v5717 = vpop.xlane.xlu0 %5716
    %v5718 = vsel %vm466, %v5706, -inf
    %5719 = vmax.xlane.f32.xlu0 %v5718
    %v5720 = vpop.xlane.xlu0 %5719
    %v5721 = vsub.f32 %v5691, %v5711
    %v5722 = vsub.f32 %v5696, %v5714
    %v5723 = vsub.f32 %v5701, %v5717
    %v5724 = vsub.f32 %v5706, %v5720
    %v5725 = vmul.f32 %v5721, 1.442695
    %v5726 = vpow.pop %v5725
    %v5727 = vmul.f32 %v5722, 1.442695
    %v5728 = vpow.pop %v5727
    %v5729 = vmul.f32 %v5723, 1.442695
    %v5730 = vpow.pop %v5729
    %v5731 = vmul.f32 %v5724, 1.442695
    %v5732 = vpow.pop %v5731
    %v5733 = vsel %vm466, %v5726, 0.0
    %5734 = vadd.xlane.f32.xlu0 %v5733
    %v5735 = vpop.xlane.xlu0 %5734
    %v5736 = vsel %vm466, %v5728, 0.0
    %5737 = vadd.xlane.f32.xlu0 %v5736
    %v5738 = vpop.xlane.xlu0 %5737
    %v5739 = vsel %vm466, %v5730, 0.0
    %5740 = vadd.xlane.f32.xlu0 %v5739
    %v5741 = vpop.xlane.xlu0 %5740
    %v5742 = vsel %vm466, %v5732, 0.0
    %5743 = vadd.xlane.f32.xlu0 %v5742
    %v5744 = vpop.xlane.xlu0 %5743
    %v5745 = vrcp.pop %v5735
    %v5746 = vrcp.pop %v5738
    %v5747 = vrcp.pop %v5741
    %v5748 = vrcp.pop %v5744
    %v5749 = vmul.f32 %v5726, %v5745
    %v5750 = vmul.f32 %v5728, %v5746
    %v5751 = vmul.f32 %v5730, %v5747
    %v5752 = vmul.f32 %v5732, %v5748
    %5753 = vrot.lane.b32.xlu0 %v4768, 40
    %v5754 = vpop.permute.xlu0 %5753
    %5755 = vrot.lane.b32.xlu0 %v4773, 40
    %v5756 = vpop.permute.xlu0 %5755
    %5757 = vrot.lane.b32.xlu0 %v4778, 40
    %v5758 = vpop.permute.xlu0 %5757
    %5759 = vrot.lane.b32.xlu0 %v4783, 40
    %v5760 = vpop.permute.xlu0 %5759
    %v5766 = vsel %vm466, %v5749, 0
    %v5769 = vsel %vm466, %v5750, 0
    %v5772 = vsel %vm466, %v5751, 0
    %v5775 = vsel %vm466, %v5752, 0
    %5777 = vmatprep.subr.mxu0 0.0
    %5778 = vmatpush1.msra.mxu0 %v5754
    %5779 = vmatprep.subr.mxu0 0.0
    %5780 = vmatpush1.msra.mxu0 %v5756
    %5781 = vmatprep.subr.mxu0 0.0
    %5782 = vmatpush1.msra.mxu0 %v5758
    %5783 = vmatprep.subr.mxu0 0.0
    %5784 = vmatpush1.msra.mxu0 %v5760
    %5785 = vmatprep.subr.mxu0 0.0
    %5786 = vmatpush1.msra.mxu0 0.0
    %5787 = vmatprep.subr.mxu0 0.0
    %5788 = vmatpush1.msra.mxu0 0.0
    %5789 = vmatprep.subr.mxu0 0.0
    %5790 = vmatpush1.msra.mxu0 0.0
    %5791 = vmatprep.subr.mxu0 0.0
    %5792 = vmatpush1.msra.mxu0 0.0
    %5793 = vmatprep.subr.mxu0 0.0
    %5794 = vmatpush1.msra.mxu0 0.0
    %5795 = vmatprep.subr.mxu0 0.0
    %5796 = vmatpush1.msra.mxu0 0.0
    %5797 = vmatprep.subr.mxu0 0.0
    %5798 = vmatpush1.msra.mxu0 0.0
    %5799 = vmatprep.subr.mxu0 0.0
    %5800 = vmatpush1.msra.mxu0 0.0
    %5801 = vmatprep.subr.mxu0 0.0
    %5802 = vmatpush1.msra.mxu0 0.0
    %5803 = vmatprep.subr.mxu0 0.0
    %5804 = vmatpush1.msra.mxu0 0.0
    %5805 = vmatprep.subr.mxu0 0.0
    %5806 = vmatpush1.msra.mxu0 0.0
    %5807 = vmatprep.subr.mxu0 0.0
    %5808 = vmatpush1.msra.mxu0 0.0
    %5809 = vmatprep.subr.mxu0 0.0
    %5810 = vmatpush1.msra.mxu0 0.0
    %5811 = vmatprep.subr.mxu0 0.0
    %5812 = vmatpush1.msra.mxu0 0.0
    %5813 = vmatprep.subr.mxu0 0.0
    %5814 = vmatpush1.msra.mxu0 0.0
    %5815 = vmatprep.subr.mxu0 0.0
    %5816 = vmatpush1.msra.mxu0 0.0
    %5817 = vmatprep.subr.mxu0 0.0
    %5818 = vmatpush1.msra.mxu0 0.0
    %5819 = vmatprep.subr.mxu0 0.0
    %5820 = vmatpush1.msra.mxu0 0.0
    %5821 = vmatprep.subr.mxu0 0.0
    %5822 = vmatpush1.msra.mxu0 0.0
    %5823 = vmatprep.subr.mxu0 0.0
    %5824 = vmatpush1.msra.mxu0 0.0
    %5825 = vmatprep.subr.mxu0 0.0
    %5826 = vmatpush1.msra.mxu0 0.0
    %5827 = vmatprep.subr.mxu0 0.0
    %5828 = vmatpush1.msra.mxu0 0.0
    %5829 = vmatprep.subr.mxu0 0.0
    %5830 = vmatpush1.msra.mxu0 0.0
    %5831 = vmatprep.subr.mxu0 0.0
    %5832 = vmatpush1.msra.mxu0 0.0
    %5833 = vmatprep.subr.mxu0 0.0
    %5834 = vmatpush1.msra.mxu0 0.0
    %5835 = vmatprep.subr.mxu0 0.0
    %5836 = vmatpush1.msra.mxu0 0.0
    %5837 = vmatprep.subr.mxu0 0.0
    %5838 = vmatpush1.msra.mxu0 0.0
    %5839 = vmatprep.subr.mxu0 0.0
    %5840 = vmatpush1.msra.mxu0 0.0
    %5841 = vmatprep.mubr.f32.mxu0 0.0
    %5842 = vmatmul.mubr.f32.gmra.mrb[0].mxu0 %v5766
    %v5843 = vpop.f32.mrb[0].mxu0
    %v5844 = vadd.f32 0.0, %v5843
    %v5845 = vpop.f32.mrb[0].mxu0
    %5846 = vmatprep.mubr.f32.mxu0 0.0
    %5847 = vmatmul.mubr.f32.gmra.mrb[0].mxu0 %v5769
    %v5848 = vpop.f32.mrb[0].mxu0
    %v5849 = vadd.f32 0.0, %v5848
    %v5850 = vpop.f32.mrb[0].mxu0
    %5851 = vmatprep.mubr.f32.mxu0 0.0
    %5852 = vmatmul.mubr.f32.gmra.mrb[0].mxu0 %v5772
    %v5853 = vpop.f32.mrb[0].mxu0
    %v5854 = vadd.f32 0.0, %v5853
    %v5855 = vpop.f32.mrb[0].mxu0
    %5856 = vmatprep.mubr.f32.mxu0 0.0
    %5857 = vmatmul.mubr.f32.gmra.mrb[0].mxu0 %v5775
    %v5858 = vpop.f32.mrb[0].mxu0
    %v5859 = vadd.f32 0.0, %v5858
    %v5860 = vpop.f32.mrb[0].mxu0
    %5861 = vdwg.mxu0
    %5866 = vrot.lane.b32.xlu0 %v5304, 8
    %v5867 = vpop.permute.xlu0 %5866
    %5868 = vrot.lane.b32.xlu0 %v5309, 8
    %v5869 = vpop.permute.xlu0 %5868
    %5870 = vrot.lane.b32.xlu0 %v5314, 8
    %v5871 = vpop.permute.xlu0 %5870
    %5872 = vrot.lane.b32.xlu0 %v5319, 8
    %v5873 = vpop.permute.xlu0 %5872
    %5882 = vrot.lane.b32.xlu0 %v5574, 16
    %v5883 = vpop.permute.xlu0 %5882
    %5884 = vrot.lane.b32.xlu0 %v5579, 16
    %v5885 = vpop.permute.xlu0 %5884
    %5886 = vrot.lane.b32.xlu0 %v5584, 16
    %v5887 = vpop.permute.xlu0 %5886
    %5888 = vrot.lane.b32.xlu0 %v5589, 16
    %v5889 = vpop.permute.xlu0 %5888
    %5898 = vrot.lane.b32.xlu0 %v5844, 24
    %v5899 = vpop.permute.xlu0 %5898
    %5900 = vrot.lane.b32.xlu0 %v5849, 24
    %v5901 = vpop.permute.xlu0 %5900
    %5902 = vrot.lane.b32.xlu0 %v5854, 24
    %v5903 = vpop.permute.xlu0 %5902
    %5904 = vrot.lane.b32.xlu0 %v5859, 24
    %v5905 = vpop.permute.xlu0 %5904
    %v5910 = vsel %vm3060, %v5034, %v5867
    %v5911 = vsel %vm3060, %v5039, %v5869
    %v5912 = vsel %vm3060, %v5044, %v5871
    %v5913 = vsel %vm3060, %v5049, %v5873
    %v5914 = vsel %vm4177, %v5910, %v5883
    %v5915 = vsel %vm4177, %v5911, %v5885
    %v5916 = vsel %vm4177, %v5912, %v5887
    %v5917 = vsel %vm4177, %v5913, %v5889
    %v5918 = vsel %vm4182, %v5914, %v5899
    %v5919 = vsel %vm4182, %v5915, %v5901
    %v5920 = vsel %vm4182, %v5916, %v5903
    %v5921 = vsel %vm4182, %v5917, %v5905
    %s5922 = scalar_lea.vmem [#allocation33], 32
    %v5923 = vld [vmem:[%s5922] sm:$0xff]
    %v5924 = vld [vmem:[%s5922 + $0x8] sm:$0xff]
    %v5925 = vld [vmem:[%s5922 + $0x10] sm:$0xff]
    %v5926 = vld [vmem:[%s5922 + $0x18] sm:$0xff]
    %v5928 = vsel %vm466, %v5918, 0
    %v5931 = vsel %vm466, %v5919, 0
    %v5934 = vsel %vm466, %v5920, 0
    %v5937 = vsel %vm466, %v5921, 0
    %5939 = vmatprep.subr.mxu0 0.0
    %5940 = vmatpush1.msra.mxu0 %v5923
    %5941 = vmatprep.subr.mxu0 0.0
    %5942 = vmatpush1.msra.mxu0 %v5924
    %5943 = vmatprep.subr.mxu0 0.0
    %5944 = vmatpush1.msra.mxu0 %v5925
    %5945 = vmatprep.subr.mxu0 0.0
    %5946 = vmatpush1.msra.mxu0 %v5926
    %5947 = vmatprep.subr.mxu0 0.0
    %5948 = vmatpush1.msra.mxu0 0.0
    %5949 = vmatprep.subr.mxu0 0.0
    %5950 = vmatpush1.msra.mxu0 0.0
    %5951 = vmatprep.subr.mxu0 0.0
    %5952 = vmatpush1.msra.mxu0 0.0
    %5953 = vmatprep.subr.mxu0 0.0
    %5954 = vmatpush1.msra.mxu0 0.0
    %5955 = vmatprep.subr.mxu0 0.0
    %5956 = vmatpush1.msra.mxu0 0.0
    %5957 = vmatprep.subr.mxu0 0.0
    %5958 = vmatpush1.msra.mxu0 0.0
    %5959 = vmatprep.subr.mxu0 0.0
    %5960 = vmatpush1.msra.mxu0 0.0
    %5961 = vmatprep.subr.mxu0 0.0
    %5962 = vmatpush1.msra.mxu0 0.0
    %5963 = vmatprep.subr.mxu0 0.0
    %5964 = vmatpush1.msra.mxu0 0.0
    %5965 = vmatprep.subr.mxu0 0.0
    %5966 = vmatpush1.msra.mxu0 0.0
    %5967 = vmatprep.subr.mxu0 0.0
    %5968 = vmatpush1.msra.mxu0 0.0
    %5969 = vmatprep.subr.mxu0 0.0
    %5970 = vmatpush1.msra.mxu0 0.0
    %5971 = vmatprep.subr.mxu0 0.0
    %5972 = vmatpush1.msra.mxu0 0.0
    %5973 = vmatprep.subr.mxu0 0.0
    %5974 = vmatpush1.msra.mxu0 0.0
    %5975 = vmatprep.subr.mxu0 0.0
    %5976 = vmatpush1.msra.mxu0 0.0
    %5977 = vmatprep.subr.mxu0 0.0
    %5978 = vmatpush1.msra.mxu0 0.0
    %5979 = vmatprep.subr.mxu0 0.0
    %5980 = vmatpush1.msra.mxu0 0.0
    %5981 = vmatprep.subr.mxu0 0.0
    %5982 = vmatpush1.msra.mxu0 0.0
    %5983 = vmatprep.subr.mxu0 0.0
    %5984 = vmatpush1.msra.mxu0 0.0
    %5985 = vmatprep.subr.mxu0 0.0
    %5986 = vmatpush1.msra.mxu0 0.0
    %5987 = vmatprep.subr.mxu0 0.0
    %5988 = vmatpush1.msra.mxu0 0.0
    %5989 = vmatprep.subr.mxu0 0.0
    %5990 = vmatpush1.msra.mxu0 0.0
    %5991 = vmatprep.subr.mxu0 0.0
    %5992 = vmatpush1.msra.mxu0 0.0
    %5993 = vmatprep.subr.mxu0 0.0
    %5994 = vmatpush1.msra.mxu0 0.0
    %5995 = vmatprep.subr.mxu0 0.0
    %5996 = vmatpush1.msra.mxu0 0.0
    %5997 = vmatprep.subr.mxu0 0.0
    %5998 = vmatpush1.msra.mxu0 0.0
    %5999 = vmatprep.subr.mxu0 0.0
    %6000 = vmatpush1.msra.mxu0 0.0
    %6001 = vmatprep.subr.mxu0 0.0
    %6002 = vmatpush1.msra.mxu0 0.0
    %6003 = vmatprep.mubr.f32.mxu0 0.0
    %6004 = vmatmul.mubr.f32.gmra.mrb[0].mxu0 %v5928
    %v6005 = vpop.f32.mrb[0].mxu0
    %v6006 = vadd.f32 0.0, %v6005
    %v6007 = vpop.f32.mrb[0].mxu0
    %6008 = vmatprep.mubr.f32.mxu0 0.0
    %6009 = vmatmul.mubr.f32.gmra.mrb[0].mxu0 %v5931
    %v6010 = vpop.f32.mrb[0].mxu0
    %v6011 = vadd.f32 0.0, %v6010
    %v6012 = vpop.f32.mrb[0].mxu0
    %6013 = vmatprep.mubr.f32.mxu0 0.0
    %6014 = vmatmul.mubr.f32.gmra.mrb[0].mxu0 %v5934
    %v6015 = vpop.f32.mrb[0].mxu0
    %v6016 = vadd.f32 0.0, %v6015
    %v6017 = vpop.f32.mrb[0].mxu0
    %6018 = vmatprep.mubr.f32.mxu0 0.0
    %6019 = vmatmul.mubr.f32.gmra.mrb[0].mxu0 %v5937
    %v6020 = vpop.f32.mrb[0].mxu0
    %v6021 = vadd.f32 0.0, %v6020
    %v6022 = vpop.f32.mrb[0].mxu0
    %6023 = vdwg.mxu0
    %v6024 = vadd.f32 %v4672, %v6006
    %v6025 = vadd.f32 %v4673, %v6011
    %v6026 = vadd.f32 %v4674, %v6016
    %v6027 = vadd.f32 %v4675, %v6021
    %s6028 = scalar_lea.vmem [#allocation34], 1
    %v6029 = vld [vmem:[%s6028] sm:$0x1]
    %v6031 = vlaneseq
    %v6032 = vshrl.u32 %v6031, 7
    %v6033 = vsub.s32 0, %v6032
    %v6034 = vrot.slane %v6029, %v6033
    %v6036 = vadd.f32 %v6024, %v6034
    %v6037 = vadd.f32 %v6025, %v6034
    %v6038 = vadd.f32 %v6026, %v6034
    %v6039 = vadd.f32 %v6027, %v6034
    %s6040 = scalar_lea.vmem %s45, 1
    %v6041 = vld [vmem:[%s6040] sm:$0x1]
    %s6042 = scalar_lea.vmem %s47, 1
    %v6043 = vld [vmem:[%s6042] sm:$0x1]
    %v6044 = vsel %vm466, %v6036, 0.0
    %6045 = vadd.xlane.f32.xlu0 %v6044
    %v6046 = vpop.xlane.xlu0 %6045
    %v6047 = vsel %vm466, %v6037, 0.0
    %6048 = vadd.xlane.f32.xlu0 %v6047
    %v6049 = vpop.xlane.xlu0 %6048
    %v6050 = vsel %vm466, %v6038, 0.0
    %6051 = vadd.xlane.f32.xlu0 %v6050
    %v6052 = vpop.xlane.xlu0 %6051
    %v6053 = vsel %vm466, %v6039, 0.0
    %6054 = vadd.xlane.f32.xlu0 %v6053
    %v6055 = vpop.xlane.xlu0 %6054
    %v6056 = vmul.f32 %v6046, %v4317
    %v6057 = vmul.f32 %v6049, %v4317
    %v6058 = vmul.f32 %v6052, %v4317
    %v6059 = vmul.f32 %v6055, %v4317
    %v6060 = vsub.f32 %v6036, %v6056
    %v6061 = vsub.f32 %v6037, %v6057
    %v6062 = vsub.f32 %v6038, %v6058
    %v6063 = vsub.f32 %v6039, %v6059
    %v6064 = vmul.f32 %v6060, %v6060
    %v6065 = vmul.f32 %v6061, %v6061
    %v6066 = vmul.f32 %v6062, %v6062
    %v6067 = vmul.f32 %v6063, %v6063
    %v6068 = vsel %vm466, %v6064, 0.0
    %6069 = vadd.xlane.f32.xlu0 %v6068
    %v6070 = vpop.xlane.xlu0 %6069
    %v6071 = vsel %vm466, %v6065, 0.0
    %6072 = vadd.xlane.f32.xlu0 %v6071
    %v6073 = vpop.xlane.xlu0 %6072
    %v6074 = vsel %vm466, %v6066, 0.0
    %6075 = vadd.xlane.f32.xlu0 %v6074
    %v6076 = vpop.xlane.xlu0 %6075
    %v6077 = vsel %vm466, %v6067, 0.0
    %6078 = vadd.xlane.f32.xlu0 %v6077
    %v6079 = vpop.xlane.xlu0 %6078
    %v6080 = vmul.f32 %v6070, %v4317
    %v6081 = vmul.f32 %v6073, %v4317
    %v6082 = vmul.f32 %v6076, %v4317
    %v6083 = vmul.f32 %v6079, %v4317
    %v6084 = vadd.f32 %v6080, 1e-05
    %v6085 = vadd.f32 %v6081, 1e-05
    %v6086 = vadd.f32 %v6082, 1e-05
    %v6087 = vadd.f32 %v6083, 1e-05
    %v6088 = vrsqrt.pop %v6084
    %v6089 = vrsqrt.pop %v6085
    %v6090 = vrsqrt.pop %v6086
    %v6091 = vrsqrt.pop %v6087
    %v6092 = vmul.f32 %v6060, %v6088
    %v6093 = vmul.f32 %v6061, %v6089
    %v6094 = vmul.f32 %v6062, %v6090
    %v6095 = vmul.f32 %v6063, %v6091
    %v6097 = vlaneseq
    %v6098 = vshrl.u32 %v6097, 7
    %v6099 = vsub.s32 0, %v6098
    %v6100 = vrot.slane %v6041, %v6099
    %v6102 = vmul.f32 %v6092, %v6100
    %v6103 = vmul.f32 %v6093, %v6100
    %v6104 = vmul.f32 %v6094, %v6100
    %v6105 = vmul.f32 %v6095, %v6100
    %v6107 = vlaneseq
    %v6108 = vshrl.u32 %v6107, 7
    %v6109 = vsub.s32 0, %v6108
    %v6110 = vrot.slane %v6043, %v6109
    %v6112 = vadd.f32 %v6102, %v6110
    %v6113 = vadd.f32 %v6103, %v6110
    %v6114 = vadd.f32 %v6104, %v6110
    %v6115 = vadd.f32 %v6105, %v6110
    %s6116 = scalar_lea.vmem %s49, 32
    %v6117 = vld [vmem:[%s6116] sm:$0xff]
    %v6118 = vld [vmem:[%s6116 + $0x8] sm:$0xff]
    %v6119 = vld [vmem:[%s6116 + $0x10] sm:$0xff]
    %v6120 = vld [vmem:[%s6116 + $0x18] sm:$0xff]
    %s6121 = scalar_lea.vmem %s51, 1
    %v6122 = vld [vmem:[%s6121] sm:$0x1]
    %v6124 = vlaneseq
    %v6125 = vshrl.u32 %v6124, 7
    %v6126 = vsub.s32 0, %v6125
    %v6127 = vrot.slane %v6122, %v6126
    %v6130 = vsel %vm466, %v6112, 0
    %v6133 = vsel %vm466, %v6113, 0
    %v6136 = vsel %vm466, %v6114, 0
    %v6139 = vsel %vm466, %v6115, 0
    %6141 = vmatprep.subr.mxu0 0.0
    %6142 = vmatpush1.msra.mxu0 %v6117
    %6143 = vmatprep.subr.mxu0 0.0
    %6144 = vmatpush1.msra.mxu0 %v6118
    %6145 = vmatprep.subr.mxu0 0.0
    %6146 = vmatpush1.msra.mxu0 %v6119
    %6147 = vmatprep.subr.mxu0 0.0
    %6148 = vmatpush1.msra.mxu0 %v6120
    %6149 = vmatprep.subr.mxu0 0.0
    %6150 = vmatpush1.msra.mxu0 0.0
    %6151 = vmatprep.subr.mxu0 0.0
    %6152 = vmatpush1.msra.mxu0 0.0
    %6153 = vmatprep.subr.mxu0 0.0
    %6154 = vmatpush1.msra.mxu0 0.0
    %6155 = vmatprep.subr.mxu0 0.0
    %6156 = vmatpush1.msra.mxu0 0.0
    %6157 = vmatprep.subr.mxu0 0.0
    %6158 = vmatpush1.msra.mxu0 0.0
    %6159 = vmatprep.subr.mxu0 0.0
    %6160 = vmatpush1.msra.mxu0 0.0
    %6161 = vmatprep.subr.mxu0 0.0
    %6162 = vmatpush1.msra.mxu0 0.0
    %6163 = vmatprep.subr.mxu0 0.0
    %6164 = vmatpush1.msra.mxu0 0.0
    %6165 = vmatprep.subr.mxu0 0.0
    %6166 = vmatpush1.msra.mxu0 0.0
    %6167 = vmatprep.subr.mxu0 0.0
    %6168 = vmatpush1.msra.mxu0 0.0
    %6169 = vmatprep.subr.mxu0 0.0
    %6170 = vmatpush1.msra.mxu0 0.0
    %6171 = vmatprep.subr.mxu0 0.0
    %6172 = vmatpush1.msra.mxu0 0.0
    %6173 = vmatprep.subr.mxu0 0.0
    %6174 = vmatpush1.msra.mxu0 0.0
    %6175 = vmatprep.subr.mxu0 0.0
    %6176 = vmatpush1.msra.mxu0 0.0
    %6177 = vmatprep.subr.mxu0 0.0
    %6178 = vmatpush1.msra.mxu0 0.0
    %6179 = vmatprep.subr.mxu0 0.0
    %6180 = vmatpush1.msra.mxu0 0.0
    %6181 = vmatprep.subr.mxu0 0.0
    %6182 = vmatpush1.msra.mxu0 0.0
    %6183 = vmatprep.subr.mxu0 0.0
    %6184 = vmatpush1.msra.mxu0 0.0
    %6185 = vmatprep.subr.mxu0 0.0
    %6186 = vmatpush1.msra.mxu0 0.0
    %6187 = vmatprep.subr.mxu0 0.0
    %6188 = vmatpush1.msra.mxu0 0.0
    %6189 = vmatprep.subr.mxu0 0.0
    %6190 = vmatpush1.msra.mxu0 0.0
    %6191 = vmatprep.subr.mxu0 0.0
    %6192 = vmatpush1.msra.mxu0 0.0
    %6193 = vmatprep.subr.mxu0 0.0
    %6194 = vmatpush1.msra.mxu0 0.0
    %6195 = vmatprep.subr.mxu0 0.0
    %6196 = vmatpush1.msra.mxu0 0.0
    %6197 = vmatprep.subr.mxu0 0.0
    %6198 = vmatpush1.msra.mxu0 0.0
    %6199 = vmatprep.subr.mxu0 0.0
    %6200 = vmatpush1.msra.mxu0 0.0
    %6201 = vmatprep.subr.mxu0 0.0
    %6202 = vmatpush1.msra.mxu0 0.0
    %6203 = vmatprep.subr.mxu0 0.0
    %6204 = vmatpush1.msra.mxu0 0.0
    %6205 = vmatprep.mubr.f32.mxu0 0.0
    %6206 = vmatmul.mubr.f32.gmra.mrb[0].mxu0 %v6130
    %v6207 = vpop.f32.mrb[0].mxu0
    %v6208 = vadd.f32 %v6127, %v6207
    %v6209 = vpop.f32.mrb[0].mxu0
    %6210 = vmatprep.mubr.f32.mxu0 0.0
    %6211 = vmatmul.mubr.f32.gmra.mrb[0].mxu0 %v6133
    %v6212 = vpop.f32.mrb[0].mxu0
    %v6213 = vadd.f32 %v6127, %v6212
    %v6214 = vpop.f32.mrb[0].mxu0
    %6215 = vmatprep.mubr.f32.mxu0 0.0
    %6216 = vmatmul.mubr.f32.gmra.mrb[0].mxu0 %v6136
    %v6217 = vpop.f32.mrb[0].mxu0
    %v6218 = vadd.f32 %v6127, %v6217
    %v6219 = vpop.f32.mrb[0].mxu0
    %6220 = vmatprep.mubr.f32.mxu0 0.0
    %6221 = vmatmul.mubr.f32.gmra.mrb[0].mxu0 %v6139
    %v6222 = vpop.f32.mrb[0].mxu0
    %v6223 = vadd.f32 %v6127, %v6222
    %v6224 = vpop.f32.mrb[0].mxu0
    %6225 = vdwg.mxu0
    %v6226 = vmax.f32 %v6208, 0.0
    %v6227 = vmax.f32 %v6213, 0.0
    %v6228 = vmax.f32 %v6218, 0.0
    %v6229 = vmax.f32 %v6223, 0.0
    %s6230 = scalar_lea.vmem [#allocation36], 128
    %v6231 = vld [vmem:[%s6230] sm:$0xff]
    %v6232 = vld [vmem:[%s6230 + $0x8] sm:$0xff]
    %v6233 = vld [vmem:[%s6230 + $0x10] sm:$0xff]
    %v6234 = vld [vmem:[%s6230 + $0x18] sm:$0xff]
    %v6235 = vld [vmem:[%s6230 + $0x20] sm:$0xff]
    %v6236 = vld [vmem:[%s6230 + $0x28] sm:$0xff]
    %v6237 = vld [vmem:[%s6230 + $0x30] sm:$0xff]
    %v6238 = vld [vmem:[%s6230 + $0x38] sm:$0xff]
    %v6239 = vld [vmem:[%s6230 + $0x40] sm:$0xff]
    %v6240 = vld [vmem:[%s6230 + $0x48] sm:$0xff]
    %v6241 = vld [vmem:[%s6230 + $0x50] sm:$0xff]
    %v6242 = vld [vmem:[%s6230 + $0x58] sm:$0xff]
    %v6243 = vld [vmem:[%s6230 + $0x60] sm:$0xff]
    %v6244 = vld [vmem:[%s6230 + $0x68] sm:$0xff]
    %v6245 = vld [vmem:[%s6230 + $0x70] sm:$0xff]
    %v6246 = vld [vmem:[%s6230 + $0x78] sm:$0xff]
    %s6247 = scalar_lea.vmem %s55, 1
    %v6248 = vld [vmem:[%s6247] sm:$0x1]
    %v6250 = vlaneseq
    %v6251 = vshrl.u32 %v6250, 7
    %v6252 = vsub.s32 0, %v6251
    %v6253 = vrot.slane %v6248, %v6252
    %6255 = vmatprep.subr.mxu0 0.0
    %6256 = vmatpush1.msra.mxu0 %v6231
    %6257 = vmatprep.subr.mxu0 0.0
    %6258 = vmatpush1.msra.mxu0 %v6232
    %6259 = vmatprep.subr.mxu0 0.0
    %6260 = vmatpush1.msra.mxu0 %v6233
    %6261 = vmatprep.subr.mxu0 0.0
    %6262 = vmatpush1.msra.mxu0 %v6234
    %6263 = vmatprep.subr.mxu0 0.0
    %6264 = vmatpush1.msra.mxu0 %v6235
    %6265 = vmatprep.subr.mxu0 0.0
    %6266 = vmatpush1.msra.mxu0 %v6236
    %6267 = vmatprep.subr.mxu0 0.0
    %6268 = vmatpush1.msra.mxu0 %v6237
    %6269 = vmatprep.subr.mxu0 0.0
    %6270 = vmatpush1.msra.mxu0 %v6238
    %6271 = vmatprep.subr.mxu0 0.0
    %6272 = vmatpush1.msra.mxu0 %v6239
    %6273 = vmatprep.subr.mxu0 0.0
    %6274 = vmatpush1.msra.mxu0 %v6240
    %6275 = vmatprep.subr.mxu0 0.0
    %6276 = vmatpush1.msra.mxu0 %v6241
    %6277 = vmatprep.subr.mxu0 0.0
    %6278 = vmatpush1.msra.mxu0 %v6242
    %6279 = vmatprep.subr.mxu0 0.0
    %6280 = vmatpush1.msra.mxu0 %v6243
    %6281 = vmatprep.subr.mxu0 0.0
    %6282 = vmatpush1.msra.mxu0 %v6244
    %6283 = vmatprep.subr.mxu0 0.0
    %6284 = vmatpush1.msra.mxu0 %v6245
    %6285 = vmatprep.subr.mxu0 0.0
    %6286 = vmatpush1.msra.mxu0 %v6246
    %6287 = vmatprep.subr.mxu0 0.0
    %6288 = vmatpush1.msra.mxu0 0.0
    %6289 = vmatprep.subr.mxu0 0.0
    %6290 = vmatpush1.msra.mxu0 0.0
    %6291 = vmatprep.subr.mxu0 0.0
    %6292 = vmatpush1.msra.mxu0 0.0
    %6293 = vmatprep.subr.mxu0 0.0
    %6294 = vmatpush1.msra.mxu0 0.0
    %6295 = vmatprep.subr.mxu0 0.0
    %6296 = vmatpush1.msra.mxu0 0.0
    %6297 = vmatprep.subr.mxu0 0.0
    %6298 = vmatpush1.msra.mxu0 0.0
    %6299 = vmatprep.subr.mxu0 0.0
    %6300 = vmatpush1.msra.mxu0 0.0
    %6301 = vmatprep.subr.mxu0 0.0
    %6302 = vmatpush1.msra.mxu0 0.0
    %6303 = vmatprep.subr.mxu0 0.0
    %6304 = vmatpush1.msra.mxu0 0.0
    %6305 = vmatprep.subr.mxu0 0.0
    %6306 = vmatpush1.msra.mxu0 0.0
    %6307 = vmatprep.subr.mxu0 0.0
    %6308 = vmatpush1.msra.mxu0 0.0
    %6309 = vmatprep.subr.mxu0 0.0
    %6310 = vmatpush1.msra.mxu0 0.0
    %6311 = vmatprep.subr.mxu0 0.0
    %6312 = vmatpush1.msra.mxu0 0.0
    %6313 = vmatprep.subr.mxu0 0.0
    %6314 = vmatpush1.msra.mxu0 0.0
    %6315 = vmatprep.subr.mxu0 0.0
    %6316 = vmatpush1.msra.mxu0 0.0
    %6317 = vmatprep.subr.mxu0 0.0
    %6318 = vmatpush1.msra.mxu0 0.0
    %6319 = vmatprep.mubr.f32.mxu0 0.0
    %6320 = vmatmul.mubr.f32.gmra.mrb[0].mxu0 %v6226
    %v6321 = vpop.f32.mrb[0].mxu0
    %v6322 = vadd.f32 %v6253, %v6321
    %v6323 = vpop.f32.mrb[0].mxu0
    %6324 = vmatprep.mubr.f32.mxu0 0.0
    %6325 = vmatmul.mubr.f32.gmra.mrb[0].mxu0 %v6227
    %v6326 = vpop.f32.mrb[0].mxu0
    %v6327 = vadd.f32 %v6253, %v6326
    %v6328 = vpop.f32.mrb[0].mxu0
    %6329 = vmatprep.mubr.f32.mxu0 0.0
    %6330 = vmatmul.mubr.f32.gmra.mrb[0].mxu0 %v6228
    %v6331 = vpop.f32.mrb[0].mxu0
    %v6332 = vadd.f32 %v6253, %v6331
    %v6333 = vpop.f32.mrb[0].mxu0
    %6334 = vmatprep.mubr.f32.mxu0 0.0
    %6335 = vmatmul.mubr.f32.gmra.mrb[0].mxu0 %v6229
    %v6336 = vpop.f32.mrb[0].mxu0
    %v6337 = vadd.f32 %v6253, %v6336
    %v6338 = vpop.f32.mrb[0].mxu0
    %6339 = vdwg.mxu0
    %v6340 = vadd.f32 %v6322, %v6112
    %v6341 = vadd.f32 %v6327, %v6113
    %v6342 = vadd.f32 %v6332, %v6114
    %v6343 = vadd.f32 %v6337, %v6115
    %s6344 = scalar_lea.vmem %s57, 1
    %v6345 = vld [vmem:[%s6344] sm:$0x1]
    %s6346 = scalar_lea.vmem %s59, 1
    %v6347 = vld [vmem:[%s6346] sm:$0x1]
    %v6348 = vsel %vm466, %v6340, 0.0
    %6349 = vadd.xlane.f32.xlu0 %v6348
    %v6350 = vpop.xlane.xlu0 %6349
    %v6351 = vsel %vm466, %v6341, 0.0
    %6352 = vadd.xlane.f32.xlu0 %v6351
    %v6353 = vpop.xlane.xlu0 %6352
    %v6354 = vsel %vm466, %v6342, 0.0
    %6355 = vadd.xlane.f32.xlu0 %v6354
    %v6356 = vpop.xlane.xlu0 %6355
    %v6357 = vsel %vm466, %v6343, 0.0
    %6358 = vadd.xlane.f32.xlu0 %v6357
    %v6359 = vpop.xlane.xlu0 %6358
    %v6360 = vmul.f32 %v6350, %v4317
    %v6361 = vmul.f32 %v6353, %v4317
    %v6362 = vmul.f32 %v6356, %v4317
    %v6363 = vmul.f32 %v6359, %v4317
    %v6364 = vsub.f32 %v6340, %v6360
    %v6365 = vsub.f32 %v6341, %v6361
    %v6366 = vsub.f32 %v6342, %v6362
    %v6367 = vsub.f32 %v6343, %v6363
    %v6368 = vmul.f32 %v6364, %v6364
    %v6369 = vmul.f32 %v6365, %v6365
    %v6370 = vmul.f32 %v6366, %v6366
    %v6371 = vmul.f32 %v6367, %v6367
    %v6372 = vsel %vm466, %v6368, 0.0
    %6373 = vadd.xlane.f32.xlu0 %v6372
    %v6374 = vpop.xlane.xlu0 %6373
    %v6375 = vsel %vm466, %v6369, 0.0
    %6376 = vadd.xlane.f32.xlu0 %v6375
    %v6377 = vpop.xlane.xlu0 %6376
    %v6378 = vsel %vm466, %v6370, 0.0
    %6379 = vadd.xlane.f32.xlu0 %v6378
    %v6380 = vpop.xlane.xlu0 %6379
    %v6381 = vsel %vm466, %v6371, 0.0
    %6382 = vadd.xlane.f32.xlu0 %v6381
    %v6383 = vpop.xlane.xlu0 %6382
    %v6384 = vmul.f32 %v6374, %v4317
    %v6385 = vmul.f32 %v6377, %v4317
    %v6386 = vmul.f32 %v6380, %v4317
    %v6387 = vmul.f32 %v6383, %v4317
    %v6388 = vadd.f32 %v6384, 1e-05
    %v6389 = vadd.f32 %v6385, 1e-05
    %v6390 = vadd.f32 %v6386, 1e-05
    %v6391 = vadd.f32 %v6387, 1e-05
    %v6392 = vrsqrt.pop %v6388
    %v6393 = vrsqrt.pop %v6389
    %v6394 = vrsqrt.pop %v6390
    %v6395 = vrsqrt.pop %v6391
    %v6396 = vmul.f32 %v6364, %v6392
    %v6397 = vmul.f32 %v6365, %v6393
    %v6398 = vmul.f32 %v6366, %v6394
    %v6399 = vmul.f32 %v6367, %v6395
    %v6401 = vlaneseq
    %v6402 = vshrl.u32 %v6401, 7
    %v6403 = vsub.s32 0, %v6402
    %v6404 = vrot.slane %v6345, %v6403
    %v6406 = vmul.f32 %v6396, %v6404
    %v6407 = vmul.f32 %v6397, %v6404
    %v6408 = vmul.f32 %v6398, %v6404
    %v6409 = vmul.f32 %v6399, %v6404
    %v6411 = vlaneseq
    %v6412 = vshrl.u32 %v6411, 7
    %v6413 = vsub.s32 0, %v6412
    %v6414 = vrot.slane %v6347, %v6413
    %v6416 = vadd.f32 %v6406, %v6414
    %v6417 = vadd.f32 %v6407, %v6414
    %v6418 = vadd.f32 %v6408, %v6414
    %v6419 = vadd.f32 %v6409, %v6414
    %s6420 = scalar_lea.vmem [#allocation30], 64
    %v6421 = vld [vmem:[%s6420] sm:$0xff]
    %v6422 = vld [vmem:[%s6420 + $0x8] sm:$0xff]
    %v6423 = vld [vmem:[%s6420 + $0x10] sm:$0xff]
    %v6424 = vld [vmem:[%s6420 + $0x18] sm:$0xff]
    %s6425 = scalar_lea.vmem [#allocation31], 2
    %v6426 = vld [vmem:[%s6425] sm:$0x1]
    %v6428 = vlaneseq
    %v6429 = vshrl.u32 %v6428, 7
    %v6430 = vsub.s32 0, %v6429
    %v6431 = vrot.slane %v6426, %v6430
    %v6434 = vsel %vm466, %v6416, 0
    %v6437 = vsel %vm466, %v6417, 0
    %v6440 = vsel %vm466, %v6418, 0
    %v6443 = vsel %vm466, %v6419, 0
    %6445 = vmatprep.subr.mxu0 0.0
    %6446 = vmatpush1.msra.mxu0 %v6421
    %6447 = vmatprep.subr.mxu0 0.0
    %6448 = vmatpush1.msra.mxu0 %v6422
    %6449 = vmatprep.subr.mxu0 0.0
    %6450 = vmatpush1.msra.mxu0 %v6423
    %6451 = vmatprep.subr.mxu0 0.0
    %6452 = vmatpush1.msra.mxu0 %v6424
    %6453 = vmatprep.subr.mxu0 0.0
    %6454 = vmatpush1.msra.mxu0 0.0
    %6455 = vmatprep.subr.mxu0 0.0
    %6456 = vmatpush1.msra.mxu0 0.0
    %6457 = vmatprep.subr.mxu0 0.0
    %6458 = vmatpush1.msra.mxu0 0.0
    %6459 = vmatprep.subr.mxu0 0.0
    %6460 = vmatpush1.msra.mxu0 0.0
    %6461 = vmatprep.subr.mxu0 0.0
    %6462 = vmatpush1.msra.mxu0 0.0
    %6463 = vmatprep.subr.mxu0 0.0
    %6464 = vmatpush1.msra.mxu0 0.0
    %6465 = vmatprep.subr.mxu0 0.0
    %6466 = vmatpush1.msra.mxu0 0.0
    %6467 = vmatprep.subr.mxu0 0.0
    %6468 = vmatpush1.msra.mxu0 0.0
    %6469 = vmatprep.subr.mxu0 0.0
    %6470 = vmatpush1.msra.mxu0 0.0
    %6471 = vmatprep.subr.mxu0 0.0
    %6472 = vmatpush1.msra.mxu0 0.0
    %6473 = vmatprep.subr.mxu0 0.0
    %6474 = vmatpush1.msra.mxu0 0.0
    %6475 = vmatprep.subr.mxu0 0.0
    %6476 = vmatpush1.msra.mxu0 0.0
    %6477 = vmatprep.subr.mxu0 0.0
    %6478 = vmatpush1.msra.mxu0 0.0
    %6479 = vmatprep.subr.mxu0 0.0
    %6480 = vmatpush1.msra.mxu0 0.0
    %6481 = vmatprep.subr.mxu0 0.0
    %6482 = vmatpush1.msra.mxu0 0.0
    %6483 = vmatprep.subr.mxu0 0.0
    %6484 = vmatpush1.msra.mxu0 0.0
    %6485 = vmatprep.subr.mxu0 0.0
    %6486 = vmatpush1.msra.mxu0 0.0
    %6487 = vmatprep.subr.mxu0 0.0
    %6488 = vmatpush1.msra.mxu0 0.0
    %6489 = vmatprep.subr.mxu0 0.0
    %6490 = vmatpush1.msra.mxu0 0.0
    %6491 = vmatprep.subr.mxu0 0.0
    %6492 = vmatpush1.msra.mxu0 0.0
    %6493 = vmatprep.subr.mxu0 0.0
    %6494 = vmatpush1.msra.mxu0 0.0
    %6495 = vmatprep.subr.mxu0 0.0
    %6496 = vmatpush1.msra.mxu0 0.0
    %6497 = vmatprep.subr.mxu0 0.0
    %6498 = vmatpush1.msra.mxu0 0.0
    %6499 = vmatprep.subr.mxu0 0.0
    %6500 = vmatpush1.msra.mxu0 0.0
    %6501 = vmatprep.subr.mxu0 0.0
    %6502 = vmatpush1.msra.mxu0 0.0
    %6503 = vmatprep.subr.mxu0 0.0
    %6504 = vmatpush1.msra.mxu0 0.0
    %6505 = vmatprep.subr.mxu0 0.0
    %6506 = vmatpush1.msra.mxu0 0.0
    %6507 = vmatprep.subr.mxu0 0.0
    %6508 = vmatpush1.msra.mxu0 0.0
    %6509 = vmatprep.mubr.f32.mxu0 0.0
    %6510 = vmatmul.mubr.f32.gmra.mrb[0].mxu0 %v6434
    %v6511 = vpop.f32.mrb[0].mxu0
    %v6512 = vadd.f32 %v6431, %v6511
    %v6513 = vpop.f32.mrb[0].mxu0
    %6514 = vmatprep.mubr.f32.mxu0 0.0
    %6515 = vmatmul.mubr.f32.gmra.mrb[0].mxu0 %v6437
    %v6516 = vpop.f32.mrb[0].mxu0
    %v6517 = vadd.f32 %v6431, %v6516
    %v6518 = vpop.f32.mrb[0].mxu0
    %6519 = vmatprep.mubr.f32.mxu0 0.0
    %6520 = vmatmul.mubr.f32.gmra.mrb[0].mxu0 %v6440
    %v6521 = vpop.f32.mrb[0].mxu0
    %v6522 = vadd.f32 %v6431, %v6521
    %v6523 = vpop.f32.mrb[0].mxu0
    %6524 = vmatprep.mubr.f32.mxu0 0.0
    %6525 = vmatmul.mubr.f32.gmra.mrb[0].mxu0 %v6443
    %v6526 = vpop.f32.mrb[0].mxu0
    %v6527 = vadd.f32 %v6431, %v6526
    %v6528 = vpop.f32.mrb[0].mxu0
    %6529 = vdwg.mxu0
    %6534 = vrot.lane.b32.xlu0 %v6512, 96
    %v6535 = vpop.permute.xlu0 %6534
    %6536 = vrot.lane.b32.xlu0 %v6517, 96
    %v6537 = vpop.permute.xlu0 %6536
    %6538 = vrot.lane.b32.xlu0 %v6522, 96
    %v6539 = vpop.permute.xlu0 %6538
    %6540 = vrot.lane.b32.xlu0 %v6527, 96
    %v6541 = vpop.permute.xlu0 %6540
    %v6542 = vsel %vm3060, %v6512, 0
    %v6544 = vsel %vm3060, %v6517, 0
    %v6546 = vsel %vm3060, %v6522, 0
    %v6548 = vsel %vm3060, %v6527, 0
    %v6550 = vsel %vm3060, %v6535, 0
    %v6552 = vsel %vm3060, %v6537, 0
    %v6554 = vsel %vm3060, %v6539, 0
    %v6556 = vsel %vm3060, %v6541, 0
    %6558 = vmatprep.subr.mxu0 0.0
    %6559 = vmatpush1.xpose.msra.mxu0 %v6550
    %6560 = vmatprep.subr.mxu0 0.0
    %6561 = vmatpush1.xpose.msra.mxu0 %v6552
    %6562 = vmatprep.subr.mxu0 0.0
    %6563 = vmatpush1.xpose.msra.mxu0 %v6554
    %6564 = vmatprep.subr.mxu0 0.0
    %6565 = vmatpush1.xpose.msra.mxu0 %v6556
    %6566 = vmatprep.subr.mxu0 0.0
    %6567 = vmatpush1.xpose.msra.mxu0 0.0
    %6568 = vmatprep.subr.mxu0 0.0
    %6569 = vmatpush1.xpose.msra.mxu0 0.0
    %6570 = vmatprep.subr.mxu0 0.0
    %6571 = vmatpush1.xpose.msra.mxu0 0.0
    %6572 = vmatprep.subr.mxu0 0.0
    %6573 = vmatpush1.xpose.msra.mxu0 0.0
    %6574 = vmatprep.subr.mxu0 0.0
    %6575 = vmatpush1.xpose.msra.mxu0 0.0
    %6576 = vmatprep.subr.mxu0 0.0
    %6577 = vmatpush1.xpose.msra.mxu0 0.0
    %6578 = vmatprep.subr.mxu0 0.0
    %6579 = vmatpush1.xpose.msra.mxu0 0.0
    %6580 = vmatprep.subr.mxu0 0.0
    %6581 = vmatpush1.xpose.msra.mxu0 0.0
    %6582 = vmatprep.subr.mxu0 0.0
    %6583 = vmatpush1.xpose.msra.mxu0 0.0
    %6584 = vmatprep.subr.mxu0 0.0
    %6585 = vmatpush1.xpose.msra.mxu0 0.0
    %6586 = vmatprep.subr.mxu0 0.0
    %6587 = vmatpush1.xpose.msra.mxu0 0.0
    %6588 = vmatprep.subr.mxu0 0.0
    %6589 = vmatpush1.xpose.msra.mxu0 0.0
    %6590 = vmatprep.subr.mxu0 0.0
    %6591 = vmatpush1.xpose.msra.mxu0 0.0
    %6592 = vmatprep.subr.mxu0 0.0
    %6593 = vmatpush1.xpose.msra.mxu0 0.0
    %6594 = vmatprep.subr.mxu0 0.0
    %6595 = vmatpush1.xpose.msra.mxu0 0.0
    %6596 = vmatprep.subr.mxu0 0.0
    %6597 = vmatpush1.xpose.msra.mxu0 0.0
    %6598 = vmatprep.subr.mxu0 0.0
    %6599 = vmatpush1.xpose.msra.mxu0 0.0
    %6600 = vmatprep.subr.mxu0 0.0
    %6601 = vmatpush1.xpose.msra.mxu0 0.0
    %6602 = vmatprep.subr.mxu0 0.0
    %6603 = vmatpush1.xpose.msra.mxu0 0.0
    %6604 = vmatprep.subr.mxu0 0.0
    %6605 = vmatpush1.xpose.msra.mxu0 0.0
    %6606 = vmatprep.subr.mxu0 0.0
    %6607 = vmatpush1.xpose.msra.mxu0 0.0
    %6608 = vmatprep.subr.mxu0 0.0
    %6609 = vmatpush1.xpose.msra.mxu0 0.0
    %6610 = vmatprep.subr.mxu0 0.0
    %6611 = vmatpush1.xpose.msra.mxu0 0.0
    %6612 = vmatprep.subr.mxu0 0.0
    %6613 = vmatpush1.xpose.msra.mxu0 0.0
    %6614 = vmatprep.subr.mxu0 0.0
    %6615 = vmatpush1.xpose.msra.mxu0 0.0
    %6616 = vmatprep.subr.mxu0 0.0
    %6617 = vmatpush1.xpose.msra.mxu0 0.0
    %6618 = vmatprep.subr.mxu0 0.0
    %6619 = vmatpush1.xpose.msra.mxu0 0.0
    %6620 = vmatprep.subr.mxu0 0.0
    %6621 = vmatpush1.xpose.msra.mxu0 0.0
    %6622 = vmatprep.mubr.f32.mxu0 0.0
    %6623 = vmatmul.mubr.f32.gmra.mrb[0].mxu0 %v6542
    %v6624 = vpop.f32.mrb[0].mxu0
    %v6625 = vadd.f32 %v2936, %v6624
    %v6626 = vpop.f32.mrb[0].mxu0
    %6627 = vmatprep.mubr.f32.mxu0 0.0
    %6628 = vmatmul.mubr.f32.gmra.mrb[0].mxu0 %v6544
    %v6629 = vpop.f32.mrb[0].mxu0
    %v6630 = vadd.f32 %v2937, %v6629
    %v6631 = vpop.f32.mrb[0].mxu0
    %6632 = vmatprep.mubr.f32.mxu0 0.0
    %6633 = vmatmul.mubr.f32.gmra.mrb[0].mxu0 %v6546
    %v6634 = vpop.f32.mrb[0].mxu0
    %v6635 = vadd.f32 %v2938, %v6634
    %v6636 = vpop.f32.mrb[0].mxu0
    %6637 = vmatprep.mubr.f32.mxu0 0.0
    %6638 = vmatmul.mubr.f32.gmra.mrb[0].mxu0 %v6548
    %v6639 = vpop.f32.mrb[0].mxu0
    %v6640 = vadd.f32 %v2939, %v6639
    %v6641 = vpop.f32.mrb[0].mxu0
    %6642 = vdwg.mxu0
    %v6643 = vsel %vm466, %v6625, -inf
    %6644 = vmax.xlane.f32.xlu0 %v6643
    %v6645 = vpop.xlane.xlu0 %6644
    %v6646 = vsel %vm466, %v6630, -inf
    %6647 = vmax.xlane.f32.xlu0 %v6646
    %v6648 = vpop.xlane.xlu0 %6647
    %v6649 = vsel %vm466, %v6635, -inf
    %6650 = vmax.xlane.f32.xlu0 %v6649
    %v6651 = vpop.xlane.xlu0 %6650
    %v6652 = vsel %vm466, %v6640, -inf
    %6653 = vmax.xlane.f32.xlu0 %v6652
    %v6654 = vpop.xlane.xlu0 %6653
    %v6655 = vsub.f32 %v6625, %v6645
    %v6656 = vsub.f32 %v6630, %v6648
    %v6657 = vsub.f32 %v6635, %v6651
    %v6658 = vsub.f32 %v6640, %v6654
    %v6659 = vmul.f32 %v6655, 1.442695
    %v6660 = vpow.pop %v6659
    %v6661 = vmul.f32 %v6656, 1.442695
    %v6662 = vpow.pop %v6661
    %v6663 = vmul.f32 %v6657, 1.442695
    %v6664 = vpow.pop %v6663
    %v6665 = vmul.f32 %v6658, 1.442695
    %v6666 = vpow.pop %v6665
    %v6667 = vsel %vm466, %v6660, 0.0
    %6668 = vadd.xlane.f32.xlu0 %v6667
    %v6669 = vpop.xlane.xlu0 %6668
    %v6670 = vsel %vm466, %v6662, 0.0
    %6671 = vadd.xlane.f32.xlu0 %v6670
    %v6672 = vpop.xlane.xlu0 %6671
    %v6673 = vsel %vm466, %v6664, 0.0
    %6674 = vadd.xlane.f32.xlu0 %v6673
    %v6675 = vpop.xlane.xlu0 %6674
    %v6676 = vsel %vm466, %v6666, 0.0
    %6677 = vadd.xlane.f32.xlu0 %v6676
    %v6678 = vpop.xlane.xlu0 %6677
    %v6679 = vrcp.pop %v6669
    %v6680 = vrcp.pop %v6672
    %v6681 = vrcp.pop %v6675
    %v6682 = vrcp.pop %v6678
    %v6683 = vmul.f32 %v6660, %v6679
    %v6684 = vmul.f32 %v6662, %v6680
    %v6685 = vmul.f32 %v6664, %v6681
    %v6686 = vmul.f32 %v6666, %v6682
    %6687 = vrot.lane.b32.xlu0 %v6512, 64
    %v6688 = vpop.permute.xlu0 %6687
    %6689 = vrot.lane.b32.xlu0 %v6517, 64
    %v6690 = vpop.permute.xlu0 %6689
    %6691 = vrot.lane.b32.xlu0 %v6522, 64
    %v6692 = vpop.permute.xlu0 %6691
    %6693 = vrot.lane.b32.xlu0 %v6527, 64
    %v6694 = vpop.permute.xlu0 %6693
    %v6700 = vsel %vm466, %v6683, 0
    %v6703 = vsel %vm466, %v6684, 0
    %v6706 = vsel %vm466, %v6685, 0
    %v6709 = vsel %vm466, %v6686, 0
    %6711 = vmatprep.subr.mxu0 0.0
    %6712 = vmatpush1.msra.mxu0 %v6688
    %6713 = vmatprep.subr.mxu0 0.0
    %6714 = vmatpush1.msra.mxu0 %v6690
    %6715 = vmatprep.subr.mxu0 0.0
    %6716 = vmatpush1.msra.mxu0 %v6692
    %6717 = vmatprep.subr.mxu0 0.0
    %6718 = vmatpush1.msra.mxu0 %v6694
    %6719 = vmatprep.subr.mxu0 0.0
    %6720 = vmatpush1.msra.mxu0 0.0
    %6721 = vmatprep.subr.mxu0 0.0
    %6722 = vmatpush1.msra.mxu0 0.0
    %6723 = vmatprep.subr.mxu0 0.0
    %6724 = vmatpush1.msra.mxu0 0.0
    %6725 = vmatprep.subr.mxu0 0.0
    %6726 = vmatpush1.msra.mxu0 0.0
    %6727 = vmatprep.subr.mxu0 0.0
    %6728 = vmatpush1.msra.mxu0 0.0
    %6729 = vmatprep.subr.mxu0 0.0
    %6730 = vmatpush1.msra.mxu0 0.0
    %6731 = vmatprep.subr.mxu0 0.0
    %6732 = vmatpush1.msra.mxu0 0.0
    %6733 = vmatprep.subr.mxu0 0.0
    %6734 = vmatpush1.msra.mxu0 0.0
    %6735 = vmatprep.subr.mxu0 0.0
    %6736 = vmatpush1.msra.mxu0 0.0
    %6737 = vmatprep.subr.mxu0 0.0
    %6738 = vmatpush1.msra.mxu0 0.0
    %6739 = vmatprep.subr.mxu0 0.0
    %6740 = vmatpush1.msra.mxu0 0.0
    %6741 = vmatprep.subr.mxu0 0.0
    %6742 = vmatpush1.msra.mxu0 0.0
    %6743 = vmatprep.subr.mxu0 0.0
    %6744 = vmatpush1.msra.mxu0 0.0
    %6745 = vmatprep.subr.mxu0 0.0
    %6746 = vmatpush1.msra.mxu0 0.0
    %6747 = vmatprep.subr.mxu0 0.0
    %6748 = vmatpush1.msra.mxu0 0.0
    %6749 = vmatprep.subr.mxu0 0.0
    %6750 = vmatpush1.msra.mxu0 0.0
    %6751 = vmatprep.subr.mxu0 0.0
    %6752 = vmatpush1.msra.mxu0 0.0
    %6753 = vmatprep.subr.mxu0 0.0
    %6754 = vmatpush1.msra.mxu0 0.0
    %6755 = vmatprep.subr.mxu0 0.0
    %6756 = vmatpush1.msra.mxu0 0.0
    %6757 = vmatprep.subr.mxu0 0.0
    %6758 = vmatpush1.msra.mxu0 0.0
    %6759 = vmatprep.subr.mxu0 0.0
    %6760 = vmatpush1.msra.mxu0 0.0
    %6761 = vmatprep.subr.mxu0 0.0
    %6762 = vmatpush1.msra.mxu0 0.0
    %6763 = vmatprep.subr.mxu0 0.0
    %6764 = vmatpush1.msra.mxu0 0.0
    %6765 = vmatprep.subr.mxu0 0.0
    %6766 = vmatpush1.msra.mxu0 0.0
    %6767 = vmatprep.subr.mxu0 0.0
    %6768 = vmatpush1.msra.mxu0 0.0
    %6769 = vmatprep.subr.mxu0 0.0
    %6770 = vmatpush1.msra.mxu0 0.0
    %6771 = vmatprep.subr.mxu0 0.0
    %6772 = vmatpush1.msra.mxu0 0.0
    %6773 = vmatprep.subr.mxu0 0.0
    %6774 = vmatpush1.msra.mxu0 0.0
    %6775 = vmatprep.mubr.f32.mxu0 0.0
    %6776 = vmatmul.mubr.f32.gmra.mrb[0].mxu0 %v6700
    %v6777 = vpop.f32.mrb[0].mxu0
    %v6778 = vadd.f32 0.0, %v6777
    %v6779 = vpop.f32.mrb[0].mxu0
    %6780 = vmatprep.mubr.f32.mxu0 0.0
    %6781 = vmatmul.mubr.f32.gmra.mrb[0].mxu0 %v6703
    %v6782 = vpop.f32.mrb[0].mxu0
    %v6783 = vadd.f32 0.0, %v6782
    %v6784 = vpop.f32.mrb[0].mxu0
    %6785 = vmatprep.mubr.f32.mxu0 0.0
    %6786 = vmatmul.mubr.f32.gmra.mrb[0].mxu0 %v6706
    %v6787 = vpop.f32.mrb[0].mxu0
    %v6788 = vadd.f32 0.0, %v6787
    %v6789 = vpop.f32.mrb[0].mxu0
    %6790 = vmatprep.mubr.f32.mxu0 0.0
    %6791 = vmatmul.mubr.f32.gmra.mrb[0].mxu0 %v6709
    %v6792 = vpop.f32.mrb[0].mxu0
    %v6793 = vadd.f32 0.0, %v6792
    %v6794 = vpop.f32.mrb[0].mxu0
    %6795 = vdwg.mxu0
    %6796 = vrot.lane.b32.xlu0 %v6512, 120
    %v6797 = vpop.permute.xlu0 %6796
    %6798 = vrot.lane.b32.xlu0 %v6517, 120
    %v6799 = vpop.permute.xlu0 %6798
    %6800 = vrot.lane.b32.xlu0 %v6522, 120
    %v6801 = vpop.permute.xlu0 %6800
    %6802 = vrot.lane.b32.xlu0 %v6527, 120
    %v6803 = vpop.permute.xlu0 %6802
    %6804 = vrot.lane.b32.xlu0 %v6512, 88
    %v6805 = vpop.permute.xlu0 %6804
    %6806 = vrot.lane.b32.xlu0 %v6517, 88
    %v6807 = vpop.permute.xlu0 %6806
    %6808 = vrot.lane.b32.xlu0 %v6522, 88
    %v6809 = vpop.permute.xlu0 %6808
    %6810 = vrot.lane.b32.xlu0 %v6527, 88
    %v6811 = vpop.permute.xlu0 %6810
    %v6812 = vsel %vm3060, %v6797, 0
    %v6814 = vsel %vm3060, %v6799, 0
    %v6816 = vsel %vm3060, %v6801, 0
    %v6818 = vsel %vm3060, %v6803, 0
    %v6820 = vsel %vm3060, %v6805, 0
    %v6822 = vsel %vm3060, %v6807, 0
    %v6824 = vsel %vm3060, %v6809, 0
    %v6826 = vsel %vm3060, %v6811, 0
    %6828 = vmatprep.subr.mxu0 0.0
    %6829 = vmatpush1.xpose.msra.mxu0 %v6820
    %6830 = vmatprep.subr.mxu0 0.0
    %6831 = vmatpush1.xpose.msra.mxu0 %v6822
    %6832 = vmatprep.subr.mxu0 0.0
    %6833 = vmatpush1.xpose.msra.mxu0 %v6824
    %6834 = vmatprep.subr.mxu0 0.0
    %6835 = vmatpush1.xpose.msra.mxu0 %v6826
    %6836 = vmatprep.subr.mxu0 0.0
    %6837 = vmatpush1.xpose.msra.mxu0 0.0
    %6838 = vmatprep.subr.mxu0 0.0
    %6839 = vmatpush1.xpose.msra.mxu0 0.0
    %6840 = vmatprep.subr.mxu0 0.0
    %6841 = vmatpush1.xpose.msra.mxu0 0.0
    %6842 = vmatprep.subr.mxu0 0.0
    %6843 = vmatpush1.xpose.msra.mxu0 0.0
    %6844 = vmatprep.subr.mxu0 0.0
    %6845 = vmatpush1.xpose.msra.mxu0 0.0
    %6846 = vmatprep.subr.mxu0 0.0
    %6847 = vmatpush1.xpose.msra.mxu0 0.0
    %6848 = vmatprep.subr.mxu0 0.0
    %6849 = vmatpush1.xpose.msra.mxu0 0.0
    %6850 = vmatprep.subr.mxu0 0.0
    %6851 = vmatpush1.xpose.msra.mxu0 0.0
    %6852 = vmatprep.subr.mxu0 0.0
    %6853 = vmatpush1.xpose.msra.mxu0 0.0
    %6854 = vmatprep.subr.mxu0 0.0
    %6855 = vmatpush1.xpose.msra.mxu0 0.0
    %6856 = vmatprep.subr.mxu0 0.0
    %6857 = vmatpush1.xpose.msra.mxu0 0.0
    %6858 = vmatprep.subr.mxu0 0.0
    %6859 = vmatpush1.xpose.msra.mxu0 0.0
    %6860 = vmatprep.subr.mxu0 0.0
    %6861 = vmatpush1.xpose.msra.mxu0 0.0
    %6862 = vmatprep.subr.mxu0 0.0
    %6863 = vmatpush1.xpose.msra.mxu0 0.0
    %6864 = vmatprep.subr.mxu0 0.0
    %6865 = vmatpush1.xpose.msra.mxu0 0.0
    %6866 = vmatprep.subr.mxu0 0.0
    %6867 = vmatpush1.xpose.msra.mxu0 0.0
    %6868 = vmatprep.subr.mxu0 0.0
    %6869 = vmatpush1.xpose.msra.mxu0 0.0
    %6870 = vmatprep.subr.mxu0 0.0
    %6871 = vmatpush1.xpose.msra.mxu0 0.0
    %6872 = vmatprep.subr.mxu0 0.0
    %6873 = vmatpush1.xpose.msra.mxu0 0.0
    %6874 = vmatprep.subr.mxu0 0.0
    %6875 = vmatpush1.xpose.msra.mxu0 0.0
    %6876 = vmatprep.subr.mxu0 0.0
    %6877 = vmatpush1.xpose.msra.mxu0 0.0
    %6878 = vmatprep.subr.mxu0 0.0
    %6879 = vmatpush1.xpose.msra.mxu0 0.0
    %6880 = vmatprep.subr.mxu0 0.0
    %6881 = vmatpush1.xpose.msra.mxu0 0.0
    %6882 = vmatprep.subr.mxu0 0.0
    %6883 = vmatpush1.xpose.msra.mxu0 0.0
    %6884 = vmatprep.subr.mxu0 0.0
    %6885 = vmatpush1.xpose.msra.mxu0 0.0
    %6886 = vmatprep.subr.mxu0 0.0
    %6887 = vmatpush1.xpose.msra.mxu0 0.0
    %6888 = vmatprep.subr.mxu0 0.0
    %6889 = vmatpush1.xpose.msra.mxu0 0.0
    %6890 = vmatprep.subr.mxu0 0.0
    %6891 = vmatpush1.xpose.msra.mxu0 0.0
    %6892 = vmatprep.mubr.f32.mxu0 0.0
    %6893 = vmatmul.mubr.f32.gmra.mrb[0].mxu0 %v6812
    %v6894 = vpop.f32.mrb[0].mxu0
    %v6895 = vadd.f32 %v2936, %v6894
    %v6896 = vpop.f32.mrb[0].mxu0
    %6897 = vmatprep.mubr.f32.mxu0 0.0
    %6898 = vmatmul.mubr.f32.gmra.mrb[0].mxu0 %v6814
    %v6899 = vpop.f32.mrb[0].mxu0
    %v6900 = vadd.f32 %v2937, %v6899
    %v6901 = vpop.f32.mrb[0].mxu0
    %6902 = vmatprep.mubr.f32.mxu0 0.0
    %6903 = vmatmul.mubr.f32.gmra.mrb[0].mxu0 %v6816
    %v6904 = vpop.f32.mrb[0].mxu0
    %v6905 = vadd.f32 %v2938, %v6904
    %v6906 = vpop.f32.mrb[0].mxu0
    %6907 = vmatprep.mubr.f32.mxu0 0.0
    %6908 = vmatmul.mubr.f32.gmra.mrb[0].mxu0 %v6818
    %v6909 = vpop.f32.mrb[0].mxu0
    %v6910 = vadd.f32 %v2939, %v6909
    %v6911 = vpop.f32.mrb[0].mxu0
    %6912 = vdwg.mxu0
    %v6913 = vsel %vm466, %v6895, -inf
    %6914 = vmax.xlane.f32.xlu0 %v6913
    %v6915 = vpop.xlane.xlu0 %6914
    %v6916 = vsel %vm466, %v6900, -inf
    %6917 = vmax.xlane.f32.xlu0 %v6916
    %v6918 = vpop.xlane.xlu0 %6917
    %v6919 = vsel %vm466, %v6905, -inf
    %6920 = vmax.xlane.f32.xlu0 %v6919
    %v6921 = vpop.xlane.xlu0 %6920
    %v6922 = vsel %vm466, %v6910, -inf
    %6923 = vmax.xlane.f32.xlu0 %v6922
    %v6924 = vpop.xlane.xlu0 %6923
    %v6925 = vsub.f32 %v6895, %v6915
    %v6926 = vsub.f32 %v6900, %v6918
    %v6927 = vsub.f32 %v6905, %v6921
    %v6928 = vsub.f32 %v6910, %v6924
    %v6929 = vmul.f32 %v6925, 1.442695
    %v6930 = vpow.pop %v6929
    %v6931 = vmul.f32 %v6926, 1.442695
    %v6932 = vpow.pop %v6931
    %v6933 = vmul.f32 %v6927, 1.442695
    %v6934 = vpow.pop %v6933
    %v6935 = vmul.f32 %v6928, 1.442695
    %v6936 = vpow.pop %v6935
    %v6937 = vsel %vm466, %v6930, 0.0
    %6938 = vadd.xlane.f32.xlu0 %v6937
    %v6939 = vpop.xlane.xlu0 %6938
    %v6940 = vsel %vm466, %v6932, 0.0
    %6941 = vadd.xlane.f32.xlu0 %v6940
    %v6942 = vpop.xlane.xlu0 %6941
    %v6943 = vsel %vm466, %v6934, 0.0
    %6944 = vadd.xlane.f32.xlu0 %v6943
    %v6945 = vpop.xlane.xlu0 %6944
    %v6946 = vsel %vm466, %v6936, 0.0
    %6947 = vadd.xlane.f32.xlu0 %v6946
    %v6948 = vpop.xlane.xlu0 %6947
    %v6949 = vrcp.pop %v6939
    %v6950 = vrcp.pop %v6942
    %v6951 = vrcp.pop %v6945
    %v6952 = vrcp.pop %v6948
    %v6953 = vmul.f32 %v6930, %v6949
    %v6954 = vmul.f32 %v6932, %v6950
    %v6955 = vmul.f32 %v6934, %v6951
    %v6956 = vmul.f32 %v6936, %v6952
    %6957 = vrot.lane.b32.xlu0 %v6512, 56
    %v6958 = vpop.permute.xlu0 %6957
    %6959 = vrot.lane.b32.xlu0 %v6517, 56
    %v6960 = vpop.permute.xlu0 %6959
    %6961 = vrot.lane.b32.xlu0 %v6522, 56
    %v6962 = vpop.permute.xlu0 %6961
    %6963 = vrot.lane.b32.xlu0 %v6527, 56
    %v6964 = vpop.permute.xlu0 %6963
    %v6970 = vsel %vm466, %v6953, 0
    %v6973 = vsel %vm466, %v6954, 0
    %v6976 = vsel %vm466, %v6955, 0
    %v6979 = vsel %vm466, %v6956, 0
    %6981 = vmatprep.subr.mxu0 0.0
    %6982 = vmatpush1.msra.mxu0 %v6958
    %6983 = vmatprep.subr.mxu0 0.0
    %6984 = vmatpush1.msra.mxu0 %v6960
    %6985 = vmatprep.subr.mxu0 0.0
    %6986 = vmatpush1.msra.mxu0 %v6962
    %6987 = vmatprep.subr.mxu0 0.0
    %6988 = vmatpush1.msra.mxu0 %v6964
    %6989 = vmatprep.subr.mxu0 0.0
    %6990 = vmatpush1.msra.mxu0 0.0
    %6991 = vmatprep.subr.mxu0 0.0
    %6992 = vmatpush1.msra.mxu0 0.0
    %6993 = vmatprep.subr.mxu0 0.0
    %6994 = vmatpush1.msra.mxu0 0.0
    %6995 = vmatprep.subr.mxu0 0.0
    %6996 = vmatpush1.msra.mxu0 0.0
    %6997 = vmatprep.subr.mxu0 0.0
    %6998 = vmatpush1.msra.mxu0 0.0
    %6999 = vmatprep.subr.mxu0 0.0
    %7000 = vmatpush1.msra.mxu0 0.0
    %7001 = vmatprep.subr.mxu0 0.0
    %7002 = vmatpush1.msra.mxu0 0.0
    %7003 = vmatprep.subr.mxu0 0.0
    %7004 = vmatpush1.msra.mxu0 0.0
    %7005 = vmatprep.subr.mxu0 0.0
    %7006 = vmatpush1.msra.mxu0 0.0
    %7007 = vmatprep.subr.mxu0 0.0
    %7008 = vmatpush1.msra.mxu0 0.0
    %7009 = vmatprep.subr.mxu0 0.0
    %7010 = vmatpush1.msra.mxu0 0.0
    %7011 = vmatprep.subr.mxu0 0.0
    %7012 = vmatpush1.msra.mxu0 0.0
    %7013 = vmatprep.subr.mxu0 0.0
    %7014 = vmatpush1.msra.mxu0 0.0
    %7015 = vmatprep.subr.mxu0 0.0
    %7016 = vmatpush1.msra.mxu0 0.0
    %7017 = vmatprep.subr.mxu0 0.0
    %7018 = vmatpush1.msra.mxu0 0.0
    %7019 = vmatprep.subr.mxu0 0.0
    %7020 = vmatpush1.msra.mxu0 0.0
    %7021 = vmatprep.subr.mxu0 0.0
    %7022 = vmatpush1.msra.mxu0 0.0
    %7023 = vmatprep.subr.mxu0 0.0
    %7024 = vmatpush1.msra.mxu0 0.0
    %7025 = vmatprep.subr.mxu0 0.0
    %7026 = vmatpush1.msra.mxu0 0.0
    %7027 = vmatprep.subr.mxu0 0.0
    %7028 = vmatpush1.msra.mxu0 0.0
    %7029 = vmatprep.subr.mxu0 0.0
    %7030 = vmatpush1.msra.mxu0 0.0
    %7031 = vmatprep.subr.mxu0 0.0
    %7032 = vmatpush1.msra.mxu0 0.0
    %7033 = vmatprep.subr.mxu0 0.0
    %7034 = vmatpush1.msra.mxu0 0.0
    %7035 = vmatprep.subr.mxu0 0.0
    %7036 = vmatpush1.msra.mxu0 0.0
    %7037 = vmatprep.subr.mxu0 0.0
    %7038 = vmatpush1.msra.mxu0 0.0
    %7039 = vmatprep.subr.mxu0 0.0
    %7040 = vmatpush1.msra.mxu0 0.0
    %7041 = vmatprep.subr.mxu0 0.0
    %7042 = vmatpush1.msra.mxu0 0.0
    %7043 = vmatprep.subr.mxu0 0.0
    %7044 = vmatpush1.msra.mxu0 0.0
    %7045 = vmatprep.mubr.f32.mxu0 0.0
    %7046 = vmatmul.mubr.f32.gmra.mrb[0].mxu0 %v6970
    %v7047 = vpop.f32.mrb[0].mxu0
    %v7048 = vadd.f32 0.0, %v7047
    %v7049 = vpop.f32.mrb[0].mxu0
    %7050 = vmatprep.mubr.f32.mxu0 0.0
    %7051 = vmatmul.mubr.f32.gmra.mrb[0].mxu0 %v6973
    %v7052 = vpop.f32.mrb[0].mxu0
    %v7053 = vadd.f32 0.0, %v7052
    %v7054 = vpop.f32.mrb[0].mxu0
    %7055 = vmatprep.mubr.f32.mxu0 0.0
    %7056 = vmatmul.mubr.f32.gmra.mrb[0].mxu0 %v6976
    %v7057 = vpop.f32.mrb[0].mxu0
    %v7058 = vadd.f32 0.0, %v7057
    %v7059 = vpop.f32.mrb[0].mxu0
    %7060 = vmatprep.mubr.f32.mxu0 0.0
    %7061 = vmatmul.mubr.f32.gmra.mrb[0].mxu0 %v6979
    %v7062 = vpop.f32.mrb[0].mxu0
    %v7063 = vadd.f32 0.0, %v7062
    %v7064 = vpop.f32.mrb[0].mxu0
    %7065 = vdwg.mxu0
    %7066 = vrot.lane.b32.xlu0 %v6512, 112
    %v7067 = vpop.permute.xlu0 %7066
    %7068 = vrot.lane.b32.xlu0 %v6517, 112
    %v7069 = vpop.permute.xlu0 %7068
    %7070 = vrot.lane.b32.xlu0 %v6522, 112
    %v7071 = vpop.permute.xlu0 %7070
    %7072 = vrot.lane.b32.xlu0 %v6527, 112
    %v7073 = vpop.permute.xlu0 %7072
    %7074 = vrot.lane.b32.xlu0 %v6512, 80
    %v7075 = vpop.permute.xlu0 %7074
    %7076 = vrot.lane.b32.xlu0 %v6517, 80
    %v7077 = vpop.permute.xlu0 %7076
    %7078 = vrot.lane.b32.xlu0 %v6522, 80
    %v7079 = vpop.permute.xlu0 %7078
    %7080 = vrot.lane.b32.xlu0 %v6527, 80
    %v7081 = vpop.permute.xlu0 %7080
    %v7082 = vsel %vm3060, %v7067, 0
    %v7084 = vsel %vm3060, %v7069, 0
    %v7086 = vsel %vm3060, %v7071, 0
    %v7088 = vsel %vm3060, %v7073, 0
    %v7090 = vsel %vm3060, %v7075, 0
    %v7092 = vsel %vm3060, %v7077, 0
    %v7094 = vsel %vm3060, %v7079, 0
    %v7096 = vsel %vm3060, %v7081, 0
    %7098 = vmatprep.subr.mxu0 0.0
    %7099 = vmatpush1.xpose.msra.mxu0 %v7090
    %7100 = vmatprep.subr.mxu0 0.0
    %7101 = vmatpush1.xpose.msra.mxu0 %v7092
    %7102 = vmatprep.subr.mxu0 0.0
    %7103 = vmatpush1.xpose.msra.mxu0 %v7094
    %7104 = vmatprep.subr.mxu0 0.0
    %7105 = vmatpush1.xpose.msra.mxu0 %v7096
    %7106 = vmatprep.subr.mxu0 0.0
    %7107 = vmatpush1.xpose.msra.mxu0 0.0
    %7108 = vmatprep.subr.mxu0 0.0
    %7109 = vmatpush1.xpose.msra.mxu0 0.0
    %7110 = vmatprep.subr.mxu0 0.0
    %7111 = vmatpush1.xpose.msra.mxu0 0.0
    %7112 = vmatprep.subr.mxu0 0.0
    %7113 = vmatpush1.xpose.msra.mxu0 0.0
    %7114 = vmatprep.subr.mxu0 0.0
    %7115 = vmatpush1.xpose.msra.mxu0 0.0
    %7116 = vmatprep.subr.mxu0 0.0
    %7117 = vmatpush1.xpose.msra.mxu0 0.0
    %7118 = vmatprep.subr.mxu0 0.0
    %7119 = vmatpush1.xpose.msra.mxu0 0.0
    %7120 = vmatprep.subr.mxu0 0.0
    %7121 = vmatpush1.xpose.msra.mxu0 0.0
    %7122 = vmatprep.subr.mxu0 0.0
    %7123 = vmatpush1.xpose.msra.mxu0 0.0
    %7124 = vmatprep.subr.mxu0 0.0
    %7125 = vmatpush1.xpose.msra.mxu0 0.0
    %7126 = vmatprep.subr.mxu0 0.0
    %7127 = vmatpush1.xpose.msra.mxu0 0.0
    %7128 = vmatprep.subr.mxu0 0.0
    %7129 = vmatpush1.xpose.msra.mxu0 0.0
    %7130 = vmatprep.subr.mxu0 0.0
    %7131 = vmatpush1.xpose.msra.mxu0 0.0
    %7132 = vmatprep.subr.mxu0 0.0
    %7133 = vmatpush1.xpose.msra.mxu0 0.0
    %7134 = vmatprep.subr.mxu0 0.0
    %7135 = vmatpush1.xpose.msra.mxu0 0.0
    %7136 = vmatprep.subr.mxu0 0.0
    %7137 = vmatpush1.xpose.msra.mxu0 0.0
    %7138 = vmatprep.subr.mxu0 0.0
    %7139 = vmatpush1.xpose.msra.mxu0 0.0
    %7140 = vmatprep.subr.mxu0 0.0
    %7141 = vmatpush1.xpose.msra.mxu0 0.0
    %7142 = vmatprep.subr.mxu0 0.0
    %7143 = vmatpush1.xpose.msra.mxu0 0.0
    %7144 = vmatprep.subr.mxu0 0.0
    %7145 = vmatpush1.xpose.msra.mxu0 0.0
    %7146 = vmatprep.subr.mxu0 0.0
    %7147 = vmatpush1.xpose.msra.mxu0 0.0
    %7148 = vmatprep.subr.mxu0 0.0
    %7149 = vmatpush1.xpose.msra.mxu0 0.0
    %7150 = vmatprep.subr.mxu0 0.0
    %7151 = vmatpush1.xpose.msra.mxu0 0.0
    %7152 = vmatprep.subr.mxu0 0.0
    %7153 = vmatpush1.xpose.msra.mxu0 0.0
    %7154 = vmatprep.subr.mxu0 0.0
    %7155 = vmatpush1.xpose.msra.mxu0 0.0
    %7156 = vmatprep.subr.mxu0 0.0
    %7157 = vmatpush1.xpose.msra.mxu0 0.0
    %7158 = vmatprep.subr.mxu0 0.0
    %7159 = vmatpush1.xpose.msra.mxu0 0.0
    %7160 = vmatprep.subr.mxu0 0.0
    %7161 = vmatpush1.xpose.msra.mxu0 0.0
    %7162 = vmatprep.mubr.f32.mxu0 0.0
    %7163 = vmatmul.mubr.f32.gmra.mrb[0].mxu0 %v7082
    %v7164 = vpop.f32.mrb[0].mxu0
    %v7165 = vadd.f32 %v2936, %v7164
    %v7166 = vpop.f32.mrb[0].mxu0
    %7167 = vmatprep.mubr.f32.mxu0 0.0
    %7168 = vmatmul.mubr.f32.gmra.mrb[0].mxu0 %v7084
    %v7169 = vpop.f32.mrb[0].mxu0
    %v7170 = vadd.f32 %v2937, %v7169
    %v7171 = vpop.f32.mrb[0].mxu0
    %7172 = vmatprep.mubr.f32.mxu0 0.0
    %7173 = vmatmul.mubr.f32.gmra.mrb[0].mxu0 %v7086
    %v7174 = vpop.f32.mrb[0].mxu0
    %v7175 = vadd.f32 %v2938, %v7174
    %v7176 = vpop.f32.mrb[0].mxu0
    %7177 = vmatprep.mubr.f32.mxu0 0.0
    %7178 = vmatmul.mubr.f32.gmra.mrb[0].mxu0 %v7088
    %v7179 = vpop.f32.mrb[0].mxu0
    %v7180 = vadd.f32 %v2939, %v7179
    %v7181 = vpop.f32.mrb[0].mxu0
    %7182 = vdwg.mxu0
    %v7183 = vsel %vm466, %v7165, -inf
    %7184 = vmax.xlane.f32.xlu0 %v7183
    %v7185 = vpop.xlane.xlu0 %7184
    %v7186 = vsel %vm466, %v7170, -inf
    %7187 = vmax.xlane.f32.xlu0 %v7186
    %v7188 = vpop.xlane.xlu0 %7187
    %v7189 = vsel %vm466, %v7175, -inf
    %7190 = vmax.xlane.f32.xlu0 %v7189
    %v7191 = vpop.xlane.xlu0 %7190
    %v7192 = vsel %vm466, %v7180, -inf
    %7193 = vmax.xlane.f32.xlu0 %v7192
    %v7194 = vpop.xlane.xlu0 %7193
    %v7195 = vsub.f32 %v7165, %v7185
    %v7196 = vsub.f32 %v7170, %v7188
    %v7197 = vsub.f32 %v7175, %v7191
    %v7198 = vsub.f32 %v7180, %v7194
    %v7199 = vmul.f32 %v7195, 1.442695
    %v7200 = vpow.pop %v7199
    %v7201 = vmul.f32 %v7196, 1.442695
    %v7202 = vpow.pop %v7201
    %v7203 = vmul.f32 %v7197, 1.442695
    %v7204 = vpow.pop %v7203
    %v7205 = vmul.f32 %v7198, 1.442695
    %v7206 = vpow.pop %v7205
    %v7207 = vsel %vm466, %v7200, 0.0
    %7208 = vadd.xlane.f32.xlu0 %v7207
    %v7209 = vpop.xlane.xlu0 %7208
    %v7210 = vsel %vm466, %v7202, 0.0
    %7211 = vadd.xlane.f32.xlu0 %v7210
    %v7212 = vpop.xlane.xlu0 %7211
    %v7213 = vsel %vm466, %v7204, 0.0
    %7214 = vadd.xlane.f32.xlu0 %v7213
    %v7215 = vpop.xlane.xlu0 %7214
    %v7216 = vsel %vm466, %v7206, 0.0
    %7217 = vadd.xlane.f32.xlu0 %v7216
    %v7218 = vpop.xlane.xlu0 %7217
    %v7219 = vrcp.pop %v7209
    %v7220 = vrcp.pop %v7212
    %v7221 = vrcp.pop %v7215
    %v7222 = vrcp.pop %v7218
    %v7223 = vmul.f32 %v7200, %v7219
    %v7224 = vmul.f32 %v7202, %v7220
    %v7225 = vmul.f32 %v7204, %v7221
    %v7226 = vmul.f32 %v7206, %v7222
    %7227 = vrot.lane.b32.xlu0 %v6512, 48
    %v7228 = vpop.permute.xlu0 %7227
    %7229 = vrot.lane.b32.xlu0 %v6517, 48
    %v7230 = vpop.permute.xlu0 %7229
    %7231 = vrot.lane.b32.xlu0 %v6522, 48
    %v7232 = vpop.permute.xlu0 %7231
    %7233 = vrot.lane.b32.xlu0 %v6527, 48
    %v7234 = vpop.permute.xlu0 %7233
    %v7240 = vsel %vm466, %v7223, 0
    %v7243 = vsel %vm466, %v7224, 0
    %v7246 = vsel %vm466, %v7225, 0
    %v7249 = vsel %vm466, %v7226, 0
    %7251 = vmatprep.subr.mxu0 0.0
    %7252 = vmatpush1.msra.mxu0 %v7228
    %7253 = vmatprep.subr.mxu0 0.0
    %7254 = vmatpush1.msra.mxu0 %v7230
    %7255 = vmatprep.subr.mxu0 0.0
    %7256 = vmatpush1.msra.mxu0 %v7232
    %7257 = vmatprep.subr.mxu0 0.0
    %7258 = vmatpush1.msra.mxu0 %v7234
    %7259 = vmatprep.subr.mxu0 0.0
    %7260 = vmatpush1.msra.mxu0 0.0
    %7261 = vmatprep.subr.mxu0 0.0
    %7262 = vmatpush1.msra.mxu0 0.0
    %7263 = vmatprep.subr.mxu0 0.0
    %7264 = vmatpush1.msra.mxu0 0.0
    %7265 = vmatprep.subr.mxu0 0.0
    %7266 = vmatpush1.msra.mxu0 0.0
    %7267 = vmatprep.subr.mxu0 0.0
    %7268 = vmatpush1.msra.mxu0 0.0
    %7269 = vmatprep.subr.mxu0 0.0
    %7270 = vmatpush1.msra.mxu0 0.0
    %7271 = vmatprep.subr.mxu0 0.0
    %7272 = vmatpush1.msra.mxu0 0.0
    %7273 = vmatprep.subr.mxu0 0.0
    %7274 = vmatpush1.msra.mxu0 0.0
    %7275 = vmatprep.subr.mxu0 0.0
    %7276 = vmatpush1.msra.mxu0 0.0
    %7277 = vmatprep.subr.mxu0 0.0
    %7278 = vmatpush1.msra.mxu0 0.0
    %7279 = vmatprep.subr.mxu0 0.0
    %7280 = vmatpush1.msra.mxu0 0.0
    %7281 = vmatprep.subr.mxu0 0.0
    %7282 = vmatpush1.msra.mxu0 0.0
    %7283 = vmatprep.subr.mxu0 0.0
    %7284 = vmatpush1.msra.mxu0 0.0
    %7285 = vmatprep.subr.mxu0 0.0
    %7286 = vmatpush1.msra.mxu0 0.0
    %7287 = vmatprep.subr.mxu0 0.0
    %7288 = vmatpush1.msra.mxu0 0.0
    %7289 = vmatprep.subr.mxu0 0.0
    %7290 = vmatpush1.msra.mxu0 0.0
    %7291 = vmatprep.subr.mxu0 0.0
    %7292 = vmatpush1.msra.mxu0 0.0
    %7293 = vmatprep.subr.mxu0 0.0
    %7294 = vmatpush1.msra.mxu0 0.0
    %7295 = vmatprep.subr.mxu0 0.0
    %7296 = vmatpush1.msra.mxu0 0.0
    %7297 = vmatprep.subr.mxu0 0.0
    %7298 = vmatpush1.msra.mxu0 0.0
    %7299 = vmatprep.subr.mxu0 0.0
    %7300 = vmatpush1.msra.mxu0 0.0
    %7301 = vmatprep.subr.mxu0 0.0
    %7302 = vmatpush1.msra.mxu0 0.0
    %7303 = vmatprep.subr.mxu0 0.0
    %7304 = vmatpush1.msra.mxu0 0.0
    %7305 = vmatprep.subr.mxu0 0.0
    %7306 = vmatpush1.msra.mxu0 0.0
    %7307 = vmatprep.subr.mxu0 0.0
    %7308 = vmatpush1.msra.mxu0 0.0
    %7309 = vmatprep.subr.mxu0 0.0
    %7310 = vmatpush1.msra.mxu0 0.0
    %7311 = vmatprep.subr.mxu0 0.0
    %7312 = vmatpush1.msra.mxu0 0.0
    %7313 = vmatprep.subr.mxu0 0.0
    %7314 = vmatpush1.msra.mxu0 0.0
    %7315 = vmatprep.mubr.f32.mxu0 0.0
    %7316 = vmatmul.mubr.f32.gmra.mrb[0].mxu0 %v7240
    %v7317 = vpop.f32.mrb[0].mxu0
    %v7318 = vadd.f32 0.0, %v7317
    %v7319 = vpop.f32.mrb[0].mxu0
    %7320 = vmatprep.mubr.f32.mxu0 0.0
    %7321 = vmatmul.mubr.f32.gmra.mrb[0].mxu0 %v7243
    %v7322 = vpop.f32.mrb[0].mxu0
    %v7323 = vadd.f32 0.0, %v7322
    %v7324 = vpop.f32.mrb[0].mxu0
    %7325 = vmatprep.mubr.f32.mxu0 0.0
    %7326 = vmatmul.mubr.f32.gmra.mrb[0].mxu0 %v7246
    %v7327 = vpop.f32.mrb[0].mxu0
    %v7328 = vadd.f32 0.0, %v7327
    %v7329 = vpop.f32.mrb[0].mxu0
    %7330 = vmatprep.mubr.f32.mxu0 0.0
    %7331 = vmatmul.mubr.f32.gmra.mrb[0].mxu0 %v7249
    %v7332 = vpop.f32.mrb[0].mxu0
    %v7333 = vadd.f32 0.0, %v7332
    %v7334 = vpop.f32.mrb[0].mxu0
    %7335 = vdwg.mxu0
    %7336 = vrot.lane.b32.xlu0 %v6512, 104
    %v7337 = vpop.permute.xlu0 %7336
    %7338 = vrot.lane.b32.xlu0 %v6517, 104
    %v7339 = vpop.permute.xlu0 %7338
    %7340 = vrot.lane.b32.xlu0 %v6522, 104
    %v7341 = vpop.permute.xlu0 %7340
    %7342 = vrot.lane.b32.xlu0 %v6527, 104
    %v7343 = vpop.permute.xlu0 %7342
    %7344 = vrot.lane.b32.xlu0 %v6512, 72
    %v7345 = vpop.permute.xlu0 %7344
    %7346 = vrot.lane.b32.xlu0 %v6517, 72
    %v7347 = vpop.permute.xlu0 %7346
    %7348 = vrot.lane.b32.xlu0 %v6522, 72
    %v7349 = vpop.permute.xlu0 %7348
    %7350 = vrot.lane.b32.xlu0 %v6527, 72
    %v7351 = vpop.permute.xlu0 %7350
    %v7352 = vsel %vm3060, %v7337, 0
    %v7354 = vsel %vm3060, %v7339, 0
    %v7356 = vsel %vm3060, %v7341, 0
    %v7358 = vsel %vm3060, %v7343, 0
    %v7360 = vsel %vm3060, %v7345, 0
    %v7362 = vsel %vm3060, %v7347, 0
    %v7364 = vsel %vm3060, %v7349, 0
    %v7366 = vsel %vm3060, %v7351, 0
    %7368 = vmatprep.subr.mxu0 0.0
    %7369 = vmatpush1.xpose.msra.mxu0 %v7360
    %7370 = vmatprep.subr.mxu0 0.0
    %7371 = vmatpush1.xpose.msra.mxu0 %v7362
    %7372 = vmatprep.subr.mxu0 0.0
    %7373 = vmatpush1.xpose.msra.mxu0 %v7364
    %7374 = vmatprep.subr.mxu0 0.0
    %7375 = vmatpush1.xpose.msra.mxu0 %v7366
    %7376 = vmatprep.subr.mxu0 0.0
    %7377 = vmatpush1.xpose.msra.mxu0 0.0
    %7378 = vmatprep.subr.mxu0 0.0
    %7379 = vmatpush1.xpose.msra.mxu0 0.0
    %7380 = vmatprep.subr.mxu0 0.0
    %7381 = vmatpush1.xpose.msra.mxu0 0.0
    %7382 = vmatprep.subr.mxu0 0.0
    %7383 = vmatpush1.xpose.msra.mxu0 0.0
    %7384 = vmatprep.subr.mxu0 0.0
    %7385 = vmatpush1.xpose.msra.mxu0 0.0
    %7386 = vmatprep.subr.mxu0 0.0
    %7387 = vmatpush1.xpose.msra.mxu0 0.0
    %7388 = vmatprep.subr.mxu0 0.0
    %7389 = vmatpush1.xpose.msra.mxu0 0.0
    %7390 = vmatprep.subr.mxu0 0.0
    %7391 = vmatpush1.xpose.msra.mxu0 0.0
    %7392 = vmatprep.subr.mxu0 0.0
    %7393 = vmatpush1.xpose.msra.mxu0 0.0
    %7394 = vmatprep.subr.mxu0 0.0
    %7395 = vmatpush1.xpose.msra.mxu0 0.0
    %7396 = vmatprep.subr.mxu0 0.0
    %7397 = vmatpush1.xpose.msra.mxu0 0.0
    %7398 = vmatprep.subr.mxu0 0.0
    %7399 = vmatpush1.xpose.msra.mxu0 0.0
    %7400 = vmatprep.subr.mxu0 0.0
    %7401 = vmatpush1.xpose.msra.mxu0 0.0
    %7402 = vmatprep.subr.mxu0 0.0
    %7403 = vmatpush1.xpose.msra.mxu0 0.0
    %7404 = vmatprep.subr.mxu0 0.0
    %7405 = vmatpush1.xpose.msra.mxu0 0.0
    %7406 = vmatprep.subr.mxu0 0.0
    %7407 = vmatpush1.xpose.msra.mxu0 0.0
    %7408 = vmatprep.subr.mxu0 0.0
    %7409 = vmatpush1.xpose.msra.mxu0 0.0
    %7410 = vmatprep.subr.mxu0 0.0
    %7411 = vmatpush1.xpose.msra.mxu0 0.0
    %7412 = vmatprep.subr.mxu0 0.0
    %7413 = vmatpush1.xpose.msra.mxu0 0.0
    %7414 = vmatprep.subr.mxu0 0.0
    %7415 = vmatpush1.xpose.msra.mxu0 0.0
    %7416 = vmatprep.subr.mxu0 0.0
    %7417 = vmatpush1.xpose.msra.mxu0 0.0
    %7418 = vmatprep.subr.mxu0 0.0
    %7419 = vmatpush1.xpose.msra.mxu0 0.0
    %7420 = vmatprep.subr.mxu0 0.0
    %7421 = vmatpush1.xpose.msra.mxu0 0.0
    %7422 = vmatprep.subr.mxu0 0.0
    %7423 = vmatpush1.xpose.msra.mxu0 0.0
    %7424 = vmatprep.subr.mxu0 0.0
    %7425 = vmatpush1.xpose.msra.mxu0 0.0
    %7426 = vmatprep.subr.mxu0 0.0
    %7427 = vmatpush1.xpose.msra.mxu0 0.0
    %7428 = vmatprep.subr.mxu0 0.0
    %7429 = vmatpush1.xpose.msra.mxu0 0.0
    %7430 = vmatprep.subr.mxu0 0.0
    %7431 = vmatpush1.xpose.msra.mxu0 0.0
    %7432 = vmatprep.mubr.f32.mxu0 0.0
    %7433 = vmatmul.mubr.f32.gmra.mrb[0].mxu0 %v7352
    %v7434 = vpop.f32.mrb[0].mxu0
    %v7435 = vadd.f32 %v2936, %v7434
    %v7436 = vpop.f32.mrb[0].mxu0
    %7437 = vmatprep.mubr.f32.mxu0 0.0
    %7438 = vmatmul.mubr.f32.gmra.mrb[0].mxu0 %v7354
    %v7439 = vpop.f32.mrb[0].mxu0
    %v7440 = vadd.f32 %v2937, %v7439
    %v7441 = vpop.f32.mrb[0].mxu0
    %7442 = vmatprep.mubr.f32.mxu0 0.0
    %7443 = vmatmul.mubr.f32.gmra.mrb[0].mxu0 %v7356
    %v7444 = vpop.f32.mrb[0].mxu0
    %v7445 = vadd.f32 %v2938, %v7444
    %v7446 = vpop.f32.mrb[0].mxu0
    %7447 = vmatprep.mubr.f32.mxu0 0.0
    %7448 = vmatmul.mubr.f32.gmra.mrb[0].mxu0 %v7358
    %v7449 = vpop.f32.mrb[0].mxu0
    %v7450 = vadd.f32 %v2939, %v7449
    %v7451 = vpop.f32.mrb[0].mxu0
    %7452 = vdwg.mxu0
    %v7453 = vsel %vm466, %v7435, -inf
    %7454 = vmax.xlane.f32.xlu0 %v7453
    %v7455 = vpop.xlane.xlu0 %7454
    %v7456 = vsel %vm466, %v7440, -inf
    %7457 = vmax.xlane.f32.xlu0 %v7456
    %v7458 = vpop.xlane.xlu0 %7457
    %v7459 = vsel %vm466, %v7445, -inf
    %7460 = vmax.xlane.f32.xlu0 %v7459
    %v7461 = vpop.xlane.xlu0 %7460
    %v7462 = vsel %vm466, %v7450, -inf
    %7463 = vmax.xlane.f32.xlu0 %v7462
    %v7464 = vpop.xlane.xlu0 %7463
    %v7465 = vsub.f32 %v7435, %v7455
    %v7466 = vsub.f32 %v7440, %v7458
    %v7467 = vsub.f32 %v7445, %v7461
    %v7468 = vsub.f32 %v7450, %v7464
    %v7469 = vmul.f32 %v7465, 1.442695
    %v7470 = vpow.pop %v7469
    %v7471 = vmul.f32 %v7466, 1.442695
    %v7472 = vpow.pop %v7471
    %v7473 = vmul.f32 %v7467, 1.442695
    %v7474 = vpow.pop %v7473
    %v7475 = vmul.f32 %v7468, 1.442695
    %v7476 = vpow.pop %v7475
    %v7477 = vsel %vm466, %v7470, 0.0
    %7478 = vadd.xlane.f32.xlu0 %v7477
    %v7479 = vpop.xlane.xlu0 %7478
    %v7480 = vsel %vm466, %v7472, 0.0
    %7481 = vadd.xlane.f32.xlu0 %v7480
    %v7482 = vpop.xlane.xlu0 %7481
    %v7483 = vsel %vm466, %v7474, 0.0
    %7484 = vadd.xlane.f32.xlu0 %v7483
    %v7485 = vpop.xlane.xlu0 %7484
    %v7486 = vsel %vm466, %v7476, 0.0
    %7487 = vadd.xlane.f32.xlu0 %v7486
    %v7488 = vpop.xlane.xlu0 %7487
    %v7489 = vrcp.pop %v7479
    %v7490 = vrcp.pop %v7482
    %v7491 = vrcp.pop %v7485
    %v7492 = vrcp.pop %v7488
    %v7493 = vmul.f32 %v7470, %v7489
    %v7494 = vmul.f32 %v7472, %v7490
    %v7495 = vmul.f32 %v7474, %v7491
    %v7496 = vmul.f32 %v7476, %v7492
    %7497 = vrot.lane.b32.xlu0 %v6512, 40
    %v7498 = vpop.permute.xlu0 %7497
    %7499 = vrot.lane.b32.xlu0 %v6517, 40
    %v7500 = vpop.permute.xlu0 %7499
    %7501 = vrot.lane.b32.xlu0 %v6522, 40
    %v7502 = vpop.permute.xlu0 %7501
    %7503 = vrot.lane.b32.xlu0 %v6527, 40
    %v7504 = vpop.permute.xlu0 %7503
    %v7510 = vsel %vm466, %v7493, 0
    %v7513 = vsel %vm466, %v7494, 0
    %v7516 = vsel %vm466, %v7495, 0
    %v7519 = vsel %vm466, %v7496, 0
    %7521 = vmatprep.subr.mxu0 0.0
    %7522 = vmatpush1.msra.mxu0 %v7498
    %7523 = vmatprep.subr.mxu0 0.0
    %7524 = vmatpush1.msra.mxu0 %v7500
    %7525 = vmatprep.subr.mxu0 0.0
    %7526 = vmatpush1.msra.mxu0 %v7502
    %7527 = vmatprep.subr.mxu0 0.0
    %7528 = vmatpush1.msra.mxu0 %v7504
    %7529 = vmatprep.subr.mxu0 0.0
    %7530 = vmatpush1.msra.mxu0 0.0
    %7531 = vmatprep.subr.mxu0 0.0
    %7532 = vmatpush1.msra.mxu0 0.0
    %7533 = vmatprep.subr.mxu0 0.0
    %7534 = vmatpush1.msra.mxu0 0.0
    %7535 = vmatprep.subr.mxu0 0.0
    %7536 = vmatpush1.msra.mxu0 0.0
    %7537 = vmatprep.subr.mxu0 0.0
    %7538 = vmatpush1.msra.mxu0 0.0
    %7539 = vmatprep.subr.mxu0 0.0
    %7540 = vmatpush1.msra.mxu0 0.0
    %7541 = vmatprep.subr.mxu0 0.0
    %7542 = vmatpush1.msra.mxu0 0.0
    %7543 = vmatprep.subr.mxu0 0.0
    %7544 = vmatpush1.msra.mxu0 0.0
    %7545 = vmatprep.subr.mxu0 0.0
    %7546 = vmatpush1.msra.mxu0 0.0
    %7547 = vmatprep.subr.mxu0 0.0
    %7548 = vmatpush1.msra.mxu0 0.0
    %7549 = vmatprep.subr.mxu0 0.0
    %7550 = vmatpush1.msra.mxu0 0.0
    %7551 = vmatprep.subr.mxu0 0.0
    %7552 = vmatpush1.msra.mxu0 0.0
    %7553 = vmatprep.subr.mxu0 0.0
    %7554 = vmatpush1.msra.mxu0 0.0
    %7555 = vmatprep.subr.mxu0 0.0
    %7556 = vmatpush1.msra.mxu0 0.0
    %7557 = vmatprep.subr.mxu0 0.0
    %7558 = vmatpush1.msra.mxu0 0.0
    %7559 = vmatprep.subr.mxu0 0.0
    %7560 = vmatpush1.msra.mxu0 0.0
    %7561 = vmatprep.subr.mxu0 0.0
    %7562 = vmatpush1.msra.mxu0 0.0
    %7563 = vmatprep.subr.mxu0 0.0
    %7564 = vmatpush1.msra.mxu0 0.0
    %7565 = vmatprep.subr.mxu0 0.0
    %7566 = vmatpush1.msra.mxu0 0.0
    %7567 = vmatprep.subr.mxu0 0.0
    %7568 = vmatpush1.msra.mxu0 0.0
    %7569 = vmatprep.subr.mxu0 0.0
    %7570 = vmatpush1.msra.mxu0 0.0
    %7571 = vmatprep.subr.mxu0 0.0
    %7572 = vmatpush1.msra.mxu0 0.0
    %7573 = vmatprep.subr.mxu0 0.0
    %7574 = vmatpush1.msra.mxu0 0.0
    %7575 = vmatprep.subr.mxu0 0.0
    %7576 = vmatpush1.msra.mxu0 0.0
    %7577 = vmatprep.subr.mxu0 0.0
    %7578 = vmatpush1.msra.mxu0 0.0
    %7579 = vmatprep.subr.mxu0 0.0
    %7580 = vmatpush1.msra.mxu0 0.0
    %7581 = vmatprep.subr.mxu0 0.0
    %7582 = vmatpush1.msra.mxu0 0.0
    %7583 = vmatprep.subr.mxu0 0.0
    %7584 = vmatpush1.msra.mxu0 0.0
    %7585 = vmatprep.mubr.f32.mxu0 0.0
    %7586 = vmatmul.mubr.f32.gmra.mrb[0].mxu0 %v7510
    %v7587 = vpop.f32.mrb[0].mxu0
    %v7588 = vadd.f32 0.0, %v7587
    %v7589 = vpop.f32.mrb[0].mxu0
    %7590 = vmatprep.mubr.f32.mxu0 0.0
    %7591 = vmatmul.mubr.f32.gmra.mrb[0].mxu0 %v7513
    %v7592 = vpop.f32.mrb[0].mxu0
    %v7593 = vadd.f32 0.0, %v7592
    %v7594 = vpop.f32.mrb[0].mxu0
    %7595 = vmatprep.mubr.f32.mxu0 0.0
    %7596 = vmatmul.mubr.f32.gmra.mrb[0].mxu0 %v7516
    %v7597 = vpop.f32.mrb[0].mxu0
    %v7598 = vadd.f32 0.0, %v7597
    %v7599 = vpop.f32.mrb[0].mxu0
    %7600 = vmatprep.mubr.f32.mxu0 0.0
    %7601 = vmatmul.mubr.f32.gmra.mrb[0].mxu0 %v7519
    %v7602 = vpop.f32.mrb[0].mxu0
    %v7603 = vadd.f32 0.0, %v7602
    %v7604 = vpop.f32.mrb[0].mxu0
    %7605 = vdwg.mxu0
    %7610 = vrot.lane.b32.xlu0 %v7048, 8
    %v7611 = vpop.permute.xlu0 %7610
    %7612 = vrot.lane.b32.xlu0 %v7053, 8
    %v7613 = vpop.permute.xlu0 %7612
    %7614 = vrot.lane.b32.xlu0 %v7058, 8
    %v7615 = vpop.permute.xlu0 %7614
    %7616 = vrot.lane.b32.xlu0 %v7063, 8
    %v7617 = vpop.permute.xlu0 %7616
    %7626 = vrot.lane.b32.xlu0 %v7318, 16
    %v7627 = vpop.permute.xlu0 %7626
    %7628 = vrot.lane.b32.xlu0 %v7323, 16
    %v7629 = vpop.permute.xlu0 %7628
    %7630 = vrot.lane.b32.xlu0 %v7328, 16
    %v7631 = vpop.permute.xlu0 %7630
    %7632 = vrot.lane.b32.xlu0 %v7333, 16
    %v7633 = vpop.permute.xlu0 %7632
    %7642 = vrot.lane.b32.xlu0 %v7588, 24
    %v7643 = vpop.permute.xlu0 %7642
    %7644 = vrot.lane.b32.xlu0 %v7593, 24
    %v7645 = vpop.permute.xlu0 %7644
    %7646 = vrot.lane.b32.xlu0 %v7598, 24
    %v7647 = vpop.permute.xlu0 %7646
    %7648 = vrot.lane.b32.xlu0 %v7603, 24
    %v7649 = vpop.permute.xlu0 %7648
    %v7654 = vsel %vm3060, %v6778, %v7611
    %v7655 = vsel %vm3060, %v6783, %v7613
    %v7656 = vsel %vm3060, %v6788, %v7615
    %v7657 = vsel %vm3060, %v6793, %v7617
    %v7658 = vsel %vm4177, %v7654, %v7627
    %v7659 = vsel %vm4177, %v7655, %v7629
    %v7660 = vsel %vm4177, %v7656, %v7631
    %v7661 = vsel %vm4177, %v7657, %v7633
    %v7662 = vsel %vm4182, %v7658, %v7643
    %v7663 = vsel %vm4182, %v7659, %v7645
    %v7664 = vsel %vm4182, %v7660, %v7647
    %v7665 = vsel %vm4182, %v7661, %v7649
    %s7666 = scalar_lea.vmem [#allocation33], 64
    %v7667 = vld [vmem:[%s7666] sm:$0xff]
    %v7668 = vld [vmem:[%s7666 + $0x8] sm:$0xff]
    %v7669 = vld [vmem:[%s7666 + $0x10] sm:$0xff]
    %v7670 = vld [vmem:[%s7666 + $0x18] sm:$0xff]
    %v7672 = vsel %vm466, %v7662, 0
    %v7675 = vsel %vm466, %v7663, 0
    %v7678 = vsel %vm466, %v7664, 0
    %v7681 = vsel %vm466, %v7665, 0
    %7683 = vmatprep.subr.mxu0 0.0
    %7684 = vmatpush1.msra.mxu0 %v7667
    %7685 = vmatprep.subr.mxu0 0.0
    %7686 = vmatpush1.msra.mxu0 %v7668
    %7687 = vmatprep.subr.mxu0 0.0
    %7688 = vmatpush1.msra.mxu0 %v7669
    %7689 = vmatprep.subr.mxu0 0.0
    %7690 = vmatpush1.msra.mxu0 %v7670
    %7691 = vmatprep.subr.mxu0 0.0
    %7692 = vmatpush1.msra.mxu0 0.0
    %7693 = vmatprep.subr.mxu0 0.0
    %7694 = vmatpush1.msra.mxu0 0.0
    %7695 = vmatprep.subr.mxu0 0.0
    %7696 = vmatpush1.msra.mxu0 0.0
    %7697 = vmatprep.subr.mxu0 0.0
    %7698 = vmatpush1.msra.mxu0 0.0
    %7699 = vmatprep.subr.mxu0 0.0
    %7700 = vmatpush1.msra.mxu0 0.0
    %7701 = vmatprep.subr.mxu0 0.0
    %7702 = vmatpush1.msra.mxu0 0.0
    %7703 = vmatprep.subr.mxu0 0.0
    %7704 = vmatpush1.msra.mxu0 0.0
    %7705 = vmatprep.subr.mxu0 0.0
    %7706 = vmatpush1.msra.mxu0 0.0
    %7707 = vmatprep.subr.mxu0 0.0
    %7708 = vmatpush1.msra.mxu0 0.0
    %7709 = vmatprep.subr.mxu0 0.0
    %7710 = vmatpush1.msra.mxu0 0.0
    %7711 = vmatprep.subr.mxu0 0.0
    %7712 = vmatpush1.msra.mxu0 0.0
    %7713 = vmatprep.subr.mxu0 0.0
    %7714 = vmatpush1.msra.mxu0 0.0
    %7715 = vmatprep.subr.mxu0 0.0
    %7716 = vmatpush1.msra.mxu0 0.0
    %7717 = vmatprep.subr.mxu0 0.0
    %7718 = vmatpush1.msra.mxu0 0.0
    %7719 = vmatprep.subr.mxu0 0.0
    %7720 = vmatpush1.msra.mxu0 0.0
    %7721 = vmatprep.subr.mxu0 0.0
    %7722 = vmatpush1.msra.mxu0 0.0
    %7723 = vmatprep.subr.mxu0 0.0
    %7724 = vmatpush1.msra.mxu0 0.0
    %7725 = vmatprep.subr.mxu0 0.0
    %7726 = vmatpush1.msra.mxu0 0.0
    %7727 = vmatprep.subr.mxu0 0.0
    %7728 = vmatpush1.msra.mxu0 0.0
    %7729 = vmatprep.subr.mxu0 0.0
    %7730 = vmatpush1.msra.mxu0 0.0
    %7731 = vmatprep.subr.mxu0 0.0
    %7732 = vmatpush1.msra.mxu0 0.0
    %7733 = vmatprep.subr.mxu0 0.0
    %7734 = vmatpush1.msra.mxu0 0.0
    %7735 = vmatprep.subr.mxu0 0.0
    %7736 = vmatpush1.msra.mxu0 0.0
    %7737 = vmatprep.subr.mxu0 0.0
    %7738 = vmatpush1.msra.mxu0 0.0
    %7739 = vmatprep.subr.mxu0 0.0
    %7740 = vmatpush1.msra.mxu0 0.0
    %7741 = vmatprep.subr.mxu0 0.0
    %7742 = vmatpush1.msra.mxu0 0.0
    %7743 = vmatprep.subr.mxu0 0.0
    %7744 = vmatpush1.msra.mxu0 0.0
    %7745 = vmatprep.subr.mxu0 0.0
    %7746 = vmatpush1.msra.mxu0 0.0
    %7747 = vmatprep.mubr.f32.mxu0 0.0
    %7748 = vmatmul.mubr.f32.gmra.mrb[0].mxu0 %v7672
    %v7749 = vpop.f32.mrb[0].mxu0
    %v7750 = vadd.f32 0.0, %v7749
    %v7751 = vpop.f32.mrb[0].mxu0
    %7752 = vmatprep.mubr.f32.mxu0 0.0
    %7753 = vmatmul.mubr.f32.gmra.mrb[0].mxu0 %v7675
    %v7754 = vpop.f32.mrb[0].mxu0
    %v7755 = vadd.f32 0.0, %v7754
    %v7756 = vpop.f32.mrb[0].mxu0
    %7757 = vmatprep.mubr.f32.mxu0 0.0
    %7758 = vmatmul.mubr.f32.gmra.mrb[0].mxu0 %v7678
    %v7759 = vpop.f32.mrb[0].mxu0
    %v7760 = vadd.f32 0.0, %v7759
    %v7761 = vpop.f32.mrb[0].mxu0
    %7762 = vmatprep.mubr.f32.mxu0 0.0
    %7763 = vmatmul.mubr.f32.gmra.mrb[0].mxu0 %v7681
    %v7764 = vpop.f32.mrb[0].mxu0
    %v7765 = vadd.f32 0.0, %v7764
    %v7766 = vpop.f32.mrb[0].mxu0
    %7767 = vdwg.mxu0
    %v7768 = vadd.f32 %v6416, %v7750
    %v7769 = vadd.f32 %v6417, %v7755
    %v7770 = vadd.f32 %v6418, %v7760
    %v7771 = vadd.f32 %v6419, %v7765
    %s7772 = scalar_lea.vmem [#allocation34], 2
    %v7773 = vld [vmem:[%s7772] sm:$0x1]
    %v7775 = vlaneseq
    %v7776 = vshrl.u32 %v7775, 7
    %v7777 = vsub.s32 0, %v7776
    %v7778 = vrot.slane %v7773, %v7777
    %v7780 = vadd.f32 %v7768, %v7778
    %v7781 = vadd.f32 %v7769, %v7778
    %v7782 = vadd.f32 %v7770, %v7778
    %v7783 = vadd.f32 %v7771, %v7778
    %s7784 = scalar_lea.vmem %s45, 2
    %v7785 = vld [vmem:[%s7784] sm:$0x1]
    %s7786 = scalar_lea.vmem %s47, 2
    %v7787 = vld [vmem:[%s7786] sm:$0x1]
    %v7788 = vsel %vm466, %v7780, 0.0
    %7789 = vadd.xlane.f32.xlu0 %v7788
    %v7790 = vpop.xlane.xlu0 %7789
    %v7791 = vsel %vm466, %v7781, 0.0
    %7792 = vadd.xlane.f32.xlu0 %v7791
    %v7793 = vpop.xlane.xlu0 %7792
    %v7794 = vsel %vm466, %v7782, 0.0
    %7795 = vadd.xlane.f32.xlu0 %v7794
    %v7796 = vpop.xlane.xlu0 %7795
    %v7797 = vsel %vm466, %v7783, 0.0
    %7798 = vadd.xlane.f32.xlu0 %v7797
    %v7799 = vpop.xlane.xlu0 %7798
    %v7800 = vmul.f32 %v7790, %v4317
    %v7801 = vmul.f32 %v7793, %v4317
    %v7802 = vmul.f32 %v7796, %v4317
    %v7803 = vmul.f32 %v7799, %v4317
    %v7804 = vsub.f32 %v7780, %v7800
    %v7805 = vsub.f32 %v7781, %v7801
    %v7806 = vsub.f32 %v7782, %v7802
    %v7807 = vsub.f32 %v7783, %v7803
    %v7808 = vmul.f32 %v7804, %v7804
    %v7809 = vmul.f32 %v7805, %v7805
    %v7810 = vmul.f32 %v7806, %v7806
    %v7811 = vmul.f32 %v7807, %v7807
    %v7812 = vsel %vm466, %v7808, 0.0
    %7813 = vadd.xlane.f32.xlu0 %v7812
    %v7814 = vpop.xlane.xlu0 %7813
    %v7815 = vsel %vm466, %v7809, 0.0
    %7816 = vadd.xlane.f32.xlu0 %v7815
    %v7817 = vpop.xlane.xlu0 %7816
    %v7818 = vsel %vm466, %v7810, 0.0
    %7819 = vadd.xlane.f32.xlu0 %v7818
    %v7820 = vpop.xlane.xlu0 %7819
    %v7821 = vsel %vm466, %v7811, 0.0
    %7822 = vadd.xlane.f32.xlu0 %v7821
    %v7823 = vpop.xlane.xlu0 %7822
    %v7824 = vmul.f32 %v7814, %v4317
    %v7825 = vmul.f32 %v7817, %v4317
    %v7826 = vmul.f32 %v7820, %v4317
    %v7827 = vmul.f32 %v7823, %v4317
    %v7828 = vadd.f32 %v7824, 1e-05
    %v7829 = vadd.f32 %v7825, 1e-05
    %v7830 = vadd.f32 %v7826, 1e-05
    %v7831 = vadd.f32 %v7827, 1e-05
    %v7832 = vrsqrt.pop %v7828
    %v7833 = vrsqrt.pop %v7829
    %v7834 = vrsqrt.pop %v7830
    %v7835 = vrsqrt.pop %v7831
    %v7836 = vmul.f32 %v7804, %v7832
    %v7837 = vmul.f32 %v7805, %v7833
    %v7838 = vmul.f32 %v7806, %v7834
    %v7839 = vmul.f32 %v7807, %v7835
    %v7841 = vlaneseq
    %v7842 = vshrl.u32 %v7841, 7
    %v7843 = vsub.s32 0, %v7842
    %v7844 = vrot.slane %v7785, %v7843
    %v7846 = vmul.f32 %v7836, %v7844
    %v7847 = vmul.f32 %v7837, %v7844
    %v7848 = vmul.f32 %v7838, %v7844
    %v7849 = vmul.f32 %v7839, %v7844
    %v7851 = vlaneseq
    %v7852 = vshrl.u32 %v7851, 7
    %v7853 = vsub.s32 0, %v7852
    %v7854 = vrot.slane %v7787, %v7853
    %v7856 = vadd.f32 %v7846, %v7854
    %v7857 = vadd.f32 %v7847, %v7854
    %v7858 = vadd.f32 %v7848, %v7854
    %v7859 = vadd.f32 %v7849, %v7854
    %s7860 = scalar_lea.vmem %s49, 64
    %v7861 = vld [vmem:[%s7860] sm:$0xff]
    %v7862 = vld [vmem:[%s7860 + $0x8] sm:$0xff]
    %v7863 = vld [vmem:[%s7860 + $0x10] sm:$0xff]
    %v7864 = vld [vmem:[%s7860 + $0x18] sm:$0xff]
    %s7865 = scalar_lea.vmem %s51, 2
    %v7866 = vld [vmem:[%s7865] sm:$0x1]
    %v7868 = vlaneseq
    %v7869 = vshrl.u32 %v7868, 7
    %v7870 = vsub.s32 0, %v7869
    %v7871 = vrot.slane %v7866, %v7870
    %v7874 = vsel %vm466, %v7856, 0
    %v7877 = vsel %vm466, %v7857, 0
    %v7880 = vsel %vm466, %v7858, 0
    %v7883 = vsel %vm466, %v7859, 0
    %7885 = vmatprep.subr.mxu0 0.0
    %7886 = vmatpush1.msra.mxu0 %v7861
    %7887 = vmatprep.subr.mxu0 0.0
    %7888 = vmatpush1.msra.mxu0 %v7862
    %7889 = vmatprep.subr.mxu0 0.0
    %7890 = vmatpush1.msra.mxu0 %v7863
    %7891 = vmatprep.subr.mxu0 0.0
    %7892 = vmatpush1.msra.mxu0 %v7864
    %7893 = vmatprep.subr.mxu0 0.0
    %7894 = vmatpush1.msra.mxu0 0.0
    %7895 = vmatprep.subr.mxu0 0.0
    %7896 = vmatpush1.msra.mxu0 0.0
    %7897 = vmatprep.subr.mxu0 0.0
    %7898 = vmatpush1.msra.mxu0 0.0
    %7899 = vmatprep.subr.mxu0 0.0
    %7900 = vmatpush1.msra.mxu0 0.0
    %7901 = vmatprep.subr.mxu0 0.0
    %7902 = vmatpush1.msra.mxu0 0.0
    %7903 = vmatprep.subr.mxu0 0.0
    %7904 = vmatpush1.msra.mxu0 0.0
    %7905 = vmatprep.subr.mxu0 0.0
    %7906 = vmatpush1.msra.mxu0 0.0
    %7907 = vmatprep.subr.mxu0 0.0
    %7908 = vmatpush1.msra.mxu0 0.0
    %7909 = vmatprep.subr.mxu0 0.0
    %7910 = vmatpush1.msra.mxu0 0.0
    %7911 = vmatprep.subr.mxu0 0.0
    %7912 = vmatpush1.msra.mxu0 0.0
    %7913 = vmatprep.subr.mxu0 0.0
    %7914 = vmatpush1.msra.mxu0 0.0
    %7915 = vmatprep.subr.mxu0 0.0
    %7916 = vmatpush1.msra.mxu0 0.0
    %7917 = vmatprep.subr.mxu0 0.0
    %7918 = vmatpush1.msra.mxu0 0.0
    %7919 = vmatprep.subr.mxu0 0.0
    %7920 = vmatpush1.msra.mxu0 0.0
    %7921 = vmatprep.subr.mxu0 0.0
    %7922 = vmatpush1.msra.mxu0 0.0
    %7923 = vmatprep.subr.mxu0 0.0
    %7924 = vmatpush1.msra.mxu0 0.0
    %7925 = vmatprep.subr.mxu0 0.0
    %7926 = vmatpush1.msra.mxu0 0.0
    %7927 = vmatprep.subr.mxu0 0.0
    %7928 = vmatpush1.msra.mxu0 0.0
    %7929 = vmatprep.subr.mxu0 0.0
    %7930 = vmatpush1.msra.mxu0 0.0
    %7931 = vmatprep.subr.mxu0 0.0
    %7932 = vmatpush1.msra.mxu0 0.0
    %7933 = vmatprep.subr.mxu0 0.0
    %7934 = vmatpush1.msra.mxu0 0.0
    %7935 = vmatprep.subr.mxu0 0.0
    %7936 = vmatpush1.msra.mxu0 0.0
    %7937 = vmatprep.subr.mxu0 0.0
    %7938 = vmatpush1.msra.mxu0 0.0
    %7939 = vmatprep.subr.mxu0 0.0
    %7940 = vmatpush1.msra.mxu0 0.0
    %7941 = vmatprep.subr.mxu0 0.0
    %7942 = vmatpush1.msra.mxu0 0.0
    %7943 = vmatprep.subr.mxu0 0.0
    %7944 = vmatpush1.msra.mxu0 0.0
    %7945 = vmatprep.subr.mxu0 0.0
    %7946 = vmatpush1.msra.mxu0 0.0
    %7947 = vmatprep.subr.mxu0 0.0
    %7948 = vmatpush1.msra.mxu0 0.0
    %7949 = vmatprep.mubr.f32.mxu0 0.0
    %7950 = vmatmul.mubr.f32.gmra.mrb[0].mxu0 %v7874
    %v7951 = vpop.f32.mrb[0].mxu0
    %v7952 = vadd.f32 %v7871, %v7951
    %v7953 = vpop.f32.mrb[0].mxu0
    %7954 = vmatprep.mubr.f32.mxu0 0.0
    %7955 = vmatmul.mubr.f32.gmra.mrb[0].mxu0 %v7877
    %v7956 = vpop.f32.mrb[0].mxu0
    %v7957 = vadd.f32 %v7871, %v7956
    %v7958 = vpop.f32.mrb[0].mxu0
    %7959 = vmatprep.mubr.f32.mxu0 0.0
    %7960 = vmatmul.mubr.f32.gmra.mrb[0].mxu0 %v7880
    %v7961 = vpop.f32.mrb[0].mxu0
    %v7962 = vadd.f32 %v7871, %v7961
    %v7963 = vpop.f32.mrb[0].mxu0
    %7964 = vmatprep.mubr.f32.mxu0 0.0
    %7965 = vmatmul.mubr.f32.gmra.mrb[0].mxu0 %v7883
    %v7966 = vpop.f32.mrb[0].mxu0
    %v7967 = vadd.f32 %v7871, %v7966
    %v7968 = vpop.f32.mrb[0].mxu0
    %7969 = vdwg.mxu0
    %v7970 = vmax.f32 %v7952, 0.0
    %v7971 = vmax.f32 %v7957, 0.0
    %v7972 = vmax.f32 %v7962, 0.0
    %v7973 = vmax.f32 %v7967, 0.0
    %s7974 = scalar_lea.vmem [#allocation36], 256
    %v7975 = vld [vmem:[%s7974] sm:$0xff]
    %v7976 = vld [vmem:[%s7974 + $0x8] sm:$0xff]
    %v7977 = vld [vmem:[%s7974 + $0x10] sm:$0xff]
    %v7978 = vld [vmem:[%s7974 + $0x18] sm:$0xff]
    %v7979 = vld [vmem:[%s7974 + $0x20] sm:$0xff]
    %v7980 = vld [vmem:[%s7974 + $0x28] sm:$0xff]
    %v7981 = vld [vmem:[%s7974 + $0x30] sm:$0xff]
    %v7982 = vld [vmem:[%s7974 + $0x38] sm:$0xff]
    %v7983 = vld [vmem:[%s7974 + $0x40] sm:$0xff]
    %v7984 = vld [vmem:[%s7974 + $0x48] sm:$0xff]
    %v7985 = vld [vmem:[%s7974 + $0x50] sm:$0xff]
    %v7986 = vld [vmem:[%s7974 + $0x58] sm:$0xff]
    %v7987 = vld [vmem:[%s7974 + $0x60] sm:$0xff]
    %v7988 = vld [vmem:[%s7974 + $0x68] sm:$0xff]
    %v7989 = vld [vmem:[%s7974 + $0x70] sm:$0xff]
    %v7990 = vld [vmem:[%s7974 + $0x78] sm:$0xff]
    %s7991 = scalar_lea.vmem %s55, 2
    %v7992 = vld [vmem:[%s7991] sm:$0x1]
    %v7994 = vlaneseq
    %v7995 = vshrl.u32 %v7994, 7
    %v7996 = vsub.s32 0, %v7995
    %v7997 = vrot.slane %v7992, %v7996
    %7999 = vmatprep.subr.mxu0 0.0
    %8000 = vmatpush1.msra.mxu0 %v7975
    %8001 = vmatprep.subr.mxu0 0.0
    %8002 = vmatpush1.msra.mxu0 %v7976
    %8003 = vmatprep.subr.mxu0 0.0
    %8004 = vmatpush1.msra.mxu0 %v7977
    %8005 = vmatprep.subr.mxu0 0.0
    %8006 = vmatpush1.msra.mxu0 %v7978
    %8007 = vmatprep.subr.mxu0 0.0
    %8008 = vmatpush1.msra.mxu0 %v7979
    %8009 = vmatprep.subr.mxu0 0.0
    %8010 = vmatpush1.msra.mxu0 %v7980
    %8011 = vmatprep.subr.mxu0 0.0
    %8012 = vmatpush1.msra.mxu0 %v7981
    %8013 = vmatprep.subr.mxu0 0.0
    %8014 = vmatpush1.msra.mxu0 %v7982
    %8015 = vmatprep.subr.mxu0 0.0
    %8016 = vmatpush1.msra.mxu0 %v7983
    %8017 = vmatprep.subr.mxu0 0.0
    %8018 = vmatpush1.msra.mxu0 %v7984
    %8019 = vmatprep.subr.mxu0 0.0
    %8020 = vmatpush1.msra.mxu0 %v7985
    %8021 = vmatprep.subr.mxu0 0.0
    %8022 = vmatpush1.msra.mxu0 %v7986
    %8023 = vmatprep.subr.mxu0 0.0
    %8024 = vmatpush1.msra.mxu0 %v7987
    %8025 = vmatprep.subr.mxu0 0.0
    %8026 = vmatpush1.msra.mxu0 %v7988
    %8027 = vmatprep.subr.mxu0 0.0
    %8028 = vmatpush1.msra.mxu0 %v7989
    %8029 = vmatprep.subr.mxu0 0.0
    %8030 = vmatpush1.msra.mxu0 %v7990
    %8031 = vmatprep.subr.mxu0 0.0
    %8032 = vmatpush1.msra.mxu0 0.0
    %8033 = vmatprep.subr.mxu0 0.0
    %8034 = vmatpush1.msra.mxu0 0.0
    %8035 = vmatprep.subr.mxu0 0.0
    %8036 = vmatpush1.msra.mxu0 0.0
    %8037 = vmatprep.subr.mxu0 0.0
    %8038 = vmatpush1.msra.mxu0 0.0
    %8039 = vmatprep.subr.mxu0 0.0
    %8040 = vmatpush1.msra.mxu0 0.0
    %8041 = vmatprep.subr.mxu0 0.0
    %8042 = vmatpush1.msra.mxu0 0.0
    %8043 = vmatprep.subr.mxu0 0.0
    %8044 = vmatpush1.msra.mxu0 0.0
    %8045 = vmatprep.subr.mxu0 0.0
    %8046 = vmatpush1.msra.mxu0 0.0
    %8047 = vmatprep.subr.mxu0 0.0
    %8048 = vmatpush1.msra.mxu0 0.0
    %8049 = vmatprep.subr.mxu0 0.0
    %8050 = vmatpush1.msra.mxu0 0.0
    %8051 = vmatprep.subr.mxu0 0.0
    %8052 = vmatpush1.msra.mxu0 0.0
    %8053 = vmatprep.subr.mxu0 0.0
    %8054 = vmatpush1.msra.mxu0 0.0
    %8055 = vmatprep.subr.mxu0 0.0
    %8056 = vmatpush1.msra.mxu0 0.0
    %8057 = vmatprep.subr.mxu0 0.0
    %8058 = vmatpush1.msra.mxu0 0.0
    %8059 = vmatprep.subr.mxu0 0.0
    %8060 = vmatpush1.msra.mxu0 0.0
    %8061 = vmatprep.subr.mxu0 0.0
    %8062 = vmatpush1.msra.mxu0 0.0
    %8063 = vmatprep.mubr.f32.mxu0 0.0
    %8064 = vmatmul.mubr.f32.gmra.mrb[0].mxu0 %v7970
    %v8065 = vpop.f32.mrb[0].mxu0
    %v8066 = vadd.f32 %v7997, %v8065
    %v8067 = vpop.f32.mrb[0].mxu0
    %8068 = vmatprep.mubr.f32.mxu0 0.0
    %8069 = vmatmul.mubr.f32.gmra.mrb[0].mxu0 %v7971
    %v8070 = vpop.f32.mrb[0].mxu0
    %v8071 = vadd.f32 %v7997, %v8070
    %v8072 = vpop.f32.mrb[0].mxu0
    %8073 = vmatprep.mubr.f32.mxu0 0.0
    %8074 = vmatmul.mubr.f32.gmra.mrb[0].mxu0 %v7972
    %v8075 = vpop.f32.mrb[0].mxu0
    %v8076 = vadd.f32 %v7997, %v8075
    %v8077 = vpop.f32.mrb[0].mxu0
    %8078 = vmatprep.mubr.f32.mxu0 0.0
    %8079 = vmatmul.mubr.f32.gmra.mrb[0].mxu0 %v7973
    %v8080 = vpop.f32.mrb[0].mxu0
    %v8081 = vadd.f32 %v7997, %v8080
    %v8082 = vpop.f32.mrb[0].mxu0
    %8083 = vdwg.mxu0
    %v8084 = vadd.f32 %v8066, %v7856
    %v8085 = vadd.f32 %v8071, %v7857
    %v8086 = vadd.f32 %v8076, %v7858
    %v8087 = vadd.f32 %v8081, %v7859
    %s8088 = scalar_lea.vmem %s57, 2
    %v8089 = vld [vmem:[%s8088] sm:$0x1]
    %s8090 = scalar_lea.vmem %s59, 2
    %v8091 = vld [vmem:[%s8090] sm:$0x1]
    %v8092 = vsel %vm466, %v8084, 0.0
    %8093 = vadd.xlane.f32.xlu0 %v8092
    %v8094 = vpop.xlane.xlu0 %8093
    %v8095 = vsel %vm466, %v8085, 0.0
    %8096 = vadd.xlane.f32.xlu0 %v8095
    %v8097 = vpop.xlane.xlu0 %8096
    %v8098 = vsel %vm466, %v8086, 0.0
    %8099 = vadd.xlane.f32.xlu0 %v8098
    %v8100 = vpop.xlane.xlu0 %8099
    %v8101 = vsel %vm466, %v8087, 0.0
    %8102 = vadd.xlane.f32.xlu0 %v8101
    %v8103 = vpop.xlane.xlu0 %8102
    %v8104 = vmul.f32 %v8094, %v4317
    %v8105 = vmul.f32 %v8097, %v4317
    %v8106 = vmul.f32 %v8100, %v4317
    %v8107 = vmul.f32 %v8103, %v4317
    %v8108 = vsub.f32 %v8084, %v8104
    %v8109 = vsub.f32 %v8085, %v8105
    %v8110 = vsub.f32 %v8086, %v8106
    %v8111 = vsub.f32 %v8087, %v8107
    %v8112 = vmul.f32 %v8108, %v8108
    %v8113 = vmul.f32 %v8109, %v8109
    %v8114 = vmul.f32 %v8110, %v8110
    %v8115 = vmul.f32 %v8111, %v8111
    %v8116 = vsel %vm466, %v8112, 0.0
    %8117 = vadd.xlane.f32.xlu0 %v8116
    %v8118 = vpop.xlane.xlu0 %8117
    %v8119 = vsel %vm466, %v8113, 0.0
    %8120 = vadd.xlane.f32.xlu0 %v8119
    %v8121 = vpop.xlane.xlu0 %8120
    %v8122 = vsel %vm466, %v8114, 0.0
    %8123 = vadd.xlane.f32.xlu0 %v8122
    %v8124 = vpop.xlane.xlu0 %8123
    %v8125 = vsel %vm466, %v8115, 0.0
    %8126 = vadd.xlane.f32.xlu0 %v8125
    %v8127 = vpop.xlane.xlu0 %8126
    %v8128 = vmul.f32 %v8118, %v4317
    %v8129 = vmul.f32 %v8121, %v4317
    %v8130 = vmul.f32 %v8124, %v4317
    %v8131 = vmul.f32 %v8127, %v4317
    %v8132 = vadd.f32 %v8128, 1e-05
    %v8133 = vadd.f32 %v8129, 1e-05
    %v8134 = vadd.f32 %v8130, 1e-05
    %v8135 = vadd.f32 %v8131, 1e-05
    %v8136 = vrsqrt.pop %v8132
    %v8137 = vrsqrt.pop %v8133
    %v8138 = vrsqrt.pop %v8134
    %v8139 = vrsqrt.pop %v8135
    %v8140 = vmul.f32 %v8108, %v8136
    %v8141 = vmul.f32 %v8109, %v8137
    %v8142 = vmul.f32 %v8110, %v8138
    %v8143 = vmul.f32 %v8111, %v8139
    %v8145 = vlaneseq
    %v8146 = vshrl.u32 %v8145, 7
    %v8147 = vsub.s32 0, %v8146
    %v8148 = vrot.slane %v8089, %v8147
    %v8150 = vmul.f32 %v8140, %v8148
    %v8151 = vmul.f32 %v8141, %v8148
    %v8152 = vmul.f32 %v8142, %v8148
    %v8153 = vmul.f32 %v8143, %v8148
    %v8155 = vlaneseq
    %v8156 = vshrl.u32 %v8155, 7
    %v8157 = vsub.s32 0, %v8156
    %v8158 = vrot.slane %v8091, %v8157
    %v8160 = vadd.f32 %v8150, %v8158
    %v8161 = vadd.f32 %v8151, %v8158
    %v8162 = vadd.f32 %v8152, %v8158
    %v8163 = vadd.f32 %v8153, %v8158
    %v8164 = vld [vmem:[#allocation37] sm:$0xff]
    %v8165 = vld [vmem:[#allocation37 + $0x8] sm:$0xff]
    %v8166 = vld [vmem:[#allocation37 + $0x10] sm:$0xff]
    %v8167 = vld [vmem:[#allocation37 + $0x18] sm:$0xff]
    %v8168 = vld [vmem:[%s63] sm:$0x1]
    %v8170 = vlaneseq
    %v8171 = vshrl.u32 %v8170, 7
    %v8172 = vsub.s32 0, %v8171
    %v8173 = vrot.slane %v8168, %v8172
    %v8176 = vsel %vm466, %v8160, 0
    %v8179 = vsel %vm466, %v8161, 0
    %v8182 = vsel %vm466, %v8162, 0
    %v8185 = vsel %vm466, %v8163, 0
    %8187 = vmatprep.subr.mxu0 0.0
    %8188 = vmatpush1.msra.mxu0 %v8164
    %8189 = vmatprep.subr.mxu0 0.0
    %8190 = vmatpush1.msra.mxu0 %v8165
    %8191 = vmatprep.subr.mxu0 0.0
    %8192 = vmatpush1.msra.mxu0 %v8166
    %8193 = vmatprep.subr.mxu0 0.0
    %8194 = vmatpush1.msra.mxu0 %v8167
    %8195 = vmatprep.subr.mxu0 0.0
    %8196 = vmatpush1.msra.mxu0 0.0
    %8197 = vmatprep.subr.mxu0 0.0
    %8198 = vmatpush1.msra.mxu0 0.0
    %8199 = vmatprep.subr.mxu0 0.0
    %8200 = vmatpush1.msra.mxu0 0.0
    %8201 = vmatprep.subr.mxu0 0.0
    %8202 = vmatpush1.msra.mxu0 0.0
    %8203 = vmatprep.subr.mxu0 0.0
    %8204 = vmatpush1.msra.mxu0 0.0
    %8205 = vmatprep.subr.mxu0 0.0
    %8206 = vmatpush1.msra.mxu0 0.0
    %8207 = vmatprep.subr.mxu0 0.0
    %8208 = vmatpush1.msra.mxu0 0.0
    %8209 = vmatprep.subr.mxu0 0.0
    %8210 = vmatpush1.msra.mxu0 0.0
    %8211 = vmatprep.subr.mxu0 0.0
    %8212 = vmatpush1.msra.mxu0 0.0
    %8213 = vmatprep.subr.mxu0 0.0
    %8214 = vmatpush1.msra.mxu0 0.0
    %8215 = vmatprep.subr.mxu0 0.0
    %8216 = vmatpush1.msra.mxu0 0.0
    %8217 = vmatprep.subr.mxu0 0.0
    %8218 = vmatpush1.msra.mxu0 0.0
    %8219 = vmatprep.subr.mxu0 0.0
    %8220 = vmatpush1.msra.mxu0 0.0
    %8221 = vmatprep.subr.mxu0 0.0
    %8222 = vmatpush1.msra.mxu0 0.0
    %8223 = vmatprep.subr.mxu0 0.0
    %8224 = vmatpush1.msra.mxu0 0.0
    %8225 = vmatprep.subr.mxu0 0.0
    %8226 = vmatpush1.msra.mxu0 0.0
    %8227 = vmatprep.subr.mxu0 0.0
    %8228 = vmatpush1.msra.mxu0 0.0
    %8229 = vmatprep.subr.mxu0 0.0
    %8230 = vmatpush1.msra.mxu0 0.0
    %8231 = vmatprep.subr.mxu0 0.0
    %8232 = vmatpush1.msra.mxu0 0.0
    %8233 = vmatprep.subr.mxu0 0.0
    %8234 = vmatpush1.msra.mxu0 0.0
    %8235 = vmatprep.subr.mxu0 0.0
    %8236 = vmatpush1.msra.mxu0 0.0
    %8237 = vmatprep.subr.mxu0 0.0
    %8238 = vmatpush1.msra.mxu0 0.0
    %8239 = vmatprep.subr.mxu0 0.0
    %8240 = vmatpush1.msra.mxu0 0.0
    %8241 = vmatprep.subr.mxu0 0.0
    %8242 = vmatpush1.msra.mxu0 0.0
    %8243 = vmatprep.subr.mxu0 0.0
    %8244 = vmatpush1.msra.mxu0 0.0
    %8245 = vmatprep.subr.mxu0 0.0
    %8246 = vmatpush1.msra.mxu0 0.0
    %8247 = vmatprep.subr.mxu0 0.0
    %8248 = vmatpush1.msra.mxu0 0.0
    %8249 = vmatprep.subr.mxu0 0.0
    %8250 = vmatpush1.msra.mxu0 0.0
    %8251 = vmatprep.mubr.f32.mxu0 0.0
    %8252 = vmatmul.mubr.f32.gmra.mrb[0].mxu0 %v8176
    %v8253 = vpop.f32.mrb[0].mxu0
    %v8254 = vadd.f32 %v8173, %v8253
    %v8255 = vpop.f32.mrb[0].mxu0
    %8256 = vmatprep.mubr.f32.mxu0 0.0
    %8257 = vmatmul.mubr.f32.gmra.mrb[0].mxu0 %v8179
    %v8258 = vpop.f32.mrb[0].mxu0
    %v8259 = vadd.f32 %v8173, %v8258
    %v8260 = vpop.f32.mrb[0].mxu0
    %8261 = vmatprep.mubr.f32.mxu0 0.0
    %8262 = vmatmul.mubr.f32.gmra.mrb[0].mxu0 %v8182
    %v8263 = vpop.f32.mrb[0].mxu0
    %v8264 = vadd.f32 %v8173, %v8263
    %v8265 = vpop.f32.mrb[0].mxu0
    %8266 = vmatprep.mubr.f32.mxu0 0.0
    %8267 = vmatmul.mubr.f32.gmra.mrb[0].mxu0 %v8185
    %v8268 = vpop.f32.mrb[0].mxu0
    %v8269 = vadd.f32 %v8173, %v8268
    %v8270 = vpop.f32.mrb[0].mxu0
    %8271 = vdwg.mxu0
    %v8272 = vmax.f32 %v8254, 0.0
    %v8273 = vmax.f32 %v8259, 0.0
    %v8274 = vmax.f32 %v8264, 0.0
    %v8275 = vmax.f32 %v8269, 0.0
    %8276 = vst.msk [vmem:[%s65] sm:$0xff] %vm3060, %v8272
    %8277 = vst.msk [vmem:[%s65 + $0x8] sm:$0xff] %vm3060, %v8273
    %8278 = vst.msk [vmem:[%s65 + $0x10] sm:$0xff] %vm3060, %v8274
    %8279 = vst.msk [vmem:[%s65 + $0x18] sm:$0xff] %vm3060, %v8275
    // Predicated region
    $region226: #{_lambda_.1} parent=1 // pred_check
      _
    $region227: #{_lambda_.1} parent=1 // pred_check_branch
      %8281 = sbr.rel (0) target = $region229
    $region228: #{_lambda_.1} parent=1 // pred_region
      _
    $region229: #{_lambda_.1} parent=1 // pred_fallthru
      _
    // Predicated region
    $region230: #{_lambda_.1} parent=1 // pred_check
      _
    $region231: #{_lambda_.1} parent=1 // pred_check_branch
      %8283 = sbr.rel (0) target = $region233
    $region232: #{_lambda_.1} parent=1 // pred_region
      _
    $region233: #{_lambda_.1} parent=1 // pred_fallthru
      _
    %8284 = vsyncpa [#allocation3], 1
    %8285 = vsyncpa [#allocation5], 1
    %8286 = vsyncpa [#allocation8], 1
    %8287 = vsyncpa [#allocation11], 1
    %8288 = vsyncpa [#allocation14], 1
    %8289 = vsyncpa [#allocation17], 1
    %8290 = vsyncpa [#allocation20], 1
    %8291 = vsyncpa [#allocation23], 1
    %8292 = vsyncpa [#allocation26], 1
    %8293 = vsyncpa [#allocation29], 1
    %8294 = vsyncpa [#allocation32], 1
    %8295 = vsyncpa [#allocation35], 1
    %8296 = vsyncpa [#allocation38], 1

</llo_original>
